<compile_context>
chip_gen: v7x
topology: tpu7x:2x2x1
jax: 0.10.0
libtpu: 0.0.40
codegen_flags: <defaults>
</compile_context>

<pallas_src>
import numpy as np
import jax
import jax.numpy as jnp
from jax import lax
from jax.experimental import pallas as pl
from jax.experimental.pallas import tpu as pltpu

B = 2          # batch
H = W = 16     # input spectrogram spatial size (PyTorch input is (B, 1, H, W))

_PAD = 24                       # staging row offset in scratch A (>= W+1 for every layer, mult. of 8)
_A_ROWS = _PAD + 256 + _PAD     # 304: padded conv-input staging
_B_ROWS = 256 + 24              # 280: conv-output / pool staging
_D_ROWS = 96                    # widest fused-conv tap slab (layer 2: 16 + 64 + 16 rows)


def _round128(n):
    return ((n + 127) // 128) * 128


# ---------------------------------------------------------------------------
# Host-side constants: tiny 0/1 "anchor row" compaction matrices for 2x2 pooling.
# C[q, p] = 1 iff p is the top-left (anchor) pixel of pooling window q.
# ---------------------------------------------------------------------------
def _pool_anchor_mat(h, w):
    h2, w2 = h // 2, w // 2
    c = np.zeros((h2 * w2, h * w), np.float32)
    for i in range(h2):
        for j in range(w2):
            c[i * w2 + j, (2 * i) * w + 2 * j] = 1.0
    return c


# ---------------------------------------------------------------------------
# Host-side packing of the base parameters for P lane-packed samples.
# ---------------------------------------------------------------------------
def pack_params(p, P):
    f32 = np.float32
    W1, b1 = np.asarray(p["W1"], f32), np.asarray(p["b1"], f32)
    W2, b2 = np.asarray(p["W2"], f32), np.asarray(p["b2"], f32)
    W3, b3 = np.asarray(p["W3"], f32), np.asarray(p["b3"], f32)
    W4, b4 = np.asarray(p["W4"], f32), np.asarray(p["b4"], f32)
    A1, c1 = np.asarray(p["A1"], f32), np.asarray(p["c1"], f32)
    A2, c2 = np.asarray(p["A2"], f32), np.asarray(p["c2"], f32)
    A3, c3 = np.asarray(p["A3"], f32), np.asarray(p["c3"], f32)

    PC = P * 32
    # layer 1 (Cin=1): pure-VPU tap weights, tiled across the P per-sample lane blocks.
    w1p = np.zeros((9, 1, PC), f32)
    b1p = np.zeros((1, PC), f32)
    for pp in range(P):
        w1p[:, 0, pp * 32:(pp + 1) * 32] = W1[:, 0, :]
        b1p[0, pp * 32:(pp + 1) * 32] = b1[0]

    def fuse_conv(Wt, bias):
        """(9, Cin, Cout) -> weight-stationary fused (P*Cin, 9*tap_block) block-diag matrix."""
        cin, cout = Wt.shape[1], Wt.shape[2]
        tb = _round128(P * cout)                               # 128-aligned lane block per tap
        wf = np.zeros((P * cin, 9 * tb), f32)
        bf = np.zeros((1, P * cout), f32)
        for t in range(9):
            for pp in range(P):
                wf[pp * cin:(pp + 1) * cin,
                   t * tb + pp * cout:t * tb + (pp + 1) * cout] = Wt[t]
        for pp in range(P):
            bf[0, pp * cout:(pp + 1) * cout] = bias[0]
        return wf, bf, tb

    w2w, b2p, tb2 = fuse_conv(W2, b2)
    w3w, b3p, tb3 = fuse_conv(W3, b3)
    w4w, b4p, tb4 = fuse_conv(W4, b4)

    HL = P * 64

    def blockdiag(A):
        n, m = A.shape
        out = np.zeros((P * n, P * m), f32)
        for pp in range(P):
            out[pp * n:(pp + 1) * n, pp * m:(pp + 1) * m] = A
        return out

    a1p, a2p = blockdiag(A1), blockdiag(A2)
    c1p, c2p = np.tile(c1, (1, P)), np.tile(c2, (1, P))
    a3p = np.zeros((HL, 128), f32)                              # lane-dense padded output head
    c3p = np.zeros((1, 128), f32)
    for pp in range(P):
        a3p[pp * 64:(pp + 1) * 64, pp] = A3[:, 0]
        c3p[0, pp] = c3[0, 0]

    consts = dict(
        w1p=w1p, b1p=b1p, w2w=w2w, b2p=b2p, w3w=w3w, b3p=b3p, w4w=w4w, b4p=b4p,
        cm1=_pool_anchor_mat(16, 16), cm2=_pool_anchor_mat(8, 8), cm3=_pool_anchor_mat(4, 4),
        a1p=a1p, c1p=c1p, a2p=a2p, c2p=c2p, a3p=a3p, c3p=c3p)
    return {k: jnp.asarray(v) for k, v in consts.items()}, (tb2, tb3, tb4)


# ---------------------------------------------------------------------------
# Kernel factory (closes over the packing factor P and per-layer tap blocks).
# ---------------------------------------------------------------------------
def _make_kernel(P, tbs):
    PC = P * 32
    tb2, tb3, tb4 = tbs

    def col_masks(hw, w):
        # w is a power of two (16/8/4/2) -> column index j = p & (w-1).
        r = lax.broadcasted_iota(jnp.int32, (hw, 1), 0)
        j = lax.bitwise_and(r, w - 1)
        m_l = jnp.where(j >= 1, 1.0, 0.0).astype(jnp.float32)        # valid for dx = -1
        m_r = jnp.where(j <= w - 2, 1.0, 0.0).astype(jnp.float32)    # valid for dx = +1
        return m_l, m_r

    def stage(a_sc, data, hw, zlead, ztrail):
        # Zero ONLY the pad rows the 3x3 taps can read, then place the activation.
        a_sc[pl.ds(_PAD - zlead, zlead), :] = jnp.zeros((zlead, PC), jnp.float32)
        a_sc[pl.ds(_PAD + hw, ztrail), :] = jnp.zeros((ztrail, PC), jnp.float32)
        a_sc[pl.ds(_PAD, hw), :] = data

    def conv_fused(a_sc, d_sc, w_ref, b_ref, hw, w, rs, rr, tb, cout):
        """3x3 'same' conv + bias + ReLU via one weight-stationary fused matmul.

        A single matmul (issued in three 3*tb-lane chunks) on the zero-padded slab
        produces every tap's contribution for every source row; the 9 taps are then
        combined with shifted row reads + 128-aligned lane-slice reads + VPU adds.
        """
        slab = a_sc[pl.ds(rs, rr), :]                                      # (rr, PC)
        for ci in range(3):
            yc = jnp.dot(slab, w_ref[:, pl.ds(ci * 3 * tb, 3 * tb)],
                         preferred_element_type=jnp.float32)               # (rr, 3*tb)
            d_sc[pl.ds(0, rr), pl.ds(ci * 3 * tb, 3 * tb)] = yc
        m_l, m_r = col_masks(hw, w)
        base = _PAD - rs
        acc = jnp.zeros((hw, cout), jnp.float32)
        for dy in (-1, 0, 1):
            for dx in (-1, 0, 1):
                t = (dy + 1) * 3 + (dx + 1)
                v = d_sc[pl.ds(base + dy * w + dx, hw), pl.ds(t * tb, cout)]
                if dx == -1:
                    v = v * m_l
                elif dx == 1:
                    v = v * m_r
                acc = acc + v
        return jnp.maximum(acc + b_ref[...], 0.0)

    def pool_small(b_sc, y, hw, w, zrows, cm_ref):
        # 2x2 max pool: elementwise max of 4 shifted reads + one 0/1 anchor compaction matmul.
        b_sc[pl.ds(0, hw), :] = y
        b_sc[pl.ds(hw, zrows), :] = jnp.zeros((zrows, PC), jnp.float32)
        m = jnp.maximum(
            jnp.maximum(b_sc[pl.ds(0, hw), :], b_sc[pl.ds(1, hw), :]),
            jnp.maximum(b_sc[pl.ds(w, hw), :], b_sc[pl.ds(w + 1, hw), :]))
        return jnp.dot(cm_ref[...], m, preferred_element_type=jnp.float32)

    def kernel(x_ref,
               w1_ref, b1_ref, w2_ref, b2_ref, w3_ref, b3_ref, w4_ref, b4_ref,
               cm1_ref, cm2_ref, cm3_ref,
               a1_ref, c1_ref, a2_ref, c2_ref, a3_ref, c3_ref,
               out_ref,
               a_sc, b_sc, d_sc):
        # ---- layer 1: conv(1->32) + ReLU (pure VPU, chunked), 2x2 max pool --------
        stage(a_sc, x_ref[...], 256, 24, 24)
        m_l, m_r = col_masks(64, 16)            # column pattern repeats every 64 rows
        for c in range(4):                      # 4 x 64-row chunks keep live vregs low
            acc = jnp.zeros((64, PC), jnp.float32)
            for dy in (-1, 0, 1):
                for dx in (-1, 0, 1):
                    t = (dy + 1) * 3 + (dx + 1)
                    sh = a_sc[pl.ds(_PAD + c * 64 + dy * 16 + dx, 64), :]
                    if dx == -1:
                        sh = sh * m_l
                    elif dx == 1:
                        sh = sh * m_r
                    acc = acc + sh * w1_ref[t]          # (1, PC) weight row, per-lane MAC
            b_sc[pl.ds(c * 64, 64), :] = jnp.maximum(acc + b1_ref[...], 0.0)
        b_sc[pl.ds(256, 24), :] = jnp.zeros((24, PC), jnp.float32)
        for c in range(4):                      # chunked 2x2 max, written back into scratch A
            r0 = c * 64
            m = jnp.maximum(
                jnp.maximum(b_sc[pl.ds(r0, 64), :], b_sc[pl.ds(r0 + 1, 64), :]),
                jnp.maximum(b_sc[pl.ds(r0 + 16, 64), :], b_sc[pl.ds(r0 + 17, 64), :]))
            a_sc[pl.ds(r0, 64), :] = m
        y = jnp.dot(cm1_ref[...], a_sc[pl.ds(0, 256), :],
                    preferred_element_type=jnp.float32)                     # (64, PC)

        # ---- layer 2: conv(32->32) + ReLU (fused matmul), pool ---------------------
        stage(a_sc, y, 64, 16, 16)
        y = conv_fused(a_sc, d_sc, w2_ref, b2_ref, 64, 8, 8, 96, tb2, PC)
        y = pool_small(b_sc, y, 64, 8, 16, cm2_ref)                         # (16, PC)

        # ---- layer 3: conv(32->32) + ReLU, pool ------------------------------------
        stage(a_sc, y, 16, 16, 16)
        y = conv_fused(a_sc, d_sc, w3_ref, b3_ref, 16, 4, 16, 32, tb3, PC)
        y = pool_small(b_sc, y, 16, 4, 8, cm3_ref)                          # (4, PC)

        # ---- layer 4: conv(32->64) + ReLU ------------------------------------------
        stage(a_sc, y, 4, 16, 16)
        y = conv_fused(a_sc, d_sc, w4_ref, b4_ref, 4, 2, 16, 16, tb4, P * 64)  # (4, P*64)

        # ---- global max pool + 3-layer MLP head (Dropout == identity at eval) ------
        emb = jnp.max(y, axis=0, keepdims=True)                             # (1, P*64)
        h = jnp.maximum(jnp.dot(emb, a1_ref[...],
                                preferred_element_type=jnp.float32) + c1_ref[...], 0.0)
        h = jnp.maximum(jnp.dot(h, a2_ref[...],
                                preferred_element_type=jnp.float32) + c2_ref[...], 0.0)
        pred = jnp.dot(h, a3_ref[...],
                       preferred_element_type=jnp.float32) + c3_ref[...]    # (1, 128) lane-dense
        out_ref[...] = pred

    return kernel


# ---------------------------------------------------------------------------
# Wrapper
# ---------------------------------------------------------------------------
def dnsmos_forward(x_nchw, params):
    b = int(x_nchw.shape[0])
    h, w = int(x_nchw.shape[2]), int(x_nchw.shape[3])
    assert (h, w) == (16, 16), "kernel is specialized to 16x16 spectrograms"
    assert (w & (w - 1)) == 0, "column masks assume W is a power of two"

    P = min(b, 4)                   # samples packed along the 128-lane axis
    G = -(-b // P)                  # grid steps (one packed group per step)
    b_pad = G * P
    x = x_nchw.astype(jnp.float32)
    if b_pad != b:
        x = jnp.concatenate([x, jnp.zeros((b_pad - b,) + x.shape[1:], jnp.float32)], axis=0)

    hw0 = h * w
    PC = P * 32
    # (B,1,H,W) -> (G, H*W, P*32): each sample's pixel is broadcast across its 32-lane
    # channel block so layer 1 is a pure VPU multiply-add (no MXU, no in-kernel broadcast).
    xg = jnp.transpose(x.reshape(G, P, hw0), (0, 2, 1))
    x_expanded = jnp.repeat(xg, 32, axis=2)                                  # (G, hw0, PC)

    consts, tbs = pack_params(params, P)
    order = ("w1p", "b1p", "w2w", "b2p", "w3w", "b3p", "w4w", "b4p",
             "cm1", "cm2", "cm3", "a1p", "c1p", "a2p", "c2p", "a3p", "c3p")
    const_args = [consts[k] for k in order]

    def const_spec(a):
        nd = a.ndim
        return pl.BlockSpec(a.shape, lambda i, _n=nd: (0,) * _n)

    in_specs = [pl.BlockSpec((None, hw0, PC), lambda i: (i, 0, 0))]
    in_specs += [const_spec(a) for a in const_args]

    d_lanes = 9 * max(tbs)
    out = pl.pallas_call(
        _make_kernel(P, tbs),
        out_shape=jax.ShapeDtypeStruct((G, 1, 128), jnp.float32),
        grid=(G,),
        in_specs=in_specs,
        out_specs=pl.BlockSpec((None, 1, 128), lambda i: (i, 0, 0)),
        scratch_shapes=[
            pltpu.VMEM((_A_ROWS, PC), jnp.float32),      # padded conv-input staging
            pltpu.VMEM((_B_ROWS, PC), jnp.float32),      # conv-output / pool staging
            pltpu.VMEM((_D_ROWS, d_lanes), jnp.float32),  # fused-conv per-tap slab
        ],
        compiler_params=pltpu.CompilerParams(
            dimension_semantics=("parallel",),
            vmem_limit_bytes=32 * 1024 * 1024),
    )(x_expanded, *const_args)

    return out[:, 0, :P].reshape(b_pad, 1)[:b]


# ---------------------------------------------------------------------------
# Deterministic synthetic parameters (shapes from the PyTorch __init__)
# ---------------------------------------------------------------------------
def init_params(key):
    ks = jax.random.split(key, 14)

    def dense(k, shape, fan_in, scale=1.0):
        return jax.random.normal(k, shape, jnp.float32) * np.float32(
            scale * np.sqrt(2.0 / fan_in))

    return {
        # conv weights stored as (9, Cin, Cout); tap t = (dy+1)*3 + (dx+1)
        "W1": dense(ks[0], (9, 1, 32), 9 * 1),
        "b1": dense(ks[1], (1, 32), 32, scale=0.1),
        "W2": dense(ks[2], (9, 32, 32), 9 * 32),
        "b2": dense(ks[3], (1, 32), 32, scale=0.1),
        "W3": dense(ks[4], (9, 32, 32), 9 * 32),
        "b3": dense(ks[5], (1, 32), 32, scale=0.1),
        "W4": dense(ks[6], (9, 32, 64), 9 * 32),
        "b4": dense(ks[7], (1, 64), 64, scale=0.1),
        # head: Linear(64,64), Linear(64,64), Linear(64,1) stored as (in, out)
        "A1": dense(ks[8], (64, 64), 64),
        "c1": dense(ks[9], (1, 64), 64, scale=0.1),
        "A2": dense(ks[10], (64, 64), 64),
        "c2": dense(ks[11], (1, 64), 64, scale=0.1),
        "A3": dense(ks[12], (64, 1), 64),
        "c3": dense(ks[13], (1, 1), 1, scale=0.1),
    }


# ---------------------------------------------------------------------------
# Pure-JAX reference (mirrors the PyTorch forward pass, inference mode)
# ---------------------------------------------------------------------------
def reference_forward(x_nchw, p):
    y = jnp.transpose(x_nchw, (0, 2, 3, 1))  # NHWC

    def conv_relu(y, wf, bf):
        cin, cout = wf.shape[1], wf.shape[2]
        w_hwio = wf.reshape(3, 3, cin, cout)
        y = lax.conv_general_dilated(
            y, w_hwio, window_strides=(1, 1), padding="SAME",
            dimension_numbers=("NHWC", "HWIO", "NHWC"))
        return jnp.maximum(y + bf.reshape(1, 1, 1, cout), 0.0)

    def pool(y):
        return lax.reduce_window(y, -jnp.inf, lax.max,
                                 (1, 2, 2, 1), (1, 2, 2, 1), "VALID")

    y = pool(conv_relu(y, p["W1"], p["b1"]))
    y = pool(conv_relu(y, p["W2"], p["b2"]))
    y = pool(conv_relu(y, p["W3"], p["b3"]))
    y = conv_relu(y, p["W4"], p["b4"])
    emb = jnp.max(y, axis=(1, 2))                       # (B, 64)
    h = jnp.maximum(emb @ p["A1"] + p["c1"], 0.0)
    h = jnp.maximum(h @ p["A2"] + p["c2"], 0.0)
    return h @ p["A3"] + p["c3"]                        # (B, 1)


if __name__ == "__main__":
    key = jax.random.PRNGKey(0)
    pkey, xkey = jax.random.split(key)
    params = init_params(pkey)

    x = jax.random.normal(xkey, (B, 1, H, W), jnp.float32)   # PyTorch NCHW input

    out = dnsmos_forward(x, params)
    out = jax.block_until_ready(out)
    assert out.shape == (B, 1), out.shape

    ref = reference_forward(x, params)
    if not np.allclose(np.asarray(out), np.asarray(ref), rtol=2e-2, atol=2e-2):
        raise AssertionError(
            f"Pallas output does not match reference:\n{out}\nvs\n{ref}")

    print("KERNEL_OK")
</pallas_src>

<mosaic_0001>
module attributes {stable_mosaic.version = 11 : i64} {
  func.func @kernel(%arg0: i32, %arg1: memref<1x256x64xf32, #tpu.memory_space<vmem>>, %arg2: memref<9x1x64xf32, #tpu.memory_space<vmem>>, %arg3: memref<1x64xf32, #tpu.memory_space<vmem>>, %arg4: memref<64x1152xf32, #tpu.memory_space<vmem>>, %arg5: memref<1x64xf32, #tpu.memory_space<vmem>>, %arg6: memref<64x1152xf32, #tpu.memory_space<vmem>>, %arg7: memref<1x64xf32, #tpu.memory_space<vmem>>, %arg8: memref<64x1152xf32, #tpu.memory_space<vmem>>, %arg9: memref<1x128xf32, #tpu.memory_space<vmem>>, %arg10: memref<64x256xf32, #tpu.memory_space<vmem>>, %arg11: memref<16x64xf32, #tpu.memory_space<vmem>>, %arg12: memref<4x16xf32, #tpu.memory_space<vmem>>, %arg13: memref<128x128xf32, #tpu.memory_space<vmem>>, %arg14: memref<1x128xf32, #tpu.memory_space<vmem>>, %arg15: memref<128x128xf32, #tpu.memory_space<vmem>>, %arg16: memref<1x128xf32, #tpu.memory_space<vmem>>, %arg17: memref<128x128xf32, #tpu.memory_space<vmem>>, %arg18: memref<1x128xf32, #tpu.memory_space<vmem>>, %arg19: memref<1x1x128xf32, #tpu.memory_space<vmem>>, %arg20: memref<304x64xf32, #tpu.memory_space<vmem>>, %arg21: memref<280x64xf32, #tpu.memory_space<vmem>>, %arg22: memref<96x1152xf32, #tpu.memory_space<vmem>>) attributes {dimension_semantics = [#tpu.dimension_semantics<parallel>], iteration_bounds = array<i64: 1>, scalar_prefetch = 0 : i64, scratch_operands = 3 : i64, tpu.core_type = #tpu.core_type<tc>, window_params = [{transform_indices = @transform_0, window_bounds = array<i64: 1, 256, 64>}, {pipeline_mode = #tpu.pipeline_mode<synchronous>, transform_indices = @transform_1, window_bounds = array<i64: 9, 1, 64>}, {pipeline_mode = #tpu.pipeline_mode<synchronous>, transform_indices = @transform_2, window_bounds = array<i64: 1, 64>}, {pipeline_mode = #tpu.pipeline_mode<synchronous>, transform_indices = @transform_3, window_bounds = array<i64: 64, 1152>}, {pipeline_mode = #tpu.pipeline_mode<synchronous>, transform_indices = @transform_4, window_bounds = array<i64: 1, 64>}, {pipeline_mode = #tpu.pipeline_mode<synchronous>, transform_indices = @transform_5, window_bounds = array<i64: 64, 1152>}, {pipeline_mode = #tpu.pipeline_mode<synchronous>, transform_indices = @transform_6, window_bounds = array<i64: 1, 64>}, {pipeline_mode = #tpu.pipeline_mode<synchronous>, transform_indices = @transform_7, window_bounds = array<i64: 64, 1152>}, {pipeline_mode = #tpu.pipeline_mode<synchronous>, transform_indices = @transform_8, window_bounds = array<i64: 1, 128>}, {pipeline_mode = #tpu.pipeline_mode<synchronous>, transform_indices = @transform_9, window_bounds = array<i64: 64, 256>}, {pipeline_mode = #tpu.pipeline_mode<synchronous>, transform_indices = @transform_10, window_bounds = array<i64: 16, 64>}, {pipeline_mode = #tpu.pipeline_mode<synchronous>, transform_indices = @transform_11, window_bounds = array<i64: 4, 16>}, {pipeline_mode = #tpu.pipeline_mode<synchronous>, transform_indices = @transform_12, window_bounds = array<i64: 128, 128>}, {pipeline_mode = #tpu.pipeline_mode<synchronous>, transform_indices = @transform_13, window_bounds = array<i64: 1, 128>}, {pipeline_mode = #tpu.pipeline_mode<synchronous>, transform_indices = @transform_14, window_bounds = array<i64: 128, 128>}, {pipeline_mode = #tpu.pipeline_mode<synchronous>, transform_indices = @transform_15, window_bounds = array<i64: 1, 128>}, {pipeline_mode = #tpu.pipeline_mode<synchronous>, transform_indices = @transform_16, window_bounds = array<i64: 128, 128>}, {pipeline_mode = #tpu.pipeline_mode<synchronous>, transform_indices = @transform_17, window_bounds = array<i64: 1, 128>}, {transform_indices = @transform_18, window_bounds = array<i64: 1, 1, 128>}]} {
    %c0 = arith.constant 0 : index
    %c0_0 = arith.constant 0 : index
    %c0_1 = arith.constant 0 : index
    %0 = vector.load %arg1[%c0, %c0_0, %c0_1] : memref<1x256x64xf32, #tpu.memory_space<vmem>>, vector<1x256x64xf32>
    %1 = vector.shape_cast %0 : vector<1x256x64xf32> to vector<256x64xf32>
    %cst = arith.constant 0.000000e+00 : f32
    %2 = vector.broadcast %cst : f32 to vector<24x64xf32>
    %c0_2 = arith.constant 0 : index
    %c0_3 = arith.constant 0 : index
    %3 = vector.load %arg20[%c0_2, %c0_3] : memref<304x64xf32, #tpu.memory_space<vmem>>, vector<24x64xf32>
    tpu.vector_store %arg20[%c0_2, %c0_3], %2 {strides = array<i32>} : memref<304x64xf32, #tpu.memory_space<vmem>>, vector<24x64xf32>,
    %cst_4 = arith.constant 0.000000e+00 : f32
    %4 = vector.broadcast %cst_4 : f32 to vector<24x64xf32>
    %c280 = arith.constant 280 : index
    %c0_5 = arith.constant 0 : index
    %5 = vector.load %arg20[%c280, %c0_5] : memref<304x64xf32, #tpu.memory_space<vmem>>, vector<24x64xf32>
    tpu.vector_store %arg20[%c280, %c0_5], %4 {strides = array<i32>} : memref<304x64xf32, #tpu.memory_space<vmem>>, vector<24x64xf32>,
    %c24 = arith.constant 24 : index
    %c0_6 = arith.constant 0 : index
    %6 = vector.load %arg20[%c24, %c0_6] : memref<304x64xf32, #tpu.memory_space<vmem>>, vector<256x64xf32>
    tpu.vector_store %arg20[%c24, %c0_6], %1 {strides = array<i32>} : memref<304x64xf32, #tpu.memory_space<vmem>>, vector<256x64xf32>,
    %7 = tpu.iota {dimensions = array<i32: 0>} : vector<64x1xi32>
    %c15_i32 = arith.constant 15 : i32
    %8 = vector.broadcast %c15_i32 : i32 to vector<64x1xi32>
    %9 = arith.andi %7, %8 : vector<64x1xi32>
    %c1_i32 = arith.constant 1 : i32
    %10 = vector.broadcast %c1_i32 : i32 to vector<64x1xi32>
    %11 = arith.cmpi sge, %9, %10 : vector<64x1xi32>
    %cst_7 = arith.constant 1.000000e+00 : f32
    %cst_8 = arith.constant 0.000000e+00 : f32
    %12 = vector.broadcast %cst_7 : f32 to vector<64x1xf32>
    %13 = vector.broadcast %cst_8 : f32 to vector<64x1xf32>
    %14 = arith.select %11, %12, %13 : vector<64x1xi1>, vector<64x1xf32>
    %c14_i32 = arith.constant 14 : i32
    %15 = vector.broadcast %c14_i32 : i32 to vector<64x1xi32>
    %16 = arith.cmpi sle, %9, %15 : vector<64x1xi32>
    %cst_9 = arith.constant 1.000000e+00 : f32
    %cst_10 = arith.constant 0.000000e+00 : f32
    %17 = vector.broadcast %cst_9 : f32 to vector<64x1xf32>
    %18 = vector.broadcast %cst_10 : f32 to vector<64x1xf32>
    %19 = arith.select %16, %17, %18 : vector<64x1xi1>, vector<64x1xf32>
    %cst_11 = arith.constant 0.000000e+00 : f32
    %20 = vector.broadcast %cst_11 : f32 to vector<64x64xf32>
    %c7 = arith.constant 7 : index
    %c0_12 = arith.constant 0 : index
    %21 = vector.load %arg20[%c7, %c0_12] : memref<304x64xf32, #tpu.memory_space<vmem>>, vector<64x64xf32>
    %22 = vector.broadcast %14 : vector<64x1xf32> to vector<64x64xf32>
    %23 = arith.mulf %21, %22 : vector<64x64xf32>
    %c0_13 = arith.constant 0 : index
    %c0_14 = arith.constant 0 : index
    %c0_15 = arith.constant 0 : index
    %24 = vector.load %arg2[%c0_13, %c0_14, %c0_15] : memref<9x1x64xf32, #tpu.memory_space<vmem>>, vector<1x1x64xf32>
    %25 = vector.shape_cast %24 : vector<1x1x64xf32> to vector<1x64xf32>
    %26 = vector.broadcast %25 : vector<1x64xf32> to vector<64x64xf32>
    %27 = arith.mulf %23, %26 : vector<64x64xf32>
    %28 = arith.addf %20, %27 : vector<64x64xf32>
    %c8 = arith.constant 8 : index
    %c0_16 = arith.constant 0 : index
    %29 = vector.load %arg20[%c8, %c0_16] : memref<304x64xf32, #tpu.memory_space<vmem>>, vector<64x64xf32>
    %c1 = arith.constant 1 : index
    %c0_17 = arith.constant 0 : index
    %c0_18 = arith.constant 0 : index
    %30 = vector.load %arg2[%c1, %c0_17, %c0_18] : memref<9x1x64xf32, #tpu.memory_space<vmem>>, vector<1x1x64xf32>
    %31 = vector.shape_cast %30 : vector<1x1x64xf32> to vector<1x64xf32>
    %32 = vector.broadcast %31 : vector<1x64xf32> to vector<64x64xf32>
    %33 = arith.mulf %29, %32 : vector<64x64xf32>
    %34 = arith.addf %28, %33 : vector<64x64xf32>
    %c9 = arith.constant 9 : index
    %c0_19 = arith.constant 0 : index
    %35 = vector.load %arg20[%c9, %c0_19] : memref<304x64xf32, #tpu.memory_space<vmem>>, vector<64x64xf32>
    %36 = vector.broadcast %19 : vector<64x1xf32> to vector<64x64xf32>
    %37 = arith.mulf %35, %36 : vector<64x64xf32>
    %c2 = arith.constant 2 : index
    %c0_20 = arith.constant 0 : index
    %c0_21 = arith.constant 0 : index
    %38 = vector.load %arg2[%c2, %c0_20, %c0_21] : memref<9x1x64xf32, #tpu.memory_space<vmem>>, vector<1x1x64xf32>
    %39 = vector.shape_cast %38 : vector<1x1x64xf32> to vector<1x64xf32>
    %40 = vector.broadcast %39 : vector<1x64xf32> to vector<64x64xf32>
    %41 = arith.mulf %37, %40 : vector<64x64xf32>
    %42 = arith.addf %34, %41 : vector<64x64xf32>
    %c23 = arith.constant 23 : index
    %c0_22 = arith.constant 0 : index
    %43 = vector.load %arg20[%c23, %c0_22] : memref<304x64xf32, #tpu.memory_space<vmem>>, vector<64x64xf32>
    %44 = vector.broadcast %14 : vector<64x1xf32> to vector<64x64xf32>
    %45 = arith.mulf %43, %44 : vector<64x64xf32>
    %c3 = arith.constant 3 : index
    %c0_23 = arith.constant 0 : index
    %c0_24 = arith.constant 0 : index
    %46 = vector.load %arg2[%c3, %c0_23, %c0_24] : memref<9x1x64xf32, #tpu.memory_space<vmem>>, vector<1x1x64xf32>
    %47 = vector.shape_cast %46 : vector<1x1x64xf32> to vector<1x64xf32>
    %48 = vector.broadcast %47 : vector<1x64xf32> to vector<64x64xf32>
    %49 = arith.mulf %45, %48 : vector<64x64xf32>
    %50 = arith.addf %42, %49 : vector<64x64xf32>
    %c24_25 = arith.constant 24 : index
    %c0_26 = arith.constant 0 : index
    %51 = vector.load %arg20[%c24_25, %c0_26] : memref<304x64xf32, #tpu.memory_space<vmem>>, vector<64x64xf32>
    %c4 = arith.constant 4 : index
    %c0_27 = arith.constant 0 : index
    %c0_28 = arith.constant 0 : index
    %52 = vector.load %arg2[%c4, %c0_27, %c0_28] : memref<9x1x64xf32, #tpu.memory_space<vmem>>, vector<1x1x64xf32>
    %53 = vector.shape_cast %52 : vector<1x1x64xf32> to vector<1x64xf32>
    %54 = vector.broadcast %53 : vector<1x64xf32> to vector<64x64xf32>
    %55 = arith.mulf %51, %54 : vector<64x64xf32>
    %56 = arith.addf %50, %55 : vector<64x64xf32>
    %c25 = arith.constant 25 : index
    %c0_29 = arith.constant 0 : index
    %57 = vector.load %arg20[%c25, %c0_29] : memref<304x64xf32, #tpu.memory_space<vmem>>, vector<64x64xf32>
    %58 = vector.broadcast %19 : vector<64x1xf32> to vector<64x64xf32>
    %59 = arith.mulf %57, %58 : vector<64x64xf32>
    %c5 = arith.constant 5 : index
    %c0_30 = arith.constant 0 : index
    %c0_31 = arith.constant 0 : index
    %60 = vector.load %arg2[%c5, %c0_30, %c0_31] : memref<9x1x64xf32, #tpu.memory_space<vmem>>, vector<1x1x64xf32>
    %61 = vector.shape_cast %60 : vector<1x1x64xf32> to vector<1x64xf32>
    %62 = vector.broadcast %61 : vector<1x64xf32> to vector<64x64xf32>
    %63 = arith.mulf %59, %62 : vector<64x64xf32>
    %64 = arith.addf %56, %63 : vector<64x64xf32>
    %c39 = arith.constant 39 : index
    %c0_32 = arith.constant 0 : index
    %65 = vector.load %arg20[%c39, %c0_32] : memref<304x64xf32, #tpu.memory_space<vmem>>, vector<64x64xf32>
    %66 = vector.broadcast %14 : vector<64x1xf32> to vector<64x64xf32>
    %67 = arith.mulf %65, %66 : vector<64x64xf32>
    %c6 = arith.constant 6 : index
    %c0_33 = arith.constant 0 : index
    %c0_34 = arith.constant 0 : index
    %68 = vector.load %arg2[%c6, %c0_33, %c0_34] : memref<9x1x64xf32, #tpu.memory_space<vmem>>, vector<1x1x64xf32>
    %69 = vector.shape_cast %68 : vector<1x1x64xf32> to vector<1x64xf32>
    %70 = vector.broadcast %69 : vector<1x64xf32> to vector<64x64xf32>
    %71 = arith.mulf %67, %70 : vector<64x64xf32>
    %72 = arith.addf %64, %71 : vector<64x64xf32>
    %c40 = arith.constant 40 : index
    %c0_35 = arith.constant 0 : index
    %73 = vector.load %arg20[%c40, %c0_35] : memref<304x64xf32, #tpu.memory_space<vmem>>, vector<64x64xf32>
    %c7_36 = arith.constant 7 : index
    %c0_37 = arith.constant 0 : index
    %c0_38 = arith.constant 0 : index
    %74 = vector.load %arg2[%c7_36, %c0_37, %c0_38] : memref<9x1x64xf32, #tpu.memory_space<vmem>>, vector<1x1x64xf32>
    %75 = vector.shape_cast %74 : vector<1x1x64xf32> to vector<1x64xf32>
    %76 = vector.broadcast %75 : vector<1x64xf32> to vector<64x64xf32>
    %77 = arith.mulf %73, %76 : vector<64x64xf32>
    %78 = arith.addf %72, %77 : vector<64x64xf32>
    %c41 = arith.constant 41 : index
    %c0_39 = arith.constant 0 : index
    %79 = vector.load %arg20[%c41, %c0_39] : memref<304x64xf32, #tpu.memory_space<vmem>>, vector<64x64xf32>
    %80 = vector.broadcast %19 : vector<64x1xf32> to vector<64x64xf32>
    %81 = arith.mulf %79, %80 : vector<64x64xf32>
    %c8_40 = arith.constant 8 : index
    %c0_41 = arith.constant 0 : index
    %c0_42 = arith.constant 0 : index
    %82 = vector.load %arg2[%c8_40, %c0_41, %c0_42] : memref<9x1x64xf32, #tpu.memory_space<vmem>>, vector<1x1x64xf32>
    %83 = vector.shape_cast %82 : vector<1x1x64xf32> to vector<1x64xf32>
    %84 = vector.broadcast %83 : vector<1x64xf32> to vector<64x64xf32>
    %85 = arith.mulf %81, %84 : vector<64x64xf32>
    %86 = arith.addf %78, %85 : vector<64x64xf32>
    %c0_43 = arith.constant 0 : index
    %c0_44 = arith.constant 0 : index
    %87 = vector.load %arg3[%c0_43, %c0_44] : memref<1x64xf32, #tpu.memory_space<vmem>>, vector<1x64xf32>
    %88 = vector.broadcast %87 : vector<1x64xf32> to vector<64x64xf32>
    %89 = arith.addf %86, %88 : vector<64x64xf32>
    %cst_45 = arith.constant 0.000000e+00 : f32
    %90 = vector.broadcast %cst_45 : f32 to vector<64x64xf32>
    %91 = arith.maximumf %89, %90 : vector<64x64xf32>
    %c0_46 = arith.constant 0 : index
    %c0_47 = arith.constant 0 : index
    %92 = vector.load %arg21[%c0_46, %c0_47] : memref<280x64xf32, #tpu.memory_space<vmem>>, vector<64x64xf32>
    tpu.vector_store %arg21[%c0_46, %c0_47], %91 {strides = array<i32>} : memref<280x64xf32, #tpu.memory_space<vmem>>, vector<64x64xf32>,
    %cst_48 = arith.constant 0.000000e+00 : f32
    %93 = vector.broadcast %cst_48 : f32 to vector<64x64xf32>
    %c71 = arith.constant 71 : index
    %c0_49 = arith.constant 0 : index
    %94 = vector.load %arg20[%c71, %c0_49] : memref<304x64xf32, #tpu.memory_space<vmem>>, vector<64x64xf32>
    %95 = vector.broadcast %14 : vector<64x1xf32> to vector<64x64xf32>
    %96 = arith.mulf %94, %95 : vector<64x64xf32>
    %c0_50 = arith.constant 0 : index
    %c0_51 = arith.constant 0 : index
    %c0_52 = arith.constant 0 : index
    %97 = vector.load %arg2[%c0_50, %c0_51, %c0_52] : memref<9x1x64xf32, #tpu.memory_space<vmem>>, vector<1x1x64xf32>
    %98 = vector.shape_cast %97 : vector<1x1x64xf32> to vector<1x64xf32>
    %99 = vector.broadcast %98 : vector<1x64xf32> to vector<64x64xf32>
    %100 = arith.mulf %96, %99 : vector<64x64xf32>
    %101 = arith.addf %93, %100 : vector<64x64xf32>
    %c72 = arith.constant 72 : index
    %c0_53 = arith.constant 0 : index
    %102 = vector.load %arg20[%c72, %c0_53] : memref<304x64xf32, #tpu.memory_space<vmem>>, vector<64x64xf32>
    %c1_54 = arith.constant 1 : index
    %c0_55 = arith.constant 0 : index
    %c0_56 = arith.constant 0 : index
    %103 = vector.load %arg2[%c1_54, %c0_55, %c0_56] : memref<9x1x64xf32, #tpu.memory_space<vmem>>, vector<1x1x64xf32>
    %104 = vector.shape_cast %103 : vector<1x1x64xf32> to vector<1x64xf32>
    %105 = vector.broadcast %104 : vector<1x64xf32> to vector<64x64xf32>
    %106 = arith.mulf %102, %105 : vector<64x64xf32>
    %107 = arith.addf %101, %106 : vector<64x64xf32>
    %c73 = arith.constant 73 : index
    %c0_57 = arith.constant 0 : index
    %108 = vector.load %arg20[%c73, %c0_57] : memref<304x64xf32, #tpu.memory_space<vmem>>, vector<64x64xf32>
    %109 = vector.broadcast %19 : vector<64x1xf32> to vector<64x64xf32>
    %110 = arith.mulf %108, %109 : vector<64x64xf32>
    %c2_58 = arith.constant 2 : index
    %c0_59 = arith.constant 0 : index
    %c0_60 = arith.constant 0 : index
    %111 = vector.load %arg2[%c2_58, %c0_59, %c0_60] : memref<9x1x64xf32, #tpu.memory_space<vmem>>, vector<1x1x64xf32>
    %112 = vector.shape_cast %111 : vector<1x1x64xf32> to vector<1x64xf32>
    %113 = vector.broadcast %112 : vector<1x64xf32> to vector<64x64xf32>
    %114 = arith.mulf %110, %113 : vector<64x64xf32>
    %115 = arith.addf %107, %114 : vector<64x64xf32>
    %c87 = arith.constant 87 : index
    %c0_61 = arith.constant 0 : index
    %116 = vector.load %arg20[%c87, %c0_61] : memref<304x64xf32, #tpu.memory_space<vmem>>, vector<64x64xf32>
    %117 = vector.broadcast %14 : vector<64x1xf32> to vector<64x64xf32>
    %118 = arith.mulf %116, %117 : vector<64x64xf32>
    %c3_62 = arith.constant 3 : index
    %c0_63 = arith.constant 0 : index
    %c0_64 = arith.constant 0 : index
    %119 = vector.load %arg2[%c3_62, %c0_63, %c0_64] : memref<9x1x64xf32, #tpu.memory_space<vmem>>, vector<1x1x64xf32>
    %120 = vector.shape_cast %119 : vector<1x1x64xf32> to vector<1x64xf32>
    %121 = vector.broadcast %120 : vector<1x64xf32> to vector<64x64xf32>
    %122 = arith.mulf %118, %121 : vector<64x64xf32>
    %123 = arith.addf %115, %122 : vector<64x64xf32>
    %c88 = arith.constant 88 : index
    %c0_65 = arith.constant 0 : index
    %124 = vector.load %arg20[%c88, %c0_65] : memref<304x64xf32, #tpu.memory_space<vmem>>, vector<64x64xf32>
    %c4_66 = arith.constant 4 : index
    %c0_67 = arith.constant 0 : index
    %c0_68 = arith.constant 0 : index
    %125 = vector.load %arg2[%c4_66, %c0_67, %c0_68] : memref<9x1x64xf32, #tpu.memory_space<vmem>>, vector<1x1x64xf32>
    %126 = vector.shape_cast %125 : vector<1x1x64xf32> to vector<1x64xf32>
    %127 = vector.broadcast %126 : vector<1x64xf32> to vector<64x64xf32>
    %128 = arith.mulf %124, %127 : vector<64x64xf32>
    %129 = arith.addf %123, %128 : vector<64x64xf32>
    %c89 = arith.constant 89 : index
    %c0_69 = arith.constant 0 : index
    %130 = vector.load %arg20[%c89, %c0_69] : memref<304x64xf32, #tpu.memory_space<vmem>>, vector<64x64xf32>
    %131 = vector.broadcast %19 : vector<64x1xf32> to vector<64x64xf32>
    %132 = arith.mulf %130, %131 : vector<64x64xf32>
    %c5_70 = arith.constant 5 : index
    %c0_71 = arith.constant 0 : index
    %c0_72 = arith.constant 0 : index
    %133 = vector.load %arg2[%c5_70, %c0_71, %c0_72] : memref<9x1x64xf32, #tpu.memory_space<vmem>>, vector<1x1x64xf32>
    %134 = vector.shape_cast %133 : vector<1x1x64xf32> to vector<1x64xf32>
    %135 = vector.broadcast %134 : vector<1x64xf32> to vector<64x64xf32>
    %136 = arith.mulf %132, %135 : vector<64x64xf32>
    %137 = arith.addf %129, %136 : vector<64x64xf32>
    %c103 = arith.constant 103 : index
    %c0_73 = arith.constant 0 : index
    %138 = vector.load %arg20[%c103, %c0_73] : memref<304x64xf32, #tpu.memory_space<vmem>>, vector<64x64xf32>
    %139 = vector.broadcast %14 : vector<64x1xf32> to vector<64x64xf32>
    %140 = arith.mulf %138, %139 : vector<64x64xf32>
    %c6_74 = arith.constant 6 : index
    %c0_75 = arith.constant 0 : index
    %c0_76 = arith.constant 0 : index
    %141 = vector.load %arg2[%c6_74, %c0_75, %c0_76] : memref<9x1x64xf32, #tpu.memory_space<vmem>>, vector<1x1x64xf32>
    %142 = vector.shape_cast %141 : vector<1x1x64xf32> to vector<1x64xf32>
    %143 = vector.broadcast %142 : vector<1x64xf32> to vector<64x64xf32>
    %144 = arith.mulf %140, %143 : vector<64x64xf32>
    %145 = arith.addf %137, %144 : vector<64x64xf32>
    %c104 = arith.constant 104 : index
    %c0_77 = arith.constant 0 : index
    %146 = vector.load %arg20[%c104, %c0_77] : memref<304x64xf32, #tpu.memory_space<vmem>>, vector<64x64xf32>
    %c7_78 = arith.constant 7 : index
    %c0_79 = arith.constant 0 : index
    %c0_80 = arith.constant 0 : index
    %147 = vector.load %arg2[%c7_78, %c0_79, %c0_80] : memref<9x1x64xf32, #tpu.memory_space<vmem>>, vector<1x1x64xf32>
    %148 = vector.shape_cast %147 : vector<1x1x64xf32> to vector<1x64xf32>
    %149 = vector.broadcast %148 : vector<1x64xf32> to vector<64x64xf32>
    %150 = arith.mulf %146, %149 : vector<64x64xf32>
    %151 = arith.addf %145, %150 : vector<64x64xf32>
    %c105 = arith.constant 105 : index
    %c0_81 = arith.constant 0 : index
    %152 = vector.load %arg20[%c105, %c0_81] : memref<304x64xf32, #tpu.memory_space<vmem>>, vector<64x64xf32>
    %153 = vector.broadcast %19 : vector<64x1xf32> to vector<64x64xf32>
    %154 = arith.mulf %152, %153 : vector<64x64xf32>
    %c8_82 = arith.constant 8 : index
    %c0_83 = arith.constant 0 : index
    %c0_84 = arith.constant 0 : index
    %155 = vector.load %arg2[%c8_82, %c0_83, %c0_84] : memref<9x1x64xf32, #tpu.memory_space<vmem>>, vector<1x1x64xf32>
    %156 = vector.shape_cast %155 : vector<1x1x64xf32> to vector<1x64xf32>
    %157 = vector.broadcast %156 : vector<1x64xf32> to vector<64x64xf32>
    %158 = arith.mulf %154, %157 : vector<64x64xf32>
    %159 = arith.addf %151, %158 : vector<64x64xf32>
    %c0_85 = arith.constant 0 : index
    %c0_86 = arith.constant 0 : index
    %160 = vector.load %arg3[%c0_85, %c0_86] : memref<1x64xf32, #tpu.memory_space<vmem>>, vector<1x64xf32>
    %161 = vector.broadcast %160 : vector<1x64xf32> to vector<64x64xf32>
    %162 = arith.addf %159, %161 : vector<64x64xf32>
    %cst_87 = arith.constant 0.000000e+00 : f32
    %163 = vector.broadcast %cst_87 : f32 to vector<64x64xf32>
    %164 = arith.maximumf %162, %163 : vector<64x64xf32>
    %c64 = arith.constant 64 : index
    %c0_88 = arith.constant 0 : index
    %165 = vector.load %arg21[%c64, %c0_88] : memref<280x64xf32, #tpu.memory_space<vmem>>, vector<64x64xf32>
    tpu.vector_store %arg21[%c64, %c0_88], %164 {strides = array<i32>} : memref<280x64xf32, #tpu.memory_space<vmem>>, vector<64x64xf32>,
    %cst_89 = arith.constant 0.000000e+00 : f32
    %166 = vector.broadcast %cst_89 : f32 to vector<64x64xf32>
    %c135 = arith.constant 135 : index
    %c0_90 = arith.constant 0 : index
    %167 = vector.load %arg20[%c135, %c0_90] : memref<304x64xf32, #tpu.memory_space<vmem>>, vector<64x64xf32>
    %168 = vector.broadcast %14 : vector<64x1xf32> to vector<64x64xf32>
    %169 = arith.mulf %167, %168 : vector<64x64xf32>
    %c0_91 = arith.constant 0 : index
    %c0_92 = arith.constant 0 : index
    %c0_93 = arith.constant 0 : index
    %170 = vector.load %arg2[%c0_91, %c0_92, %c0_93] : memref<9x1x64xf32, #tpu.memory_space<vmem>>, vector<1x1x64xf32>
    %171 = vector.shape_cast %170 : vector<1x1x64xf32> to vector<1x64xf32>
    %172 = vector.broadcast %171 : vector<1x64xf32> to vector<64x64xf32>
    %173 = arith.mulf %169, %172 : vector<64x64xf32>
    %174 = arith.addf %166, %173 : vector<64x64xf32>
    %c136 = arith.constant 136 : index
    %c0_94 = arith.constant 0 : index
    %175 = vector.load %arg20[%c136, %c0_94] : memref<304x64xf32, #tpu.memory_space<vmem>>, vector<64x64xf32>
    %c1_95 = arith.constant 1 : index
    %c0_96 = arith.constant 0 : index
    %c0_97 = arith.constant 0 : index
    %176 = vector.load %arg2[%c1_95, %c0_96, %c0_97] : memref<9x1x64xf32, #tpu.memory_space<vmem>>, vector<1x1x64xf32>
    %177 = vector.shape_cast %176 : vector<1x1x64xf32> to vector<1x64xf32>
    %178 = vector.broadcast %177 : vector<1x64xf32> to vector<64x64xf32>
    %179 = arith.mulf %175, %178 : vector<64x64xf32>
    %180 = arith.addf %174, %179 : vector<64x64xf32>
    %c137 = arith.constant 137 : index
    %c0_98 = arith.constant 0 : index
    %181 = vector.load %arg20[%c137, %c0_98] : memref<304x64xf32, #tpu.memory_space<vmem>>, vector<64x64xf32>
    %182 = vector.broadcast %19 : vector<64x1xf32> to vector<64x64xf32>
    %183 = arith.mulf %181, %182 : vector<64x64xf32>
    %c2_99 = arith.constant 2 : index
    %c0_100 = arith.constant 0 : index
    %c0_101 = arith.constant 0 : index
    %184 = vector.load %arg2[%c2_99, %c0_100, %c0_101] : memref<9x1x64xf32, #tpu.memory_space<vmem>>, vector<1x1x64xf32>
    %185 = vector.shape_cast %184 : vector<1x1x64xf32> to vector<1x64xf32>
    %186 = vector.broadcast %185 : vector<1x64xf32> to vector<64x64xf32>
    %187 = arith.mulf %183, %186 : vector<64x64xf32>
    %188 = arith.addf %180, %187 : vector<64x64xf32>
    %c151 = arith.constant 151 : index
    %c0_102 = arith.constant 0 : index
    %189 = vector.load %arg20[%c151, %c0_102] : memref<304x64xf32, #tpu.memory_space<vmem>>, vector<64x64xf32>
    %190 = vector.broadcast %14 : vector<64x1xf32> to vector<64x64xf32>
    %191 = arith.mulf %189, %190 : vector<64x64xf32>
    %c3_103 = arith.constant 3 : index
    %c0_104 = arith.constant 0 : index
    %c0_105 = arith.constant 0 : index
    %192 = vector.load %arg2[%c3_103, %c0_104, %c0_105] : memref<9x1x64xf32, #tpu.memory_space<vmem>>, vector<1x1x64xf32>
    %193 = vector.shape_cast %192 : vector<1x1x64xf32> to vector<1x64xf32>
    %194 = vector.broadcast %193 : vector<1x64xf32> to vector<64x64xf32>
    %195 = arith.mulf %191, %194 : vector<64x64xf32>
    %196 = arith.addf %188, %195 : vector<64x64xf32>
    %c152 = arith.constant 152 : index
    %c0_106 = arith.constant 0 : index
    %197 = vector.load %arg20[%c152, %c0_106] : memref<304x64xf32, #tpu.memory_space<vmem>>, vector<64x64xf32>
    %c4_107 = arith.constant 4 : index
    %c0_108 = arith.constant 0 : index
    %c0_109 = arith.constant 0 : index
    %198 = vector.load %arg2[%c4_107, %c0_108, %c0_109] : memref<9x1x64xf32, #tpu.memory_space<vmem>>, vector<1x1x64xf32>
    %199 = vector.shape_cast %198 : vector<1x1x64xf32> to vector<1x64xf32>
    %200 = vector.broadcast %199 : vector<1x64xf32> to vector<64x64xf32>
    %201 = arith.mulf %197, %200 : vector<64x64xf32>
    %202 = arith.addf %196, %201 : vector<64x64xf32>
    %c153 = arith.constant 153 : index
    %c0_110 = arith.constant 0 : index
    %203 = vector.load %arg20[%c153, %c0_110] : memref<304x64xf32, #tpu.memory_space<vmem>>, vector<64x64xf32>
    %204 = vector.broadcast %19 : vector<64x1xf32> to vector<64x64xf32>
    %205 = arith.mulf %203, %204 : vector<64x64xf32>
    %c5_111 = arith.constant 5 : index
    %c0_112 = arith.constant 0 : index
    %c0_113 = arith.constant 0 : index
    %206 = vector.load %arg2[%c5_111, %c0_112, %c0_113] : memref<9x1x64xf32, #tpu.memory_space<vmem>>, vector<1x1x64xf32>
    %207 = vector.shape_cast %206 : vector<1x1x64xf32> to vector<1x64xf32>
    %208 = vector.broadcast %207 : vector<1x64xf32> to vector<64x64xf32>
    %209 = arith.mulf %205, %208 : vector<64x64xf32>
    %210 = arith.addf %202, %209 : vector<64x64xf32>
    %c167 = arith.constant 167 : index
    %c0_114 = arith.constant 0 : index
    %211 = vector.load %arg20[%c167, %c0_114] : memref<304x64xf32, #tpu.memory_space<vmem>>, vector<64x64xf32>
    %212 = vector.broadcast %14 : vector<64x1xf32> to vector<64x64xf32>
    %213 = arith.mulf %211, %212 : vector<64x64xf32>
    %c6_115 = arith.constant 6 : index
    %c0_116 = arith.constant 0 : index
    %c0_117 = arith.constant 0 : index
    %214 = vector.load %arg2[%c6_115, %c0_116, %c0_117] : memref<9x1x64xf32, #tpu.memory_space<vmem>>, vector<1x1x64xf32>
    %215 = vector.shape_cast %214 : vector<1x1x64xf32> to vector<1x64xf32>
    %216 = vector.broadcast %215 : vector<1x64xf32> to vector<64x64xf32>
    %217 = arith.mulf %213, %216 : vector<64x64xf32>
    %218 = arith.addf %210, %217 : vector<64x64xf32>
    %c168 = arith.constant 168 : index
    %c0_118 = arith.constant 0 : index
    %219 = vector.load %arg20[%c168, %c0_118] : memref<304x64xf32, #tpu.memory_space<vmem>>, vector<64x64xf32>
    %c7_119 = arith.constant 7 : index
    %c0_120 = arith.constant 0 : index
    %c0_121 = arith.constant 0 : index
    %220 = vector.load %arg2[%c7_119, %c0_120, %c0_121] : memref<9x1x64xf32, #tpu.memory_space<vmem>>, vector<1x1x64xf32>
    %221 = vector.shape_cast %220 : vector<1x1x64xf32> to vector<1x64xf32>
    %222 = vector.broadcast %221 : vector<1x64xf32> to vector<64x64xf32>
    %223 = arith.mulf %219, %222 : vector<64x64xf32>
    %224 = arith.addf %218, %223 : vector<64x64xf32>
    %c169 = arith.constant 169 : index
    %c0_122 = arith.constant 0 : index
    %225 = vector.load %arg20[%c169, %c0_122] : memref<304x64xf32, #tpu.memory_space<vmem>>, vector<64x64xf32>
    %226 = vector.broadcast %19 : vector<64x1xf32> to vector<64x64xf32>
    %227 = arith.mulf %225, %226 : vector<64x64xf32>
    %c8_123 = arith.constant 8 : index
    %c0_124 = arith.constant 0 : index
    %c0_125 = arith.constant 0 : index
    %228 = vector.load %arg2[%c8_123, %c0_124, %c0_125] : memref<9x1x64xf32, #tpu.memory_space<vmem>>, vector<1x1x64xf32>
    %229 = vector.shape_cast %228 : vector<1x1x64xf32> to vector<1x64xf32>
    %230 = vector.broadcast %229 : vector<1x64xf32> to vector<64x64xf32>
    %231 = arith.mulf %227, %230 : vector<64x64xf32>
    %232 = arith.addf %224, %231 : vector<64x64xf32>
    %c0_126 = arith.constant 0 : index
    %c0_127 = arith.constant 0 : index
    %233 = vector.load %arg3[%c0_126, %c0_127] : memref<1x64xf32, #tpu.memory_space<vmem>>, vector<1x64xf32>
    %234 = vector.broadcast %233 : vector<1x64xf32> to vector<64x64xf32>
    %235 = arith.addf %232, %234 : vector<64x64xf32>
    %cst_128 = arith.constant 0.000000e+00 : f32
    %236 = vector.broadcast %cst_128 : f32 to vector<64x64xf32>
    %237 = arith.maximumf %235, %236 : vector<64x64xf32>
    %c128 = arith.constant 128 : index
    %c0_129 = arith.constant 0 : index
    %238 = vector.load %arg21[%c128, %c0_129] : memref<280x64xf32, #tpu.memory_space<vmem>>, vector<64x64xf32>
    tpu.vector_store %arg21[%c128, %c0_129], %237 {strides = array<i32>} : memref<280x64xf32, #tpu.memory_space<vmem>>, vector<64x64xf32>,
    %cst_130 = arith.constant 0.000000e+00 : f32
    %239 = vector.broadcast %cst_130 : f32 to vector<64x64xf32>
    %c199 = arith.constant 199 : index
    %c0_131 = arith.constant 0 : index
    %240 = vector.load %arg20[%c199, %c0_131] : memref<304x64xf32, #tpu.memory_space<vmem>>, vector<64x64xf32>
    %241 = vector.broadcast %14 : vector<64x1xf32> to vector<64x64xf32>
    %242 = arith.mulf %240, %241 : vector<64x64xf32>
    %c0_132 = arith.constant 0 : index
    %c0_133 = arith.constant 0 : index
    %c0_134 = arith.constant 0 : index
    %243 = vector.load %arg2[%c0_132, %c0_133, %c0_134] : memref<9x1x64xf32, #tpu.memory_space<vmem>>, vector<1x1x64xf32>
    %244 = vector.shape_cast %243 : vector<1x1x64xf32> to vector<1x64xf32>
    %245 = vector.broadcast %244 : vector<1x64xf32> to vector<64x64xf32>
    %246 = arith.mulf %242, %245 : vector<64x64xf32>
    %247 = arith.addf %239, %246 : vector<64x64xf32>
    %c200 = arith.constant 200 : index
    %c0_135 = arith.constant 0 : index
    %248 = vector.load %arg20[%c200, %c0_135] : memref<304x64xf32, #tpu.memory_space<vmem>>, vector<64x64xf32>
    %c1_136 = arith.constant 1 : index
    %c0_137 = arith.constant 0 : index
    %c0_138 = arith.constant 0 : index
    %249 = vector.load %arg2[%c1_136, %c0_137, %c0_138] : memref<9x1x64xf32, #tpu.memory_space<vmem>>, vector<1x1x64xf32>
    %250 = vector.shape_cast %249 : vector<1x1x64xf32> to vector<1x64xf32>
    %251 = vector.broadcast %250 : vector<1x64xf32> to vector<64x64xf32>
    %252 = arith.mulf %248, %251 : vector<64x64xf32>
    %253 = arith.addf %247, %252 : vector<64x64xf32>
    %c201 = arith.constant 201 : index
    %c0_139 = arith.constant 0 : index
    %254 = vector.load %arg20[%c201, %c0_139] : memref<304x64xf32, #tpu.memory_space<vmem>>, vector<64x64xf32>
    %255 = vector.broadcast %19 : vector<64x1xf32> to vector<64x64xf32>
    %256 = arith.mulf %254, %255 : vector<64x64xf32>
    %c2_140 = arith.constant 2 : index
    %c0_141 = arith.constant 0 : index
    %c0_142 = arith.constant 0 : index
    %257 = vector.load %arg2[%c2_140, %c0_141, %c0_142] : memref<9x1x64xf32, #tpu.memory_space<vmem>>, vector<1x1x64xf32>
    %258 = vector.shape_cast %257 : vector<1x1x64xf32> to vector<1x64xf32>
    %259 = vector.broadcast %258 : vector<1x64xf32> to vector<64x64xf32>
    %260 = arith.mulf %256, %259 : vector<64x64xf32>
    %261 = arith.addf %253, %260 : vector<64x64xf32>
    %c215 = arith.constant 215 : index
    %c0_143 = arith.constant 0 : index
    %262 = vector.load %arg20[%c215, %c0_143] : memref<304x64xf32, #tpu.memory_space<vmem>>, vector<64x64xf32>
    %263 = vector.broadcast %14 : vector<64x1xf32> to vector<64x64xf32>
    %264 = arith.mulf %262, %263 : vector<64x64xf32>
    %c3_144 = arith.constant 3 : index
    %c0_145 = arith.constant 0 : index
    %c0_146 = arith.constant 0 : index
    %265 = vector.load %arg2[%c3_144, %c0_145, %c0_146] : memref<9x1x64xf32, #tpu.memory_space<vmem>>, vector<1x1x64xf32>
    %266 = vector.shape_cast %265 : vector<1x1x64xf32> to vector<1x64xf32>
    %267 = vector.broadcast %266 : vector<1x64xf32> to vector<64x64xf32>
    %268 = arith.mulf %264, %267 : vector<64x64xf32>
    %269 = arith.addf %261, %268 : vector<64x64xf32>
    %c216 = arith.constant 216 : index
    %c0_147 = arith.constant 0 : index
    %270 = vector.load %arg20[%c216, %c0_147] : memref<304x64xf32, #tpu.memory_space<vmem>>, vector<64x64xf32>
    %c4_148 = arith.constant 4 : index
    %c0_149 = arith.constant 0 : index
    %c0_150 = arith.constant 0 : index
    %271 = vector.load %arg2[%c4_148, %c0_149, %c0_150] : memref<9x1x64xf32, #tpu.memory_space<vmem>>, vector<1x1x64xf32>
    %272 = vector.shape_cast %271 : vector<1x1x64xf32> to vector<1x64xf32>
    %273 = vector.broadcast %272 : vector<1x64xf32> to vector<64x64xf32>
    %274 = arith.mulf %270, %273 : vector<64x64xf32>
    %275 = arith.addf %269, %274 : vector<64x64xf32>
    %c217 = arith.constant 217 : index
    %c0_151 = arith.constant 0 : index
    %276 = vector.load %arg20[%c217, %c0_151] : memref<304x64xf32, #tpu.memory_space<vmem>>, vector<64x64xf32>
    %277 = vector.broadcast %19 : vector<64x1xf32> to vector<64x64xf32>
    %278 = arith.mulf %276, %277 : vector<64x64xf32>
    %c5_152 = arith.constant 5 : index
    %c0_153 = arith.constant 0 : index
    %c0_154 = arith.constant 0 : index
    %279 = vector.load %arg2[%c5_152, %c0_153, %c0_154] : memref<9x1x64xf32, #tpu.memory_space<vmem>>, vector<1x1x64xf32>
    %280 = vector.shape_cast %279 : vector<1x1x64xf32> to vector<1x64xf32>
    %281 = vector.broadcast %280 : vector<1x64xf32> to vector<64x64xf32>
    %282 = arith.mulf %278, %281 : vector<64x64xf32>
    %283 = arith.addf %275, %282 : vector<64x64xf32>
    %c231 = arith.constant 231 : index
    %c0_155 = arith.constant 0 : index
    %284 = vector.load %arg20[%c231, %c0_155] : memref<304x64xf32, #tpu.memory_space<vmem>>, vector<64x64xf32>
    %285 = vector.broadcast %14 : vector<64x1xf32> to vector<64x64xf32>
    %286 = arith.mulf %284, %285 : vector<64x64xf32>
    %c6_156 = arith.constant 6 : index
    %c0_157 = arith.constant 0 : index
    %c0_158 = arith.constant 0 : index
    %287 = vector.load %arg2[%c6_156, %c0_157, %c0_158] : memref<9x1x64xf32, #tpu.memory_space<vmem>>, vector<1x1x64xf32>
    %288 = vector.shape_cast %287 : vector<1x1x64xf32> to vector<1x64xf32>
    %289 = vector.broadcast %288 : vector<1x64xf32> to vector<64x64xf32>
    %290 = arith.mulf %286, %289 : vector<64x64xf32>
    %291 = arith.addf %283, %290 : vector<64x64xf32>
    %c232 = arith.constant 232 : index
    %c0_159 = arith.constant 0 : index
    %292 = vector.load %arg20[%c232, %c0_159] : memref<304x64xf32, #tpu.memory_space<vmem>>, vector<64x64xf32>
    %c7_160 = arith.constant 7 : index
    %c0_161 = arith.constant 0 : index
    %c0_162 = arith.constant 0 : index
    %293 = vector.load %arg2[%c7_160, %c0_161, %c0_162] : memref<9x1x64xf32, #tpu.memory_space<vmem>>, vector<1x1x64xf32>
    %294 = vector.shape_cast %293 : vector<1x1x64xf32> to vector<1x64xf32>
    %295 = vector.broadcast %294 : vector<1x64xf32> to vector<64x64xf32>
    %296 = arith.mulf %292, %295 : vector<64x64xf32>
    %297 = arith.addf %291, %296 : vector<64x64xf32>
    %c233 = arith.constant 233 : index
    %c0_163 = arith.constant 0 : index
    %298 = vector.load %arg20[%c233, %c0_163] : memref<304x64xf32, #tpu.memory_space<vmem>>, vector<64x64xf32>
    %299 = vector.broadcast %19 : vector<64x1xf32> to vector<64x64xf32>
    %300 = arith.mulf %298, %299 : vector<64x64xf32>
    %c8_164 = arith.constant 8 : index
    %c0_165 = arith.constant 0 : index
    %c0_166 = arith.constant 0 : index
    %301 = vector.load %arg2[%c8_164, %c0_165, %c0_166] : memref<9x1x64xf32, #tpu.memory_space<vmem>>, vector<1x1x64xf32>
    %302 = vector.shape_cast %301 : vector<1x1x64xf32> to vector<1x64xf32>
    %303 = vector.broadcast %302 : vector<1x64xf32> to vector<64x64xf32>
    %304 = arith.mulf %300, %303 : vector<64x64xf32>
    %305 = arith.addf %297, %304 : vector<64x64xf32>
    %c0_167 = arith.constant 0 : index
    %c0_168 = arith.constant 0 : index
    %306 = vector.load %arg3[%c0_167, %c0_168] : memref<1x64xf32, #tpu.memory_space<vmem>>, vector<1x64xf32>
    %307 = vector.broadcast %306 : vector<1x64xf32> to vector<64x64xf32>
    %308 = arith.addf %305, %307 : vector<64x64xf32>
    %cst_169 = arith.constant 0.000000e+00 : f32
    %309 = vector.broadcast %cst_169 : f32 to vector<64x64xf32>
    %310 = arith.maximumf %308, %309 : vector<64x64xf32>
    %c192 = arith.constant 192 : index
    %c0_170 = arith.constant 0 : index
    %311 = vector.load %arg21[%c192, %c0_170] : memref<280x64xf32, #tpu.memory_space<vmem>>, vector<64x64xf32>
    tpu.vector_store %arg21[%c192, %c0_170], %310 {strides = array<i32>} : memref<280x64xf32, #tpu.memory_space<vmem>>, vector<64x64xf32>,
    %cst_171 = arith.constant 0.000000e+00 : f32
    %312 = vector.broadcast %cst_171 : f32 to vector<24x64xf32>
    %c256 = arith.constant 256 : index
    %c0_172 = arith.constant 0 : index
    %313 = vector.load %arg21[%c256, %c0_172] : memref<280x64xf32, #tpu.memory_space<vmem>>, vector<24x64xf32>
    tpu.vector_store %arg21[%c256, %c0_172], %312 {strides = array<i32>} : memref<280x64xf32, #tpu.memory_space<vmem>>, vector<24x64xf32>,
    %c0_173 = arith.constant 0 : index
    %c0_174 = arith.constant 0 : index
    %314 = vector.load %arg21[%c0_173, %c0_174] : memref<280x64xf32, #tpu.memory_space<vmem>>, vector<64x64xf32>
    %c1_175 = arith.constant 1 : index
    %c0_176 = arith.constant 0 : index
    %315 = vector.load %arg21[%c1_175, %c0_176] : memref<280x64xf32, #tpu.memory_space<vmem>>, vector<64x64xf32>
    %316 = arith.maximumf %314, %315 : vector<64x64xf32>
    %c16 = arith.constant 16 : index
    %c0_177 = arith.constant 0 : index
    %317 = vector.load %arg21[%c16, %c0_177] : memref<280x64xf32, #tpu.memory_space<vmem>>, vector<64x64xf32>
    %c17 = arith.constant 17 : index
    %c0_178 = arith.constant 0 : index
    %318 = vector.load %arg21[%c17, %c0_178] : memref<280x64xf32, #tpu.memory_space<vmem>>, vector<64x64xf32>
    %319 = arith.maximumf %317, %318 : vector<64x64xf32>
    %320 = arith.maximumf %316, %319 : vector<64x64xf32>
    %c0_179 = arith.constant 0 : index
    %c0_180 = arith.constant 0 : index
    %321 = vector.load %arg20[%c0_179, %c0_180] : memref<304x64xf32, #tpu.memory_space<vmem>>, vector<64x64xf32>
    tpu.vector_store %arg20[%c0_179, %c0_180], %320 {strides = array<i32>} : memref<304x64xf32, #tpu.memory_space<vmem>>, vector<64x64xf32>,
    %c64_181 = arith.constant 64 : index
    %c0_182 = arith.constant 0 : index
    %322 = vector.load %arg21[%c64_181, %c0_182] : memref<280x64xf32, #tpu.memory_space<vmem>>, vector<64x64xf32>
    %c65 = arith.constant 65 : index
    %c0_183 = arith.constant 0 : index
    %323 = vector.load %arg21[%c65, %c0_183] : memref<280x64xf32, #tpu.memory_space<vmem>>, vector<64x64xf32>
    %324 = arith.maximumf %322, %323 : vector<64x64xf32>
    %c80 = arith.constant 80 : index
    %c0_184 = arith.constant 0 : index
    %325 = vector.load %arg21[%c80, %c0_184] : memref<280x64xf32, #tpu.memory_space<vmem>>, vector<64x64xf32>
    %c81 = arith.constant 81 : index
    %c0_185 = arith.constant 0 : index
    %326 = vector.load %arg21[%c81, %c0_185] : memref<280x64xf32, #tpu.memory_space<vmem>>, vector<64x64xf32>
    %327 = arith.maximumf %325, %326 : vector<64x64xf32>
    %328 = arith.maximumf %324, %327 : vector<64x64xf32>
    %c64_186 = arith.constant 64 : index
    %c0_187 = arith.constant 0 : index
    %329 = vector.load %arg20[%c64_186, %c0_187] : memref<304x64xf32, #tpu.memory_space<vmem>>, vector<64x64xf32>
    tpu.vector_store %arg20[%c64_186, %c0_187], %328 {strides = array<i32>} : memref<304x64xf32, #tpu.memory_space<vmem>>, vector<64x64xf32>,
    %c128_188 = arith.constant 128 : index
    %c0_189 = arith.constant 0 : index
    %330 = vector.load %arg21[%c128_188, %c0_189] : memref<280x64xf32, #tpu.memory_space<vmem>>, vector<64x64xf32>
    %c129 = arith.constant 129 : index
    %c0_190 = arith.constant 0 : index
    %331 = vector.load %arg21[%c129, %c0_190] : memref<280x64xf32, #tpu.memory_space<vmem>>, vector<64x64xf32>
    %332 = arith.maximumf %330, %331 : vector<64x64xf32>
    %c144 = arith.constant 144 : index
    %c0_191 = arith.constant 0 : index
    %333 = vector.load %arg21[%c144, %c0_191] : memref<280x64xf32, #tpu.memory_space<vmem>>, vector<64x64xf32>
    %c145 = arith.constant 145 : index
    %c0_192 = arith.constant 0 : index
    %334 = vector.load %arg21[%c145, %c0_192] : memref<280x64xf32, #tpu.memory_space<vmem>>, vector<64x64xf32>
    %335 = arith.maximumf %333, %334 : vector<64x64xf32>
    %336 = arith.maximumf %332, %335 : vector<64x64xf32>
    %c128_193 = arith.constant 128 : index
    %c0_194 = arith.constant 0 : index
    %337 = vector.load %arg20[%c128_193, %c0_194] : memref<304x64xf32, #tpu.memory_space<vmem>>, vector<64x64xf32>
    tpu.vector_store %arg20[%c128_193, %c0_194], %336 {strides = array<i32>} : memref<304x64xf32, #tpu.memory_space<vmem>>, vector<64x64xf32>,
    %c192_195 = arith.constant 192 : index
    %c0_196 = arith.constant 0 : index
    %338 = vector.load %arg21[%c192_195, %c0_196] : memref<280x64xf32, #tpu.memory_space<vmem>>, vector<64x64xf32>
    %c193 = arith.constant 193 : index
    %c0_197 = arith.constant 0 : index
    %339 = vector.load %arg21[%c193, %c0_197] : memref<280x64xf32, #tpu.memory_space<vmem>>, vector<64x64xf32>
    %340 = arith.maximumf %338, %339 : vector<64x64xf32>
    %c208 = arith.constant 208 : index
    %c0_198 = arith.constant 0 : index
    %341 = vector.load %arg21[%c208, %c0_198] : memref<280x64xf32, #tpu.memory_space<vmem>>, vector<64x64xf32>
    %c209 = arith.constant 209 : index
    %c0_199 = arith.constant 0 : index
    %342 = vector.load %arg21[%c209, %c0_199] : memref<280x64xf32, #tpu.memory_space<vmem>>, vector<64x64xf32>
    %343 = arith.maximumf %341, %342 : vector<64x64xf32>
    %344 = arith.maximumf %340, %343 : vector<64x64xf32>
    %c192_200 = arith.constant 192 : index
    %c0_201 = arith.constant 0 : index
    %345 = vector.load %arg20[%c192_200, %c0_201] : memref<304x64xf32, #tpu.memory_space<vmem>>, vector<64x64xf32>
    tpu.vector_store %arg20[%c192_200, %c0_201], %344 {strides = array<i32>} : memref<304x64xf32, #tpu.memory_space<vmem>>, vector<64x64xf32>,
    %c0_202 = arith.constant 0 : index
    %c0_203 = arith.constant 0 : index
    %346 = vector.load %arg10[%c0_202, %c0_203] : memref<64x256xf32, #tpu.memory_space<vmem>>, vector<64x256xf32>
    %c0_204 = arith.constant 0 : index
    %c0_205 = arith.constant 0 : index
    %347 = vector.load %arg20[%c0_204, %c0_205] : memref<304x64xf32, #tpu.memory_space<vmem>>, vector<256x64xf32>
    %cst_206 = arith.constant dense<0.000000e+00> : vector<64x64xf32>
    %348 = tpu.matmul %346, %347, %cst_206 {dimension_numbers = #tpu.dot_dimension_numbers<[1], [0], [0], [1], [0, 0, 1, 1], [], []>} : vector<64x256xf32>, vector<256x64xf32>, vector<64x64xf32> -> vector<64x64xf32>
    %cst_207 = arith.constant 0.000000e+00 : f32
    %349 = vector.broadcast %cst_207 : f32 to vector<16x64xf32>
    %c8_208 = arith.constant 8 : index
    %c0_209 = arith.constant 0 : index
    %350 = vector.load %arg20[%c8_208, %c0_209] : memref<304x64xf32, #tpu.memory_space<vmem>>, vector<16x64xf32>
    tpu.vector_store %arg20[%c8_208, %c0_209], %349 {strides = array<i32>} : memref<304x64xf32, #tpu.memory_space<vmem>>, vector<16x64xf32>,
    %cst_210 = arith.constant 0.000000e+00 : f32
    %351 = vector.broadcast %cst_210 : f32 to vector<16x64xf32>
    %c88_211 = arith.constant 88 : index
    %c0_212 = arith.constant 0 : index
    %352 = vector.load %arg20[%c88_211, %c0_212] : memref<304x64xf32, #tpu.memory_space<vmem>>, vector<16x64xf32>
    tpu.vector_store %arg20[%c88_211, %c0_212], %351 {strides = array<i32>} : memref<304x64xf32, #tpu.memory_space<vmem>>, vector<16x64xf32>,
    %c24_213 = arith.constant 24 : index
    %c0_214 = arith.constant 0 : index
    %353 = vector.load %arg20[%c24_213, %c0_214] : memref<304x64xf32, #tpu.memory_space<vmem>>, vector<64x64xf32>
    tpu.vector_store %arg20[%c24_213, %c0_214], %348 {strides = array<i32>} : memref<304x64xf32, #tpu.memory_space<vmem>>, vector<64x64xf32>,
    %c8_215 = arith.constant 8 : index
    %c0_216 = arith.constant 0 : index
    %354 = vector.load %arg20[%c8_215, %c0_216] : memref<304x64xf32, #tpu.memory_space<vmem>>, vector<96x64xf32>
    %c0_217 = arith.constant 0 : index
    %c0_218 = arith.constant 0 : index
    %355 = vector.load %arg4[%c0_217, %c0_218] : memref<64x1152xf32, #tpu.memory_space<vmem>>, vector<64x384xf32>
    %cst_219 = arith.constant dense<0.000000e+00> : vector<96x384xf32>
    %356 = tpu.matmul %354, %355, %cst_219 {dimension_numbers = #tpu.dot_dimension_numbers<[1], [0], [0], [1], [0, 0, 1, 1], [], []>} : vector<96x64xf32>, vector<64x384xf32>, vector<96x384xf32> -> vector<96x384xf32>
    %c0_220 = arith.constant 0 : index
    %c0_221 = arith.constant 0 : index
    %357 = vector.load %arg22[%c0_220, %c0_221] : memref<96x1152xf32, #tpu.memory_space<vmem>>, vector<96x384xf32>
    tpu.vector_store %arg22[%c0_220, %c0_221], %356 {strides = array<i32>} : memref<96x1152xf32, #tpu.memory_space<vmem>>, vector<96x384xf32>,
    %c0_222 = arith.constant 0 : index
    %c384 = arith.constant 384 : index
    %358 = vector.load %arg4[%c0_222, %c384] : memref<64x1152xf32, #tpu.memory_space<vmem>>, vector<64x384xf32>
    %cst_223 = arith.constant dense<0.000000e+00> : vector<96x384xf32>
    %359 = tpu.matmul %354, %358, %cst_223 {dimension_numbers = #tpu.dot_dimension_numbers<[1], [0], [0], [1], [0, 0, 1, 1], [], []>} : vector<96x64xf32>, vector<64x384xf32>, vector<96x384xf32> -> vector<96x384xf32>
    %c0_224 = arith.constant 0 : index
    %c384_225 = arith.constant 384 : index
    %360 = vector.load %arg22[%c0_224, %c384_225] : memref<96x1152xf32, #tpu.memory_space<vmem>>, vector<96x384xf32>
    tpu.vector_store %arg22[%c0_224, %c384_225], %359 {strides = array<i32>} : memref<96x1152xf32, #tpu.memory_space<vmem>>, vector<96x384xf32>,
    %c0_226 = arith.constant 0 : index
    %c768 = arith.constant 768 : index
    %361 = vector.load %arg4[%c0_226, %c768] : memref<64x1152xf32, #tpu.memory_space<vmem>>, vector<64x384xf32>
    %cst_227 = arith.constant dense<0.000000e+00> : vector<96x384xf32>
    %362 = tpu.matmul %354, %361, %cst_227 {dimension_numbers = #tpu.dot_dimension_numbers<[1], [0], [0], [1], [0, 0, 1, 1], [], []>} : vector<96x64xf32>, vector<64x384xf32>, vector<96x384xf32> -> vector<96x384xf32>
    %c0_228 = arith.constant 0 : index
    %c768_229 = arith.constant 768 : index
    %363 = vector.load %arg22[%c0_228, %c768_229] : memref<96x1152xf32, #tpu.memory_space<vmem>>, vector<96x384xf32>
    tpu.vector_store %arg22[%c0_228, %c768_229], %362 {strides = array<i32>} : memref<96x1152xf32, #tpu.memory_space<vmem>>, vector<96x384xf32>,
    %364 = tpu.iota {dimensions = array<i32: 0>} : vector<64x1xi32>
    %c7_i32 = arith.constant 7 : i32
    %365 = vector.broadcast %c7_i32 : i32 to vector<64x1xi32>
    %366 = arith.andi %364, %365 : vector<64x1xi32>
    %c1_i32_230 = arith.constant 1 : i32
    %367 = vector.broadcast %c1_i32_230 : i32 to vector<64x1xi32>
    %368 = arith.cmpi sge, %366, %367 : vector<64x1xi32>
    %cst_231 = arith.constant 1.000000e+00 : f32
    %cst_232 = arith.constant 0.000000e+00 : f32
    %369 = vector.broadcast %cst_231 : f32 to vector<64x1xf32>
    %370 = vector.broadcast %cst_232 : f32 to vector<64x1xf32>
    %371 = arith.select %368, %369, %370 : vector<64x1xi1>, vector<64x1xf32>
    %c6_i32 = arith.constant 6 : i32
    %372 = vector.broadcast %c6_i32 : i32 to vector<64x1xi32>
    %373 = arith.cmpi sle, %366, %372 : vector<64x1xi32>
    %cst_233 = arith.constant 1.000000e+00 : f32
    %cst_234 = arith.constant 0.000000e+00 : f32
    %374 = vector.broadcast %cst_233 : f32 to vector<64x1xf32>
    %375 = vector.broadcast %cst_234 : f32 to vector<64x1xf32>
    %376 = arith.select %373, %374, %375 : vector<64x1xi1>, vector<64x1xf32>
    %cst_235 = arith.constant 0.000000e+00 : f32
    %377 = vector.broadcast %cst_235 : f32 to vector<64x64xf32>
    %c7_236 = arith.constant 7 : index
    %c0_237 = arith.constant 0 : index
    %378 = vector.load %arg22[%c7_236, %c0_237] : memref<96x1152xf32, #tpu.memory_space<vmem>>, vector<64x64xf32>
    %379 = vector.broadcast %371 : vector<64x1xf32> to vector<64x64xf32>
    %380 = arith.mulf %378, %379 : vector<64x64xf32>
    %381 = arith.addf %377, %380 : vector<64x64xf32>
    %c8_238 = arith.constant 8 : index
    %c128_239 = arith.constant 128 : index
    %382 = vector.load %arg22[%c8_238, %c128_239] : memref<96x1152xf32, #tpu.memory_space<vmem>>, vector<64x64xf32>
    %383 = arith.addf %381, %382 : vector<64x64xf32>
    %c9_240 = arith.constant 9 : index
    %c256_241 = arith.constant 256 : index
    %384 = vector.load %arg22[%c9_240, %c256_241] : memref<96x1152xf32, #tpu.memory_space<vmem>>, vector<64x64xf32>
    %385 = vector.broadcast %376 : vector<64x1xf32> to vector<64x64xf32>
    %386 = arith.mulf %384, %385 : vector<64x64xf32>
    %387 = arith.addf %383, %386 : vector<64x64xf32>
    %c15 = arith.constant 15 : index
    %c384_242 = arith.constant 384 : index
    %388 = vector.load %arg22[%c15, %c384_242] : memref<96x1152xf32, #tpu.memory_space<vmem>>, vector<64x64xf32>
    %389 = vector.broadcast %371 : vector<64x1xf32> to vector<64x64xf32>
    %390 = arith.mulf %388, %389 : vector<64x64xf32>
    %391 = arith.addf %387, %390 : vector<64x64xf32>
    %c16_243 = arith.constant 16 : index
    %c512 = arith.constant 512 : index
    %392 = vector.load %arg22[%c16_243, %c512] : memref<96x1152xf32, #tpu.memory_space<vmem>>, vector<64x64xf32>
    %393 = arith.addf %391, %392 : vector<64x64xf32>
    %c17_244 = arith.constant 17 : index
    %c640 = arith.constant 640 : index
    %394 = vector.load %arg22[%c17_244, %c640] : memref<96x1152xf32, #tpu.memory_space<vmem>>, vector<64x64xf32>
    %395 = vector.broadcast %376 : vector<64x1xf32> to vector<64x64xf32>
    %396 = arith.mulf %394, %395 : vector<64x64xf32>
    %397 = arith.addf %393, %396 : vector<64x64xf32>
    %c23_245 = arith.constant 23 : index
    %c768_246 = arith.constant 768 : index
    %398 = vector.load %arg22[%c23_245, %c768_246] : memref<96x1152xf32, #tpu.memory_space<vmem>>, vector<64x64xf32>
    %399 = vector.broadcast %371 : vector<64x1xf32> to vector<64x64xf32>
    %400 = arith.mulf %398, %399 : vector<64x64xf32>
    %401 = arith.addf %397, %400 : vector<64x64xf32>
    %c24_247 = arith.constant 24 : index
    %c896 = arith.constant 896 : index
    %402 = vector.load %arg22[%c24_247, %c896] : memref<96x1152xf32, #tpu.memory_space<vmem>>, vector<64x64xf32>
    %403 = arith.addf %401, %402 : vector<64x64xf32>
    %c25_248 = arith.constant 25 : index
    %c1024 = arith.constant 1024 : index
    %404 = vector.load %arg22[%c25_248, %c1024] : memref<96x1152xf32, #tpu.memory_space<vmem>>, vector<64x64xf32>
    %405 = vector.broadcast %376 : vector<64x1xf32> to vector<64x64xf32>
    %406 = arith.mulf %404, %405 : vector<64x64xf32>
    %407 = arith.addf %403, %406 : vector<64x64xf32>
    %c0_249 = arith.constant 0 : index
    %c0_250 = arith.constant 0 : index
    %408 = vector.load %arg5[%c0_249, %c0_250] : memref<1x64xf32, #tpu.memory_space<vmem>>, vector<1x64xf32>
    %409 = vector.broadcast %408 : vector<1x64xf32> to vector<64x64xf32>
    %410 = arith.addf %407, %409 : vector<64x64xf32>
    %cst_251 = arith.constant 0.000000e+00 : f32
    %411 = vector.broadcast %cst_251 : f32 to vector<64x64xf32>
    %412 = arith.maximumf %410, %411 : vector<64x64xf32>
    %c0_252 = arith.constant 0 : index
    %c0_253 = arith.constant 0 : index
    %413 = vector.load %arg21[%c0_252, %c0_253] : memref<280x64xf32, #tpu.memory_space<vmem>>, vector<64x64xf32>
    tpu.vector_store %arg21[%c0_252, %c0_253], %412 {strides = array<i32>} : memref<280x64xf32, #tpu.memory_space<vmem>>, vector<64x64xf32>,
    %cst_254 = arith.constant 0.000000e+00 : f32
    %414 = vector.broadcast %cst_254 : f32 to vector<16x64xf32>
    %c64_255 = arith.constant 64 : index
    %c0_256 = arith.constant 0 : index
    %415 = vector.load %arg21[%c64_255, %c0_256] : memref<280x64xf32, #tpu.memory_space<vmem>>, vector<16x64xf32>
    tpu.vector_store %arg21[%c64_255, %c0_256], %414 {strides = array<i32>} : memref<280x64xf32, #tpu.memory_space<vmem>>, vector<16x64xf32>,
    %c0_257 = arith.constant 0 : index
    %c0_258 = arith.constant 0 : index
    %416 = vector.load %arg21[%c0_257, %c0_258] : memref<280x64xf32, #tpu.memory_space<vmem>>, vector<64x64xf32>
    %c1_259 = arith.constant 1 : index
    %c0_260 = arith.constant 0 : index
    %417 = vector.load %arg21[%c1_259, %c0_260] : memref<280x64xf32, #tpu.memory_space<vmem>>, vector<64x64xf32>
    %418 = arith.maximumf %416, %417 : vector<64x64xf32>
    %c8_261 = arith.constant 8 : index
    %c0_262 = arith.constant 0 : index
    %419 = vector.load %arg21[%c8_261, %c0_262] : memref<280x64xf32, #tpu.memory_space<vmem>>, vector<64x64xf32>
    %c9_263 = arith.constant 9 : index
    %c0_264 = arith.constant 0 : index
    %420 = vector.load %arg21[%c9_263, %c0_264] : memref<280x64xf32, #tpu.memory_space<vmem>>, vector<64x64xf32>
    %421 = arith.maximumf %419, %420 : vector<64x64xf32>
    %422 = arith.maximumf %418, %421 : vector<64x64xf32>
    %c0_265 = arith.constant 0 : index
    %c0_266 = arith.constant 0 : index
    %423 = vector.load %arg11[%c0_265, %c0_266] : memref<16x64xf32, #tpu.memory_space<vmem>>, vector<16x64xf32>
    %cst_267 = arith.constant dense<0.000000e+00> : vector<16x64xf32>
    %424 = tpu.matmul %423, %422, %cst_267 {dimension_numbers = #tpu.dot_dimension_numbers<[1], [0], [0], [1], [0, 0, 1, 1], [], []>} : vector<16x64xf32>, vector<64x64xf32>, vector<16x64xf32> -> vector<16x64xf32>
    %cst_268 = arith.constant 0.000000e+00 : f32
    %425 = vector.broadcast %cst_268 : f32 to vector<16x64xf32>
    %c8_269 = arith.constant 8 : index
    %c0_270 = arith.constant 0 : index
    %426 = vector.load %arg20[%c8_269, %c0_270] : memref<304x64xf32, #tpu.memory_space<vmem>>, vector<16x64xf32>
    tpu.vector_store %arg20[%c8_269, %c0_270], %425 {strides = array<i32>} : memref<304x64xf32, #tpu.memory_space<vmem>>, vector<16x64xf32>,
    %cst_271 = arith.constant 0.000000e+00 : f32
    %427 = vector.broadcast %cst_271 : f32 to vector<16x64xf32>
    %c40_272 = arith.constant 40 : index
    %c0_273 = arith.constant 0 : index
    %428 = vector.load %arg20[%c40_272, %c0_273] : memref<304x64xf32, #tpu.memory_space<vmem>>, vector<16x64xf32>
    tpu.vector_store %arg20[%c40_272, %c0_273], %427 {strides = array<i32>} : memref<304x64xf32, #tpu.memory_space<vmem>>, vector<16x64xf32>,
    %c24_274 = arith.constant 24 : index
    %c0_275 = arith.constant 0 : index
    %429 = vector.load %arg20[%c24_274, %c0_275] : memref<304x64xf32, #tpu.memory_space<vmem>>, vector<16x64xf32>
    tpu.vector_store %arg20[%c24_274, %c0_275], %424 {strides = array<i32>} : memref<304x64xf32, #tpu.memory_space<vmem>>, vector<16x64xf32>,
    %c16_276 = arith.constant 16 : index
    %c0_277 = arith.constant 0 : index
    %430 = vector.load %arg20[%c16_276, %c0_277] : memref<304x64xf32, #tpu.memory_space<vmem>>, vector<32x64xf32>
    %c0_278 = arith.constant 0 : index
    %c0_279 = arith.constant 0 : index
    %431 = vector.load %arg6[%c0_278, %c0_279] : memref<64x1152xf32, #tpu.memory_space<vmem>>, vector<64x384xf32>
    %cst_280 = arith.constant dense<0.000000e+00> : vector<32x384xf32>
    %432 = tpu.matmul %430, %431, %cst_280 {dimension_numbers = #tpu.dot_dimension_numbers<[1], [0], [0], [1], [0, 0, 1, 1], [], []>} : vector<32x64xf32>, vector<64x384xf32>, vector<32x384xf32> -> vector<32x384xf32>
    %c0_281 = arith.constant 0 : index
    %c0_282 = arith.constant 0 : index
    %433 = vector.load %arg22[%c0_281, %c0_282] : memref<96x1152xf32, #tpu.memory_space<vmem>>, vector<32x384xf32>
    tpu.vector_store %arg22[%c0_281, %c0_282], %432 {strides = array<i32>} : memref<96x1152xf32, #tpu.memory_space<vmem>>, vector<32x384xf32>,
    %c0_283 = arith.constant 0 : index
    %c384_284 = arith.constant 384 : index
    %434 = vector.load %arg6[%c0_283, %c384_284] : memref<64x1152xf32, #tpu.memory_space<vmem>>, vector<64x384xf32>
    %cst_285 = arith.constant dense<0.000000e+00> : vector<32x384xf32>
    %435 = tpu.matmul %430, %434, %cst_285 {dimension_numbers = #tpu.dot_dimension_numbers<[1], [0], [0], [1], [0, 0, 1, 1], [], []>} : vector<32x64xf32>, vector<64x384xf32>, vector<32x384xf32> -> vector<32x384xf32>
    %c0_286 = arith.constant 0 : index
    %c384_287 = arith.constant 384 : index
    %436 = vector.load %arg22[%c0_286, %c384_287] : memref<96x1152xf32, #tpu.memory_space<vmem>>, vector<32x384xf32>
    tpu.vector_store %arg22[%c0_286, %c384_287], %435 {strides = array<i32>} : memref<96x1152xf32, #tpu.memory_space<vmem>>, vector<32x384xf32>,
    %c0_288 = arith.constant 0 : index
    %c768_289 = arith.constant 768 : index
    %437 = vector.load %arg6[%c0_288, %c768_289] : memref<64x1152xf32, #tpu.memory_space<vmem>>, vector<64x384xf32>
    %cst_290 = arith.constant dense<0.000000e+00> : vector<32x384xf32>
    %438 = tpu.matmul %430, %437, %cst_290 {dimension_numbers = #tpu.dot_dimension_numbers<[1], [0], [0], [1], [0, 0, 1, 1], [], []>} : vector<32x64xf32>, vector<64x384xf32>, vector<32x384xf32> -> vector<32x384xf32>
    %c0_291 = arith.constant 0 : index
    %c768_292 = arith.constant 768 : index
    %439 = vector.load %arg22[%c0_291, %c768_292] : memref<96x1152xf32, #tpu.memory_space<vmem>>, vector<32x384xf32>
    tpu.vector_store %arg22[%c0_291, %c768_292], %438 {strides = array<i32>} : memref<96x1152xf32, #tpu.memory_space<vmem>>, vector<32x384xf32>,
    %440 = tpu.iota {dimensions = array<i32: 0>} : vector<16x1xi32>
    %c3_i32 = arith.constant 3 : i32
    %441 = vector.broadcast %c3_i32 : i32 to vector<16x1xi32>
    %442 = arith.andi %440, %441 : vector<16x1xi32>
    %c1_i32_293 = arith.constant 1 : i32
    %443 = vector.broadcast %c1_i32_293 : i32 to vector<16x1xi32>
    %444 = arith.cmpi sge, %442, %443 : vector<16x1xi32>
    %cst_294 = arith.constant 1.000000e+00 : f32
    %cst_295 = arith.constant 0.000000e+00 : f32
    %445 = vector.broadcast %cst_294 : f32 to vector<16x1xf32>
    %446 = vector.broadcast %cst_295 : f32 to vector<16x1xf32>
    %447 = arith.select %444, %445, %446 : vector<16x1xi1>, vector<16x1xf32>
    %c2_i32 = arith.constant 2 : i32
    %448 = vector.broadcast %c2_i32 : i32 to vector<16x1xi32>
    %449 = arith.cmpi sle, %442, %448 : vector<16x1xi32>
    %cst_296 = arith.constant 1.000000e+00 : f32
    %cst_297 = arith.constant 0.000000e+00 : f32
    %450 = vector.broadcast %cst_296 : f32 to vector<16x1xf32>
    %451 = vector.broadcast %cst_297 : f32 to vector<16x1xf32>
    %452 = arith.select %449, %450, %451 : vector<16x1xi1>, vector<16x1xf32>
    %cst_298 = arith.constant 0.000000e+00 : f32
    %453 = vector.broadcast %cst_298 : f32 to vector<16x64xf32>
    %c3_299 = arith.constant 3 : index
    %c0_300 = arith.constant 0 : index
    %454 = vector.load %arg22[%c3_299, %c0_300] : memref<96x1152xf32, #tpu.memory_space<vmem>>, vector<16x64xf32>
    %455 = vector.broadcast %447 : vector<16x1xf32> to vector<16x64xf32>
    %456 = arith.mulf %454, %455 : vector<16x64xf32>
    %457 = arith.addf %453, %456 : vector<16x64xf32>
    %c4_301 = arith.constant 4 : index
    %c128_302 = arith.constant 128 : index
    %458 = vector.load %arg22[%c4_301, %c128_302] : memref<96x1152xf32, #tpu.memory_space<vmem>>, vector<16x64xf32>
    %459 = arith.addf %457, %458 : vector<16x64xf32>
    %c5_303 = arith.constant 5 : index
    %c256_304 = arith.constant 256 : index
    %460 = vector.load %arg22[%c5_303, %c256_304] : memref<96x1152xf32, #tpu.memory_space<vmem>>, vector<16x64xf32>
    %461 = vector.broadcast %452 : vector<16x1xf32> to vector<16x64xf32>
    %462 = arith.mulf %460, %461 : vector<16x64xf32>
    %463 = arith.addf %459, %462 : vector<16x64xf32>
    %c7_305 = arith.constant 7 : index
    %c384_306 = arith.constant 384 : index
    %464 = vector.load %arg22[%c7_305, %c384_306] : memref<96x1152xf32, #tpu.memory_space<vmem>>, vector<16x64xf32>
    %465 = vector.broadcast %447 : vector<16x1xf32> to vector<16x64xf32>
    %466 = arith.mulf %464, %465 : vector<16x64xf32>
    %467 = arith.addf %463, %466 : vector<16x64xf32>
    %c8_307 = arith.constant 8 : index
    %c512_308 = arith.constant 512 : index
    %468 = vector.load %arg22[%c8_307, %c512_308] : memref<96x1152xf32, #tpu.memory_space<vmem>>, vector<16x64xf32>
    %469 = arith.addf %467, %468 : vector<16x64xf32>
    %c9_309 = arith.constant 9 : index
    %c640_310 = arith.constant 640 : index
    %470 = vector.load %arg22[%c9_309, %c640_310] : memref<96x1152xf32, #tpu.memory_space<vmem>>, vector<16x64xf32>
    %471 = vector.broadcast %452 : vector<16x1xf32> to vector<16x64xf32>
    %472 = arith.mulf %470, %471 : vector<16x64xf32>
    %473 = arith.addf %469, %472 : vector<16x64xf32>
    %c11 = arith.constant 11 : index
    %c768_311 = arith.constant 768 : index
    %474 = vector.load %arg22[%c11, %c768_311] : memref<96x1152xf32, #tpu.memory_space<vmem>>, vector<16x64xf32>
    %475 = vector.broadcast %447 : vector<16x1xf32> to vector<16x64xf32>
    %476 = arith.mulf %474, %475 : vector<16x64xf32>
    %477 = arith.addf %473, %476 : vector<16x64xf32>
    %c12 = arith.constant 12 : index
    %c896_312 = arith.constant 896 : index
    %478 = vector.load %arg22[%c12, %c896_312] : memref<96x1152xf32, #tpu.memory_space<vmem>>, vector<16x64xf32>
    %479 = arith.addf %477, %478 : vector<16x64xf32>
    %c13 = arith.constant 13 : index
    %c1024_313 = arith.constant 1024 : index
    %480 = vector.load %arg22[%c13, %c1024_313] : memref<96x1152xf32, #tpu.memory_space<vmem>>, vector<16x64xf32>
    %481 = vector.broadcast %452 : vector<16x1xf32> to vector<16x64xf32>
    %482 = arith.mulf %480, %481 : vector<16x64xf32>
    %483 = arith.addf %479, %482 : vector<16x64xf32>
    %c0_314 = arith.constant 0 : index
    %c0_315 = arith.constant 0 : index
    %484 = vector.load %arg7[%c0_314, %c0_315] : memref<1x64xf32, #tpu.memory_space<vmem>>, vector<1x64xf32>
    %485 = vector.broadcast %484 : vector<1x64xf32> to vector<16x64xf32>
    %486 = arith.addf %483, %485 : vector<16x64xf32>
    %cst_316 = arith.constant 0.000000e+00 : f32
    %487 = vector.broadcast %cst_316 : f32 to vector<16x64xf32>
    %488 = arith.maximumf %486, %487 : vector<16x64xf32>
    %c0_317 = arith.constant 0 : index
    %c0_318 = arith.constant 0 : index
    %489 = vector.load %arg21[%c0_317, %c0_318] : memref<280x64xf32, #tpu.memory_space<vmem>>, vector<16x64xf32>
    tpu.vector_store %arg21[%c0_317, %c0_318], %488 {strides = array<i32>} : memref<280x64xf32, #tpu.memory_space<vmem>>, vector<16x64xf32>,
    %cst_319 = arith.constant 0.000000e+00 : f32
    %490 = vector.broadcast %cst_319 : f32 to vector<8x64xf32>
    %c16_320 = arith.constant 16 : index
    %c0_321 = arith.constant 0 : index
    %491 = vector.load %arg21[%c16_320, %c0_321] : memref<280x64xf32, #tpu.memory_space<vmem>>, vector<8x64xf32>
    tpu.vector_store %arg21[%c16_320, %c0_321], %490 {strides = array<i32>} : memref<280x64xf32, #tpu.memory_space<vmem>>, vector<8x64xf32>,
    %c0_322 = arith.constant 0 : index
    %c0_323 = arith.constant 0 : index
    %492 = vector.load %arg21[%c0_322, %c0_323] : memref<280x64xf32, #tpu.memory_space<vmem>>, vector<16x64xf32>
    %c1_324 = arith.constant 1 : index
    %c0_325 = arith.constant 0 : index
    %493 = vector.load %arg21[%c1_324, %c0_325] : memref<280x64xf32, #tpu.memory_space<vmem>>, vector<16x64xf32>
    %494 = arith.maximumf %492, %493 : vector<16x64xf32>
    %c4_326 = arith.constant 4 : index
    %c0_327 = arith.constant 0 : index
    %495 = vector.load %arg21[%c4_326, %c0_327] : memref<280x64xf32, #tpu.memory_space<vmem>>, vector<16x64xf32>
    %c5_328 = arith.constant 5 : index
    %c0_329 = arith.constant 0 : index
    %496 = vector.load %arg21[%c5_328, %c0_329] : memref<280x64xf32, #tpu.memory_space<vmem>>, vector<16x64xf32>
    %497 = arith.maximumf %495, %496 : vector<16x64xf32>
    %498 = arith.maximumf %494, %497 : vector<16x64xf32>
    %c0_330 = arith.constant 0 : index
    %c0_331 = arith.constant 0 : index
    %499 = vector.load %arg12[%c0_330, %c0_331] : memref<4x16xf32, #tpu.memory_space<vmem>>, vector<4x16xf32>
    %cst_332 = arith.constant dense<0.000000e+00> : vector<4x64xf32>
    %500 = tpu.matmul %499, %498, %cst_332 {dimension_numbers = #tpu.dot_dimension_numbers<[1], [0], [0], [1], [0, 0, 1, 1], [], []>} : vector<4x16xf32>, vector<16x64xf32>, vector<4x64xf32> -> vector<4x64xf32>
    %cst_333 = arith.constant 0.000000e+00 : f32
    %501 = vector.broadcast %cst_333 : f32 to vector<16x64xf32>
    %c8_334 = arith.constant 8 : index
    %c0_335 = arith.constant 0 : index
    %502 = vector.load %arg20[%c8_334, %c0_335] : memref<304x64xf32, #tpu.memory_space<vmem>>, vector<16x64xf32>
    tpu.vector_store %arg20[%c8_334, %c0_335], %501 {strides = array<i32>} : memref<304x64xf32, #tpu.memory_space<vmem>>, vector<16x64xf32>,
    %cst_336 = arith.constant 0.000000e+00 : f32
    %503 = vector.broadcast %cst_336 : f32 to vector<16x64xf32>
    %c28 = arith.constant 28 : index
    %c0_337 = arith.constant 0 : index
    %504 = vector.load %arg20[%c28, %c0_337] : memref<304x64xf32, #tpu.memory_space<vmem>>, vector<16x64xf32>
    tpu.vector_store %arg20[%c28, %c0_337], %503 {strides = array<i32>} : memref<304x64xf32, #tpu.memory_space<vmem>>, vector<16x64xf32>,
    %c24_338 = arith.constant 24 : index
    %c0_339 = arith.constant 0 : index
    %505 = vector.load %arg20[%c24_338, %c0_339] : memref<304x64xf32, #tpu.memory_space<vmem>>, vector<4x64xf32>
    tpu.vector_store %arg20[%c24_338, %c0_339], %500 {strides = array<i32>} : memref<304x64xf32, #tpu.memory_space<vmem>>, vector<4x64xf32>,
    %c16_340 = arith.constant 16 : index
    %c0_341 = arith.constant 0 : index
    %506 = vector.load %arg20[%c16_340, %c0_341] : memref<304x64xf32, #tpu.memory_space<vmem>>, vector<16x64xf32>
    %c0_342 = arith.constant 0 : index
    %c0_343 = arith.constant 0 : index
    %507 = vector.load %arg8[%c0_342, %c0_343] : memref<64x1152xf32, #tpu.memory_space<vmem>>, vector<64x384xf32>
    %cst_344 = arith.constant dense<0.000000e+00> : vector<16x384xf32>
    %508 = tpu.matmul %506, %507, %cst_344 {dimension_numbers = #tpu.dot_dimension_numbers<[1], [0], [0], [1], [0, 0, 1, 1], [], []>} : vector<16x64xf32>, vector<64x384xf32>, vector<16x384xf32> -> vector<16x384xf32>
    %c0_345 = arith.constant 0 : index
    %c0_346 = arith.constant 0 : index
    %509 = vector.load %arg22[%c0_345, %c0_346] : memref<96x1152xf32, #tpu.memory_space<vmem>>, vector<16x384xf32>
    tpu.vector_store %arg22[%c0_345, %c0_346], %508 {strides = array<i32>} : memref<96x1152xf32, #tpu.memory_space<vmem>>, vector<16x384xf32>,
    %c0_347 = arith.constant 0 : index
    %c384_348 = arith.constant 384 : index
    %510 = vector.load %arg8[%c0_347, %c384_348] : memref<64x1152xf32, #tpu.memory_space<vmem>>, vector<64x384xf32>
    %cst_349 = arith.constant dense<0.000000e+00> : vector<16x384xf32>
    %511 = tpu.matmul %506, %510, %cst_349 {dimension_numbers = #tpu.dot_dimension_numbers<[1], [0], [0], [1], [0, 0, 1, 1], [], []>} : vector<16x64xf32>, vector<64x384xf32>, vector<16x384xf32> -> vector<16x384xf32>
    %c0_350 = arith.constant 0 : index
    %c384_351 = arith.constant 384 : index
    %512 = vector.load %arg22[%c0_350, %c384_351] : memref<96x1152xf32, #tpu.memory_space<vmem>>, vector<16x384xf32>
    tpu.vector_store %arg22[%c0_350, %c384_351], %511 {strides = array<i32>} : memref<96x1152xf32, #tpu.memory_space<vmem>>, vector<16x384xf32>,
    %c0_352 = arith.constant 0 : index
    %c768_353 = arith.constant 768 : index
    %513 = vector.load %arg8[%c0_352, %c768_353] : memref<64x1152xf32, #tpu.memory_space<vmem>>, vector<64x384xf32>
    %cst_354 = arith.constant dense<0.000000e+00> : vector<16x384xf32>
    %514 = tpu.matmul %506, %513, %cst_354 {dimension_numbers = #tpu.dot_dimension_numbers<[1], [0], [0], [1], [0, 0, 1, 1], [], []>} : vector<16x64xf32>, vector<64x384xf32>, vector<16x384xf32> -> vector<16x384xf32>
    %c0_355 = arith.constant 0 : index
    %c768_356 = arith.constant 768 : index
    %515 = vector.load %arg22[%c0_355, %c768_356] : memref<96x1152xf32, #tpu.memory_space<vmem>>, vector<16x384xf32>
    tpu.vector_store %arg22[%c0_355, %c768_356], %514 {strides = array<i32>} : memref<96x1152xf32, #tpu.memory_space<vmem>>, vector<16x384xf32>,
    %516 = tpu.iota {dimensions = array<i32: 0>} : vector<4x1xi32>
    %c1_i32_357 = arith.constant 1 : i32
    %517 = vector.broadcast %c1_i32_357 : i32 to vector<4x1xi32>
    %518 = arith.andi %516, %517 : vector<4x1xi32>
    %c1_i32_358 = arith.constant 1 : i32
    %519 = vector.broadcast %c1_i32_358 : i32 to vector<4x1xi32>
    %520 = arith.cmpi sge, %518, %519 : vector<4x1xi32>
    %cst_359 = arith.constant 1.000000e+00 : f32
    %cst_360 = arith.constant 0.000000e+00 : f32
    %521 = vector.broadcast %cst_359 : f32 to vector<4x1xf32>
    %522 = vector.broadcast %cst_360 : f32 to vector<4x1xf32>
    %523 = arith.select %520, %521, %522 : vector<4x1xi1>, vector<4x1xf32>
    %c0_i32 = arith.constant 0 : i32
    %524 = vector.broadcast %c0_i32 : i32 to vector<4x1xi32>
    %525 = arith.cmpi sle, %518, %524 : vector<4x1xi32>
    %cst_361 = arith.constant 1.000000e+00 : f32
    %cst_362 = arith.constant 0.000000e+00 : f32
    %526 = vector.broadcast %cst_361 : f32 to vector<4x1xf32>
    %527 = vector.broadcast %cst_362 : f32 to vector<4x1xf32>
    %528 = arith.select %525, %526, %527 : vector<4x1xi1>, vector<4x1xf32>
    %cst_363 = arith.constant 0.000000e+00 : f32
    %529 = vector.broadcast %cst_363 : f32 to vector<4x128xf32>
    %c5_364 = arith.constant 5 : index
    %c0_365 = arith.constant 0 : index
    %530 = vector.load %arg22[%c5_364, %c0_365] : memref<96x1152xf32, #tpu.memory_space<vmem>>, vector<4x128xf32>
    %531 = vector.broadcast %523 : vector<4x1xf32> to vector<4x128xf32>
    %532 = arith.mulf %530, %531 : vector<4x128xf32>
    %533 = arith.addf %529, %532 : vector<4x128xf32>
    %c6_366 = arith.constant 6 : index
    %c128_367 = arith.constant 128 : index
    %534 = vector.load %arg22[%c6_366, %c128_367] : memref<96x1152xf32, #tpu.memory_space<vmem>>, vector<4x128xf32>
    %535 = arith.addf %533, %534 : vector<4x128xf32>
    %c7_368 = arith.constant 7 : index
    %c256_369 = arith.constant 256 : index
    %536 = vector.load %arg22[%c7_368, %c256_369] : memref<96x1152xf32, #tpu.memory_space<vmem>>, vector<4x128xf32>
    %537 = vector.broadcast %528 : vector<4x1xf32> to vector<4x128xf32>
    %538 = arith.mulf %536, %537 : vector<4x128xf32>
    %539 = arith.addf %535, %538 : vector<4x128xf32>
    %c7_370 = arith.constant 7 : index
    %c384_371 = arith.constant 384 : index
    %540 = vector.load %arg22[%c7_370, %c384_371] : memref<96x1152xf32, #tpu.memory_space<vmem>>, vector<4x128xf32>
    %541 = vector.broadcast %523 : vector<4x1xf32> to vector<4x128xf32>
    %542 = arith.mulf %540, %541 : vector<4x128xf32>
    %543 = arith.addf %539, %542 : vector<4x128xf32>
    %c8_372 = arith.constant 8 : index
    %c512_373 = arith.constant 512 : index
    %544 = vector.load %arg22[%c8_372, %c512_373] : memref<96x1152xf32, #tpu.memory_space<vmem>>, vector<4x128xf32>
    %545 = arith.addf %543, %544 : vector<4x128xf32>
    %c9_374 = arith.constant 9 : index
    %c640_375 = arith.constant 640 : index
    %546 = vector.load %arg22[%c9_374, %c640_375] : memref<96x1152xf32, #tpu.memory_space<vmem>>, vector<4x128xf32>
    %547 = vector.broadcast %528 : vector<4x1xf32> to vector<4x128xf32>
    %548 = arith.mulf %546, %547 : vector<4x128xf32>
    %549 = arith.addf %545, %548 : vector<4x128xf32>
    %c9_376 = arith.constant 9 : index
    %c768_377 = arith.constant 768 : index
    %550 = vector.load %arg22[%c9_376, %c768_377] : memref<96x1152xf32, #tpu.memory_space<vmem>>, vector<4x128xf32>
    %551 = vector.broadcast %523 : vector<4x1xf32> to vector<4x128xf32>
    %552 = arith.mulf %550, %551 : vector<4x128xf32>
    %553 = arith.addf %549, %552 : vector<4x128xf32>
    %c10 = arith.constant 10 : index
    %c896_378 = arith.constant 896 : index
    %554 = vector.load %arg22[%c10, %c896_378] : memref<96x1152xf32, #tpu.memory_space<vmem>>, vector<4x128xf32>
    %555 = arith.addf %553, %554 : vector<4x128xf32>
    %c11_379 = arith.constant 11 : index
    %c1024_380 = arith.constant 1024 : index
    %556 = vector.load %arg22[%c11_379, %c1024_380] : memref<96x1152xf32, #tpu.memory_space<vmem>>, vector<4x128xf32>
    %557 = vector.broadcast %528 : vector<4x1xf32> to vector<4x128xf32>
    %558 = arith.mulf %556, %557 : vector<4x128xf32>
    %559 = arith.addf %555, %558 : vector<4x128xf32>
    %c0_381 = arith.constant 0 : index
    %c0_382 = arith.constant 0 : index
    %560 = vector.load %arg9[%c0_381, %c0_382] : memref<1x128xf32, #tpu.memory_space<vmem>>, vector<1x128xf32>
    %561 = vector.broadcast %560 : vector<1x128xf32> to vector<4x128xf32>
    %562 = arith.addf %559, %561 : vector<4x128xf32>
    %cst_383 = arith.constant 0.000000e+00 : f32
    %563 = vector.broadcast %cst_383 : f32 to vector<4x128xf32>
    %564 = arith.maximumf %562, %563 : vector<4x128xf32>
    %cst_384 = arith.constant dense<0xFF800000> : vector<128xf32>
    %565 = vector.multi_reduction <maximumf>, %564, %cst_384 [0] : vector<4x128xf32> to vector<128xf32>
    %566 = vector.shape_cast %565 : vector<128xf32> to vector<1x128xf32>
    %c0_385 = arith.constant 0 : index
    %c0_386 = arith.constant 0 : index
    %567 = vector.load %arg13[%c0_385, %c0_386] : memref<128x128xf32, #tpu.memory_space<vmem>>, vector<128x128xf32>
    %cst_387 = arith.constant dense<0.000000e+00> : vector<1x128xf32>
    %568 = tpu.matmul %566, %567, %cst_387 {dimension_numbers = #tpu.dot_dimension_numbers<[1], [0], [0], [1], [0, 0, 1, 1], [], []>} : vector<1x128xf32>, vector<128x128xf32>, vector<1x128xf32> -> vector<1x128xf32>
    %c0_388 = arith.constant 0 : index
    %c0_389 = arith.constant 0 : index
    %569 = vector.load %arg14[%c0_388, %c0_389] : memref<1x128xf32, #tpu.memory_space<vmem>>, vector<1x128xf32>
    %570 = arith.addf %568, %569 : vector<1x128xf32>
    %cst_390 = arith.constant 0.000000e+00 : f32
    %571 = vector.broadcast %cst_390 : f32 to vector<1x128xf32>
    %572 = arith.maximumf %570, %571 : vector<1x128xf32>
    %c0_391 = arith.constant 0 : index
    %c0_392 = arith.constant 0 : index
    %573 = vector.load %arg15[%c0_391, %c0_392] : memref<128x128xf32, #tpu.memory_space<vmem>>, vector<128x128xf32>
    %cst_393 = arith.constant dense<0.000000e+00> : vector<1x128xf32>
    %574 = tpu.matmul %572, %573, %cst_393 {dimension_numbers = #tpu.dot_dimension_numbers<[1], [0], [0], [1], [0, 0, 1, 1], [], []>} : vector<1x128xf32>, vector<128x128xf32>, vector<1x128xf32> -> vector<1x128xf32>
    %c0_394 = arith.constant 0 : index
    %c0_395 = arith.constant 0 : index
    %575 = vector.load %arg16[%c0_394, %c0_395] : memref<1x128xf32, #tpu.memory_space<vmem>>, vector<1x128xf32>
    %576 = arith.addf %574, %575 : vector<1x128xf32>
    %cst_396 = arith.constant 0.000000e+00 : f32
    %577 = vector.broadcast %cst_396 : f32 to vector<1x128xf32>
    %578 = arith.maximumf %576, %577 : vector<1x128xf32>
    %c0_397 = arith.constant 0 : index
    %c0_398 = arith.constant 0 : index
    %579 = vector.load %arg17[%c0_397, %c0_398] : memref<128x128xf32, #tpu.memory_space<vmem>>, vector<128x128xf32>
    %cst_399 = arith.constant dense<0.000000e+00> : vector<1x128xf32>
    %580 = tpu.matmul %578, %579, %cst_399 {dimension_numbers = #tpu.dot_dimension_numbers<[1], [0], [0], [1], [0, 0, 1, 1], [], []>} : vector<1x128xf32>, vector<128x128xf32>, vector<1x128xf32> -> vector<1x128xf32>
    %c0_400 = arith.constant 0 : index
    %c0_401 = arith.constant 0 : index
    %581 = vector.load %arg18[%c0_400, %c0_401] : memref<1x128xf32, #tpu.memory_space<vmem>>, vector<1x128xf32>
    %582 = arith.addf %580, %581 : vector<1x128xf32>
    %c0_402 = arith.constant 0 : index
    %c0_403 = arith.constant 0 : index
    %c0_404 = arith.constant 0 : index
    %583 = vector.load %arg19[%c0_402, %c0_403, %c0_404] : memref<1x1x128xf32, #tpu.memory_space<vmem>>, vector<1x1x128xf32>
    %584 = vector.shape_cast %583 : vector<1x1x128xf32> to vector<1x128xf32>
    %585 = vector.shape_cast %582 : vector<1x128xf32> to vector<1x1x128xf32>
    tpu.vector_store %arg19[%c0_402, %c0_403, %c0_404], %585 {strides = array<i32>} : memref<1x1x128xf32, #tpu.memory_space<vmem>>, vector<1x1x128xf32>,
    return
  }
  func.func @transform_0(%arg0: i32) -> (i32, i32, i32) {
    %c0_i32 = arith.constant 0 : i32
    %c0_i32_0 = arith.constant 0 : i32
    %c0_i32_1 = arith.constant 0 : i32
    return %arg0, %c0_i32, %c0_i32_0 : i32, i32, i32
  }
  func.func @transform_1(%arg0: i32) -> (i32, i32, i32) {
    %c0_i32 = arith.constant 0 : i32
    %c0_i32_0 = arith.constant 0 : i32
    %c0_i32_1 = arith.constant 0 : i32
    %c0_i32_2 = arith.constant 0 : i32
    return %c0_i32, %c0_i32_0, %c0_i32_1 : i32, i32, i32
  }
  func.func @transform_2(%arg0: i32) -> (i32, i32) {
    %c0_i32 = arith.constant 0 : i32
    %c0_i32_0 = arith.constant 0 : i32
    %c0_i32_1 = arith.constant 0 : i32
    return %c0_i32, %c0_i32_0 : i32, i32
  }
  func.func @transform_3(%arg0: i32) -> (i32, i32) {
    %c0_i32 = arith.constant 0 : i32
    %c0_i32_0 = arith.constant 0 : i32
    %c0_i32_1 = arith.constant 0 : i32
    return %c0_i32, %c0_i32_0 : i32, i32
  }
  func.func @transform_4(%arg0: i32) -> (i32, i32) {
    %c0_i32 = arith.constant 0 : i32
    %c0_i32_0 = arith.constant 0 : i32
    %c0_i32_1 = arith.constant 0 : i32
    return %c0_i32, %c0_i32_0 : i32, i32
  }
  func.func @transform_5(%arg0: i32) -> (i32, i32) {
    %c0_i32 = arith.constant 0 : i32
    %c0_i32_0 = arith.constant 0 : i32
    %c0_i32_1 = arith.constant 0 : i32
    return %c0_i32, %c0_i32_0 : i32, i32
  }
  func.func @transform_6(%arg0: i32) -> (i32, i32) {
    %c0_i32 = arith.constant 0 : i32
    %c0_i32_0 = arith.constant 0 : i32
    %c0_i32_1 = arith.constant 0 : i32
    return %c0_i32, %c0_i32_0 : i32, i32
  }
  func.func @transform_7(%arg0: i32) -> (i32, i32) {
    %c0_i32 = arith.constant 0 : i32
    %c0_i32_0 = arith.constant 0 : i32
    %c0_i32_1 = arith.constant 0 : i32
    return %c0_i32, %c0_i32_0 : i32, i32
  }
  func.func @transform_8(%arg0: i32) -> (i32, i32) {
    %c0_i32 = arith.constant 0 : i32
    %c0_i32_0 = arith.constant 0 : i32
    %c0_i32_1 = arith.constant 0 : i32
    return %c0_i32, %c0_i32_0 : i32, i32
  }
  func.func @transform_9(%arg0: i32) -> (i32, i32) {
    %c0_i32 = arith.constant 0 : i32
    %c0_i32_0 = arith.constant 0 : i32
    %c0_i32_1 = arith.constant 0 : i32
    return %c0_i32, %c0_i32_0 : i32, i32
  }
  func.func @transform_10(%arg0: i32) -> (i32, i32) {
    %c0_i32 = arith.constant 0 : i32
    %c0_i32_0 = arith.constant 0 : i32
    %c0_i32_1 = arith.constant 0 : i32
    return %c0_i32, %c0_i32_0 : i32, i32
  }
  func.func @transform_11(%arg0: i32) -> (i32, i32) {
    %c0_i32 = arith.constant 0 : i32
    %c0_i32_0 = arith.constant 0 : i32
    %c0_i32_1 = arith.constant 0 : i32
    return %c0_i32, %c0_i32_0 : i32, i32
  }
  func.func @transform_12(%arg0: i32) -> (i32, i32) {
    %c0_i32 = arith.constant 0 : i32
    %c0_i32_0 = arith.constant 0 : i32
    %c0_i32_1 = arith.constant 0 : i32
    return %c0_i32, %c0_i32_0 : i32, i32
  }
  func.func @transform_13(%arg0: i32) -> (i32, i32) {
    %c0_i32 = arith.constant 0 : i32
    %c0_i32_0 = arith.constant 0 : i32
    %c0_i32_1 = arith.constant 0 : i32
    return %c0_i32, %c0_i32_0 : i32, i32
  }
  func.func @transform_14(%arg0: i32) -> (i32, i32) {
    %c0_i32 = arith.constant 0 : i32
    %c0_i32_0 = arith.constant 0 : i32
    %c0_i32_1 = arith.constant 0 : i32
    return %c0_i32, %c0_i32_0 : i32, i32
  }
  func.func @transform_15(%arg0: i32) -> (i32, i32) {
    %c0_i32 = arith.constant 0 : i32
    %c0_i32_0 = arith.constant 0 : i32
    %c0_i32_1 = arith.constant 0 : i32
    return %c0_i32, %c0_i32_0 : i32, i32
  }
  func.func @transform_16(%arg0: i32) -> (i32, i32) {
    %c0_i32 = arith.constant 0 : i32
    %c0_i32_0 = arith.constant 0 : i32
    %c0_i32_1 = arith.constant 0 : i32
    return %c0_i32, %c0_i32_0 : i32, i32
  }
  func.func @transform_17(%arg0: i32) -> (i32, i32) {
    %c0_i32 = arith.constant 0 : i32
    %c0_i32_0 = arith.constant 0 : i32
    %c0_i32_1 = arith.constant 0 : i32
    return %c0_i32, %c0_i32_0 : i32, i32
  }
  func.func @transform_18(%arg0: i32) -> (i32, i32, i32) {
    %c0_i32 = arith.constant 0 : i32
    %c0_i32_0 = arith.constant 0 : i32
    %c0_i32_1 = arith.constant 0 : i32
    return %arg0, %c0_i32, %c0_i32_0 : i32, i32, i32
  }
}

</mosaic_0001>

<llo_original>
// kernel: tpu_custom_call.1
$region0: #{tpu_custom_call.1}
  #allocation0 [shape = 'u32[]', space=smem, size = 0x4, offset = 0x4, fixed_abs, tag = 'smem constant byte address 0x4 - core index']
  #allocation1 [shape = 'u32[144,128]{1,0:T(1,128)}', space=vmem, size = 0x12000, scoped, tag = 'internal scratch']
  #allocation2 [shape = 'f32[304,64]{1,0:T(8,128)}', space=vmem, size = 0x26000, scoped, tag = 'scratch operand']
  #allocation3 [shape = 'f32[280,64]{1,0:T(8,128)}', space=vmem, size = 0x23000, scoped, tag = 'scratch operand']
  #allocation4 [shape = 'f32[96,1152]{1,0:T(8,128)}', space=vmem, size = 0x6c000, scoped, tag = 'scratch operand']
  %s0 = inlined_call_operand.vmem [shape: f32[1,256,64], index: 0, kind: input, shape index: {}]
  %s1 = inlined_call_operand.hbm [shape: f32[9,1,64], index: 1, kind: input, shape index: {}]
  %s2 = inlined_call_operand.vmem [shape: f32[1,64], index: 2, kind: input, shape index: {}]
  %s3 = inlined_call_operand.hbm [shape: f32[64,1152], index: 3, kind: input, shape index: {}]
  %s4 = inlined_call_operand.vmem [shape: f32[1,64], index: 4, kind: input, shape index: {}]
  %s5 = inlined_call_operand.hbm [shape: f32[64,1152], index: 5, kind: input, shape index: {}]
  %s6 = inlined_call_operand.hbm [shape: f32[1,64], index: 6, kind: input, shape index: {}]
  %s7 = inlined_call_operand.hbm [shape: f32[64,1152], index: 7, kind: input, shape index: {}]
  %s8 = inlined_call_operand.vmem [shape: f32[1,128], index: 8, kind: input, shape index: {}]
  %s9 = inlined_call_operand.vmem [shape: f32[64,256], index: 9, kind: input, shape index: {}]
  %s10 = inlined_call_operand.vmem [shape: f32[16,64], index: 10, kind: input, shape index: {}]
  %s11 = inlined_call_operand.vmem [shape: f32[4,16], index: 11, kind: input, shape index: {}]
  %s12 = inlined_call_operand.vmem [shape: f32[128,128], index: 12, kind: input, shape index: {}]
  %s13 = inlined_call_operand.vmem [shape: f32[1,128], index: 13, kind: input, shape index: {}]
  %s14 = inlined_call_operand.vmem [shape: f32[128,128], index: 14, kind: input, shape index: {}]
  %s15 = inlined_call_operand.vmem [shape: f32[1,128], index: 15, kind: input, shape index: {}]
  %s16 = inlined_call_operand.hbm [shape: f32[128,128], index: 16, kind: input, shape index: {}]
  %s17 = inlined_call_operand.vmem [shape: f32[1,128], index: 17, kind: input, shape index: {}]
  %s18 = inlined_call_operand.hbm [shape: f32[1,1,128], index: 18, kind: output, shape index: {}]
  %s19 = sld [smem:[#allocation0]]
  $region106: #{tpu_custom_call.1} parent=0
    _
  %s21 = ssub.s32 1, %s19
  %s22 = scalar_select 0, %s21, %s19
  $region1: #{tpu_custom_call.1} parent=0
    #allocation5 [shape = 'u8[4608]{0}', space=vmem, size = 0x1400, scoped, tag = 'input window, operand 1, single buffered']
    #allocation6 [shape = 's32[1]{0}', space=sflag, size = 0x4, scoped, tag = 'scoped memory for tpu_custom_call.1']
    #allocation7 [shape = 's32[1]{0}', space=sflag, size = 0x4, scoped, tag = 'scoped memory for tpu_custom_call.1']
    #allocation8 [shape = 'u8[294912]{0}', space=vmem, size = 0x48000, scoped, tag = 'input window, operand 3, single buffered']
    #allocation9 [shape = 's32[1]{0}', space=sflag, size = 0x4, scoped, tag = 'scoped memory for tpu_custom_call.1']
    #allocation10 [shape = 'u8[294912]{0}', space=vmem, size = 0x48000, scoped, tag = 'input window, operand 5, single buffered']
    #allocation11 [shape = 'u8[512]{0}', space=vmem, size = 0x400, scoped, tag = 'input window, operand 6, single buffered']
    #allocation12 [shape = 's32[1]{0}', space=sflag, size = 0x4, scoped, tag = 'scoped memory for tpu_custom_call.1']
    #allocation13 [shape = 'u8[294912]{0}', space=vmem, size = 0x48000, scoped, tag = 'input window, operand 7, single buffered']
    #allocation14 [shape = 'u8[65536]{0}', space=vmem, size = 0x10000, scoped, tag = 'input window, operand 16, single buffered']
    #allocation15 [shape = 's32[1]{0}', space=sflag, size = 0x4, scoped, tag = 'scoped memory for tpu_custom_call.1']
    #allocation16 [shape = 'u8[512]{0}', space=vmem, size = 0x400, scoped, tag = 'output window, operand 0, single buffered']
    %23 = vsyncpa [#allocation6], 0
    %24 = vsyncpa [#allocation9], 0
    %25 = vsyncpa [#allocation12], 0
    %26 = vsyncpa [#allocation15], 0
    %27 = vsyncpa [#allocation7], 0
    // Predicated region
    $region2: #{tpu_custom_call.1} parent=1 // pred_check
      _
    $region3: #{tpu_custom_call.1} parent=1 // pred_check_branch
      %29 = sbr.rel (0) target = $region5
    $region4: #{tpu_custom_call.1} parent=1 // pred_region
      _
    $region5: #{tpu_custom_call.1} parent=1 // pred_fallthru
      _
    // Predicated region
    $region6: #{tpu_custom_call.1} parent=1 // pred_check
      _
    $region7: #{tpu_custom_call.1} parent=1 // pred_check_branch
      %31 = sbr.rel (0) target = $region9
    $region8: #{tpu_custom_call.1} parent=1 // pred_region
      %s33 = ssub.s32 144, 144
      %34 = vsyncadd [#allocation6], %s33
      %s35 = sshll.u32 [#allocation5], 4
      %s36 = int_to_ptr.vmem [resolvable:$true] %s35
      %41 = dma.hbm_to_vmem [thread:$0]  %s1, 144, %s36, [#allocation6], 16, 16, 1
    $region9: #{tpu_custom_call.1} parent=1 // pred_fallthru
      _
    // Predicated region
    $region10: #{tpu_custom_call.1} parent=1 // pred_check
      _
    $region11: #{tpu_custom_call.1} parent=1 // pred_check_branch
      %43 = sbr.rel (0) target = $region13
    $region12: #{tpu_custom_call.1} parent=1 // pred_region
      _
    $region13: #{tpu_custom_call.1} parent=1 // pred_fallthru
      _
    // Predicated region
    $region14: #{tpu_custom_call.1} parent=1 // pred_check
      _
    $region15: #{tpu_custom_call.1} parent=1 // pred_check_branch
      %45 = sbr.rel (0) target = $region17
    $region16: #{tpu_custom_call.1} parent=1 // pred_region
      %s47 = ssub.s32 9216, 9216
      %48 = vsyncadd [#allocation9], %s47
      %s49 = sshll.u32 [#allocation8], 4
      %s50 = int_to_ptr.vmem [resolvable:$true] %s49
      %55 = dma.hbm_to_vmem [thread:$0]  %s3, 9216, %s50, [#allocation9], 1152, 1152, 72
    $region17: #{tpu_custom_call.1} parent=1 // pred_fallthru
      _
    // Predicated region
    $region18: #{tpu_custom_call.1} parent=1 // pred_check
      _
    $region19: #{tpu_custom_call.1} parent=1 // pred_check_branch
      %57 = sbr.rel (0) target = $region21
    $region20: #{tpu_custom_call.1} parent=1 // pred_region
      _
    $region21: #{tpu_custom_call.1} parent=1 // pred_fallthru
      _
    // Predicated region
    $region22: #{tpu_custom_call.1} parent=1 // pred_check
      _
    $region23: #{tpu_custom_call.1} parent=1 // pred_check_branch
      %59 = sbr.rel (0) target = $region25
    $region24: #{tpu_custom_call.1} parent=1 // pred_region
      %s61 = ssub.s32 9216, 9216
      %62 = vsyncadd [#allocation9], %s61
      %s63 = sshll.u32 [#allocation10], 4
      %s64 = int_to_ptr.vmem [resolvable:$true] %s63
      %69 = dma.hbm_to_vmem [thread:$0]  %s5, 9216, %s64, [#allocation9], 1152, 1152, 72
    $region25: #{tpu_custom_call.1} parent=1 // pred_fallthru
      _
    // Predicated region
    $region26: #{tpu_custom_call.1} parent=1 // pred_check
      _
    $region27: #{tpu_custom_call.1} parent=1 // pred_check_branch
      %71 = sbr.rel (0) target = $region29
    $region28: #{tpu_custom_call.1} parent=1 // pred_region
      %s73 = ssub.s32 16, 16
      %74 = vsyncadd [#allocation12], %s73
      %s76 = sshll.u32 [#allocation11], 4
      %s77 = int_to_ptr.vmem [resolvable:$true] %s76
      %79 = dma.hbm_to_vmem [thread:$0]  %s6, 16, %s77, [#allocation12]
    $region29: #{tpu_custom_call.1} parent=1 // pred_fallthru
      _
    // Predicated region
    $region30: #{tpu_custom_call.1} parent=1 // pred_check
      _
    $region31: #{tpu_custom_call.1} parent=1 // pred_check_branch
      %81 = sbr.rel (0) target = $region33
    $region32: #{tpu_custom_call.1} parent=1 // pred_region
      %s83 = ssub.s32 9216, 9216
      %84 = vsyncadd [#allocation12], %s83
      %s85 = sshll.u32 [#allocation13], 4
      %s86 = int_to_ptr.vmem [resolvable:$true] %s85
      %91 = dma.hbm_to_vmem [thread:$0]  %s7, 9216, %s86, [#allocation12], 1152, 1152, 72
    $region33: #{tpu_custom_call.1} parent=1 // pred_fallthru
      _
    // Predicated region
    $region34: #{tpu_custom_call.1} parent=1 // pred_check
      _
    $region35: #{tpu_custom_call.1} parent=1 // pred_check_branch
      %93 = sbr.rel (0) target = $region37
    $region36: #{tpu_custom_call.1} parent=1 // pred_region
      _
    $region37: #{tpu_custom_call.1} parent=1 // pred_fallthru
      _
    // Predicated region
    $region38: #{tpu_custom_call.1} parent=1 // pred_check
      _
    $region39: #{tpu_custom_call.1} parent=1 // pred_check_branch
      %95 = sbr.rel (0) target = $region41
    $region40: #{tpu_custom_call.1} parent=1 // pred_region
      _
    $region41: #{tpu_custom_call.1} parent=1 // pred_fallthru
      _
    // Predicated region
    $region42: #{tpu_custom_call.1} parent=1 // pred_check
      _
    $region43: #{tpu_custom_call.1} parent=1 // pred_check_branch
      %97 = sbr.rel (0) target = $region45
    $region44: #{tpu_custom_call.1} parent=1 // pred_region
      _
    $region45: #{tpu_custom_call.1} parent=1 // pred_fallthru
      _
    // Predicated region
    $region46: #{tpu_custom_call.1} parent=1 // pred_check
      _
    $region47: #{tpu_custom_call.1} parent=1 // pred_check_branch
      %99 = sbr.rel (0) target = $region49
    $region48: #{tpu_custom_call.1} parent=1 // pred_region
      _
    $region49: #{tpu_custom_call.1} parent=1 // pred_fallthru
      _
    // Predicated region
    $region50: #{tpu_custom_call.1} parent=1 // pred_check
      _
    $region51: #{tpu_custom_call.1} parent=1 // pred_check_branch
      %101 = sbr.rel (0) target = $region53
    $region52: #{tpu_custom_call.1} parent=1 // pred_region
      _
    $region53: #{tpu_custom_call.1} parent=1 // pred_fallthru
      _
    // Predicated region
    $region54: #{tpu_custom_call.1} parent=1 // pred_check
      _
    $region55: #{tpu_custom_call.1} parent=1 // pred_check_branch
      %103 = sbr.rel (0) target = $region57
    $region56: #{tpu_custom_call.1} parent=1 // pred_region
      _
    $region57: #{tpu_custom_call.1} parent=1 // pred_fallthru
      _
    // Predicated region
    $region58: #{tpu_custom_call.1} parent=1 // pred_check
      _
    $region59: #{tpu_custom_call.1} parent=1 // pred_check_branch
      %105 = sbr.rel (0) target = $region61
    $region60: #{tpu_custom_call.1} parent=1 // pred_region
      _
    $region61: #{tpu_custom_call.1} parent=1 // pred_fallthru
      _
    // Predicated region
    $region62: #{tpu_custom_call.1} parent=1 // pred_check
      _
    $region63: #{tpu_custom_call.1} parent=1 // pred_check_branch
      %107 = sbr.rel (0) target = $region65
    $region64: #{tpu_custom_call.1} parent=1 // pred_region
      _
    $region65: #{tpu_custom_call.1} parent=1 // pred_fallthru
      _
    // Predicated region
    $region66: #{tpu_custom_call.1} parent=1 // pred_check
      _
    $region67: #{tpu_custom_call.1} parent=1 // pred_check_branch
      %109 = sbr.rel (0) target = $region69
    $region68: #{tpu_custom_call.1} parent=1 // pred_region
      %s111 = ssub.s32 2048, 2048
      %112 = vsyncadd [#allocation15], %s111
      %s113 = sshll.u32 [#allocation14], 4
      %s114 = int_to_ptr.vmem [resolvable:$true] %s113
      %119 = dma.hbm_to_vmem [thread:$0]  %s16, 2048, %s114, [#allocation15], 128, 128, 8
    $region69: #{tpu_custom_call.1} parent=1 // pred_fallthru
      _
    // Predicated region
    $region70: #{tpu_custom_call.1} parent=1 // pred_check
      _
    $region71: #{tpu_custom_call.1} parent=1 // pred_check_branch
      %121 = sbr.rel (0) target = $region73
    $region72: #{tpu_custom_call.1} parent=1 // pred_region
      _
    $region73: #{tpu_custom_call.1} parent=1 // pred_fallthru
      _
    // Predicated region
    $region74: #{tpu_custom_call.1} parent=1 // pred_check
      _
    $region75: #{tpu_custom_call.1} parent=1 // pred_check_branch
      %123 = sbr.rel (0) target = $region77
    $region76: #{tpu_custom_call.1} parent=1 // pred_region
      %124 = dma.done [#allocation6], 144
    $region77: #{tpu_custom_call.1} parent=1 // pred_fallthru
      _
    // Predicated region
    $region78: #{tpu_custom_call.1} parent=1 // pred_check
      _
    $region79: #{tpu_custom_call.1} parent=1 // pred_check_branch
      %126 = sbr.rel (0) target = $region81
    $region80: #{tpu_custom_call.1} parent=1 // pred_region
      %127 = dma.done [#allocation9], 9216
    $region81: #{tpu_custom_call.1} parent=1 // pred_fallthru
      _
    // Predicated region
    $region82: #{tpu_custom_call.1} parent=1 // pred_check
      _
    $region83: #{tpu_custom_call.1} parent=1 // pred_check_branch
      %129 = sbr.rel (0) target = $region85
    $region84: #{tpu_custom_call.1} parent=1 // pred_region
      %130 = dma.done [#allocation9], 9216
    $region85: #{tpu_custom_call.1} parent=1 // pred_fallthru
      _
    // Predicated region
    $region86: #{tpu_custom_call.1} parent=1 // pred_check
      _
    $region87: #{tpu_custom_call.1} parent=1 // pred_check_branch
      %132 = sbr.rel (0) target = $region89
    $region88: #{tpu_custom_call.1} parent=1 // pred_region
      %133 = dma.done [#allocation12], 16
    $region89: #{tpu_custom_call.1} parent=1 // pred_fallthru
      _
    // Predicated region
    $region90: #{tpu_custom_call.1} parent=1 // pred_check
      _
    $region91: #{tpu_custom_call.1} parent=1 // pred_check_branch
      %135 = sbr.rel (0) target = $region93
    $region92: #{tpu_custom_call.1} parent=1 // pred_region
      %136 = dma.done [#allocation12], 9216
    $region93: #{tpu_custom_call.1} parent=1 // pred_fallthru
      _
    // Predicated region
    $region94: #{tpu_custom_call.1} parent=1 // pred_check
      _
    $region95: #{tpu_custom_call.1} parent=1 // pred_check_branch
      %138 = sbr.rel (0) target = $region97
    $region96: #{tpu_custom_call.1} parent=1 // pred_region
      %139 = dma.done [#allocation15], 2048
    $region97: #{tpu_custom_call.1} parent=1 // pred_fallthru
      _
    %v140 = vld [vmem:[%s0] sm:$0xff]
    %v141 = vld [vmem:[%s0 + $0x8] sm:$0xff]
    %v142 = vld [vmem:[%s0 + $0x10] sm:$0xff]
    %v143 = vld [vmem:[%s0 + $0x18] sm:$0xff]
    %v144 = vld [vmem:[%s0 + $0x20] sm:$0xff]
    %v145 = vld [vmem:[%s0 + $0x28] sm:$0xff]
    %v146 = vld [vmem:[%s0 + $0x30] sm:$0xff]
    %v147 = vld [vmem:[%s0 + $0x38] sm:$0xff]
    %v148 = vld [vmem:[%s0 + $0x40] sm:$0xff]
    %v149 = vld [vmem:[%s0 + $0x48] sm:$0xff]
    %v150 = vld [vmem:[%s0 + $0x50] sm:$0xff]
    %v151 = vld [vmem:[%s0 + $0x58] sm:$0xff]
    %v152 = vld [vmem:[%s0 + $0x60] sm:$0xff]
    %v153 = vld [vmem:[%s0 + $0x68] sm:$0xff]
    %v154 = vld [vmem:[%s0 + $0x70] sm:$0xff]
    %v155 = vld [vmem:[%s0 + $0x78] sm:$0xff]
    %v156 = vld [vmem:[%s0 + $0x80] sm:$0xff]
    %v157 = vld [vmem:[%s0 + $0x88] sm:$0xff]
    %v158 = vld [vmem:[%s0 + $0x90] sm:$0xff]
    %v159 = vld [vmem:[%s0 + $0x98] sm:$0xff]
    %v160 = vld [vmem:[%s0 + $0xa0] sm:$0xff]
    %v161 = vld [vmem:[%s0 + $0xa8] sm:$0xff]
    %v162 = vld [vmem:[%s0 + $0xb0] sm:$0xff]
    %v163 = vld [vmem:[%s0 + $0xb8] sm:$0xff]
    %v164 = vld [vmem:[%s0 + $0xc0] sm:$0xff]
    %v165 = vld [vmem:[%s0 + $0xc8] sm:$0xff]
    %v166 = vld [vmem:[%s0 + $0xd0] sm:$0xff]
    %v167 = vld [vmem:[%s0 + $0xd8] sm:$0xff]
    %v168 = vld [vmem:[%s0 + $0xe0] sm:$0xff]
    %v169 = vld [vmem:[%s0 + $0xe8] sm:$0xff]
    %v170 = vld [vmem:[%s0 + $0xf0] sm:$0xff]
    %v171 = vld [vmem:[%s0 + $0xf8] sm:$0xff]
    %vm172 = vcmask 523264
    %173 = vst.msk [vmem:[#allocation2] sm:$0xff] %vm172, 0.0
    %174 = vst.msk [vmem:[#allocation2 + $0x8] sm:$0xff] %vm172, 0.0
    %175 = vst.msk [vmem:[#allocation2 + $0x10] sm:$0xff] %vm172, 0.0
    %176 = vst.msk [vmem:[#allocation2 + $0x118] sm:$0xff] %vm172, 0.0
    %177 = vst.msk [vmem:[#allocation2 + $0x120] sm:$0xff] %vm172, 0.0
    %178 = vst.msk [vmem:[#allocation2 + $0x128] sm:$0xff] %vm172, 0.0
    %179 = vst.msk [vmem:[#allocation2 + $0x18] sm:$0xff] %vm172, %v140
    %180 = vst.msk [vmem:[#allocation2 + $0x20] sm:$0xff] %vm172, %v141
    %181 = vst.msk [vmem:[#allocation2 + $0x28] sm:$0xff] %vm172, %v142
    %182 = vst.msk [vmem:[#allocation2 + $0x30] sm:$0xff] %vm172, %v143
    %183 = vst.msk [vmem:[#allocation2 + $0x38] sm:$0xff] %vm172, %v144
    %184 = vst.msk [vmem:[#allocation2 + $0x40] sm:$0xff] %vm172, %v145
    %185 = vst.msk [vmem:[#allocation2 + $0x48] sm:$0xff] %vm172, %v146
    %186 = vst.msk [vmem:[#allocation2 + $0x50] sm:$0xff] %vm172, %v147
    %187 = vst.msk [vmem:[#allocation2 + $0x58] sm:$0xff] %vm172, %v148
    %188 = vst.msk [vmem:[#allocation2 + $0x60] sm:$0xff] %vm172, %v149
    %189 = vst.msk [vmem:[#allocation2 + $0x68] sm:$0xff] %vm172, %v150
    %190 = vst.msk [vmem:[#allocation2 + $0x70] sm:$0xff] %vm172, %v151
    %191 = vst.msk [vmem:[#allocation2 + $0x78] sm:$0xff] %vm172, %v152
    %192 = vst.msk [vmem:[#allocation2 + $0x80] sm:$0xff] %vm172, %v153
    %193 = vst.msk [vmem:[#allocation2 + $0x88] sm:$0xff] %vm172, %v154
    %194 = vst.msk [vmem:[#allocation2 + $0x90] sm:$0xff] %vm172, %v155
    %195 = vst.msk [vmem:[#allocation2 + $0x98] sm:$0xff] %vm172, %v156
    %196 = vst.msk [vmem:[#allocation2 + $0xa0] sm:$0xff] %vm172, %v157
    %197 = vst.msk [vmem:[#allocation2 + $0xa8] sm:$0xff] %vm172, %v158
    %198 = vst.msk [vmem:[#allocation2 + $0xb0] sm:$0xff] %vm172, %v159
    %199 = vst.msk [vmem:[#allocation2 + $0xb8] sm:$0xff] %vm172, %v160
    %200 = vst.msk [vmem:[#allocation2 + $0xc0] sm:$0xff] %vm172, %v161
    %201 = vst.msk [vmem:[#allocation2 + $0xc8] sm:$0xff] %vm172, %v162
    %202 = vst.msk [vmem:[#allocation2 + $0xd0] sm:$0xff] %vm172, %v163
    %203 = vst.msk [vmem:[#allocation2 + $0xd8] sm:$0xff] %vm172, %v164
    %204 = vst.msk [vmem:[#allocation2 + $0xe0] sm:$0xff] %vm172, %v165
    %205 = vst.msk [vmem:[#allocation2 + $0xe8] sm:$0xff] %vm172, %v166
    %206 = vst.msk [vmem:[#allocation2 + $0xf0] sm:$0xff] %vm172, %v167
    %207 = vst.msk [vmem:[#allocation2 + $0xf8] sm:$0xff] %vm172, %v168
    %208 = vst.msk [vmem:[#allocation2 + $0x100] sm:$0xff] %vm172, %v169
    %209 = vst.msk [vmem:[#allocation2 + $0x108] sm:$0xff] %vm172, %v170
    %210 = vst.msk [vmem:[#allocation2 + $0x110] sm:$0xff] %vm172, %v171
    %v211 = vlaneseq
    %v212 = vshrl.u32 %v211, 7
    %v213 = vadd.s32 %v212, 8
    %v214 = vadd.s32 %v212, 16
    %v215 = vadd.s32 %v212, 24
    %v216 = vadd.s32 %v212, 32
    %v217 = vadd.s32 %v212, 40
    %v218 = vadd.s32 %v212, 48
    %v219 = vadd.s32 %v212, 56
    %v220 = vand.u32 %v212, 15
    %v221 = vand.u32 %v213, 15
    %v222 = vand.u32 %v214, 15
    %v223 = vand.u32 %v215, 15
    %v224 = vand.u32 %v216, 15
    %v225 = vand.u32 %v217, 15
    %v226 = vand.u32 %v218, 15
    %v227 = vand.u32 %v219, 15
    %vm228 = vcmp.ge.s32.totalorder %v220, 1
    %vm229 = vcmp.ge.s32.totalorder %v221, 1
    %vm230 = vcmp.ge.s32.totalorder %v222, 1
    %vm231 = vcmp.ge.s32.totalorder %v223, 1
    %vm232 = vcmp.ge.s32.totalorder %v224, 1
    %vm233 = vcmp.ge.s32.totalorder %v225, 1
    %vm234 = vcmp.ge.s32.totalorder %v226, 1
    %vm235 = vcmp.ge.s32.totalorder %v227, 1
    %v236 = vsel %vm228, 1.0, 0.0
    %v237 = vsel %vm229, 1.0, 0.0
    %v238 = vsel %vm230, 1.0, 0.0
    %v239 = vsel %vm231, 1.0, 0.0
    %v240 = vsel %vm232, 1.0, 0.0
    %v241 = vsel %vm233, 1.0, 0.0
    %v242 = vsel %vm234, 1.0, 0.0
    %v243 = vsel %vm235, 1.0, 0.0
    %vm244 = vcmp.le.s32.totalorder %v220, 14
    %vm245 = vcmp.le.s32.totalorder %v221, 14
    %vm246 = vcmp.le.s32.totalorder %v222, 14
    %vm247 = vcmp.le.s32.totalorder %v223, 14
    %vm248 = vcmp.le.s32.totalorder %v224, 14
    %vm249 = vcmp.le.s32.totalorder %v225, 14
    %vm250 = vcmp.le.s32.totalorder %v226, 14
    %vm251 = vcmp.le.s32.totalorder %v227, 14
    %v252 = vsel %vm244, 1.0, 0.0
    %v253 = vsel %vm245, 1.0, 0.0
    %v254 = vsel %vm246, 1.0, 0.0
    %v255 = vsel %vm247, 1.0, 0.0
    %v256 = vsel %vm248, 1.0, 0.0
    %v257 = vsel %vm249, 1.0, 0.0
    %v258 = vsel %vm250, 1.0, 0.0
    %v259 = vsel %vm251, 1.0, 0.0
    %v260 = vld [vmem:[#allocation2 + $0x7] sm:$0xff]
    %v261 = vld [vmem:[#allocation2 + $0xf] sm:$0xff]
    %v262 = vld [vmem:[#allocation2 + $0x17] sm:$0xff]
    %v263 = vld [vmem:[#allocation2 + $0x1f] sm:$0xff]
    %v264 = vld [vmem:[#allocation2 + $0x27] sm:$0xff]
    %v265 = vld [vmem:[#allocation2 + $0x2f] sm:$0xff]
    %v266 = vld [vmem:[#allocation2 + $0x37] sm:$0xff]
    %v267 = vld [vmem:[#allocation2 + $0x3f] sm:$0xff]
    %v268 = vmul.f32 %v260, %v236
    %v269 = vmul.f32 %v261, %v237
    %v270 = vmul.f32 %v262, %v238
    %v271 = vmul.f32 %v263, %v239
    %v272 = vmul.f32 %v264, %v240
    %v273 = vmul.f32 %v265, %v241
    %v274 = vmul.f32 %v266, %v242
    %v275 = vmul.f32 %v267, %v243
    %v276 = vld [vmem:[#allocation5] sm:$0x1]
    %v278 = vlaneseq
    %v279 = vshrl.u32 %v278, 7
    %v280 = vsub.s32 0, %v279
    %v281 = vrot.slane %v276, %v280
    %v283 = vmul.f32 %v268, %v281
    %v284 = vmul.f32 %v269, %v281
    %v285 = vmul.f32 %v270, %v281
    %v286 = vmul.f32 %v271, %v281
    %v287 = vmul.f32 %v272, %v281
    %v288 = vmul.f32 %v273, %v281
    %v289 = vmul.f32 %v274, %v281
    %v290 = vmul.f32 %v275, %v281
    %v291 = vadd.f32 %v283, 0.0
    %v292 = vadd.f32 %v284, 0.0
    %v293 = vadd.f32 %v285, 0.0
    %v294 = vadd.f32 %v286, 0.0
    %v295 = vadd.f32 %v287, 0.0
    %v296 = vadd.f32 %v288, 0.0
    %v297 = vadd.f32 %v289, 0.0
    %v298 = vadd.f32 %v290, 0.0
    %v299 = vld [vmem:[#allocation2 + $0x8] sm:$0xff]
    %v300 = vld [vmem:[#allocation2 + $0x10] sm:$0xff]
    %v301 = vld [vmem:[#allocation2 + $0x18] sm:$0xff]
    %v302 = vld [vmem:[#allocation2 + $0x20] sm:$0xff]
    %v303 = vld [vmem:[#allocation2 + $0x28] sm:$0xff]
    %v304 = vld [vmem:[#allocation2 + $0x30] sm:$0xff]
    %v305 = vld [vmem:[#allocation2 + $0x38] sm:$0xff]
    %v306 = vld [vmem:[#allocation2 + $0x40] sm:$0xff]
    %s307 = scalar_lea.vmem [#allocation5], 1
    %v308 = vld [vmem:[%s307] sm:$0x1]
    %v310 = vlaneseq
    %v311 = vshrl.u32 %v310, 7
    %v312 = vsub.s32 0, %v311
    %v313 = vrot.slane %v308, %v312
    %v315 = vmul.f32 %v299, %v313
    %v316 = vmul.f32 %v300, %v313
    %v317 = vmul.f32 %v301, %v313
    %v318 = vmul.f32 %v302, %v313
    %v319 = vmul.f32 %v303, %v313
    %v320 = vmul.f32 %v304, %v313
    %v321 = vmul.f32 %v305, %v313
    %v322 = vmul.f32 %v306, %v313
    %v323 = vadd.f32 %v291, %v315
    %v324 = vadd.f32 %v292, %v316
    %v325 = vadd.f32 %v293, %v317
    %v326 = vadd.f32 %v294, %v318
    %v327 = vadd.f32 %v295, %v319
    %v328 = vadd.f32 %v296, %v320
    %v329 = vadd.f32 %v297, %v321
    %v330 = vadd.f32 %v298, %v322
    %v331 = vld [vmem:[#allocation2 + $0x9] sm:$0xff]
    %v332 = vld [vmem:[#allocation2 + $0x11] sm:$0xff]
    %v333 = vld [vmem:[#allocation2 + $0x19] sm:$0xff]
    %v334 = vld [vmem:[#allocation2 + $0x21] sm:$0xff]
    %v335 = vld [vmem:[#allocation2 + $0x29] sm:$0xff]
    %v336 = vld [vmem:[#allocation2 + $0x31] sm:$0xff]
    %v337 = vld [vmem:[#allocation2 + $0x39] sm:$0xff]
    %v338 = vld [vmem:[#allocation2 + $0x41] sm:$0xff]
    %v339 = vmul.f32 %v331, %v252
    %v340 = vmul.f32 %v332, %v253
    %v341 = vmul.f32 %v333, %v254
    %v342 = vmul.f32 %v334, %v255
    %v343 = vmul.f32 %v335, %v256
    %v344 = vmul.f32 %v336, %v257
    %v345 = vmul.f32 %v337, %v258
    %v346 = vmul.f32 %v338, %v259
    %s347 = scalar_lea.vmem [#allocation5], 2
    %v348 = vld [vmem:[%s347] sm:$0x1]
    %v350 = vlaneseq
    %v351 = vshrl.u32 %v350, 7
    %v352 = vsub.s32 0, %v351
    %v353 = vrot.slane %v348, %v352
    %v355 = vmul.f32 %v339, %v353
    %v356 = vmul.f32 %v340, %v353
    %v357 = vmul.f32 %v341, %v353
    %v358 = vmul.f32 %v342, %v353
    %v359 = vmul.f32 %v343, %v353
    %v360 = vmul.f32 %v344, %v353
    %v361 = vmul.f32 %v345, %v353
    %v362 = vmul.f32 %v346, %v353
    %v363 = vadd.f32 %v323, %v355
    %v364 = vadd.f32 %v324, %v356
    %v365 = vadd.f32 %v325, %v357
    %v366 = vadd.f32 %v326, %v358
    %v367 = vadd.f32 %v327, %v359
    %v368 = vadd.f32 %v328, %v360
    %v369 = vadd.f32 %v329, %v361
    %v370 = vadd.f32 %v330, %v362
    %v371 = vld [vmem:[#allocation2 + $0x47] sm:$0xff]
    %v372 = vld [vmem:[#allocation2 + $0x4f] sm:$0xff]
    %v373 = vmul.f32 %v262, %v236
    %v374 = vmul.f32 %v263, %v237
    %v375 = vmul.f32 %v264, %v238
    %v376 = vmul.f32 %v265, %v239
    %v377 = vmul.f32 %v266, %v240
    %v378 = vmul.f32 %v267, %v241
    %v379 = vmul.f32 %v371, %v242
    %v380 = vmul.f32 %v372, %v243
    %s381 = scalar_lea.vmem [#allocation5], 3
    %v382 = vld [vmem:[%s381] sm:$0x1]
    %v384 = vlaneseq
    %v385 = vshrl.u32 %v384, 7
    %v386 = vsub.s32 0, %v385
    %v387 = vrot.slane %v382, %v386
    %v389 = vmul.f32 %v373, %v387
    %v390 = vmul.f32 %v374, %v387
    %v391 = vmul.f32 %v375, %v387
    %v392 = vmul.f32 %v376, %v387
    %v393 = vmul.f32 %v377, %v387
    %v394 = vmul.f32 %v378, %v387
    %v395 = vmul.f32 %v379, %v387
    %v396 = vmul.f32 %v380, %v387
    %v397 = vadd.f32 %v363, %v389
    %v398 = vadd.f32 %v364, %v390
    %v399 = vadd.f32 %v365, %v391
    %v400 = vadd.f32 %v366, %v392
    %v401 = vadd.f32 %v367, %v393
    %v402 = vadd.f32 %v368, %v394
    %v403 = vadd.f32 %v369, %v395
    %v404 = vadd.f32 %v370, %v396
    %v405 = vld [vmem:[#allocation2 + $0x48] sm:$0xff]
    %v406 = vld [vmem:[#allocation2 + $0x50] sm:$0xff]
    %s407 = scalar_lea.vmem [#allocation5], 4
    %v408 = vld [vmem:[%s407] sm:$0x1]
    %v410 = vlaneseq
    %v411 = vshrl.u32 %v410, 7
    %v412 = vsub.s32 0, %v411
    %v413 = vrot.slane %v408, %v412
    %v415 = vmul.f32 %v301, %v413
    %v416 = vmul.f32 %v302, %v413
    %v417 = vmul.f32 %v303, %v413
    %v418 = vmul.f32 %v304, %v413
    %v419 = vmul.f32 %v305, %v413
    %v420 = vmul.f32 %v306, %v413
    %v421 = vmul.f32 %v405, %v413
    %v422 = vmul.f32 %v406, %v413
    %v423 = vadd.f32 %v397, %v415
    %v424 = vadd.f32 %v398, %v416
    %v425 = vadd.f32 %v399, %v417
    %v426 = vadd.f32 %v400, %v418
    %v427 = vadd.f32 %v401, %v419
    %v428 = vadd.f32 %v402, %v420
    %v429 = vadd.f32 %v403, %v421
    %v430 = vadd.f32 %v404, %v422
    %v431 = vld [vmem:[#allocation2 + $0x49] sm:$0xff]
    %v432 = vld [vmem:[#allocation2 + $0x51] sm:$0xff]
    %v433 = vmul.f32 %v333, %v252
    %v434 = vmul.f32 %v334, %v253
    %v435 = vmul.f32 %v335, %v254
    %v436 = vmul.f32 %v336, %v255
    %v437 = vmul.f32 %v337, %v256
    %v438 = vmul.f32 %v338, %v257
    %v439 = vmul.f32 %v431, %v258
    %v440 = vmul.f32 %v432, %v259
    %s441 = scalar_lea.vmem [#allocation5], 5
    %v442 = vld [vmem:[%s441] sm:$0x1]
    %v444 = vlaneseq
    %v445 = vshrl.u32 %v444, 7
    %v446 = vsub.s32 0, %v445
    %v447 = vrot.slane %v442, %v446
    %v449 = vmul.f32 %v433, %v447
    %v450 = vmul.f32 %v434, %v447
    %v451 = vmul.f32 %v435, %v447
    %v452 = vmul.f32 %v436, %v447
    %v453 = vmul.f32 %v437, %v447
    %v454 = vmul.f32 %v438, %v447
    %v455 = vmul.f32 %v439, %v447
    %v456 = vmul.f32 %v440, %v447
    %v457 = vadd.f32 %v423, %v449
    %v458 = vadd.f32 %v424, %v450
    %v459 = vadd.f32 %v425, %v451
    %v460 = vadd.f32 %v426, %v452
    %v461 = vadd.f32 %v427, %v453
    %v462 = vadd.f32 %v428, %v454
    %v463 = vadd.f32 %v429, %v455
    %v464 = vadd.f32 %v430, %v456
    %v465 = vld [vmem:[#allocation2 + $0x57] sm:$0xff]
    %v466 = vld [vmem:[#allocation2 + $0x5f] sm:$0xff]
    %v467 = vmul.f32 %v264, %v236
    %v468 = vmul.f32 %v265, %v237
    %v469 = vmul.f32 %v266, %v238
    %v470 = vmul.f32 %v267, %v239
    %v471 = vmul.f32 %v371, %v240
    %v472 = vmul.f32 %v372, %v241
    %v473 = vmul.f32 %v465, %v242
    %v474 = vmul.f32 %v466, %v243
    %s475 = scalar_lea.vmem [#allocation5], 6
    %v476 = vld [vmem:[%s475] sm:$0x1]
    %v478 = vlaneseq
    %v479 = vshrl.u32 %v478, 7
    %v480 = vsub.s32 0, %v479
    %v481 = vrot.slane %v476, %v480
    %v483 = vmul.f32 %v467, %v481
    %v484 = vmul.f32 %v468, %v481
    %v485 = vmul.f32 %v469, %v481
    %v486 = vmul.f32 %v470, %v481
    %v487 = vmul.f32 %v471, %v481
    %v488 = vmul.f32 %v472, %v481
    %v489 = vmul.f32 %v473, %v481
    %v490 = vmul.f32 %v474, %v481
    %v491 = vadd.f32 %v457, %v483
    %v492 = vadd.f32 %v458, %v484
    %v493 = vadd.f32 %v459, %v485
    %v494 = vadd.f32 %v460, %v486
    %v495 = vadd.f32 %v461, %v487
    %v496 = vadd.f32 %v462, %v488
    %v497 = vadd.f32 %v463, %v489
    %v498 = vadd.f32 %v464, %v490
    %v499 = vld [vmem:[#allocation2 + $0x58] sm:$0xff]
    %v500 = vld [vmem:[#allocation2 + $0x60] sm:$0xff]
    %s501 = scalar_lea.vmem [#allocation5], 7
    %v502 = vld [vmem:[%s501] sm:$0x1]
    %v504 = vlaneseq
    %v505 = vshrl.u32 %v504, 7
    %v506 = vsub.s32 0, %v505
    %v507 = vrot.slane %v502, %v506
    %v509 = vmul.f32 %v303, %v507
    %v510 = vmul.f32 %v304, %v507
    %v511 = vmul.f32 %v305, %v507
    %v512 = vmul.f32 %v306, %v507
    %v513 = vmul.f32 %v405, %v507
    %v514 = vmul.f32 %v406, %v507
    %v515 = vmul.f32 %v499, %v507
    %v516 = vmul.f32 %v500, %v507
    %v517 = vadd.f32 %v491, %v509
    %v518 = vadd.f32 %v492, %v510
    %v519 = vadd.f32 %v493, %v511
    %v520 = vadd.f32 %v494, %v512
    %v521 = vadd.f32 %v495, %v513
    %v522 = vadd.f32 %v496, %v514
    %v523 = vadd.f32 %v497, %v515
    %v524 = vadd.f32 %v498, %v516
    %v525 = vld [vmem:[#allocation2 + $0x59] sm:$0xff]
    %v526 = vld [vmem:[#allocation2 + $0x61] sm:$0xff]
    %v527 = vmul.f32 %v335, %v252
    %v528 = vmul.f32 %v336, %v253
    %v529 = vmul.f32 %v337, %v254
    %v530 = vmul.f32 %v338, %v255
    %v531 = vmul.f32 %v431, %v256
    %v532 = vmul.f32 %v432, %v257
    %v533 = vmul.f32 %v525, %v258
    %v534 = vmul.f32 %v526, %v259
    %s535 = scalar_lea.vmem [#allocation5], 8
    %v536 = vld [vmem:[%s535] sm:$0x1]
    %v538 = vlaneseq
    %v539 = vshrl.u32 %v538, 7
    %v540 = vsub.s32 0, %v539
    %v541 = vrot.slane %v536, %v540
    %v543 = vmul.f32 %v527, %v541
    %v544 = vmul.f32 %v528, %v541
    %v545 = vmul.f32 %v529, %v541
    %v546 = vmul.f32 %v530, %v541
    %v547 = vmul.f32 %v531, %v541
    %v548 = vmul.f32 %v532, %v541
    %v549 = vmul.f32 %v533, %v541
    %v550 = vmul.f32 %v534, %v541
    %v551 = vadd.f32 %v517, %v543
    %v552 = vadd.f32 %v518, %v544
    %v553 = vadd.f32 %v519, %v545
    %v554 = vadd.f32 %v520, %v546
    %v555 = vadd.f32 %v521, %v547
    %v556 = vadd.f32 %v522, %v548
    %v557 = vadd.f32 %v523, %v549
    %v558 = vadd.f32 %v524, %v550
    %v559 = vld [vmem:[%s2] sm:$0x1]
    %v561 = vlaneseq
    %v562 = vshrl.u32 %v561, 7
    %v563 = vsub.s32 0, %v562
    %v564 = vrot.slane %v559, %v563
    %v566 = vadd.f32 %v551, %v564
    %v567 = vadd.f32 %v552, %v564
    %v568 = vadd.f32 %v553, %v564
    %v569 = vadd.f32 %v554, %v564
    %v570 = vadd.f32 %v555, %v564
    %v571 = vadd.f32 %v556, %v564
    %v572 = vadd.f32 %v557, %v564
    %v573 = vadd.f32 %v558, %v564
    %v574 = vmax.f32 %v566, 0.0
    %v575 = vmax.f32 %v567, 0.0
    %v576 = vmax.f32 %v568, 0.0
    %v577 = vmax.f32 %v569, 0.0
    %v578 = vmax.f32 %v570, 0.0
    %v579 = vmax.f32 %v571, 0.0
    %v580 = vmax.f32 %v572, 0.0
    %v581 = vmax.f32 %v573, 0.0
    %582 = vst.msk [vmem:[#allocation3] sm:$0xff] %vm172, %v574
    %583 = vst.msk [vmem:[#allocation3 + $0x8] sm:$0xff] %vm172, %v575
    %584 = vst.msk [vmem:[#allocation3 + $0x10] sm:$0xff] %vm172, %v576
    %585 = vst.msk [vmem:[#allocation3 + $0x18] sm:$0xff] %vm172, %v577
    %586 = vst.msk [vmem:[#allocation3 + $0x20] sm:$0xff] %vm172, %v578
    %587 = vst.msk [vmem:[#allocation3 + $0x28] sm:$0xff] %vm172, %v579
    %588 = vst.msk [vmem:[#allocation3 + $0x30] sm:$0xff] %vm172, %v580
    %589 = vst.msk [vmem:[#allocation3 + $0x38] sm:$0xff] %vm172, %v581
    %v590 = vld [vmem:[#allocation2 + $0x47] sm:$0xff]
    %v591 = vld [vmem:[#allocation2 + $0x4f] sm:$0xff]
    %v592 = vld [vmem:[#allocation2 + $0x57] sm:$0xff]
    %v593 = vld [vmem:[#allocation2 + $0x5f] sm:$0xff]
    %v594 = vld [vmem:[#allocation2 + $0x67] sm:$0xff]
    %v595 = vld [vmem:[#allocation2 + $0x6f] sm:$0xff]
    %v596 = vld [vmem:[#allocation2 + $0x77] sm:$0xff]
    %v597 = vld [vmem:[#allocation2 + $0x7f] sm:$0xff]
    %v598 = vmul.f32 %v590, %v236
    %v599 = vmul.f32 %v591, %v237
    %v600 = vmul.f32 %v592, %v238
    %v601 = vmul.f32 %v593, %v239
    %v602 = vmul.f32 %v594, %v240
    %v603 = vmul.f32 %v595, %v241
    %v604 = vmul.f32 %v596, %v242
    %v605 = vmul.f32 %v597, %v243
    %v606 = vld [vmem:[#allocation5] sm:$0x1]
    %v608 = vlaneseq
    %v609 = vshrl.u32 %v608, 7
    %v610 = vsub.s32 0, %v609
    %v611 = vrot.slane %v606, %v610
    %v613 = vmul.f32 %v598, %v611
    %v614 = vmul.f32 %v599, %v611
    %v615 = vmul.f32 %v600, %v611
    %v616 = vmul.f32 %v601, %v611
    %v617 = vmul.f32 %v602, %v611
    %v618 = vmul.f32 %v603, %v611
    %v619 = vmul.f32 %v604, %v611
    %v620 = vmul.f32 %v605, %v611
    %v621 = vadd.f32 %v613, 0.0
    %v622 = vadd.f32 %v614, 0.0
    %v623 = vadd.f32 %v615, 0.0
    %v624 = vadd.f32 %v616, 0.0
    %v625 = vadd.f32 %v617, 0.0
    %v626 = vadd.f32 %v618, 0.0
    %v627 = vadd.f32 %v619, 0.0
    %v628 = vadd.f32 %v620, 0.0
    %v629 = vld [vmem:[#allocation2 + $0x48] sm:$0xff]
    %v630 = vld [vmem:[#allocation2 + $0x50] sm:$0xff]
    %v631 = vld [vmem:[#allocation2 + $0x58] sm:$0xff]
    %v632 = vld [vmem:[#allocation2 + $0x60] sm:$0xff]
    %v633 = vld [vmem:[#allocation2 + $0x68] sm:$0xff]
    %v634 = vld [vmem:[#allocation2 + $0x70] sm:$0xff]
    %v635 = vld [vmem:[#allocation2 + $0x78] sm:$0xff]
    %v636 = vld [vmem:[#allocation2 + $0x80] sm:$0xff]
    %v637 = vld [vmem:[%s307] sm:$0x1]
    %v639 = vlaneseq
    %v640 = vshrl.u32 %v639, 7
    %v641 = vsub.s32 0, %v640
    %v642 = vrot.slane %v637, %v641
    %v644 = vmul.f32 %v629, %v642
    %v645 = vmul.f32 %v630, %v642
    %v646 = vmul.f32 %v631, %v642
    %v647 = vmul.f32 %v632, %v642
    %v648 = vmul.f32 %v633, %v642
    %v649 = vmul.f32 %v634, %v642
    %v650 = vmul.f32 %v635, %v642
    %v651 = vmul.f32 %v636, %v642
    %v652 = vadd.f32 %v621, %v644
    %v653 = vadd.f32 %v622, %v645
    %v654 = vadd.f32 %v623, %v646
    %v655 = vadd.f32 %v624, %v647
    %v656 = vadd.f32 %v625, %v648
    %v657 = vadd.f32 %v626, %v649
    %v658 = vadd.f32 %v627, %v650
    %v659 = vadd.f32 %v628, %v651
    %v660 = vld [vmem:[#allocation2 + $0x49] sm:$0xff]
    %v661 = vld [vmem:[#allocation2 + $0x51] sm:$0xff]
    %v662 = vld [vmem:[#allocation2 + $0x59] sm:$0xff]
    %v663 = vld [vmem:[#allocation2 + $0x61] sm:$0xff]
    %v664 = vld [vmem:[#allocation2 + $0x69] sm:$0xff]
    %v665 = vld [vmem:[#allocation2 + $0x71] sm:$0xff]
    %v666 = vld [vmem:[#allocation2 + $0x79] sm:$0xff]
    %v667 = vld [vmem:[#allocation2 + $0x81] sm:$0xff]
    %v668 = vmul.f32 %v660, %v252
    %v669 = vmul.f32 %v661, %v253
    %v670 = vmul.f32 %v662, %v254
    %v671 = vmul.f32 %v663, %v255
    %v672 = vmul.f32 %v664, %v256
    %v673 = vmul.f32 %v665, %v257
    %v674 = vmul.f32 %v666, %v258
    %v675 = vmul.f32 %v667, %v259
    %v676 = vld [vmem:[%s347] sm:$0x1]
    %v678 = vlaneseq
    %v679 = vshrl.u32 %v678, 7
    %v680 = vsub.s32 0, %v679
    %v681 = vrot.slane %v676, %v680
    %v683 = vmul.f32 %v668, %v681
    %v684 = vmul.f32 %v669, %v681
    %v685 = vmul.f32 %v670, %v681
    %v686 = vmul.f32 %v671, %v681
    %v687 = vmul.f32 %v672, %v681
    %v688 = vmul.f32 %v673, %v681
    %v689 = vmul.f32 %v674, %v681
    %v690 = vmul.f32 %v675, %v681
    %v691 = vadd.f32 %v652, %v683
    %v692 = vadd.f32 %v653, %v684
    %v693 = vadd.f32 %v654, %v685
    %v694 = vadd.f32 %v655, %v686
    %v695 = vadd.f32 %v656, %v687
    %v696 = vadd.f32 %v657, %v688
    %v697 = vadd.f32 %v658, %v689
    %v698 = vadd.f32 %v659, %v690
    %v699 = vld [vmem:[#allocation2 + $0x87] sm:$0xff]
    %v700 = vld [vmem:[#allocation2 + $0x8f] sm:$0xff]
    %v701 = vmul.f32 %v592, %v236
    %v702 = vmul.f32 %v593, %v237
    %v703 = vmul.f32 %v594, %v238
    %v704 = vmul.f32 %v595, %v239
    %v705 = vmul.f32 %v596, %v240
    %v706 = vmul.f32 %v597, %v241
    %v707 = vmul.f32 %v699, %v242
    %v708 = vmul.f32 %v700, %v243
    %v709 = vld [vmem:[%s381] sm:$0x1]
    %v711 = vlaneseq
    %v712 = vshrl.u32 %v711, 7
    %v713 = vsub.s32 0, %v712
    %v714 = vrot.slane %v709, %v713
    %v716 = vmul.f32 %v701, %v714
    %v717 = vmul.f32 %v702, %v714
    %v718 = vmul.f32 %v703, %v714
    %v719 = vmul.f32 %v704, %v714
    %v720 = vmul.f32 %v705, %v714
    %v721 = vmul.f32 %v706, %v714
    %v722 = vmul.f32 %v707, %v714
    %v723 = vmul.f32 %v708, %v714
    %v724 = vadd.f32 %v691, %v716
    %v725 = vadd.f32 %v692, %v717
    %v726 = vadd.f32 %v693, %v718
    %v727 = vadd.f32 %v694, %v719
    %v728 = vadd.f32 %v695, %v720
    %v729 = vadd.f32 %v696, %v721
    %v730 = vadd.f32 %v697, %v722
    %v731 = vadd.f32 %v698, %v723
    %v732 = vld [vmem:[#allocation2 + $0x88] sm:$0xff]
    %v733 = vld [vmem:[#allocation2 + $0x90] sm:$0xff]
    %v734 = vld [vmem:[%s407] sm:$0x1]
    %v736 = vlaneseq
    %v737 = vshrl.u32 %v736, 7
    %v738 = vsub.s32 0, %v737
    %v739 = vrot.slane %v734, %v738
    %v741 = vmul.f32 %v631, %v739
    %v742 = vmul.f32 %v632, %v739
    %v743 = vmul.f32 %v633, %v739
    %v744 = vmul.f32 %v634, %v739
    %v745 = vmul.f32 %v635, %v739
    %v746 = vmul.f32 %v636, %v739
    %v747 = vmul.f32 %v732, %v739
    %v748 = vmul.f32 %v733, %v739
    %v749 = vadd.f32 %v724, %v741
    %v750 = vadd.f32 %v725, %v742
    %v751 = vadd.f32 %v726, %v743
    %v752 = vadd.f32 %v727, %v744
    %v753 = vadd.f32 %v728, %v745
    %v754 = vadd.f32 %v729, %v746
    %v755 = vadd.f32 %v730, %v747
    %v756 = vadd.f32 %v731, %v748
    %v757 = vld [vmem:[#allocation2 + $0x89] sm:$0xff]
    %v758 = vld [vmem:[#allocation2 + $0x91] sm:$0xff]
    %v759 = vmul.f32 %v662, %v252
    %v760 = vmul.f32 %v663, %v253
    %v761 = vmul.f32 %v664, %v254
    %v762 = vmul.f32 %v665, %v255
    %v763 = vmul.f32 %v666, %v256
    %v764 = vmul.f32 %v667, %v257
    %v765 = vmul.f32 %v757, %v258
    %v766 = vmul.f32 %v758, %v259
    %v767 = vld [vmem:[%s441] sm:$0x1]
    %v769 = vlaneseq
    %v770 = vshrl.u32 %v769, 7
    %v771 = vsub.s32 0, %v770
    %v772 = vrot.slane %v767, %v771
    %v774 = vmul.f32 %v759, %v772
    %v775 = vmul.f32 %v760, %v772
    %v776 = vmul.f32 %v761, %v772
    %v777 = vmul.f32 %v762, %v772
    %v778 = vmul.f32 %v763, %v772
    %v779 = vmul.f32 %v764, %v772
    %v780 = vmul.f32 %v765, %v772
    %v781 = vmul.f32 %v766, %v772
    %v782 = vadd.f32 %v749, %v774
    %v783 = vadd.f32 %v750, %v775
    %v784 = vadd.f32 %v751, %v776
    %v785 = vadd.f32 %v752, %v777
    %v786 = vadd.f32 %v753, %v778
    %v787 = vadd.f32 %v754, %v779
    %v788 = vadd.f32 %v755, %v780
    %v789 = vadd.f32 %v756, %v781
    %v790 = vld [vmem:[#allocation2 + $0x97] sm:$0xff]
    %v791 = vld [vmem:[#allocation2 + $0x9f] sm:$0xff]
    %v792 = vmul.f32 %v594, %v236
    %v793 = vmul.f32 %v595, %v237
    %v794 = vmul.f32 %v596, %v238
    %v795 = vmul.f32 %v597, %v239
    %v796 = vmul.f32 %v699, %v240
    %v797 = vmul.f32 %v700, %v241
    %v798 = vmul.f32 %v790, %v242
    %v799 = vmul.f32 %v791, %v243
    %v800 = vld [vmem:[%s475] sm:$0x1]
    %v802 = vlaneseq
    %v803 = vshrl.u32 %v802, 7
    %v804 = vsub.s32 0, %v803
    %v805 = vrot.slane %v800, %v804
    %v807 = vmul.f32 %v792, %v805
    %v808 = vmul.f32 %v793, %v805
    %v809 = vmul.f32 %v794, %v805
    %v810 = vmul.f32 %v795, %v805
    %v811 = vmul.f32 %v796, %v805
    %v812 = vmul.f32 %v797, %v805
    %v813 = vmul.f32 %v798, %v805
    %v814 = vmul.f32 %v799, %v805
    %v815 = vadd.f32 %v782, %v807
    %v816 = vadd.f32 %v783, %v808
    %v817 = vadd.f32 %v784, %v809
    %v818 = vadd.f32 %v785, %v810
    %v819 = vadd.f32 %v786, %v811
    %v820 = vadd.f32 %v787, %v812
    %v821 = vadd.f32 %v788, %v813
    %v822 = vadd.f32 %v789, %v814
    %v823 = vld [vmem:[#allocation2 + $0x98] sm:$0xff]
    %v824 = vld [vmem:[#allocation2 + $0xa0] sm:$0xff]
    %v825 = vld [vmem:[%s501] sm:$0x1]
    %v827 = vlaneseq
    %v828 = vshrl.u32 %v827, 7
    %v829 = vsub.s32 0, %v828
    %v830 = vrot.slane %v825, %v829
    %v832 = vmul.f32 %v633, %v830
    %v833 = vmul.f32 %v634, %v830
    %v834 = vmul.f32 %v635, %v830
    %v835 = vmul.f32 %v636, %v830
    %v836 = vmul.f32 %v732, %v830
    %v837 = vmul.f32 %v733, %v830
    %v838 = vmul.f32 %v823, %v830
    %v839 = vmul.f32 %v824, %v830
    %v840 = vadd.f32 %v815, %v832
    %v841 = vadd.f32 %v816, %v833
    %v842 = vadd.f32 %v817, %v834
    %v843 = vadd.f32 %v818, %v835
    %v844 = vadd.f32 %v819, %v836
    %v845 = vadd.f32 %v820, %v837
    %v846 = vadd.f32 %v821, %v838
    %v847 = vadd.f32 %v822, %v839
    %v848 = vld [vmem:[#allocation2 + $0x99] sm:$0xff]
    %v849 = vld [vmem:[#allocation2 + $0xa1] sm:$0xff]
    %v850 = vmul.f32 %v664, %v252
    %v851 = vmul.f32 %v665, %v253
    %v852 = vmul.f32 %v666, %v254
    %v853 = vmul.f32 %v667, %v255
    %v854 = vmul.f32 %v757, %v256
    %v855 = vmul.f32 %v758, %v257
    %v856 = vmul.f32 %v848, %v258
    %v857 = vmul.f32 %v849, %v259
    %v858 = vld [vmem:[%s535] sm:$0x1]
    %v860 = vlaneseq
    %v861 = vshrl.u32 %v860, 7
    %v862 = vsub.s32 0, %v861
    %v863 = vrot.slane %v858, %v862
    %v865 = vmul.f32 %v850, %v863
    %v866 = vmul.f32 %v851, %v863
    %v867 = vmul.f32 %v852, %v863
    %v868 = vmul.f32 %v853, %v863
    %v869 = vmul.f32 %v854, %v863
    %v870 = vmul.f32 %v855, %v863
    %v871 = vmul.f32 %v856, %v863
    %v872 = vmul.f32 %v857, %v863
    %v873 = vadd.f32 %v840, %v865
    %v874 = vadd.f32 %v841, %v866
    %v875 = vadd.f32 %v842, %v867
    %v876 = vadd.f32 %v843, %v868
    %v877 = vadd.f32 %v844, %v869
    %v878 = vadd.f32 %v845, %v870
    %v879 = vadd.f32 %v846, %v871
    %v880 = vadd.f32 %v847, %v872
    %v881 = vld [vmem:[%s2] sm:$0x1]
    %v883 = vlaneseq
    %v884 = vshrl.u32 %v883, 7
    %v885 = vsub.s32 0, %v884
    %v886 = vrot.slane %v881, %v885
    %v888 = vadd.f32 %v873, %v886
    %v889 = vadd.f32 %v874, %v886
    %v890 = vadd.f32 %v875, %v886
    %v891 = vadd.f32 %v876, %v886
    %v892 = vadd.f32 %v877, %v886
    %v893 = vadd.f32 %v878, %v886
    %v894 = vadd.f32 %v879, %v886
    %v895 = vadd.f32 %v880, %v886
    %v896 = vmax.f32 %v888, 0.0
    %v897 = vmax.f32 %v889, 0.0
    %v898 = vmax.f32 %v890, 0.0
    %v899 = vmax.f32 %v891, 0.0
    %v900 = vmax.f32 %v892, 0.0
    %v901 = vmax.f32 %v893, 0.0
    %v902 = vmax.f32 %v894, 0.0
    %v903 = vmax.f32 %v895, 0.0
    %904 = vst.msk [vmem:[#allocation3 + $0x40] sm:$0xff] %vm172, %v896
    %905 = vst.msk [vmem:[#allocation3 + $0x48] sm:$0xff] %vm172, %v897
    %906 = vst.msk [vmem:[#allocation3 + $0x50] sm:$0xff] %vm172, %v898
    %907 = vst.msk [vmem:[#allocation3 + $0x58] sm:$0xff] %vm172, %v899
    %908 = vst.msk [vmem:[#allocation3 + $0x60] sm:$0xff] %vm172, %v900
    %909 = vst.msk [vmem:[#allocation3 + $0x68] sm:$0xff] %vm172, %v901
    %910 = vst.msk [vmem:[#allocation3 + $0x70] sm:$0xff] %vm172, %v902
    %911 = vst.msk [vmem:[#allocation3 + $0x78] sm:$0xff] %vm172, %v903
    %v912 = vld [vmem:[#allocation2 + $0x87] sm:$0xff]
    %v913 = vld [vmem:[#allocation2 + $0x8f] sm:$0xff]
    %v914 = vld [vmem:[#allocation2 + $0x97] sm:$0xff]
    %v915 = vld [vmem:[#allocation2 + $0x9f] sm:$0xff]
    %v916 = vld [vmem:[#allocation2 + $0xa7] sm:$0xff]
    %v917 = vld [vmem:[#allocation2 + $0xaf] sm:$0xff]
    %v918 = vld [vmem:[#allocation2 + $0xb7] sm:$0xff]
    %v919 = vld [vmem:[#allocation2 + $0xbf] sm:$0xff]
    %v920 = vmul.f32 %v912, %v236
    %v921 = vmul.f32 %v913, %v237
    %v922 = vmul.f32 %v914, %v238
    %v923 = vmul.f32 %v915, %v239
    %v924 = vmul.f32 %v916, %v240
    %v925 = vmul.f32 %v917, %v241
    %v926 = vmul.f32 %v918, %v242
    %v927 = vmul.f32 %v919, %v243
    %v928 = vld [vmem:[#allocation5] sm:$0x1]
    %v930 = vlaneseq
    %v931 = vshrl.u32 %v930, 7
    %v932 = vsub.s32 0, %v931
    %v933 = vrot.slane %v928, %v932
    %v935 = vmul.f32 %v920, %v933
    %v936 = vmul.f32 %v921, %v933
    %v937 = vmul.f32 %v922, %v933
    %v938 = vmul.f32 %v923, %v933
    %v939 = vmul.f32 %v924, %v933
    %v940 = vmul.f32 %v925, %v933
    %v941 = vmul.f32 %v926, %v933
    %v942 = vmul.f32 %v927, %v933
    %v943 = vadd.f32 %v935, 0.0
    %v944 = vadd.f32 %v936, 0.0
    %v945 = vadd.f32 %v937, 0.0
    %v946 = vadd.f32 %v938, 0.0
    %v947 = vadd.f32 %v939, 0.0
    %v948 = vadd.f32 %v940, 0.0
    %v949 = vadd.f32 %v941, 0.0
    %v950 = vadd.f32 %v942, 0.0
    %v951 = vld [vmem:[#allocation2 + $0x88] sm:$0xff]
    %v952 = vld [vmem:[#allocation2 + $0x90] sm:$0xff]
    %v953 = vld [vmem:[#allocation2 + $0x98] sm:$0xff]
    %v954 = vld [vmem:[#allocation2 + $0xa0] sm:$0xff]
    %v955 = vld [vmem:[#allocation2 + $0xa8] sm:$0xff]
    %v956 = vld [vmem:[#allocation2 + $0xb0] sm:$0xff]
    %v957 = vld [vmem:[#allocation2 + $0xb8] sm:$0xff]
    %v958 = vld [vmem:[#allocation2 + $0xc0] sm:$0xff]
    %v959 = vld [vmem:[%s307] sm:$0x1]
    %v961 = vlaneseq
    %v962 = vshrl.u32 %v961, 7
    %v963 = vsub.s32 0, %v962
    %v964 = vrot.slane %v959, %v963
    %v966 = vmul.f32 %v951, %v964
    %v967 = vmul.f32 %v952, %v964
    %v968 = vmul.f32 %v953, %v964
    %v969 = vmul.f32 %v954, %v964
    %v970 = vmul.f32 %v955, %v964
    %v971 = vmul.f32 %v956, %v964
    %v972 = vmul.f32 %v957, %v964
    %v973 = vmul.f32 %v958, %v964
    %v974 = vadd.f32 %v943, %v966
    %v975 = vadd.f32 %v944, %v967
    %v976 = vadd.f32 %v945, %v968
    %v977 = vadd.f32 %v946, %v969
    %v978 = vadd.f32 %v947, %v970
    %v979 = vadd.f32 %v948, %v971
    %v980 = vadd.f32 %v949, %v972
    %v981 = vadd.f32 %v950, %v973
    %v982 = vld [vmem:[#allocation2 + $0x89] sm:$0xff]
    %v983 = vld [vmem:[#allocation2 + $0x91] sm:$0xff]
    %v984 = vld [vmem:[#allocation2 + $0x99] sm:$0xff]
    %v985 = vld [vmem:[#allocation2 + $0xa1] sm:$0xff]
    %v986 = vld [vmem:[#allocation2 + $0xa9] sm:$0xff]
    %v987 = vld [vmem:[#allocation2 + $0xb1] sm:$0xff]
    %v988 = vld [vmem:[#allocation2 + $0xb9] sm:$0xff]
    %v989 = vld [vmem:[#allocation2 + $0xc1] sm:$0xff]
    %v990 = vmul.f32 %v982, %v252
    %v991 = vmul.f32 %v983, %v253
    %v992 = vmul.f32 %v984, %v254
    %v993 = vmul.f32 %v985, %v255
    %v994 = vmul.f32 %v986, %v256
    %v995 = vmul.f32 %v987, %v257
    %v996 = vmul.f32 %v988, %v258
    %v997 = vmul.f32 %v989, %v259
    %v998 = vld [vmem:[%s347] sm:$0x1]
    %v1000 = vlaneseq
    %v1001 = vshrl.u32 %v1000, 7
    %v1002 = vsub.s32 0, %v1001
    %v1003 = vrot.slane %v998, %v1002
    %v1005 = vmul.f32 %v990, %v1003
    %v1006 = vmul.f32 %v991, %v1003
    %v1007 = vmul.f32 %v992, %v1003
    %v1008 = vmul.f32 %v993, %v1003
    %v1009 = vmul.f32 %v994, %v1003
    %v1010 = vmul.f32 %v995, %v1003
    %v1011 = vmul.f32 %v996, %v1003
    %v1012 = vmul.f32 %v997, %v1003
    %v1013 = vadd.f32 %v974, %v1005
    %v1014 = vadd.f32 %v975, %v1006
    %v1015 = vadd.f32 %v976, %v1007
    %v1016 = vadd.f32 %v977, %v1008
    %v1017 = vadd.f32 %v978, %v1009
    %v1018 = vadd.f32 %v979, %v1010
    %v1019 = vadd.f32 %v980, %v1011
    %v1020 = vadd.f32 %v981, %v1012
    %v1021 = vld [vmem:[#allocation2 + $0xc7] sm:$0xff]
    %v1022 = vld [vmem:[#allocation2 + $0xcf] sm:$0xff]
    %v1023 = vmul.f32 %v914, %v236
    %v1024 = vmul.f32 %v915, %v237
    %v1025 = vmul.f32 %v916, %v238
    %v1026 = vmul.f32 %v917, %v239
    %v1027 = vmul.f32 %v918, %v240
    %v1028 = vmul.f32 %v919, %v241
    %v1029 = vmul.f32 %v1021, %v242
    %v1030 = vmul.f32 %v1022, %v243
    %v1031 = vld [vmem:[%s381] sm:$0x1]
    %v1033 = vlaneseq
    %v1034 = vshrl.u32 %v1033, 7
    %v1035 = vsub.s32 0, %v1034
    %v1036 = vrot.slane %v1031, %v1035
    %v1038 = vmul.f32 %v1023, %v1036
    %v1039 = vmul.f32 %v1024, %v1036
    %v1040 = vmul.f32 %v1025, %v1036
    %v1041 = vmul.f32 %v1026, %v1036
    %v1042 = vmul.f32 %v1027, %v1036
    %v1043 = vmul.f32 %v1028, %v1036
    %v1044 = vmul.f32 %v1029, %v1036
    %v1045 = vmul.f32 %v1030, %v1036
    %v1046 = vadd.f32 %v1013, %v1038
    %v1047 = vadd.f32 %v1014, %v1039
    %v1048 = vadd.f32 %v1015, %v1040
    %v1049 = vadd.f32 %v1016, %v1041
    %v1050 = vadd.f32 %v1017, %v1042
    %v1051 = vadd.f32 %v1018, %v1043
    %v1052 = vadd.f32 %v1019, %v1044
    %v1053 = vadd.f32 %v1020, %v1045
    %v1054 = vld [vmem:[#allocation2 + $0xc8] sm:$0xff]
    %v1055 = vld [vmem:[#allocation2 + $0xd0] sm:$0xff]
    %v1056 = vld [vmem:[%s407] sm:$0x1]
    %v1058 = vlaneseq
    %v1059 = vshrl.u32 %v1058, 7
    %v1060 = vsub.s32 0, %v1059
    %v1061 = vrot.slane %v1056, %v1060
    %v1063 = vmul.f32 %v953, %v1061
    %v1064 = vmul.f32 %v954, %v1061
    %v1065 = vmul.f32 %v955, %v1061
    %v1066 = vmul.f32 %v956, %v1061
    %v1067 = vmul.f32 %v957, %v1061
    %v1068 = vmul.f32 %v958, %v1061
    %v1069 = vmul.f32 %v1054, %v1061
    %v1070 = vmul.f32 %v1055, %v1061
    %v1071 = vadd.f32 %v1046, %v1063
    %v1072 = vadd.f32 %v1047, %v1064
    %v1073 = vadd.f32 %v1048, %v1065
    %v1074 = vadd.f32 %v1049, %v1066
    %v1075 = vadd.f32 %v1050, %v1067
    %v1076 = vadd.f32 %v1051, %v1068
    %v1077 = vadd.f32 %v1052, %v1069
    %v1078 = vadd.f32 %v1053, %v1070
    %v1079 = vld [vmem:[#allocation2 + $0xc9] sm:$0xff]
    %v1080 = vld [vmem:[#allocation2 + $0xd1] sm:$0xff]
    %v1081 = vmul.f32 %v984, %v252
    %v1082 = vmul.f32 %v985, %v253
    %v1083 = vmul.f32 %v986, %v254
    %v1084 = vmul.f32 %v987, %v255
    %v1085 = vmul.f32 %v988, %v256
    %v1086 = vmul.f32 %v989, %v257
    %v1087 = vmul.f32 %v1079, %v258
    %v1088 = vmul.f32 %v1080, %v259
    %v1089 = vld [vmem:[%s441] sm:$0x1]
    %v1091 = vlaneseq
    %v1092 = vshrl.u32 %v1091, 7
    %v1093 = vsub.s32 0, %v1092
    %v1094 = vrot.slane %v1089, %v1093
    %v1096 = vmul.f32 %v1081, %v1094
    %v1097 = vmul.f32 %v1082, %v1094
    %v1098 = vmul.f32 %v1083, %v1094
    %v1099 = vmul.f32 %v1084, %v1094
    %v1100 = vmul.f32 %v1085, %v1094
    %v1101 = vmul.f32 %v1086, %v1094
    %v1102 = vmul.f32 %v1087, %v1094
    %v1103 = vmul.f32 %v1088, %v1094
    %v1104 = vadd.f32 %v1071, %v1096
    %v1105 = vadd.f32 %v1072, %v1097
    %v1106 = vadd.f32 %v1073, %v1098
    %v1107 = vadd.f32 %v1074, %v1099
    %v1108 = vadd.f32 %v1075, %v1100
    %v1109 = vadd.f32 %v1076, %v1101
    %v1110 = vadd.f32 %v1077, %v1102
    %v1111 = vadd.f32 %v1078, %v1103
    %v1112 = vld [vmem:[#allocation2 + $0xd7] sm:$0xff]
    %v1113 = vld [vmem:[#allocation2 + $0xdf] sm:$0xff]
    %v1114 = vmul.f32 %v916, %v236
    %v1115 = vmul.f32 %v917, %v237
    %v1116 = vmul.f32 %v918, %v238
    %v1117 = vmul.f32 %v919, %v239
    %v1118 = vmul.f32 %v1021, %v240
    %v1119 = vmul.f32 %v1022, %v241
    %v1120 = vmul.f32 %v1112, %v242
    %v1121 = vmul.f32 %v1113, %v243
    %v1122 = vld [vmem:[%s475] sm:$0x1]
    %v1124 = vlaneseq
    %v1125 = vshrl.u32 %v1124, 7
    %v1126 = vsub.s32 0, %v1125
    %v1127 = vrot.slane %v1122, %v1126
    %v1129 = vmul.f32 %v1114, %v1127
    %v1130 = vmul.f32 %v1115, %v1127
    %v1131 = vmul.f32 %v1116, %v1127
    %v1132 = vmul.f32 %v1117, %v1127
    %v1133 = vmul.f32 %v1118, %v1127
    %v1134 = vmul.f32 %v1119, %v1127
    %v1135 = vmul.f32 %v1120, %v1127
    %v1136 = vmul.f32 %v1121, %v1127
    %v1137 = vadd.f32 %v1104, %v1129
    %v1138 = vadd.f32 %v1105, %v1130
    %v1139 = vadd.f32 %v1106, %v1131
    %v1140 = vadd.f32 %v1107, %v1132
    %v1141 = vadd.f32 %v1108, %v1133
    %v1142 = vadd.f32 %v1109, %v1134
    %v1143 = vadd.f32 %v1110, %v1135
    %v1144 = vadd.f32 %v1111, %v1136
    %v1145 = vld [vmem:[#allocation2 + $0xd8] sm:$0xff]
    %v1146 = vld [vmem:[#allocation2 + $0xe0] sm:$0xff]
    %v1147 = vld [vmem:[%s501] sm:$0x1]
    %v1149 = vlaneseq
    %v1150 = vshrl.u32 %v1149, 7
    %v1151 = vsub.s32 0, %v1150
    %v1152 = vrot.slane %v1147, %v1151
    %v1154 = vmul.f32 %v955, %v1152
    %v1155 = vmul.f32 %v956, %v1152
    %v1156 = vmul.f32 %v957, %v1152
    %v1157 = vmul.f32 %v958, %v1152
    %v1158 = vmul.f32 %v1054, %v1152
    %v1159 = vmul.f32 %v1055, %v1152
    %v1160 = vmul.f32 %v1145, %v1152
    %v1161 = vmul.f32 %v1146, %v1152
    %v1162 = vadd.f32 %v1137, %v1154
    %v1163 = vadd.f32 %v1138, %v1155
    %v1164 = vadd.f32 %v1139, %v1156
    %v1165 = vadd.f32 %v1140, %v1157
    %v1166 = vadd.f32 %v1141, %v1158
    %v1167 = vadd.f32 %v1142, %v1159
    %v1168 = vadd.f32 %v1143, %v1160
    %v1169 = vadd.f32 %v1144, %v1161
    %v1170 = vld [vmem:[#allocation2 + $0xd9] sm:$0xff]
    %v1171 = vld [vmem:[#allocation2 + $0xe1] sm:$0xff]
    %v1172 = vmul.f32 %v986, %v252
    %v1173 = vmul.f32 %v987, %v253
    %v1174 = vmul.f32 %v988, %v254
    %v1175 = vmul.f32 %v989, %v255
    %v1176 = vmul.f32 %v1079, %v256
    %v1177 = vmul.f32 %v1080, %v257
    %v1178 = vmul.f32 %v1170, %v258
    %v1179 = vmul.f32 %v1171, %v259
    %v1180 = vld [vmem:[%s535] sm:$0x1]
    %v1182 = vlaneseq
    %v1183 = vshrl.u32 %v1182, 7
    %v1184 = vsub.s32 0, %v1183
    %v1185 = vrot.slane %v1180, %v1184
    %v1187 = vmul.f32 %v1172, %v1185
    %v1188 = vmul.f32 %v1173, %v1185
    %v1189 = vmul.f32 %v1174, %v1185
    %v1190 = vmul.f32 %v1175, %v1185
    %v1191 = vmul.f32 %v1176, %v1185
    %v1192 = vmul.f32 %v1177, %v1185
    %v1193 = vmul.f32 %v1178, %v1185
    %v1194 = vmul.f32 %v1179, %v1185
    %v1195 = vadd.f32 %v1162, %v1187
    %v1196 = vadd.f32 %v1163, %v1188
    %v1197 = vadd.f32 %v1164, %v1189
    %v1198 = vadd.f32 %v1165, %v1190
    %v1199 = vadd.f32 %v1166, %v1191
    %v1200 = vadd.f32 %v1167, %v1192
    %v1201 = vadd.f32 %v1168, %v1193
    %v1202 = vadd.f32 %v1169, %v1194
    %v1203 = vld [vmem:[%s2] sm:$0x1]
    %v1205 = vlaneseq
    %v1206 = vshrl.u32 %v1205, 7
    %v1207 = vsub.s32 0, %v1206
    %v1208 = vrot.slane %v1203, %v1207
    %v1210 = vadd.f32 %v1195, %v1208
    %v1211 = vadd.f32 %v1196, %v1208
    %v1212 = vadd.f32 %v1197, %v1208
    %v1213 = vadd.f32 %v1198, %v1208
    %v1214 = vadd.f32 %v1199, %v1208
    %v1215 = vadd.f32 %v1200, %v1208
    %v1216 = vadd.f32 %v1201, %v1208
    %v1217 = vadd.f32 %v1202, %v1208
    %v1218 = vmax.f32 %v1210, 0.0
    %v1219 = vmax.f32 %v1211, 0.0
    %v1220 = vmax.f32 %v1212, 0.0
    %v1221 = vmax.f32 %v1213, 0.0
    %v1222 = vmax.f32 %v1214, 0.0
    %v1223 = vmax.f32 %v1215, 0.0
    %v1224 = vmax.f32 %v1216, 0.0
    %v1225 = vmax.f32 %v1217, 0.0
    %1226 = vst.msk [vmem:[#allocation3 + $0x80] sm:$0xff] %vm172, %v1218
    %1227 = vst.msk [vmem:[#allocation3 + $0x88] sm:$0xff] %vm172, %v1219
    %1228 = vst.msk [vmem:[#allocation3 + $0x90] sm:$0xff] %vm172, %v1220
    %1229 = vst.msk [vmem:[#allocation3 + $0x98] sm:$0xff] %vm172, %v1221
    %1230 = vst.msk [vmem:[#allocation3 + $0xa0] sm:$0xff] %vm172, %v1222
    %1231 = vst.msk [vmem:[#allocation3 + $0xa8] sm:$0xff] %vm172, %v1223
    %1232 = vst.msk [vmem:[#allocation3 + $0xb0] sm:$0xff] %vm172, %v1224
    %1233 = vst.msk [vmem:[#allocation3 + $0xb8] sm:$0xff] %vm172, %v1225
    %v1234 = vld [vmem:[#allocation2 + $0xc7] sm:$0xff]
    %v1235 = vld [vmem:[#allocation2 + $0xcf] sm:$0xff]
    %v1236 = vld [vmem:[#allocation2 + $0xd7] sm:$0xff]
    %v1237 = vld [vmem:[#allocation2 + $0xdf] sm:$0xff]
    %v1238 = vld [vmem:[#allocation2 + $0xe7] sm:$0xff]
    %v1239 = vld [vmem:[#allocation2 + $0xef] sm:$0xff]
    %v1240 = vld [vmem:[#allocation2 + $0xf7] sm:$0xff]
    %v1241 = vld [vmem:[#allocation2 + $0xff] sm:$0xff]
    %v1242 = vmul.f32 %v1234, %v236
    %v1243 = vmul.f32 %v1235, %v237
    %v1244 = vmul.f32 %v1236, %v238
    %v1245 = vmul.f32 %v1237, %v239
    %v1246 = vmul.f32 %v1238, %v240
    %v1247 = vmul.f32 %v1239, %v241
    %v1248 = vmul.f32 %v1240, %v242
    %v1249 = vmul.f32 %v1241, %v243
    %v1250 = vld [vmem:[#allocation5] sm:$0x1]
    %v1252 = vlaneseq
    %v1253 = vshrl.u32 %v1252, 7
    %v1254 = vsub.s32 0, %v1253
    %v1255 = vrot.slane %v1250, %v1254
    %v1257 = vmul.f32 %v1242, %v1255
    %v1258 = vmul.f32 %v1243, %v1255
    %v1259 = vmul.f32 %v1244, %v1255
    %v1260 = vmul.f32 %v1245, %v1255
    %v1261 = vmul.f32 %v1246, %v1255
    %v1262 = vmul.f32 %v1247, %v1255
    %v1263 = vmul.f32 %v1248, %v1255
    %v1264 = vmul.f32 %v1249, %v1255
    %v1265 = vadd.f32 %v1257, 0.0
    %v1266 = vadd.f32 %v1258, 0.0
    %v1267 = vadd.f32 %v1259, 0.0
    %v1268 = vadd.f32 %v1260, 0.0
    %v1269 = vadd.f32 %v1261, 0.0
    %v1270 = vadd.f32 %v1262, 0.0
    %v1271 = vadd.f32 %v1263, 0.0
    %v1272 = vadd.f32 %v1264, 0.0
    %v1273 = vld [vmem:[#allocation2 + $0xc8] sm:$0xff]
    %v1274 = vld [vmem:[#allocation2 + $0xd0] sm:$0xff]
    %v1275 = vld [vmem:[#allocation2 + $0xd8] sm:$0xff]
    %v1276 = vld [vmem:[#allocation2 + $0xe0] sm:$0xff]
    %v1277 = vld [vmem:[#allocation2 + $0xe8] sm:$0xff]
    %v1278 = vld [vmem:[#allocation2 + $0xf0] sm:$0xff]
    %v1279 = vld [vmem:[#allocation2 + $0xf8] sm:$0xff]
    %v1280 = vld [vmem:[#allocation2 + $0x100] sm:$0xff]
    %v1281 = vld [vmem:[%s307] sm:$0x1]
    %v1283 = vlaneseq
    %v1284 = vshrl.u32 %v1283, 7
    %v1285 = vsub.s32 0, %v1284
    %v1286 = vrot.slane %v1281, %v1285
    %v1288 = vmul.f32 %v1273, %v1286
    %v1289 = vmul.f32 %v1274, %v1286
    %v1290 = vmul.f32 %v1275, %v1286
    %v1291 = vmul.f32 %v1276, %v1286
    %v1292 = vmul.f32 %v1277, %v1286
    %v1293 = vmul.f32 %v1278, %v1286
    %v1294 = vmul.f32 %v1279, %v1286
    %v1295 = vmul.f32 %v1280, %v1286
    %v1296 = vadd.f32 %v1265, %v1288
    %v1297 = vadd.f32 %v1266, %v1289
    %v1298 = vadd.f32 %v1267, %v1290
    %v1299 = vadd.f32 %v1268, %v1291
    %v1300 = vadd.f32 %v1269, %v1292
    %v1301 = vadd.f32 %v1270, %v1293
    %v1302 = vadd.f32 %v1271, %v1294
    %v1303 = vadd.f32 %v1272, %v1295
    %v1304 = vld [vmem:[#allocation2 + $0xc9] sm:$0xff]
    %v1305 = vld [vmem:[#allocation2 + $0xd1] sm:$0xff]
    %v1306 = vld [vmem:[#allocation2 + $0xd9] sm:$0xff]
    %v1307 = vld [vmem:[#allocation2 + $0xe1] sm:$0xff]
    %v1308 = vld [vmem:[#allocation2 + $0xe9] sm:$0xff]
    %v1309 = vld [vmem:[#allocation2 + $0xf1] sm:$0xff]
    %v1310 = vld [vmem:[#allocation2 + $0xf9] sm:$0xff]
    %v1311 = vld [vmem:[#allocation2 + $0x101] sm:$0xff]
    %v1312 = vmul.f32 %v1304, %v252
    %v1313 = vmul.f32 %v1305, %v253
    %v1314 = vmul.f32 %v1306, %v254
    %v1315 = vmul.f32 %v1307, %v255
    %v1316 = vmul.f32 %v1308, %v256
    %v1317 = vmul.f32 %v1309, %v257
    %v1318 = vmul.f32 %v1310, %v258
    %v1319 = vmul.f32 %v1311, %v259
    %v1320 = vld [vmem:[%s347] sm:$0x1]
    %v1322 = vlaneseq
    %v1323 = vshrl.u32 %v1322, 7
    %v1324 = vsub.s32 0, %v1323
    %v1325 = vrot.slane %v1320, %v1324
    %v1327 = vmul.f32 %v1312, %v1325
    %v1328 = vmul.f32 %v1313, %v1325
    %v1329 = vmul.f32 %v1314, %v1325
    %v1330 = vmul.f32 %v1315, %v1325
    %v1331 = vmul.f32 %v1316, %v1325
    %v1332 = vmul.f32 %v1317, %v1325
    %v1333 = vmul.f32 %v1318, %v1325
    %v1334 = vmul.f32 %v1319, %v1325
    %v1335 = vadd.f32 %v1296, %v1327
    %v1336 = vadd.f32 %v1297, %v1328
    %v1337 = vadd.f32 %v1298, %v1329
    %v1338 = vadd.f32 %v1299, %v1330
    %v1339 = vadd.f32 %v1300, %v1331
    %v1340 = vadd.f32 %v1301, %v1332
    %v1341 = vadd.f32 %v1302, %v1333
    %v1342 = vadd.f32 %v1303, %v1334
    %v1343 = vld [vmem:[#allocation2 + $0x107] sm:$0xff]
    %v1344 = vld [vmem:[#allocation2 + $0x10f] sm:$0xff]
    %v1345 = vmul.f32 %v1236, %v236
    %v1346 = vmul.f32 %v1237, %v237
    %v1347 = vmul.f32 %v1238, %v238
    %v1348 = vmul.f32 %v1239, %v239
    %v1349 = vmul.f32 %v1240, %v240
    %v1350 = vmul.f32 %v1241, %v241
    %v1351 = vmul.f32 %v1343, %v242
    %v1352 = vmul.f32 %v1344, %v243
    %v1353 = vld [vmem:[%s381] sm:$0x1]
    %v1355 = vlaneseq
    %v1356 = vshrl.u32 %v1355, 7
    %v1357 = vsub.s32 0, %v1356
    %v1358 = vrot.slane %v1353, %v1357
    %v1360 = vmul.f32 %v1345, %v1358
    %v1361 = vmul.f32 %v1346, %v1358
    %v1362 = vmul.f32 %v1347, %v1358
    %v1363 = vmul.f32 %v1348, %v1358
    %v1364 = vmul.f32 %v1349, %v1358
    %v1365 = vmul.f32 %v1350, %v1358
    %v1366 = vmul.f32 %v1351, %v1358
    %v1367 = vmul.f32 %v1352, %v1358
    %v1368 = vadd.f32 %v1335, %v1360
    %v1369 = vadd.f32 %v1336, %v1361
    %v1370 = vadd.f32 %v1337, %v1362
    %v1371 = vadd.f32 %v1338, %v1363
    %v1372 = vadd.f32 %v1339, %v1364
    %v1373 = vadd.f32 %v1340, %v1365
    %v1374 = vadd.f32 %v1341, %v1366
    %v1375 = vadd.f32 %v1342, %v1367
    %v1376 = vld [vmem:[#allocation2 + $0x108] sm:$0xff]
    %v1377 = vld [vmem:[#allocation2 + $0x110] sm:$0xff]
    %v1378 = vld [vmem:[%s407] sm:$0x1]
    %v1380 = vlaneseq
    %v1381 = vshrl.u32 %v1380, 7
    %v1382 = vsub.s32 0, %v1381
    %v1383 = vrot.slane %v1378, %v1382
    %v1385 = vmul.f32 %v1275, %v1383
    %v1386 = vmul.f32 %v1276, %v1383
    %v1387 = vmul.f32 %v1277, %v1383
    %v1388 = vmul.f32 %v1278, %v1383
    %v1389 = vmul.f32 %v1279, %v1383
    %v1390 = vmul.f32 %v1280, %v1383
    %v1391 = vmul.f32 %v1376, %v1383
    %v1392 = vmul.f32 %v1377, %v1383
    %v1393 = vadd.f32 %v1368, %v1385
    %v1394 = vadd.f32 %v1369, %v1386
    %v1395 = vadd.f32 %v1370, %v1387
    %v1396 = vadd.f32 %v1371, %v1388
    %v1397 = vadd.f32 %v1372, %v1389
    %v1398 = vadd.f32 %v1373, %v1390
    %v1399 = vadd.f32 %v1374, %v1391
    %v1400 = vadd.f32 %v1375, %v1392
    %v1401 = vld [vmem:[#allocation2 + $0x109] sm:$0xff]
    %v1402 = vld [vmem:[#allocation2 + $0x111] sm:$0xff]
    %v1403 = vmul.f32 %v1306, %v252
    %v1404 = vmul.f32 %v1307, %v253
    %v1405 = vmul.f32 %v1308, %v254
    %v1406 = vmul.f32 %v1309, %v255
    %v1407 = vmul.f32 %v1310, %v256
    %v1408 = vmul.f32 %v1311, %v257
    %v1409 = vmul.f32 %v1401, %v258
    %v1410 = vmul.f32 %v1402, %v259
    %v1411 = vld [vmem:[%s441] sm:$0x1]
    %v1413 = vlaneseq
    %v1414 = vshrl.u32 %v1413, 7
    %v1415 = vsub.s32 0, %v1414
    %v1416 = vrot.slane %v1411, %v1415
    %v1418 = vmul.f32 %v1403, %v1416
    %v1419 = vmul.f32 %v1404, %v1416
    %v1420 = vmul.f32 %v1405, %v1416
    %v1421 = vmul.f32 %v1406, %v1416
    %v1422 = vmul.f32 %v1407, %v1416
    %v1423 = vmul.f32 %v1408, %v1416
    %v1424 = vmul.f32 %v1409, %v1416
    %v1425 = vmul.f32 %v1410, %v1416
    %v1426 = vadd.f32 %v1393, %v1418
    %v1427 = vadd.f32 %v1394, %v1419
    %v1428 = vadd.f32 %v1395, %v1420
    %v1429 = vadd.f32 %v1396, %v1421
    %v1430 = vadd.f32 %v1397, %v1422
    %v1431 = vadd.f32 %v1398, %v1423
    %v1432 = vadd.f32 %v1399, %v1424
    %v1433 = vadd.f32 %v1400, %v1425
    %v1434 = vld [vmem:[#allocation2 + $0x117] sm:$0xff]
    %v1435 = vld [vmem:[#allocation2 + $0x11f] sm:$0xff]
    %v1436 = vmul.f32 %v1238, %v236
    %v1437 = vmul.f32 %v1239, %v237
    %v1438 = vmul.f32 %v1240, %v238
    %v1439 = vmul.f32 %v1241, %v239
    %v1440 = vmul.f32 %v1343, %v240
    %v1441 = vmul.f32 %v1344, %v241
    %v1442 = vmul.f32 %v1434, %v242
    %v1443 = vmul.f32 %v1435, %v243
    %v1444 = vld [vmem:[%s475] sm:$0x1]
    %v1446 = vlaneseq
    %v1447 = vshrl.u32 %v1446, 7
    %v1448 = vsub.s32 0, %v1447
    %v1449 = vrot.slane %v1444, %v1448
    %v1451 = vmul.f32 %v1436, %v1449
    %v1452 = vmul.f32 %v1437, %v1449
    %v1453 = vmul.f32 %v1438, %v1449
    %v1454 = vmul.f32 %v1439, %v1449
    %v1455 = vmul.f32 %v1440, %v1449
    %v1456 = vmul.f32 %v1441, %v1449
    %v1457 = vmul.f32 %v1442, %v1449
    %v1458 = vmul.f32 %v1443, %v1449
    %v1459 = vadd.f32 %v1426, %v1451
    %v1460 = vadd.f32 %v1427, %v1452
    %v1461 = vadd.f32 %v1428, %v1453
    %v1462 = vadd.f32 %v1429, %v1454
    %v1463 = vadd.f32 %v1430, %v1455
    %v1464 = vadd.f32 %v1431, %v1456
    %v1465 = vadd.f32 %v1432, %v1457
    %v1466 = vadd.f32 %v1433, %v1458
    %v1467 = vld [vmem:[#allocation2 + $0x118] sm:$0xff]
    %v1468 = vld [vmem:[#allocation2 + $0x120] sm:$0xff]
    %v1469 = vld [vmem:[%s501] sm:$0x1]
    %v1471 = vlaneseq
    %v1472 = vshrl.u32 %v1471, 7
    %v1473 = vsub.s32 0, %v1472
    %v1474 = vrot.slane %v1469, %v1473
    %v1476 = vmul.f32 %v1277, %v1474
    %v1477 = vmul.f32 %v1278, %v1474
    %v1478 = vmul.f32 %v1279, %v1474
    %v1479 = vmul.f32 %v1280, %v1474
    %v1480 = vmul.f32 %v1376, %v1474
    %v1481 = vmul.f32 %v1377, %v1474
    %v1482 = vmul.f32 %v1467, %v1474
    %v1483 = vmul.f32 %v1468, %v1474
    %v1484 = vadd.f32 %v1459, %v1476
    %v1485 = vadd.f32 %v1460, %v1477
    %v1486 = vadd.f32 %v1461, %v1478
    %v1487 = vadd.f32 %v1462, %v1479
    %v1488 = vadd.f32 %v1463, %v1480
    %v1489 = vadd.f32 %v1464, %v1481
    %v1490 = vadd.f32 %v1465, %v1482
    %v1491 = vadd.f32 %v1466, %v1483
    %v1492 = vld [vmem:[#allocation2 + $0x119] sm:$0xff]
    %v1493 = vld [vmem:[#allocation2 + $0x121] sm:$0xff]
    %v1494 = vmul.f32 %v1308, %v252
    %v1495 = vmul.f32 %v1309, %v253
    %v1496 = vmul.f32 %v1310, %v254
    %v1497 = vmul.f32 %v1311, %v255
    %v1498 = vmul.f32 %v1401, %v256
    %v1499 = vmul.f32 %v1402, %v257
    %v1500 = vmul.f32 %v1492, %v258
    %v1501 = vmul.f32 %v1493, %v259
    %v1502 = vld [vmem:[%s535] sm:$0x1]
    %v1504 = vlaneseq
    %v1505 = vshrl.u32 %v1504, 7
    %v1506 = vsub.s32 0, %v1505
    %v1507 = vrot.slane %v1502, %v1506
    %v1509 = vmul.f32 %v1494, %v1507
    %v1510 = vmul.f32 %v1495, %v1507
    %v1511 = vmul.f32 %v1496, %v1507
    %v1512 = vmul.f32 %v1497, %v1507
    %v1513 = vmul.f32 %v1498, %v1507
    %v1514 = vmul.f32 %v1499, %v1507
    %v1515 = vmul.f32 %v1500, %v1507
    %v1516 = vmul.f32 %v1501, %v1507
    %v1517 = vadd.f32 %v1484, %v1509
    %v1518 = vadd.f32 %v1485, %v1510
    %v1519 = vadd.f32 %v1486, %v1511
    %v1520 = vadd.f32 %v1487, %v1512
    %v1521 = vadd.f32 %v1488, %v1513
    %v1522 = vadd.f32 %v1489, %v1514
    %v1523 = vadd.f32 %v1490, %v1515
    %v1524 = vadd.f32 %v1491, %v1516
    %v1525 = vld [vmem:[%s2] sm:$0x1]
    %v1527 = vlaneseq
    %v1528 = vshrl.u32 %v1527, 7
    %v1529 = vsub.s32 0, %v1528
    %v1530 = vrot.slane %v1525, %v1529
    %v1532 = vadd.f32 %v1517, %v1530
    %v1533 = vadd.f32 %v1518, %v1530
    %v1534 = vadd.f32 %v1519, %v1530
    %v1535 = vadd.f32 %v1520, %v1530
    %v1536 = vadd.f32 %v1521, %v1530
    %v1537 = vadd.f32 %v1522, %v1530
    %v1538 = vadd.f32 %v1523, %v1530
    %v1539 = vadd.f32 %v1524, %v1530
    %v1540 = vmax.f32 %v1532, 0.0
    %v1541 = vmax.f32 %v1533, 0.0
    %v1542 = vmax.f32 %v1534, 0.0
    %v1543 = vmax.f32 %v1535, 0.0
    %v1544 = vmax.f32 %v1536, 0.0
    %v1545 = vmax.f32 %v1537, 0.0
    %v1546 = vmax.f32 %v1538, 0.0
    %v1547 = vmax.f32 %v1539, 0.0
    %1548 = vst.msk [vmem:[#allocation3 + $0xc0] sm:$0xff] %vm172, %v1540
    %1549 = vst.msk [vmem:[#allocation3 + $0xc8] sm:$0xff] %vm172, %v1541
    %1550 = vst.msk [vmem:[#allocation3 + $0xd0] sm:$0xff] %vm172, %v1542
    %1551 = vst.msk [vmem:[#allocation3 + $0xd8] sm:$0xff] %vm172, %v1543
    %1552 = vst.msk [vmem:[#allocation3 + $0xe0] sm:$0xff] %vm172, %v1544
    %1553 = vst.msk [vmem:[#allocation3 + $0xe8] sm:$0xff] %vm172, %v1545
    %1554 = vst.msk [vmem:[#allocation3 + $0xf0] sm:$0xff] %vm172, %v1546
    %1555 = vst.msk [vmem:[#allocation3 + $0xf8] sm:$0xff] %vm172, %v1547
    %1556 = vst.msk [vmem:[#allocation3 + $0x100] sm:$0xff] %vm172, 0.0
    %1557 = vst.msk [vmem:[#allocation3 + $0x108] sm:$0xff] %vm172, 0.0
    %1558 = vst.msk [vmem:[#allocation3 + $0x110] sm:$0xff] %vm172, 0.0
    %v1559 = vld [vmem:[#allocation3] sm:$0xff]
    %v1560 = vld [vmem:[#allocation3 + $0x8] sm:$0xff]
    %v1561 = vld [vmem:[#allocation3 + $0x10] sm:$0xff]
    %v1562 = vld [vmem:[#allocation3 + $0x18] sm:$0xff]
    %v1563 = vld [vmem:[#allocation3 + $0x20] sm:$0xff]
    %v1564 = vld [vmem:[#allocation3 + $0x28] sm:$0xff]
    %v1565 = vld [vmem:[#allocation3 + $0x30] sm:$0xff]
    %v1566 = vld [vmem:[#allocation3 + $0x38] sm:$0xff]
    %v1567 = vld [vmem:[#allocation3 + $0x1] sm:$0xff]
    %v1568 = vld [vmem:[#allocation3 + $0x9] sm:$0xff]
    %v1569 = vld [vmem:[#allocation3 + $0x11] sm:$0xff]
    %v1570 = vld [vmem:[#allocation3 + $0x19] sm:$0xff]
    %v1571 = vld [vmem:[#allocation3 + $0x21] sm:$0xff]
    %v1572 = vld [vmem:[#allocation3 + $0x29] sm:$0xff]
    %v1573 = vld [vmem:[#allocation3 + $0x31] sm:$0xff]
    %v1574 = vld [vmem:[#allocation3 + $0x39] sm:$0xff]
    %v1575 = vmax.f32 %v1559, %v1567
    %v1576 = vmax.f32 %v1560, %v1568
    %v1577 = vmax.f32 %v1561, %v1569
    %v1578 = vmax.f32 %v1562, %v1570
    %v1579 = vmax.f32 %v1563, %v1571
    %v1580 = vmax.f32 %v1564, %v1572
    %v1581 = vmax.f32 %v1565, %v1573
    %v1582 = vmax.f32 %v1566, %v1574
    %v1583 = vld [vmem:[#allocation3 + $0x40] sm:$0xff]
    %v1584 = vld [vmem:[#allocation3 + $0x48] sm:$0xff]
    %v1585 = vld [vmem:[#allocation3 + $0x41] sm:$0xff]
    %v1586 = vld [vmem:[#allocation3 + $0x49] sm:$0xff]
    %v1587 = vmax.f32 %v1583, %v1585
    %v1588 = vmax.f32 %v1584, %v1586
    %v1589 = vmax.f32 %v1575, %v1577
    %v1590 = vmax.f32 %v1576, %v1578
    %v1591 = vmax.f32 %v1577, %v1579
    %v1592 = vmax.f32 %v1578, %v1580
    %v1593 = vmax.f32 %v1579, %v1581
    %v1594 = vmax.f32 %v1580, %v1582
    %v1595 = vmax.f32 %v1581, %v1587
    %v1596 = vmax.f32 %v1582, %v1588
    %1597 = vst.msk [vmem:[#allocation2] sm:$0xff] %vm172, %v1589
    %1598 = vst.msk [vmem:[#allocation2 + $0x8] sm:$0xff] %vm172, %v1590
    %1599 = vst.msk [vmem:[#allocation2 + $0x10] sm:$0xff] %vm172, %v1591
    %1600 = vst.msk [vmem:[#allocation2 + $0x18] sm:$0xff] %vm172, %v1592
    %1601 = vst.msk [vmem:[#allocation2 + $0x20] sm:$0xff] %vm172, %v1593
    %1602 = vst.msk [vmem:[#allocation2 + $0x28] sm:$0xff] %vm172, %v1594
    %1603 = vst.msk [vmem:[#allocation2 + $0x30] sm:$0xff] %vm172, %v1595
    %1604 = vst.msk [vmem:[#allocation2 + $0x38] sm:$0xff] %vm172, %v1596
    %v1605 = vld [vmem:[#allocation3 + $0x40] sm:$0xff]
    %v1606 = vld [vmem:[#allocation3 + $0x48] sm:$0xff]
    %v1607 = vld [vmem:[#allocation3 + $0x50] sm:$0xff]
    %v1608 = vld [vmem:[#allocation3 + $0x58] sm:$0xff]
    %v1609 = vld [vmem:[#allocation3 + $0x60] sm:$0xff]
    %v1610 = vld [vmem:[#allocation3 + $0x68] sm:$0xff]
    %v1611 = vld [vmem:[#allocation3 + $0x70] sm:$0xff]
    %v1612 = vld [vmem:[#allocation3 + $0x78] sm:$0xff]
    %v1613 = vld [vmem:[#allocation3 + $0x41] sm:$0xff]
    %v1614 = vld [vmem:[#allocation3 + $0x49] sm:$0xff]
    %v1615 = vld [vmem:[#allocation3 + $0x51] sm:$0xff]
    %v1616 = vld [vmem:[#allocation3 + $0x59] sm:$0xff]
    %v1617 = vld [vmem:[#allocation3 + $0x61] sm:$0xff]
    %v1618 = vld [vmem:[#allocation3 + $0x69] sm:$0xff]
    %v1619 = vld [vmem:[#allocation3 + $0x71] sm:$0xff]
    %v1620 = vld [vmem:[#allocation3 + $0x79] sm:$0xff]
    %v1621 = vmax.f32 %v1605, %v1613
    %v1622 = vmax.f32 %v1606, %v1614
    %v1623 = vmax.f32 %v1607, %v1615
    %v1624 = vmax.f32 %v1608, %v1616
    %v1625 = vmax.f32 %v1609, %v1617
    %v1626 = vmax.f32 %v1610, %v1618
    %v1627 = vmax.f32 %v1611, %v1619
    %v1628 = vmax.f32 %v1612, %v1620
    %v1629 = vld [vmem:[#allocation3 + $0x80] sm:$0xff]
    %v1630 = vld [vmem:[#allocation3 + $0x88] sm:$0xff]
    %v1631 = vld [vmem:[#allocation3 + $0x81] sm:$0xff]
    %v1632 = vld [vmem:[#allocation3 + $0x89] sm:$0xff]
    %v1633 = vmax.f32 %v1629, %v1631
    %v1634 = vmax.f32 %v1630, %v1632
    %v1635 = vmax.f32 %v1621, %v1623
    %v1636 = vmax.f32 %v1622, %v1624
    %v1637 = vmax.f32 %v1623, %v1625
    %v1638 = vmax.f32 %v1624, %v1626
    %v1639 = vmax.f32 %v1625, %v1627
    %v1640 = vmax.f32 %v1626, %v1628
    %v1641 = vmax.f32 %v1627, %v1633
    %v1642 = vmax.f32 %v1628, %v1634
    %1643 = vst.msk [vmem:[#allocation2 + $0x40] sm:$0xff] %vm172, %v1635
    %1644 = vst.msk [vmem:[#allocation2 + $0x48] sm:$0xff] %vm172, %v1636
    %1645 = vst.msk [vmem:[#allocation2 + $0x50] sm:$0xff] %vm172, %v1637
    %1646 = vst.msk [vmem:[#allocation2 + $0x58] sm:$0xff] %vm172, %v1638
    %1647 = vst.msk [vmem:[#allocation2 + $0x60] sm:$0xff] %vm172, %v1639
    %1648 = vst.msk [vmem:[#allocation2 + $0x68] sm:$0xff] %vm172, %v1640
    %1649 = vst.msk [vmem:[#allocation2 + $0x70] sm:$0xff] %vm172, %v1641
    %1650 = vst.msk [vmem:[#allocation2 + $0x78] sm:$0xff] %vm172, %v1642
    %v1651 = vld [vmem:[#allocation3 + $0x80] sm:$0xff]
    %v1652 = vld [vmem:[#allocation3 + $0x88] sm:$0xff]
    %v1653 = vld [vmem:[#allocation3 + $0x90] sm:$0xff]
    %v1654 = vld [vmem:[#allocation3 + $0x98] sm:$0xff]
    %v1655 = vld [vmem:[#allocation3 + $0xa0] sm:$0xff]
    %v1656 = vld [vmem:[#allocation3 + $0xa8] sm:$0xff]
    %v1657 = vld [vmem:[#allocation3 + $0xb0] sm:$0xff]
    %v1658 = vld [vmem:[#allocation3 + $0xb8] sm:$0xff]
    %v1659 = vld [vmem:[#allocation3 + $0x81] sm:$0xff]
    %v1660 = vld [vmem:[#allocation3 + $0x89] sm:$0xff]
    %v1661 = vld [vmem:[#allocation3 + $0x91] sm:$0xff]
    %v1662 = vld [vmem:[#allocation3 + $0x99] sm:$0xff]
    %v1663 = vld [vmem:[#allocation3 + $0xa1] sm:$0xff]
    %v1664 = vld [vmem:[#allocation3 + $0xa9] sm:$0xff]
    %v1665 = vld [vmem:[#allocation3 + $0xb1] sm:$0xff]
    %v1666 = vld [vmem:[#allocation3 + $0xb9] sm:$0xff]
    %v1667 = vmax.f32 %v1651, %v1659
    %v1668 = vmax.f32 %v1652, %v1660
    %v1669 = vmax.f32 %v1653, %v1661
    %v1670 = vmax.f32 %v1654, %v1662
    %v1671 = vmax.f32 %v1655, %v1663
    %v1672 = vmax.f32 %v1656, %v1664
    %v1673 = vmax.f32 %v1657, %v1665
    %v1674 = vmax.f32 %v1658, %v1666
    %v1675 = vld [vmem:[#allocation3 + $0xc0] sm:$0xff]
    %v1676 = vld [vmem:[#allocation3 + $0xc8] sm:$0xff]
    %v1677 = vld [vmem:[#allocation3 + $0xc1] sm:$0xff]
    %v1678 = vld [vmem:[#allocation3 + $0xc9] sm:$0xff]
    %v1679 = vmax.f32 %v1675, %v1677
    %v1680 = vmax.f32 %v1676, %v1678
    %v1681 = vmax.f32 %v1667, %v1669
    %v1682 = vmax.f32 %v1668, %v1670
    %v1683 = vmax.f32 %v1669, %v1671
    %v1684 = vmax.f32 %v1670, %v1672
    %v1685 = vmax.f32 %v1671, %v1673
    %v1686 = vmax.f32 %v1672, %v1674
    %v1687 = vmax.f32 %v1673, %v1679
    %v1688 = vmax.f32 %v1674, %v1680
    %1689 = vst.msk [vmem:[#allocation2 + $0x80] sm:$0xff] %vm172, %v1681
    %1690 = vst.msk [vmem:[#allocation2 + $0x88] sm:$0xff] %vm172, %v1682
    %1691 = vst.msk [vmem:[#allocation2 + $0x90] sm:$0xff] %vm172, %v1683
    %1692 = vst.msk [vmem:[#allocation2 + $0x98] sm:$0xff] %vm172, %v1684
    %1693 = vst.msk [vmem:[#allocation2 + $0xa0] sm:$0xff] %vm172, %v1685
    %1694 = vst.msk [vmem:[#allocation2 + $0xa8] sm:$0xff] %vm172, %v1686
    %1695 = vst.msk [vmem:[#allocation2 + $0xb0] sm:$0xff] %vm172, %v1687
    %1696 = vst.msk [vmem:[#allocation2 + $0xb8] sm:$0xff] %vm172, %v1688
    %v1697 = vld [vmem:[#allocation3 + $0xc0] sm:$0xff]
    %v1698 = vld [vmem:[#allocation3 + $0xc8] sm:$0xff]
    %v1699 = vld [vmem:[#allocation3 + $0xd0] sm:$0xff]
    %v1700 = vld [vmem:[#allocation3 + $0xd8] sm:$0xff]
    %v1701 = vld [vmem:[#allocation3 + $0xe0] sm:$0xff]
    %v1702 = vld [vmem:[#allocation3 + $0xe8] sm:$0xff]
    %v1703 = vld [vmem:[#allocation3 + $0xf0] sm:$0xff]
    %v1704 = vld [vmem:[#allocation3 + $0xf8] sm:$0xff]
    %v1705 = vld [vmem:[#allocation3 + $0xc1] sm:$0xff]
    %v1706 = vld [vmem:[#allocation3 + $0xc9] sm:$0xff]
    %v1707 = vld [vmem:[#allocation3 + $0xd1] sm:$0xff]
    %v1708 = vld [vmem:[#allocation3 + $0xd9] sm:$0xff]
    %v1709 = vld [vmem:[#allocation3 + $0xe1] sm:$0xff]
    %v1710 = vld [vmem:[#allocation3 + $0xe9] sm:$0xff]
    %v1711 = vld [vmem:[#allocation3 + $0xf1] sm:$0xff]
    %v1712 = vld [vmem:[#allocation3 + $0xf9] sm:$0xff]
    %v1713 = vmax.f32 %v1697, %v1705
    %v1714 = vmax.f32 %v1698, %v1706
    %v1715 = vmax.f32 %v1699, %v1707
    %v1716 = vmax.f32 %v1700, %v1708
    %v1717 = vmax.f32 %v1701, %v1709
    %v1718 = vmax.f32 %v1702, %v1710
    %v1719 = vmax.f32 %v1703, %v1711
    %v1720 = vmax.f32 %v1704, %v1712
    %v1721 = vld [vmem:[#allocation3 + $0x100] sm:$0xff]
    %v1722 = vld [vmem:[#allocation3 + $0x108] sm:$0xff]
    %v1723 = vld [vmem:[#allocation3 + $0x101] sm:$0xff]
    %v1724 = vld [vmem:[#allocation3 + $0x109] sm:$0xff]
    %v1725 = vmax.f32 %v1721, %v1723
    %v1726 = vmax.f32 %v1722, %v1724
    %v1727 = vmax.f32 %v1713, %v1715
    %v1728 = vmax.f32 %v1714, %v1716
    %v1729 = vmax.f32 %v1715, %v1717
    %v1730 = vmax.f32 %v1716, %v1718
    %v1731 = vmax.f32 %v1717, %v1719
    %v1732 = vmax.f32 %v1718, %v1720
    %v1733 = vmax.f32 %v1719, %v1725
    %v1734 = vmax.f32 %v1720, %v1726
    %1735 = vst.msk [vmem:[#allocation2 + $0xc0] sm:$0xff] %vm172, %v1727
    %1736 = vst.msk [vmem:[#allocation2 + $0xc8] sm:$0xff] %vm172, %v1728
    %1737 = vst.msk [vmem:[#allocation2 + $0xd0] sm:$0xff] %vm172, %v1729
    %1738 = vst.msk [vmem:[#allocation2 + $0xd8] sm:$0xff] %vm172, %v1730
    %1739 = vst.msk [vmem:[#allocation2 + $0xe0] sm:$0xff] %vm172, %v1731
    %1740 = vst.msk [vmem:[#allocation2 + $0xe8] sm:$0xff] %vm172, %v1732
    %1741 = vst.msk [vmem:[#allocation2 + $0xf0] sm:$0xff] %vm172, %v1733
    %1742 = vst.msk [vmem:[#allocation2 + $0xf8] sm:$0xff] %vm172, %v1734
    %v1743 = vld [vmem:[%s9] sm:$0xff]
    %v1744 = vld [vmem:[%s9 + $0x8] sm:$0xff]
    %v1745 = vld [vmem:[%s9 + $0x10] sm:$0xff]
    %v1746 = vld [vmem:[%s9 + $0x18] sm:$0xff]
    %v1747 = vld [vmem:[%s9 + $0x20] sm:$0xff]
    %v1748 = vld [vmem:[%s9 + $0x28] sm:$0xff]
    %v1749 = vld [vmem:[%s9 + $0x30] sm:$0xff]
    %v1750 = vld [vmem:[%s9 + $0x38] sm:$0xff]
    %v1751 = vld [vmem:[%s9 + $0x40] sm:$0xff]
    %v1752 = vld [vmem:[%s9 + $0x48] sm:$0xff]
    %v1753 = vld [vmem:[%s9 + $0x50] sm:$0xff]
    %v1754 = vld [vmem:[%s9 + $0x58] sm:$0xff]
    %v1755 = vld [vmem:[%s9 + $0x60] sm:$0xff]
    %v1756 = vld [vmem:[%s9 + $0x68] sm:$0xff]
    %v1757 = vld [vmem:[%s9 + $0x70] sm:$0xff]
    %v1758 = vld [vmem:[%s9 + $0x78] sm:$0xff]
    %v1759 = vld [vmem:[#allocation2] sm:$0xff]
    %v1760 = vld [vmem:[#allocation2 + $0x8] sm:$0xff]
    %v1761 = vld [vmem:[#allocation2 + $0x10] sm:$0xff]
    %v1762 = vld [vmem:[#allocation2 + $0x18] sm:$0xff]
    %v1763 = vld [vmem:[#allocation2 + $0x20] sm:$0xff]
    %v1764 = vld [vmem:[#allocation2 + $0x28] sm:$0xff]
    %v1765 = vld [vmem:[#allocation2 + $0x30] sm:$0xff]
    %v1766 = vld [vmem:[#allocation2 + $0x38] sm:$0xff]
    %v1767 = vld [vmem:[#allocation2 + $0x40] sm:$0xff]
    %v1768 = vld [vmem:[#allocation2 + $0x48] sm:$0xff]
    %v1769 = vld [vmem:[#allocation2 + $0x50] sm:$0xff]
    %v1770 = vld [vmem:[#allocation2 + $0x58] sm:$0xff]
    %v1771 = vld [vmem:[#allocation2 + $0x60] sm:$0xff]
    %v1772 = vld [vmem:[#allocation2 + $0x68] sm:$0xff]
    %v1773 = vld [vmem:[#allocation2 + $0x70] sm:$0xff]
    %v1774 = vld [vmem:[#allocation2 + $0x78] sm:$0xff]
    %v1775 = vld [vmem:[#allocation2 + $0x80] sm:$0xff]
    %v1776 = vld [vmem:[#allocation2 + $0x88] sm:$0xff]
    %v1777 = vld [vmem:[#allocation2 + $0x90] sm:$0xff]
    %v1778 = vld [vmem:[#allocation2 + $0x98] sm:$0xff]
    %v1779 = vld [vmem:[#allocation2 + $0xa0] sm:$0xff]
    %v1780 = vld [vmem:[#allocation2 + $0xa8] sm:$0xff]
    %v1781 = vld [vmem:[#allocation2 + $0xb0] sm:$0xff]
    %v1782 = vld [vmem:[#allocation2 + $0xb8] sm:$0xff]
    %v1783 = vld [vmem:[#allocation2 + $0xc0] sm:$0xff]
    %v1784 = vld [vmem:[#allocation2 + $0xc8] sm:$0xff]
    %v1785 = vld [vmem:[#allocation2 + $0xd0] sm:$0xff]
    %v1786 = vld [vmem:[#allocation2 + $0xd8] sm:$0xff]
    %v1787 = vld [vmem:[#allocation2 + $0xe0] sm:$0xff]
    %v1788 = vld [vmem:[#allocation2 + $0xe8] sm:$0xff]
    %v1789 = vld [vmem:[#allocation2 + $0xf0] sm:$0xff]
    %v1790 = vld [vmem:[#allocation2 + $0xf8] sm:$0xff]
    %1791 = vmatprep.subr.mxu0 0.0
    %1792 = vmatpush1.msra.mxu0 %v1759
    %1793 = vmatprep.subr.mxu0 0.0
    %1794 = vmatpush1.msra.mxu0 %v1760
    %1795 = vmatprep.subr.mxu0 0.0
    %1796 = vmatpush1.msra.mxu0 %v1761
    %1797 = vmatprep.subr.mxu0 0.0
    %1798 = vmatpush1.msra.mxu0 %v1762
    %1799 = vmatprep.subr.mxu0 0.0
    %1800 = vmatpush1.msra.mxu0 %v1763
    %1801 = vmatprep.subr.mxu0 0.0
    %1802 = vmatpush1.msra.mxu0 %v1764
    %1803 = vmatprep.subr.mxu0 0.0
    %1804 = vmatpush1.msra.mxu0 %v1765
    %1805 = vmatprep.subr.mxu0 0.0
    %1806 = vmatpush1.msra.mxu0 %v1766
    %1807 = vmatprep.subr.mxu0 0.0
    %1808 = vmatpush1.msra.mxu0 %v1767
    %1809 = vmatprep.subr.mxu0 0.0
    %1810 = vmatpush1.msra.mxu0 %v1768
    %1811 = vmatprep.subr.mxu0 0.0
    %1812 = vmatpush1.msra.mxu0 %v1769
    %1813 = vmatprep.subr.mxu0 0.0
    %1814 = vmatpush1.msra.mxu0 %v1770
    %1815 = vmatprep.subr.mxu0 0.0
    %1816 = vmatpush1.msra.mxu0 %v1771
    %1817 = vmatprep.subr.mxu0 0.0
    %1818 = vmatpush1.msra.mxu0 %v1772
    %1819 = vmatprep.subr.mxu0 0.0
    %1820 = vmatpush1.msra.mxu0 %v1773
    %1821 = vmatprep.subr.mxu0 0.0
    %1822 = vmatpush1.msra.mxu0 %v1774
    %1823 = vmatprep.subr.mxu0 0.0
    %1824 = vmatpush1.msra.mxu0 %v1775
    %1825 = vmatprep.subr.mxu0 0.0
    %1826 = vmatpush1.msra.mxu0 %v1776
    %1827 = vmatprep.subr.mxu0 0.0
    %1828 = vmatpush1.msra.mxu0 %v1777
    %1829 = vmatprep.subr.mxu0 0.0
    %1830 = vmatpush1.msra.mxu0 %v1778
    %1831 = vmatprep.subr.mxu0 0.0
    %1832 = vmatpush1.msra.mxu0 %v1779
    %1833 = vmatprep.subr.mxu0 0.0
    %1834 = vmatpush1.msra.mxu0 %v1780
    %1835 = vmatprep.subr.mxu0 0.0
    %1836 = vmatpush1.msra.mxu0 %v1781
    %1837 = vmatprep.subr.mxu0 0.0
    %1838 = vmatpush1.msra.mxu0 %v1782
    %1839 = vmatprep.subr.mxu0 0.0
    %1840 = vmatpush1.msra.mxu0 %v1783
    %1841 = vmatprep.subr.mxu0 0.0
    %1842 = vmatpush1.msra.mxu0 %v1784
    %1843 = vmatprep.subr.mxu0 0.0
    %1844 = vmatpush1.msra.mxu0 %v1785
    %1845 = vmatprep.subr.mxu0 0.0
    %1846 = vmatpush1.msra.mxu0 %v1786
    %1847 = vmatprep.subr.mxu0 0.0
    %1848 = vmatpush1.msra.mxu0 %v1787
    %1849 = vmatprep.subr.mxu0 0.0
    %1850 = vmatpush1.msra.mxu0 %v1788
    %1851 = vmatprep.subr.mxu0 0.0
    %1852 = vmatpush1.msra.mxu0 %v1789
    %1853 = vmatprep.subr.mxu0 0.0
    %1854 = vmatpush1.msra.mxu0 %v1790
    %1855 = vmatprep.mubr.f32.mxu0 %v1744
    %1856 = vmatmul.mubr.f32.gmra.mrb[0].mxu0 %v1743
    %v1857 = vpop.f32.mrb[0].mxu0
    %v1858 = vadd.f32 0.0, %v1857
    %v1859 = vpop.f32.mrb[0].mxu0
    %1860 = vmatprep.mubr.f32.mxu0 %v1746
    %1861 = vmatmul.mubr.f32.gmra.mrb[0].mxu0 %v1745
    %v1862 = vpop.f32.mrb[0].mxu0
    %v1863 = vadd.f32 0.0, %v1862
    %v1864 = vpop.f32.mrb[0].mxu0
    %1865 = vmatprep.mubr.f32.mxu0 %v1748
    %1866 = vmatmul.mubr.f32.gmra.mrb[0].mxu0 %v1747
    %v1867 = vpop.f32.mrb[0].mxu0
    %v1868 = vadd.f32 0.0, %v1867
    %v1869 = vpop.f32.mrb[0].mxu0
    %1870 = vmatprep.mubr.f32.mxu0 %v1750
    %1871 = vmatmul.mubr.f32.gmra.mrb[0].mxu0 %v1749
    %v1872 = vpop.f32.mrb[0].mxu0
    %v1873 = vadd.f32 0.0, %v1872
    %v1874 = vpop.f32.mrb[0].mxu0
    %1875 = vmatprep.mubr.f32.mxu0 %v1752
    %1876 = vmatmul.mubr.f32.gmra.mrb[0].mxu0 %v1751
    %v1877 = vpop.f32.mrb[0].mxu0
    %v1878 = vadd.f32 0.0, %v1877
    %v1879 = vpop.f32.mrb[0].mxu0
    %1880 = vmatprep.mubr.f32.mxu0 %v1754
    %1881 = vmatmul.mubr.f32.gmra.mrb[0].mxu0 %v1753
    %v1882 = vpop.f32.mrb[0].mxu0
    %v1883 = vadd.f32 0.0, %v1882
    %v1884 = vpop.f32.mrb[0].mxu0
    %1885 = vmatprep.mubr.f32.mxu0 %v1756
    %1886 = vmatmul.mubr.f32.gmra.mrb[0].mxu0 %v1755
    %v1887 = vpop.f32.mrb[0].mxu0
    %v1888 = vadd.f32 0.0, %v1887
    %v1889 = vpop.f32.mrb[0].mxu0
    %1890 = vmatprep.mubr.f32.mxu0 %v1758
    %1891 = vmatmul.mubr.f32.gmra.mrb[0].mxu0 %v1757
    %v1892 = vpop.f32.mrb[0].mxu0
    %v1893 = vadd.f32 0.0, %v1892
    %v1894 = vpop.f32.mrb[0].mxu0
    %1895 = vdwg.mxu0
    %1896 = vst.msk [vmem:[#allocation2 + $0x8] sm:$0xff] %vm172, 0.0
    %1897 = vst.msk [vmem:[#allocation2 + $0x10] sm:$0xff] %vm172, 0.0
    %1898 = vst.msk [vmem:[#allocation2 + $0x58] sm:$0xff] %vm172, 0.0
    %1899 = vst.msk [vmem:[#allocation2 + $0x60] sm:$0xff] %vm172, 0.0
    %1900 = vst.msk [vmem:[#allocation2 + $0x18] sm:$0xff] %vm172, %v1858
    %1901 = vst.msk [vmem:[#allocation2 + $0x20] sm:$0xff] %vm172, %v1863
    %1902 = vst.msk [vmem:[#allocation2 + $0x28] sm:$0xff] %vm172, %v1868
    %1903 = vst.msk [vmem:[#allocation2 + $0x30] sm:$0xff] %vm172, %v1873
    %1904 = vst.msk [vmem:[#allocation2 + $0x38] sm:$0xff] %vm172, %v1878
    %1905 = vst.msk [vmem:[#allocation2 + $0x40] sm:$0xff] %vm172, %v1883
    %1906 = vst.msk [vmem:[#allocation2 + $0x48] sm:$0xff] %vm172, %v1888
    %1907 = vst.msk [vmem:[#allocation2 + $0x50] sm:$0xff] %vm172, %v1893
    %v1908 = vld [vmem:[#allocation2 + $0x8] sm:$0xff]
    %v1909 = vld [vmem:[#allocation2 + $0x10] sm:$0xff]
    %v1910 = vld [vmem:[#allocation2 + $0x18] sm:$0xff]
    %v1911 = vld [vmem:[#allocation2 + $0x20] sm:$0xff]
    %v1912 = vld [vmem:[#allocation2 + $0x28] sm:$0xff]
    %v1913 = vld [vmem:[#allocation2 + $0x30] sm:$0xff]
    %v1914 = vld [vmem:[#allocation2 + $0x38] sm:$0xff]
    %v1915 = vld [vmem:[#allocation2 + $0x40] sm:$0xff]
    %v1916 = vld [vmem:[#allocation2 + $0x48] sm:$0xff]
    %v1917 = vld [vmem:[#allocation2 + $0x50] sm:$0xff]
    %v1918 = vld [vmem:[#allocation2 + $0x58] sm:$0xff]
    %v1919 = vld [vmem:[#allocation2 + $0x60] sm:$0xff]
    %v1920 = vld [vmem:[#allocation8] sm:$0xff]
    %v1921 = vld [vmem:[#allocation8 + $0x8] sm:$0xff]
    %v1922 = vld [vmem:[#allocation8 + $0x10] sm:$0xff]
    %v1923 = vld [vmem:[#allocation8 + $0x48] sm:$0xff]
    %v1924 = vld [vmem:[#allocation8 + $0x50] sm:$0xff]
    %v1925 = vld [vmem:[#allocation8 + $0x58] sm:$0xff]
    %v1926 = vld [vmem:[#allocation8 + $0x90] sm:$0xff]
    %v1927 = vld [vmem:[#allocation8 + $0x98] sm:$0xff]
    %v1928 = vld [vmem:[#allocation8 + $0xa0] sm:$0xff]
    %v1929 = vld [vmem:[#allocation8 + $0xd8] sm:$0xff]
    %v1930 = vld [vmem:[#allocation8 + $0xe0] sm:$0xff]
    %v1931 = vld [vmem:[#allocation8 + $0xe8] sm:$0xff]
    %v1932 = vld [vmem:[#allocation8 + $0x120] sm:$0xff]
    %v1933 = vld [vmem:[#allocation8 + $0x128] sm:$0xff]
    %v1934 = vld [vmem:[#allocation8 + $0x130] sm:$0xff]
    %v1935 = vld [vmem:[#allocation8 + $0x168] sm:$0xff]
    %v1936 = vld [vmem:[#allocation8 + $0x170] sm:$0xff]
    %v1937 = vld [vmem:[#allocation8 + $0x178] sm:$0xff]
    %v1938 = vld [vmem:[#allocation8 + $0x1b0] sm:$0xff]
    %v1939 = vld [vmem:[#allocation8 + $0x1b8] sm:$0xff]
    %v1940 = vld [vmem:[#allocation8 + $0x1c0] sm:$0xff]
    %v1941 = vld [vmem:[#allocation8 + $0x1f8] sm:$0xff]
    %v1942 = vld [vmem:[#allocation8 + $0x200] sm:$0xff]
    %v1943 = vld [vmem:[#allocation8 + $0x208] sm:$0xff]
    %v1945 = vsel %vm172, %v1908, 0
    %v1948 = vsel %vm172, %v1909, 0
    %v1951 = vsel %vm172, %v1910, 0
    %v1954 = vsel %vm172, %v1911, 0
    %v1957 = vsel %vm172, %v1912, 0
    %v1960 = vsel %vm172, %v1913, 0
    %v1963 = vsel %vm172, %v1914, 0
    %v1966 = vsel %vm172, %v1915, 0
    %v1969 = vsel %vm172, %v1916, 0
    %v1972 = vsel %vm172, %v1917, 0
    %v1975 = vsel %vm172, %v1918, 0
    %v1978 = vsel %vm172, %v1919, 0
    %1980 = vmatprep.subr.mxu0 %v1921
    %1981 = vmatpush1.msra.mxu0 %v1920
    %1982 = vmatprep.subr.mxu0 %v1924
    %1983 = vmatpush1.msra.mxu0 %v1923
    %1984 = vmatprep.subr.mxu0 %v1927
    %1985 = vmatpush1.msra.mxu0 %v1926
    %1986 = vmatprep.subr.mxu0 %v1930
    %1987 = vmatpush1.msra.mxu0 %v1929
    %1988 = vmatprep.subr.mxu0 %v1933
    %1989 = vmatpush1.msra.mxu0 %v1932
    %1990 = vmatprep.subr.mxu0 %v1936
    %1991 = vmatpush1.msra.mxu0 %v1935
    %1992 = vmatprep.subr.mxu0 %v1939
    %1993 = vmatpush1.msra.mxu0 %v1938
    %1994 = vmatprep.subr.mxu0 %v1942
    %1995 = vmatpush1.msra.mxu0 %v1941
    %1996 = vmatprep.subr.mxu0 0.0
    %1997 = vmatpush1.msra.mxu0 0.0
    %1998 = vmatprep.subr.mxu0 0.0
    %1999 = vmatpush1.msra.mxu0 0.0
    %2000 = vmatprep.subr.mxu0 0.0
    %2001 = vmatpush1.msra.mxu0 0.0
    %2002 = vmatprep.subr.mxu0 0.0
    %2003 = vmatpush1.msra.mxu0 0.0
    %2004 = vmatprep.subr.mxu0 0.0
    %2005 = vmatpush1.msra.mxu0 0.0
    %2006 = vmatprep.subr.mxu0 0.0
    %2007 = vmatpush1.msra.mxu0 0.0
    %2008 = vmatprep.subr.mxu0 0.0
    %2009 = vmatpush1.msra.mxu0 0.0
    %2010 = vmatprep.subr.mxu0 0.0
    %2011 = vmatpush1.msra.mxu0 0.0
    %2012 = vmatprep.subr.mxu0 0.0
    %2013 = vmatpush1.msra.mxu0 0.0
    %2014 = vmatprep.subr.mxu0 0.0
    %2015 = vmatpush1.msra.mxu0 0.0
    %2016 = vmatprep.subr.mxu0 0.0
    %2017 = vmatpush1.msra.mxu0 0.0
    %2018 = vmatprep.subr.mxu0 0.0
    %2019 = vmatpush1.msra.mxu0 0.0
    %2020 = vmatprep.subr.mxu0 0.0
    %2021 = vmatpush1.msra.mxu0 0.0
    %2022 = vmatprep.subr.mxu0 0.0
    %2023 = vmatpush1.msra.mxu0 0.0
    %2024 = vmatprep.subr.mxu0 0.0
    %2025 = vmatpush1.msra.mxu0 0.0
    %2026 = vmatprep.subr.mxu0 0.0
    %2027 = vmatpush1.msra.mxu0 0.0
    %2028 = vmatprep.subr.mxu0 0.0
    %2029 = vmatpush1.msra.mxu0 0.0
    %2030 = vmatprep.subr.mxu0 0.0
    %2031 = vmatpush1.msra.mxu0 0.0
    %2032 = vmatprep.subr.mxu0 0.0
    %2033 = vmatpush1.msra.mxu0 0.0
    %2034 = vmatprep.subr.mxu0 0.0
    %2035 = vmatpush1.msra.mxu0 0.0
    %2036 = vmatprep.subr.mxu0 0.0
    %2037 = vmatpush1.msra.mxu0 0.0
    %2038 = vmatprep.subr.mxu0 0.0
    %2039 = vmatpush1.msra.mxu0 0.0
    %2040 = vmatprep.subr.mxu0 0.0
    %2041 = vmatpush1.msra.mxu0 0.0
    %2042 = vmatprep.subr.mxu0 0.0
    %2043 = vmatpush1.msra.mxu0 0.0
    %2044 = vmatprep.mubr.f32.mxu0 0.0
    %2045 = vmatmul.mubr.f32.gmra.mrb[0].mxu0 %v1945
    %v2046 = vpop.f32.mrb[0].mxu0
    %v2047 = vadd.f32 0.0, %v2046
    %v2048 = vpop.f32.mrb[0].mxu0
    %v2049 = vadd.f32 0.0, %v2048
    %2050 = vmatprep.mubr.f32.mxu0 0.0
    %2051 = vmatmul.mubr.f32.gmra.mrb[0].mxu0 %v1948
    %v2052 = vpop.f32.mrb[0].mxu0
    %v2053 = vadd.f32 0.0, %v2052
    %v2054 = vpop.f32.mrb[0].mxu0
    %v2055 = vadd.f32 0.0, %v2054
    %2056 = vmatprep.mubr.f32.mxu0 0.0
    %2057 = vmatmul.mubr.f32.gmra.mrb[0].mxu0 %v1951
    %v2058 = vpop.f32.mrb[0].mxu0
    %v2059 = vadd.f32 0.0, %v2058
    %v2060 = vpop.f32.mrb[0].mxu0
    %v2061 = vadd.f32 0.0, %v2060
    %2062 = vmatprep.mubr.f32.mxu0 0.0
    %2063 = vmatmul.mubr.f32.gmra.mrb[0].mxu0 %v1954
    %v2064 = vpop.f32.mrb[0].mxu0
    %v2065 = vadd.f32 0.0, %v2064
    %v2066 = vpop.f32.mrb[0].mxu0
    %v2067 = vadd.f32 0.0, %v2066
    %2068 = vmatprep.mubr.f32.mxu0 0.0
    %2069 = vmatmul.mubr.f32.gmra.mrb[0].mxu0 %v1957
    %v2070 = vpop.f32.mrb[0].mxu0
    %v2071 = vadd.f32 0.0, %v2070
    %v2072 = vpop.f32.mrb[0].mxu0
    %v2073 = vadd.f32 0.0, %v2072
    %2074 = vmatprep.mubr.f32.mxu0 0.0
    %2075 = vmatmul.mubr.f32.gmra.mrb[0].mxu0 %v1960
    %v2076 = vpop.f32.mrb[0].mxu0
    %v2077 = vadd.f32 0.0, %v2076
    %v2078 = vpop.f32.mrb[0].mxu0
    %v2079 = vadd.f32 0.0, %v2078
    %2080 = vmatprep.mubr.f32.mxu0 0.0
    %2081 = vmatmul.mubr.f32.gmra.mrb[0].mxu0 %v1963
    %v2082 = vpop.f32.mrb[0].mxu0
    %v2083 = vadd.f32 0.0, %v2082
    %v2084 = vpop.f32.mrb[0].mxu0
    %v2085 = vadd.f32 0.0, %v2084
    %2086 = vmatprep.mubr.f32.mxu0 0.0
    %2087 = vmatmul.mubr.f32.gmra.mrb[0].mxu0 %v1966
    %v2088 = vpop.f32.mrb[0].mxu0
    %v2089 = vadd.f32 0.0, %v2088
    %v2090 = vpop.f32.mrb[0].mxu0
    %v2091 = vadd.f32 0.0, %v2090
    %2092 = vmatprep.mubr.f32.mxu0 0.0
    %2093 = vmatmul.mubr.f32.gmra.mrb[0].mxu0 %v1969
    %v2094 = vpop.f32.mrb[0].mxu0
    %v2095 = vadd.f32 0.0, %v2094
    %v2096 = vpop.f32.mrb[0].mxu0
    %v2097 = vadd.f32 0.0, %v2096
    %2098 = vmatprep.mubr.f32.mxu0 0.0
    %2099 = vmatmul.mubr.f32.gmra.mrb[0].mxu0 %v1972
    %v2100 = vpop.f32.mrb[0].mxu0
    %v2101 = vadd.f32 0.0, %v2100
    %v2102 = vpop.f32.mrb[0].mxu0
    %v2103 = vadd.f32 0.0, %v2102
    %2104 = vmatprep.mubr.f32.mxu0 0.0
    %2105 = vmatmul.mubr.f32.gmra.mrb[0].mxu0 %v1975
    %v2106 = vpop.f32.mrb[0].mxu0
    %v2107 = vadd.f32 0.0, %v2106
    %v2108 = vpop.f32.mrb[0].mxu0
    %v2109 = vadd.f32 0.0, %v2108
    %2110 = vmatprep.mubr.f32.mxu0 0.0
    %2111 = vmatmul.mubr.f32.gmra.mrb[0].mxu0 %v1978
    %v2112 = vpop.f32.mrb[0].mxu0
    %v2113 = vadd.f32 0.0, %v2112
    %v2114 = vpop.f32.mrb[0].mxu0
    %v2115 = vadd.f32 0.0, %v2114
    %2116 = vdwg.mxu0
    %2117 = vmatprep.subr.mxu0 0.0
    %2118 = vmatpush1.msra.mxu0 %v1922
    %2119 = vmatprep.subr.mxu0 0.0
    %2120 = vmatpush1.msra.mxu0 %v1925
    %2121 = vmatprep.subr.mxu0 0.0
    %2122 = vmatpush1.msra.mxu0 %v1928
    %2123 = vmatprep.subr.mxu0 0.0
    %2124 = vmatpush1.msra.mxu0 %v1931
    %2125 = vmatprep.subr.mxu0 0.0
    %2126 = vmatpush1.msra.mxu0 %v1934
    %2127 = vmatprep.subr.mxu0 0.0
    %2128 = vmatpush1.msra.mxu0 %v1937
    %2129 = vmatprep.subr.mxu0 0.0
    %2130 = vmatpush1.msra.mxu0 %v1940
    %2131 = vmatprep.subr.mxu0 0.0
    %2132 = vmatpush1.msra.mxu0 %v1943
    %2133 = vmatprep.subr.mxu0 0.0
    %2134 = vmatpush1.msra.mxu0 0.0
    %2135 = vmatprep.subr.mxu0 0.0
    %2136 = vmatpush1.msra.mxu0 0.0
    %2137 = vmatprep.subr.mxu0 0.0
    %2138 = vmatpush1.msra.mxu0 0.0
    %2139 = vmatprep.subr.mxu0 0.0
    %2140 = vmatpush1.msra.mxu0 0.0
    %2141 = vmatprep.subr.mxu0 0.0
    %2142 = vmatpush1.msra.mxu0 0.0
    %2143 = vmatprep.subr.mxu0 0.0
    %2144 = vmatpush1.msra.mxu0 0.0
    %2145 = vmatprep.subr.mxu0 0.0
    %2146 = vmatpush1.msra.mxu0 0.0
    %2147 = vmatprep.subr.mxu0 0.0
    %2148 = vmatpush1.msra.mxu0 0.0
    %2149 = vmatprep.subr.mxu0 0.0
    %2150 = vmatpush1.msra.mxu0 0.0
    %2151 = vmatprep.subr.mxu0 0.0
    %2152 = vmatpush1.msra.mxu0 0.0
    %2153 = vmatprep.subr.mxu0 0.0
    %2154 = vmatpush1.msra.mxu0 0.0
    %2155 = vmatprep.subr.mxu0 0.0
    %2156 = vmatpush1.msra.mxu0 0.0
    %2157 = vmatprep.subr.mxu0 0.0
    %2158 = vmatpush1.msra.mxu0 0.0
    %2159 = vmatprep.subr.mxu0 0.0
    %2160 = vmatpush1.msra.mxu0 0.0
    %2161 = vmatprep.subr.mxu0 0.0
    %2162 = vmatpush1.msra.mxu0 0.0
    %2163 = vmatprep.subr.mxu0 0.0
    %2164 = vmatpush1.msra.mxu0 0.0
    %2165 = vmatprep.subr.mxu0 0.0
    %2166 = vmatpush1.msra.mxu0 0.0
    %2167 = vmatprep.subr.mxu0 0.0
    %2168 = vmatpush1.msra.mxu0 0.0
    %2169 = vmatprep.subr.mxu0 0.0
    %2170 = vmatpush1.msra.mxu0 0.0
    %2171 = vmatprep.subr.mxu0 0.0
    %2172 = vmatpush1.msra.mxu0 0.0
    %2173 = vmatprep.subr.mxu0 0.0
    %2174 = vmatpush1.msra.mxu0 0.0
    %2175 = vmatprep.subr.mxu0 0.0
    %2176 = vmatpush1.msra.mxu0 0.0
    %2177 = vmatprep.subr.mxu0 0.0
    %2178 = vmatpush1.msra.mxu0 0.0
    %2179 = vmatprep.subr.mxu0 0.0
    %2180 = vmatpush1.msra.mxu0 0.0
    %2181 = vmatprep.mubr.f32.mxu0 0.0
    %2182 = vmatmul.mubr.f32.gmra.mrb[0].mxu0 %v1945
    %v2183 = vpop.f32.mrb[0].mxu0
    %v2184 = vadd.f32 0.0, %v2183
    %v2185 = vpop.f32.mrb[0].mxu0
    %2186 = vmatprep.mubr.f32.mxu0 0.0
    %2187 = vmatmul.mubr.f32.gmra.mrb[0].mxu0 %v1948
    %v2188 = vpop.f32.mrb[0].mxu0
    %v2189 = vadd.f32 0.0, %v2188
    %v2190 = vpop.f32.mrb[0].mxu0
    %2191 = vmatprep.mubr.f32.mxu0 0.0
    %2192 = vmatmul.mubr.f32.gmra.mrb[0].mxu0 %v1951
    %v2193 = vpop.f32.mrb[0].mxu0
    %v2194 = vadd.f32 0.0, %v2193
    %v2195 = vpop.f32.mrb[0].mxu0
    %2196 = vmatprep.mubr.f32.mxu0 0.0
    %2197 = vmatmul.mubr.f32.gmra.mrb[0].mxu0 %v1954
    %v2198 = vpop.f32.mrb[0].mxu0
    %v2199 = vadd.f32 0.0, %v2198
    %v2200 = vpop.f32.mrb[0].mxu0
    %2201 = vmatprep.mubr.f32.mxu0 0.0
    %2202 = vmatmul.mubr.f32.gmra.mrb[0].mxu0 %v1957
    %v2203 = vpop.f32.mrb[0].mxu0
    %v2204 = vadd.f32 0.0, %v2203
    %v2205 = vpop.f32.mrb[0].mxu0
    %2206 = vmatprep.mubr.f32.mxu0 0.0
    %2207 = vmatmul.mubr.f32.gmra.mrb[0].mxu0 %v1960
    %v2208 = vpop.f32.mrb[0].mxu0
    %v2209 = vadd.f32 0.0, %v2208
    %v2210 = vpop.f32.mrb[0].mxu0
    %2211 = vmatprep.mubr.f32.mxu0 0.0
    %2212 = vmatmul.mubr.f32.gmra.mrb[0].mxu0 %v1963
    %v2213 = vpop.f32.mrb[0].mxu0
    %v2214 = vadd.f32 0.0, %v2213
    %v2215 = vpop.f32.mrb[0].mxu0
    %2216 = vmatprep.mubr.f32.mxu0 0.0
    %2217 = vmatmul.mubr.f32.gmra.mrb[0].mxu0 %v1966
    %v2218 = vpop.f32.mrb[0].mxu0
    %v2219 = vadd.f32 0.0, %v2218
    %v2220 = vpop.f32.mrb[0].mxu0
    %2221 = vmatprep.mubr.f32.mxu0 0.0
    %2222 = vmatmul.mubr.f32.gmra.mrb[0].mxu0 %v1969
    %v2223 = vpop.f32.mrb[0].mxu0
    %v2224 = vadd.f32 0.0, %v2223
    %v2225 = vpop.f32.mrb[0].mxu0
    %2226 = vmatprep.mubr.f32.mxu0 0.0
    %2227 = vmatmul.mubr.f32.gmra.mrb[0].mxu0 %v1972
    %v2228 = vpop.f32.mrb[0].mxu0
    %v2229 = vadd.f32 0.0, %v2228
    %v2230 = vpop.f32.mrb[0].mxu0
    %2231 = vmatprep.mubr.f32.mxu0 0.0
    %2232 = vmatmul.mubr.f32.gmra.mrb[0].mxu0 %v1975
    %v2233 = vpop.f32.mrb[0].mxu0
    %v2234 = vadd.f32 0.0, %v2233
    %v2235 = vpop.f32.mrb[0].mxu0
    %2236 = vmatprep.mubr.f32.mxu0 0.0
    %2237 = vmatmul.mubr.f32.gmra.mrb[0].mxu0 %v1978
    %v2238 = vpop.f32.mrb[0].mxu0
    %v2239 = vadd.f32 0.0, %v2238
    %v2240 = vpop.f32.mrb[0].mxu0
    %2241 = vdwg.mxu0
    %2242 = vst [vmem:[#allocation4] sm:$0xff] %v2047
    %2243 = vst [vmem:[#allocation4 + $0x8] sm:$0xff] %v2049
    %2244 = vst [vmem:[#allocation4 + $0x10] sm:$0xff] %v2184
    %2245 = vst [vmem:[#allocation4 + $0x48] sm:$0xff] %v2053
    %2246 = vst [vmem:[#allocation4 + $0x50] sm:$0xff] %v2055
    %2247 = vst [vmem:[#allocation4 + $0x58] sm:$0xff] %v2189
    %2248 = vst [vmem:[#allocation4 + $0x90] sm:$0xff] %v2059
    %2249 = vst [vmem:[#allocation4 + $0x98] sm:$0xff] %v2061
    %2250 = vst [vmem:[#allocation4 + $0xa0] sm:$0xff] %v2194
    %2251 = vst [vmem:[#allocation4 + $0xd8] sm:$0xff] %v2065
    %2252 = vst [vmem:[#allocation4 + $0xe0] sm:$0xff] %v2067
    %2253 = vst [vmem:[#allocation4 + $0xe8] sm:$0xff] %v2199
    %2254 = vst [vmem:[#allocation4 + $0x120] sm:$0xff] %v2071
    %2255 = vst [vmem:[#allocation4 + $0x128] sm:$0xff] %v2073
    %2256 = vst [vmem:[#allocation4 + $0x130] sm:$0xff] %v2204
    %2257 = vst [vmem:[#allocation4 + $0x168] sm:$0xff] %v2077
    %2258 = vst [vmem:[#allocation4 + $0x170] sm:$0xff] %v2079
    %2259 = vst [vmem:[#allocation4 + $0x178] sm:$0xff] %v2209
    %2260 = vst [vmem:[#allocation4 + $0x1b0] sm:$0xff] %v2083
    %2261 = vst [vmem:[#allocation4 + $0x1b8] sm:$0xff] %v2085
    %2262 = vst [vmem:[#allocation4 + $0x1c0] sm:$0xff] %v2214
    %2263 = vst [vmem:[#allocation4 + $0x1f8] sm:$0xff] %v2089
    %2264 = vst [vmem:[#allocation4 + $0x200] sm:$0xff] %v2091
    %2265 = vst [vmem:[#allocation4 + $0x208] sm:$0xff] %v2219
    %2266 = vst [vmem:[#allocation4 + $0x240] sm:$0xff] %v2095
    %2267 = vst [vmem:[#allocation4 + $0x248] sm:$0xff] %v2097
    %2268 = vst [vmem:[#allocation4 + $0x250] sm:$0xff] %v2224
    %2269 = vst [vmem:[#allocation4 + $0x288] sm:$0xff] %v2101
    %2270 = vst [vmem:[#allocation4 + $0x290] sm:$0xff] %v2103
    %2271 = vst [vmem:[#allocation4 + $0x298] sm:$0xff] %v2229
    %2272 = vst [vmem:[#allocation4 + $0x2d0] sm:$0xff] %v2107
    %2273 = vst [vmem:[#allocation4 + $0x2d8] sm:$0xff] %v2109
    %2274 = vst [vmem:[#allocation4 + $0x2e0] sm:$0xff] %v2234
    %2275 = vst [vmem:[#allocation4 + $0x318] sm:$0xff] %v2113
    %2276 = vst [vmem:[#allocation4 + $0x320] sm:$0xff] %v2115
    %2277 = vst [vmem:[#allocation4 + $0x328] sm:$0xff] %v2239
    %v2278 = vld [vmem:[#allocation8 + $0x18] sm:$0xff]
    %v2279 = vld [vmem:[#allocation8 + $0x20] sm:$0xff]
    %v2280 = vld [vmem:[#allocation8 + $0x28] sm:$0xff]
    %v2281 = vld [vmem:[#allocation8 + $0x60] sm:$0xff]
    %v2282 = vld [vmem:[#allocation8 + $0x68] sm:$0xff]
    %v2283 = vld [vmem:[#allocation8 + $0x70] sm:$0xff]
    %v2284 = vld [vmem:[#allocation8 + $0xa8] sm:$0xff]
    %v2285 = vld [vmem:[#allocation8 + $0xb0] sm:$0xff]
    %v2286 = vld [vmem:[#allocation8 + $0xb8] sm:$0xff]
    %v2287 = vld [vmem:[#allocation8 + $0xf0] sm:$0xff]
    %v2288 = vld [vmem:[#allocation8 + $0xf8] sm:$0xff]
    %v2289 = vld [vmem:[#allocation8 + $0x100] sm:$0xff]
    %v2290 = vld [vmem:[#allocation8 + $0x138] sm:$0xff]
    %v2291 = vld [vmem:[#allocation8 + $0x140] sm:$0xff]
    %v2292 = vld [vmem:[#allocation8 + $0x148] sm:$0xff]
    %v2293 = vld [vmem:[#allocation8 + $0x180] sm:$0xff]
    %v2294 = vld [vmem:[#allocation8 + $0x188] sm:$0xff]
    %v2295 = vld [vmem:[#allocation8 + $0x190] sm:$0xff]
    %v2296 = vld [vmem:[#allocation8 + $0x1c8] sm:$0xff]
    %v2297 = vld [vmem:[#allocation8 + $0x1d0] sm:$0xff]
    %v2298 = vld [vmem:[#allocation8 + $0x1d8] sm:$0xff]
    %v2299 = vld [vmem:[#allocation8 + $0x210] sm:$0xff]
    %v2300 = vld [vmem:[#allocation8 + $0x218] sm:$0xff]
    %v2301 = vld [vmem:[#allocation8 + $0x220] sm:$0xff]
    %2302 = vmatprep.subr.mxu0 %v2279
    %2303 = vmatpush1.msra.mxu0 %v2278
    %2304 = vmatprep.subr.mxu0 %v2282
    %2305 = vmatpush1.msra.mxu0 %v2281
    %2306 = vmatprep.subr.mxu0 %v2285
    %2307 = vmatpush1.msra.mxu0 %v2284
    %2308 = vmatprep.subr.mxu0 %v2288
    %2309 = vmatpush1.msra.mxu0 %v2287
    %2310 = vmatprep.subr.mxu0 %v2291
    %2311 = vmatpush1.msra.mxu0 %v2290
    %2312 = vmatprep.subr.mxu0 %v2294
    %2313 = vmatpush1.msra.mxu0 %v2293
    %2314 = vmatprep.subr.mxu0 %v2297
    %2315 = vmatpush1.msra.mxu0 %v2296
    %2316 = vmatprep.subr.mxu0 %v2300
    %2317 = vmatpush1.msra.mxu0 %v2299
    %2318 = vmatprep.subr.mxu0 0.0
    %2319 = vmatpush1.msra.mxu0 0.0
    %2320 = vmatprep.subr.mxu0 0.0
    %2321 = vmatpush1.msra.mxu0 0.0
    %2322 = vmatprep.subr.mxu0 0.0
    %2323 = vmatpush1.msra.mxu0 0.0
    %2324 = vmatprep.subr.mxu0 0.0
    %2325 = vmatpush1.msra.mxu0 0.0
    %2326 = vmatprep.subr.mxu0 0.0
    %2327 = vmatpush1.msra.mxu0 0.0
    %2328 = vmatprep.subr.mxu0 0.0
    %2329 = vmatpush1.msra.mxu0 0.0
    %2330 = vmatprep.subr.mxu0 0.0
    %2331 = vmatpush1.msra.mxu0 0.0
    %2332 = vmatprep.subr.mxu0 0.0
    %2333 = vmatpush1.msra.mxu0 0.0
    %2334 = vmatprep.subr.mxu0 0.0
    %2335 = vmatpush1.msra.mxu0 0.0
    %2336 = vmatprep.subr.mxu0 0.0
    %2337 = vmatpush1.msra.mxu0 0.0
    %2338 = vmatprep.subr.mxu0 0.0
    %2339 = vmatpush1.msra.mxu0 0.0
    %2340 = vmatprep.subr.mxu0 0.0
    %2341 = vmatpush1.msra.mxu0 0.0
    %2342 = vmatprep.subr.mxu0 0.0
    %2343 = vmatpush1.msra.mxu0 0.0
    %2344 = vmatprep.subr.mxu0 0.0
    %2345 = vmatpush1.msra.mxu0 0.0
    %2346 = vmatprep.subr.mxu0 0.0
    %2347 = vmatpush1.msra.mxu0 0.0
    %2348 = vmatprep.subr.mxu0 0.0
    %2349 = vmatpush1.msra.mxu0 0.0
    %2350 = vmatprep.subr.mxu0 0.0
    %2351 = vmatpush1.msra.mxu0 0.0
    %2352 = vmatprep.subr.mxu0 0.0
    %2353 = vmatpush1.msra.mxu0 0.0
    %2354 = vmatprep.subr.mxu0 0.0
    %2355 = vmatpush1.msra.mxu0 0.0
    %2356 = vmatprep.subr.mxu0 0.0
    %2357 = vmatpush1.msra.mxu0 0.0
    %2358 = vmatprep.subr.mxu0 0.0
    %2359 = vmatpush1.msra.mxu0 0.0
    %2360 = vmatprep.subr.mxu0 0.0
    %2361 = vmatpush1.msra.mxu0 0.0
    %2362 = vmatprep.subr.mxu0 0.0
    %2363 = vmatpush1.msra.mxu0 0.0
    %2364 = vmatprep.subr.mxu0 0.0
    %2365 = vmatpush1.msra.mxu0 0.0
    %2366 = vmatprep.mubr.f32.mxu0 0.0
    %2367 = vmatmul.mubr.f32.gmra.mrb[0].mxu0 %v1945
    %v2368 = vpop.f32.mrb[0].mxu0
    %v2369 = vadd.f32 0.0, %v2368
    %v2370 = vpop.f32.mrb[0].mxu0
    %v2371 = vadd.f32 0.0, %v2370
    %2372 = vmatprep.mubr.f32.mxu0 0.0
    %2373 = vmatmul.mubr.f32.gmra.mrb[0].mxu0 %v1948
    %v2374 = vpop.f32.mrb[0].mxu0
    %v2375 = vadd.f32 0.0, %v2374
    %v2376 = vpop.f32.mrb[0].mxu0
    %v2377 = vadd.f32 0.0, %v2376
    %2378 = vmatprep.mubr.f32.mxu0 0.0
    %2379 = vmatmul.mubr.f32.gmra.mrb[0].mxu0 %v1951
    %v2380 = vpop.f32.mrb[0].mxu0
    %v2381 = vadd.f32 0.0, %v2380
    %v2382 = vpop.f32.mrb[0].mxu0
    %v2383 = vadd.f32 0.0, %v2382
    %2384 = vmatprep.mubr.f32.mxu0 0.0
    %2385 = vmatmul.mubr.f32.gmra.mrb[0].mxu0 %v1954
    %v2386 = vpop.f32.mrb[0].mxu0
    %v2387 = vadd.f32 0.0, %v2386
    %v2388 = vpop.f32.mrb[0].mxu0
    %v2389 = vadd.f32 0.0, %v2388
    %2390 = vmatprep.mubr.f32.mxu0 0.0
    %2391 = vmatmul.mubr.f32.gmra.mrb[0].mxu0 %v1957
    %v2392 = vpop.f32.mrb[0].mxu0
    %v2393 = vadd.f32 0.0, %v2392
    %v2394 = vpop.f32.mrb[0].mxu0
    %v2395 = vadd.f32 0.0, %v2394
    %2396 = vmatprep.mubr.f32.mxu0 0.0
    %2397 = vmatmul.mubr.f32.gmra.mrb[0].mxu0 %v1960
    %v2398 = vpop.f32.mrb[0].mxu0
    %v2399 = vadd.f32 0.0, %v2398
    %v2400 = vpop.f32.mrb[0].mxu0
    %v2401 = vadd.f32 0.0, %v2400
    %2402 = vmatprep.mubr.f32.mxu0 0.0
    %2403 = vmatmul.mubr.f32.gmra.mrb[0].mxu0 %v1963
    %v2404 = vpop.f32.mrb[0].mxu0
    %v2405 = vadd.f32 0.0, %v2404
    %v2406 = vpop.f32.mrb[0].mxu0
    %v2407 = vadd.f32 0.0, %v2406
    %2408 = vmatprep.mubr.f32.mxu0 0.0
    %2409 = vmatmul.mubr.f32.gmra.mrb[0].mxu0 %v1966
    %v2410 = vpop.f32.mrb[0].mxu0
    %v2411 = vadd.f32 0.0, %v2410
    %v2412 = vpop.f32.mrb[0].mxu0
    %v2413 = vadd.f32 0.0, %v2412
    %2414 = vmatprep.mubr.f32.mxu0 0.0
    %2415 = vmatmul.mubr.f32.gmra.mrb[0].mxu0 %v1969
    %v2416 = vpop.f32.mrb[0].mxu0
    %v2417 = vadd.f32 0.0, %v2416
    %v2418 = vpop.f32.mrb[0].mxu0
    %v2419 = vadd.f32 0.0, %v2418
    %2420 = vmatprep.mubr.f32.mxu0 0.0
    %2421 = vmatmul.mubr.f32.gmra.mrb[0].mxu0 %v1972
    %v2422 = vpop.f32.mrb[0].mxu0
    %v2423 = vadd.f32 0.0, %v2422
    %v2424 = vpop.f32.mrb[0].mxu0
    %v2425 = vadd.f32 0.0, %v2424
    %2426 = vmatprep.mubr.f32.mxu0 0.0
    %2427 = vmatmul.mubr.f32.gmra.mrb[0].mxu0 %v1975
    %v2428 = vpop.f32.mrb[0].mxu0
    %v2429 = vadd.f32 0.0, %v2428
    %v2430 = vpop.f32.mrb[0].mxu0
    %v2431 = vadd.f32 0.0, %v2430
    %2432 = vmatprep.mubr.f32.mxu0 0.0
    %2433 = vmatmul.mubr.f32.gmra.mrb[0].mxu0 %v1978
    %v2434 = vpop.f32.mrb[0].mxu0
    %v2435 = vadd.f32 0.0, %v2434
    %v2436 = vpop.f32.mrb[0].mxu0
    %v2437 = vadd.f32 0.0, %v2436
    %2438 = vdwg.mxu0
    %2439 = vmatprep.subr.mxu0 0.0
    %2440 = vmatpush1.msra.mxu0 %v2280
    %2441 = vmatprep.subr.mxu0 0.0
    %2442 = vmatpush1.msra.mxu0 %v2283
    %2443 = vmatprep.subr.mxu0 0.0
    %2444 = vmatpush1.msra.mxu0 %v2286
    %2445 = vmatprep.subr.mxu0 0.0
    %2446 = vmatpush1.msra.mxu0 %v2289
    %2447 = vmatprep.subr.mxu0 0.0
    %2448 = vmatpush1.msra.mxu0 %v2292
    %2449 = vmatprep.subr.mxu0 0.0
    %2450 = vmatpush1.msra.mxu0 %v2295
    %2451 = vmatprep.subr.mxu0 0.0
    %2452 = vmatpush1.msra.mxu0 %v2298
    %2453 = vmatprep.subr.mxu0 0.0
    %2454 = vmatpush1.msra.mxu0 %v2301
    %2455 = vmatprep.subr.mxu0 0.0
    %2456 = vmatpush1.msra.mxu0 0.0
    %2457 = vmatprep.subr.mxu0 0.0
    %2458 = vmatpush1.msra.mxu0 0.0
    %2459 = vmatprep.subr.mxu0 0.0
    %2460 = vmatpush1.msra.mxu0 0.0
    %2461 = vmatprep.subr.mxu0 0.0
    %2462 = vmatpush1.msra.mxu0 0.0
    %2463 = vmatprep.subr.mxu0 0.0
    %2464 = vmatpush1.msra.mxu0 0.0
    %2465 = vmatprep.subr.mxu0 0.0
    %2466 = vmatpush1.msra.mxu0 0.0
    %2467 = vmatprep.subr.mxu0 0.0
    %2468 = vmatpush1.msra.mxu0 0.0
    %2469 = vmatprep.subr.mxu0 0.0
    %2470 = vmatpush1.msra.mxu0 0.0
    %2471 = vmatprep.subr.mxu0 0.0
    %2472 = vmatpush1.msra.mxu0 0.0
    %2473 = vmatprep.subr.mxu0 0.0
    %2474 = vmatpush1.msra.mxu0 0.0
    %2475 = vmatprep.subr.mxu0 0.0
    %2476 = vmatpush1.msra.mxu0 0.0
    %2477 = vmatprep.subr.mxu0 0.0
    %2478 = vmatpush1.msra.mxu0 0.0
    %2479 = vmatprep.subr.mxu0 0.0
    %2480 = vmatpush1.msra.mxu0 0.0
    %2481 = vmatprep.subr.mxu0 0.0
    %2482 = vmatpush1.msra.mxu0 0.0
    %2483 = vmatprep.subr.mxu0 0.0
    %2484 = vmatpush1.msra.mxu0 0.0
    %2485 = vmatprep.subr.mxu0 0.0
    %2486 = vmatpush1.msra.mxu0 0.0
    %2487 = vmatprep.subr.mxu0 0.0
    %2488 = vmatpush1.msra.mxu0 0.0
    %2489 = vmatprep.subr.mxu0 0.0
    %2490 = vmatpush1.msra.mxu0 0.0
    %2491 = vmatprep.subr.mxu0 0.0
    %2492 = vmatpush1.msra.mxu0 0.0
    %2493 = vmatprep.subr.mxu0 0.0
    %2494 = vmatpush1.msra.mxu0 0.0
    %2495 = vmatprep.subr.mxu0 0.0
    %2496 = vmatpush1.msra.mxu0 0.0
    %2497 = vmatprep.subr.mxu0 0.0
    %2498 = vmatpush1.msra.mxu0 0.0
    %2499 = vmatprep.subr.mxu0 0.0
    %2500 = vmatpush1.msra.mxu0 0.0
    %2501 = vmatprep.subr.mxu0 0.0
    %2502 = vmatpush1.msra.mxu0 0.0
    %2503 = vmatprep.mubr.f32.mxu0 0.0
    %2504 = vmatmul.mubr.f32.gmra.mrb[0].mxu0 %v1945
    %v2505 = vpop.f32.mrb[0].mxu0
    %v2506 = vadd.f32 0.0, %v2505
    %v2507 = vpop.f32.mrb[0].mxu0
    %2508 = vmatprep.mubr.f32.mxu0 0.0
    %2509 = vmatmul.mubr.f32.gmra.mrb[0].mxu0 %v1948
    %v2510 = vpop.f32.mrb[0].mxu0
    %v2511 = vadd.f32 0.0, %v2510
    %v2512 = vpop.f32.mrb[0].mxu0
    %2513 = vmatprep.mubr.f32.mxu0 0.0
    %2514 = vmatmul.mubr.f32.gmra.mrb[0].mxu0 %v1951
    %v2515 = vpop.f32.mrb[0].mxu0
    %v2516 = vadd.f32 0.0, %v2515
    %v2517 = vpop.f32.mrb[0].mxu0
    %2518 = vmatprep.mubr.f32.mxu0 0.0
    %2519 = vmatmul.mubr.f32.gmra.mrb[0].mxu0 %v1954
    %v2520 = vpop.f32.mrb[0].mxu0
    %v2521 = vadd.f32 0.0, %v2520
    %v2522 = vpop.f32.mrb[0].mxu0
    %2523 = vmatprep.mubr.f32.mxu0 0.0
    %2524 = vmatmul.mubr.f32.gmra.mrb[0].mxu0 %v1957
    %v2525 = vpop.f32.mrb[0].mxu0
    %v2526 = vadd.f32 0.0, %v2525
    %v2527 = vpop.f32.mrb[0].mxu0
    %2528 = vmatprep.mubr.f32.mxu0 0.0
    %2529 = vmatmul.mubr.f32.gmra.mrb[0].mxu0 %v1960
    %v2530 = vpop.f32.mrb[0].mxu0
    %v2531 = vadd.f32 0.0, %v2530
    %v2532 = vpop.f32.mrb[0].mxu0
    %2533 = vmatprep.mubr.f32.mxu0 0.0
    %2534 = vmatmul.mubr.f32.gmra.mrb[0].mxu0 %v1963
    %v2535 = vpop.f32.mrb[0].mxu0
    %v2536 = vadd.f32 0.0, %v2535
    %v2537 = vpop.f32.mrb[0].mxu0
    %2538 = vmatprep.mubr.f32.mxu0 0.0
    %2539 = vmatmul.mubr.f32.gmra.mrb[0].mxu0 %v1966
    %v2540 = vpop.f32.mrb[0].mxu0
    %v2541 = vadd.f32 0.0, %v2540
    %v2542 = vpop.f32.mrb[0].mxu0
    %2543 = vmatprep.mubr.f32.mxu0 0.0
    %2544 = vmatmul.mubr.f32.gmra.mrb[0].mxu0 %v1969
    %v2545 = vpop.f32.mrb[0].mxu0
    %v2546 = vadd.f32 0.0, %v2545
    %v2547 = vpop.f32.mrb[0].mxu0
    %2548 = vmatprep.mubr.f32.mxu0 0.0
    %2549 = vmatmul.mubr.f32.gmra.mrb[0].mxu0 %v1972
    %v2550 = vpop.f32.mrb[0].mxu0
    %v2551 = vadd.f32 0.0, %v2550
    %v2552 = vpop.f32.mrb[0].mxu0
    %2553 = vmatprep.mubr.f32.mxu0 0.0
    %2554 = vmatmul.mubr.f32.gmra.mrb[0].mxu0 %v1975
    %v2555 = vpop.f32.mrb[0].mxu0
    %v2556 = vadd.f32 0.0, %v2555
    %v2557 = vpop.f32.mrb[0].mxu0
    %2558 = vmatprep.mubr.f32.mxu0 0.0
    %2559 = vmatmul.mubr.f32.gmra.mrb[0].mxu0 %v1978
    %v2560 = vpop.f32.mrb[0].mxu0
    %v2561 = vadd.f32 0.0, %v2560
    %v2562 = vpop.f32.mrb[0].mxu0
    %2563 = vdwg.mxu0
    %2564 = vst [vmem:[#allocation4 + $0x18] sm:$0xff] %v2369
    %2565 = vst [vmem:[#allocation4 + $0x20] sm:$0xff] %v2371
    %2566 = vst [vmem:[#allocation4 + $0x28] sm:$0xff] %v2506
    %2567 = vst [vmem:[#allocation4 + $0x60] sm:$0xff] %v2375
    %2568 = vst [vmem:[#allocation4 + $0x68] sm:$0xff] %v2377
    %2569 = vst [vmem:[#allocation4 + $0x70] sm:$0xff] %v2511
    %2570 = vst [vmem:[#allocation4 + $0xa8] sm:$0xff] %v2381
    %2571 = vst [vmem:[#allocation4 + $0xb0] sm:$0xff] %v2383
    %2572 = vst [vmem:[#allocation4 + $0xb8] sm:$0xff] %v2516
    %2573 = vst [vmem:[#allocation4 + $0xf0] sm:$0xff] %v2387
    %2574 = vst [vmem:[#allocation4 + $0xf8] sm:$0xff] %v2389
    %2575 = vst [vmem:[#allocation4 + $0x100] sm:$0xff] %v2521
    %2576 = vst [vmem:[#allocation4 + $0x138] sm:$0xff] %v2393
    %2577 = vst [vmem:[#allocation4 + $0x140] sm:$0xff] %v2395
    %2578 = vst [vmem:[#allocation4 + $0x148] sm:$0xff] %v2526
    %2579 = vst [vmem:[#allocation4 + $0x180] sm:$0xff] %v2399
    %2580 = vst [vmem:[#allocation4 + $0x188] sm:$0xff] %v2401
    %2581 = vst [vmem:[#allocation4 + $0x190] sm:$0xff] %v2531
    %2582 = vst [vmem:[#allocation4 + $0x1c8] sm:$0xff] %v2405
    %2583 = vst [vmem:[#allocation4 + $0x1d0] sm:$0xff] %v2407
    %2584 = vst [vmem:[#allocation4 + $0x1d8] sm:$0xff] %v2536
    %2585 = vst [vmem:[#allocation4 + $0x210] sm:$0xff] %v2411
    %2586 = vst [vmem:[#allocation4 + $0x218] sm:$0xff] %v2413
    %2587 = vst [vmem:[#allocation4 + $0x220] sm:$0xff] %v2541
    %2588 = vst [vmem:[#allocation4 + $0x258] sm:$0xff] %v2417
    %2589 = vst [vmem:[#allocation4 + $0x260] sm:$0xff] %v2419
    %2590 = vst [vmem:[#allocation4 + $0x268] sm:$0xff] %v2546
    %2591 = vst [vmem:[#allocation4 + $0x2a0] sm:$0xff] %v2423
    %2592 = vst [vmem:[#allocation4 + $0x2a8] sm:$0xff] %v2425
    %2593 = vst [vmem:[#allocation4 + $0x2b0] sm:$0xff] %v2551
    %2594 = vst [vmem:[#allocation4 + $0x2e8] sm:$0xff] %v2429
    %2595 = vst [vmem:[#allocation4 + $0x2f0] sm:$0xff] %v2431
    %2596 = vst [vmem:[#allocation4 + $0x2f8] sm:$0xff] %v2556
    %2597 = vst [vmem:[#allocation4 + $0x330] sm:$0xff] %v2435
    %2598 = vst [vmem:[#allocation4 + $0x338] sm:$0xff] %v2437
    %2599 = vst [vmem:[#allocation4 + $0x340] sm:$0xff] %v2561
    %v2600 = vld [vmem:[#allocation8 + $0x30] sm:$0xff]
    %v2601 = vld [vmem:[#allocation8 + $0x38] sm:$0xff]
    %v2602 = vld [vmem:[#allocation8 + $0x40] sm:$0xff]
    %v2603 = vld [vmem:[#allocation8 + $0x78] sm:$0xff]
    %v2604 = vld [vmem:[#allocation8 + $0x80] sm:$0xff]
    %v2605 = vld [vmem:[#allocation8 + $0x88] sm:$0xff]
    %v2606 = vld [vmem:[#allocation8 + $0xc0] sm:$0xff]
    %v2607 = vld [vmem:[#allocation8 + $0xc8] sm:$0xff]
    %v2608 = vld [vmem:[#allocation8 + $0xd0] sm:$0xff]
    %v2609 = vld [vmem:[#allocation8 + $0x108] sm:$0xff]
    %v2610 = vld [vmem:[#allocation8 + $0x110] sm:$0xff]
    %v2611 = vld [vmem:[#allocation8 + $0x118] sm:$0xff]
    %v2612 = vld [vmem:[#allocation8 + $0x150] sm:$0xff]
    %v2613 = vld [vmem:[#allocation8 + $0x158] sm:$0xff]
    %v2614 = vld [vmem:[#allocation8 + $0x160] sm:$0xff]
    %v2615 = vld [vmem:[#allocation8 + $0x198] sm:$0xff]
    %v2616 = vld [vmem:[#allocation8 + $0x1a0] sm:$0xff]
    %v2617 = vld [vmem:[#allocation8 + $0x1a8] sm:$0xff]
    %v2618 = vld [vmem:[#allocation8 + $0x1e0] sm:$0xff]
    %v2619 = vld [vmem:[#allocation8 + $0x1e8] sm:$0xff]
    %v2620 = vld [vmem:[#allocation8 + $0x1f0] sm:$0xff]
    %v2621 = vld [vmem:[#allocation8 + $0x228] sm:$0xff]
    %v2622 = vld [vmem:[#allocation8 + $0x230] sm:$0xff]
    %v2623 = vld [vmem:[#allocation8 + $0x238] sm:$0xff]
    %2624 = vmatprep.subr.mxu0 %v2601
    %2625 = vmatpush1.msra.mxu0 %v2600
    %2626 = vmatprep.subr.mxu0 %v2604
    %2627 = vmatpush1.msra.mxu0 %v2603
    %2628 = vmatprep.subr.mxu0 %v2607
    %2629 = vmatpush1.msra.mxu0 %v2606
    %2630 = vmatprep.subr.mxu0 %v2610
    %2631 = vmatpush1.msra.mxu0 %v2609
    %2632 = vmatprep.subr.mxu0 %v2613
    %2633 = vmatpush1.msra.mxu0 %v2612
    %2634 = vmatprep.subr.mxu0 %v2616
    %2635 = vmatpush1.msra.mxu0 %v2615
    %2636 = vmatprep.subr.mxu0 %v2619
    %2637 = vmatpush1.msra.mxu0 %v2618
    %2638 = vmatprep.subr.mxu0 %v2622
    %2639 = vmatpush1.msra.mxu0 %v2621
    %2640 = vmatprep.subr.mxu0 0.0
    %2641 = vmatpush1.msra.mxu0 0.0
    %2642 = vmatprep.subr.mxu0 0.0
    %2643 = vmatpush1.msra.mxu0 0.0
    %2644 = vmatprep.subr.mxu0 0.0
    %2645 = vmatpush1.msra.mxu0 0.0
    %2646 = vmatprep.subr.mxu0 0.0
    %2647 = vmatpush1.msra.mxu0 0.0
    %2648 = vmatprep.subr.mxu0 0.0
    %2649 = vmatpush1.msra.mxu0 0.0
    %2650 = vmatprep.subr.mxu0 0.0
    %2651 = vmatpush1.msra.mxu0 0.0
    %2652 = vmatprep.subr.mxu0 0.0
    %2653 = vmatpush1.msra.mxu0 0.0
    %2654 = vmatprep.subr.mxu0 0.0
    %2655 = vmatpush1.msra.mxu0 0.0
    %2656 = vmatprep.subr.mxu0 0.0
    %2657 = vmatpush1.msra.mxu0 0.0
    %2658 = vmatprep.subr.mxu0 0.0
    %2659 = vmatpush1.msra.mxu0 0.0
    %2660 = vmatprep.subr.mxu0 0.0
    %2661 = vmatpush1.msra.mxu0 0.0
    %2662 = vmatprep.subr.mxu0 0.0
    %2663 = vmatpush1.msra.mxu0 0.0
    %2664 = vmatprep.subr.mxu0 0.0
    %2665 = vmatpush1.msra.mxu0 0.0
    %2666 = vmatprep.subr.mxu0 0.0
    %2667 = vmatpush1.msra.mxu0 0.0
    %2668 = vmatprep.subr.mxu0 0.0
    %2669 = vmatpush1.msra.mxu0 0.0
    %2670 = vmatprep.subr.mxu0 0.0
    %2671 = vmatpush1.msra.mxu0 0.0
    %2672 = vmatprep.subr.mxu0 0.0
    %2673 = vmatpush1.msra.mxu0 0.0
    %2674 = vmatprep.subr.mxu0 0.0
    %2675 = vmatpush1.msra.mxu0 0.0
    %2676 = vmatprep.subr.mxu0 0.0
    %2677 = vmatpush1.msra.mxu0 0.0
    %2678 = vmatprep.subr.mxu0 0.0
    %2679 = vmatpush1.msra.mxu0 0.0
    %2680 = vmatprep.subr.mxu0 0.0
    %2681 = vmatpush1.msra.mxu0 0.0
    %2682 = vmatprep.subr.mxu0 0.0
    %2683 = vmatpush1.msra.mxu0 0.0
    %2684 = vmatprep.subr.mxu0 0.0
    %2685 = vmatpush1.msra.mxu0 0.0
    %2686 = vmatprep.subr.mxu0 0.0
    %2687 = vmatpush1.msra.mxu0 0.0
    %2688 = vmatprep.mubr.f32.mxu0 0.0
    %2689 = vmatmul.mubr.f32.gmra.mrb[0].mxu0 %v1945
    %v2690 = vpop.f32.mrb[0].mxu0
    %v2691 = vadd.f32 0.0, %v2690
    %v2692 = vpop.f32.mrb[0].mxu0
    %v2693 = vadd.f32 0.0, %v2692
    %2694 = vmatprep.mubr.f32.mxu0 0.0
    %2695 = vmatmul.mubr.f32.gmra.mrb[0].mxu0 %v1948
    %v2696 = vpop.f32.mrb[0].mxu0
    %v2697 = vadd.f32 0.0, %v2696
    %v2698 = vpop.f32.mrb[0].mxu0
    %v2699 = vadd.f32 0.0, %v2698
    %2700 = vmatprep.mubr.f32.mxu0 0.0
    %2701 = vmatmul.mubr.f32.gmra.mrb[0].mxu0 %v1951
    %v2702 = vpop.f32.mrb[0].mxu0
    %v2703 = vadd.f32 0.0, %v2702
    %v2704 = vpop.f32.mrb[0].mxu0
    %v2705 = vadd.f32 0.0, %v2704
    %2706 = vmatprep.mubr.f32.mxu0 0.0
    %2707 = vmatmul.mubr.f32.gmra.mrb[0].mxu0 %v1954
    %v2708 = vpop.f32.mrb[0].mxu0
    %v2709 = vadd.f32 0.0, %v2708
    %v2710 = vpop.f32.mrb[0].mxu0
    %v2711 = vadd.f32 0.0, %v2710
    %2712 = vmatprep.mubr.f32.mxu0 0.0
    %2713 = vmatmul.mubr.f32.gmra.mrb[0].mxu0 %v1957
    %v2714 = vpop.f32.mrb[0].mxu0
    %v2715 = vadd.f32 0.0, %v2714
    %v2716 = vpop.f32.mrb[0].mxu0
    %v2717 = vadd.f32 0.0, %v2716
    %2718 = vmatprep.mubr.f32.mxu0 0.0
    %2719 = vmatmul.mubr.f32.gmra.mrb[0].mxu0 %v1960
    %v2720 = vpop.f32.mrb[0].mxu0
    %v2721 = vadd.f32 0.0, %v2720
    %v2722 = vpop.f32.mrb[0].mxu0
    %v2723 = vadd.f32 0.0, %v2722
    %2724 = vmatprep.mubr.f32.mxu0 0.0
    %2725 = vmatmul.mubr.f32.gmra.mrb[0].mxu0 %v1963
    %v2726 = vpop.f32.mrb[0].mxu0
    %v2727 = vadd.f32 0.0, %v2726
    %v2728 = vpop.f32.mrb[0].mxu0
    %v2729 = vadd.f32 0.0, %v2728
    %2730 = vmatprep.mubr.f32.mxu0 0.0
    %2731 = vmatmul.mubr.f32.gmra.mrb[0].mxu0 %v1966
    %v2732 = vpop.f32.mrb[0].mxu0
    %v2733 = vadd.f32 0.0, %v2732
    %v2734 = vpop.f32.mrb[0].mxu0
    %v2735 = vadd.f32 0.0, %v2734
    %2736 = vmatprep.mubr.f32.mxu0 0.0
    %2737 = vmatmul.mubr.f32.gmra.mrb[0].mxu0 %v1969
    %v2738 = vpop.f32.mrb[0].mxu0
    %v2739 = vadd.f32 0.0, %v2738
    %v2740 = vpop.f32.mrb[0].mxu0
    %v2741 = vadd.f32 0.0, %v2740
    %2742 = vmatprep.mubr.f32.mxu0 0.0
    %2743 = vmatmul.mubr.f32.gmra.mrb[0].mxu0 %v1972
    %v2744 = vpop.f32.mrb[0].mxu0
    %v2745 = vadd.f32 0.0, %v2744
    %v2746 = vpop.f32.mrb[0].mxu0
    %v2747 = vadd.f32 0.0, %v2746
    %2748 = vmatprep.mubr.f32.mxu0 0.0
    %2749 = vmatmul.mubr.f32.gmra.mrb[0].mxu0 %v1975
    %v2750 = vpop.f32.mrb[0].mxu0
    %v2751 = vadd.f32 0.0, %v2750
    %v2752 = vpop.f32.mrb[0].mxu0
    %v2753 = vadd.f32 0.0, %v2752
    %2754 = vmatprep.mubr.f32.mxu0 0.0
    %2755 = vmatmul.mubr.f32.gmra.mrb[0].mxu0 %v1978
    %v2756 = vpop.f32.mrb[0].mxu0
    %v2757 = vadd.f32 0.0, %v2756
    %v2758 = vpop.f32.mrb[0].mxu0
    %v2759 = vadd.f32 0.0, %v2758
    %2760 = vdwg.mxu0
    %2761 = vmatprep.subr.mxu0 0.0
    %2762 = vmatpush1.msra.mxu0 %v2602
    %2763 = vmatprep.subr.mxu0 0.0
    %2764 = vmatpush1.msra.mxu0 %v2605
    %2765 = vmatprep.subr.mxu0 0.0
    %2766 = vmatpush1.msra.mxu0 %v2608
    %2767 = vmatprep.subr.mxu0 0.0
    %2768 = vmatpush1.msra.mxu0 %v2611
    %2769 = vmatprep.subr.mxu0 0.0
    %2770 = vmatpush1.msra.mxu0 %v2614
    %2771 = vmatprep.subr.mxu0 0.0
    %2772 = vmatpush1.msra.mxu0 %v2617
    %2773 = vmatprep.subr.mxu0 0.0
    %2774 = vmatpush1.msra.mxu0 %v2620
    %2775 = vmatprep.subr.mxu0 0.0
    %2776 = vmatpush1.msra.mxu0 %v2623
    %2777 = vmatprep.subr.mxu0 0.0
    %2778 = vmatpush1.msra.mxu0 0.0
    %2779 = vmatprep.subr.mxu0 0.0
    %2780 = vmatpush1.msra.mxu0 0.0
    %2781 = vmatprep.subr.mxu0 0.0
    %2782 = vmatpush1.msra.mxu0 0.0
    %2783 = vmatprep.subr.mxu0 0.0
    %2784 = vmatpush1.msra.mxu0 0.0
    %2785 = vmatprep.subr.mxu0 0.0
    %2786 = vmatpush1.msra.mxu0 0.0
    %2787 = vmatprep.subr.mxu0 0.0
    %2788 = vmatpush1.msra.mxu0 0.0
    %2789 = vmatprep.subr.mxu0 0.0
    %2790 = vmatpush1.msra.mxu0 0.0
    %2791 = vmatprep.subr.mxu0 0.0
    %2792 = vmatpush1.msra.mxu0 0.0
    %2793 = vmatprep.subr.mxu0 0.0
    %2794 = vmatpush1.msra.mxu0 0.0
    %2795 = vmatprep.subr.mxu0 0.0
    %2796 = vmatpush1.msra.mxu0 0.0
    %2797 = vmatprep.subr.mxu0 0.0
    %2798 = vmatpush1.msra.mxu0 0.0
    %2799 = vmatprep.subr.mxu0 0.0
    %2800 = vmatpush1.msra.mxu0 0.0
    %2801 = vmatprep.subr.mxu0 0.0
    %2802 = vmatpush1.msra.mxu0 0.0
    %2803 = vmatprep.subr.mxu0 0.0
    %2804 = vmatpush1.msra.mxu0 0.0
    %2805 = vmatprep.subr.mxu0 0.0
    %2806 = vmatpush1.msra.mxu0 0.0
    %2807 = vmatprep.subr.mxu0 0.0
    %2808 = vmatpush1.msra.mxu0 0.0
    %2809 = vmatprep.subr.mxu0 0.0
    %2810 = vmatpush1.msra.mxu0 0.0
    %2811 = vmatprep.subr.mxu0 0.0
    %2812 = vmatpush1.msra.mxu0 0.0
    %2813 = vmatprep.subr.mxu0 0.0
    %2814 = vmatpush1.msra.mxu0 0.0
    %2815 = vmatprep.subr.mxu0 0.0
    %2816 = vmatpush1.msra.mxu0 0.0
    %2817 = vmatprep.subr.mxu0 0.0
    %2818 = vmatpush1.msra.mxu0 0.0
    %2819 = vmatprep.subr.mxu0 0.0
    %2820 = vmatpush1.msra.mxu0 0.0
    %2821 = vmatprep.subr.mxu0 0.0
    %2822 = vmatpush1.msra.mxu0 0.0
    %2823 = vmatprep.subr.mxu0 0.0
    %2824 = vmatpush1.msra.mxu0 0.0
    %2825 = vmatprep.mubr.f32.mxu0 0.0
    %2826 = vmatmul.mubr.f32.gmra.mrb[0].mxu0 %v1945
    %v2827 = vpop.f32.mrb[0].mxu0
    %v2828 = vadd.f32 0.0, %v2827
    %v2829 = vpop.f32.mrb[0].mxu0
    %2830 = vmatprep.mubr.f32.mxu0 0.0
    %2831 = vmatmul.mubr.f32.gmra.mrb[0].mxu0 %v1948
    %v2832 = vpop.f32.mrb[0].mxu0
    %v2833 = vadd.f32 0.0, %v2832
    %v2834 = vpop.f32.mrb[0].mxu0
    %2835 = vmatprep.mubr.f32.mxu0 0.0
    %2836 = vmatmul.mubr.f32.gmra.mrb[0].mxu0 %v1951
    %v2837 = vpop.f32.mrb[0].mxu0
    %v2838 = vadd.f32 0.0, %v2837
    %v2839 = vpop.f32.mrb[0].mxu0
    %2840 = vmatprep.mubr.f32.mxu0 0.0
    %2841 = vmatmul.mubr.f32.gmra.mrb[0].mxu0 %v1954
    %v2842 = vpop.f32.mrb[0].mxu0
    %v2843 = vadd.f32 0.0, %v2842
    %v2844 = vpop.f32.mrb[0].mxu0
    %2845 = vmatprep.mubr.f32.mxu0 0.0
    %2846 = vmatmul.mubr.f32.gmra.mrb[0].mxu0 %v1957
    %v2847 = vpop.f32.mrb[0].mxu0
    %v2848 = vadd.f32 0.0, %v2847
    %v2849 = vpop.f32.mrb[0].mxu0
    %2850 = vmatprep.mubr.f32.mxu0 0.0
    %2851 = vmatmul.mubr.f32.gmra.mrb[0].mxu0 %v1960
    %v2852 = vpop.f32.mrb[0].mxu0
    %v2853 = vadd.f32 0.0, %v2852
    %v2854 = vpop.f32.mrb[0].mxu0
    %2855 = vmatprep.mubr.f32.mxu0 0.0
    %2856 = vmatmul.mubr.f32.gmra.mrb[0].mxu0 %v1963
    %v2857 = vpop.f32.mrb[0].mxu0
    %v2858 = vadd.f32 0.0, %v2857
    %v2859 = vpop.f32.mrb[0].mxu0
    %2860 = vmatprep.mubr.f32.mxu0 0.0
    %2861 = vmatmul.mubr.f32.gmra.mrb[0].mxu0 %v1966
    %v2862 = vpop.f32.mrb[0].mxu0
    %v2863 = vadd.f32 0.0, %v2862
    %v2864 = vpop.f32.mrb[0].mxu0
    %2865 = vmatprep.mubr.f32.mxu0 0.0
    %2866 = vmatmul.mubr.f32.gmra.mrb[0].mxu0 %v1969
    %v2867 = vpop.f32.mrb[0].mxu0
    %v2868 = vadd.f32 0.0, %v2867
    %v2869 = vpop.f32.mrb[0].mxu0
    %2870 = vmatprep.mubr.f32.mxu0 0.0
    %2871 = vmatmul.mubr.f32.gmra.mrb[0].mxu0 %v1972
    %v2872 = vpop.f32.mrb[0].mxu0
    %v2873 = vadd.f32 0.0, %v2872
    %v2874 = vpop.f32.mrb[0].mxu0
    %2875 = vmatprep.mubr.f32.mxu0 0.0
    %2876 = vmatmul.mubr.f32.gmra.mrb[0].mxu0 %v1975
    %v2877 = vpop.f32.mrb[0].mxu0
    %v2878 = vadd.f32 0.0, %v2877
    %v2879 = vpop.f32.mrb[0].mxu0
    %2880 = vmatprep.mubr.f32.mxu0 0.0
    %2881 = vmatmul.mubr.f32.gmra.mrb[0].mxu0 %v1978
    %v2882 = vpop.f32.mrb[0].mxu0
    %v2883 = vadd.f32 0.0, %v2882
    %v2884 = vpop.f32.mrb[0].mxu0
    %2885 = vdwg.mxu0
    %2886 = vst [vmem:[#allocation4 + $0x30] sm:$0xff] %v2691
    %2887 = vst [vmem:[#allocation4 + $0x38] sm:$0xff] %v2693
    %2888 = vst [vmem:[#allocation4 + $0x40] sm:$0xff] %v2828
    %2889 = vst [vmem:[#allocation4 + $0x78] sm:$0xff] %v2697
    %2890 = vst [vmem:[#allocation4 + $0x80] sm:$0xff] %v2699
    %2891 = vst [vmem:[#allocation4 + $0x88] sm:$0xff] %v2833
    %2892 = vst [vmem:[#allocation4 + $0xc0] sm:$0xff] %v2703
    %2893 = vst [vmem:[#allocation4 + $0xc8] sm:$0xff] %v2705
    %2894 = vst [vmem:[#allocation4 + $0xd0] sm:$0xff] %v2838
    %2895 = vst [vmem:[#allocation4 + $0x108] sm:$0xff] %v2709
    %2896 = vst [vmem:[#allocation4 + $0x110] sm:$0xff] %v2711
    %2897 = vst [vmem:[#allocation4 + $0x118] sm:$0xff] %v2843
    %2898 = vst [vmem:[#allocation4 + $0x150] sm:$0xff] %v2715
    %2899 = vst [vmem:[#allocation4 + $0x158] sm:$0xff] %v2717
    %2900 = vst [vmem:[#allocation4 + $0x160] sm:$0xff] %v2848
    %2901 = vst [vmem:[#allocation4 + $0x198] sm:$0xff] %v2721
    %2902 = vst [vmem:[#allocation4 + $0x1a0] sm:$0xff] %v2723
    %2903 = vst [vmem:[#allocation4 + $0x1a8] sm:$0xff] %v2853
    %2904 = vst [vmem:[#allocation4 + $0x1e0] sm:$0xff] %v2727
    %2905 = vst [vmem:[#allocation4 + $0x1e8] sm:$0xff] %v2729
    %2906 = vst [vmem:[#allocation4 + $0x1f0] sm:$0xff] %v2858
    %2907 = vst [vmem:[#allocation4 + $0x228] sm:$0xff] %v2733
    %2908 = vst [vmem:[#allocation4 + $0x230] sm:$0xff] %v2735
    %2909 = vst [vmem:[#allocation4 + $0x238] sm:$0xff] %v2863
    %2910 = vst [vmem:[#allocation4 + $0x270] sm:$0xff] %v2739
    %2911 = vst [vmem:[#allocation4 + $0x278] sm:$0xff] %v2741
    %2912 = vst [vmem:[#allocation4 + $0x280] sm:$0xff] %v2868
    %2913 = vst [vmem:[#allocation4 + $0x2b8] sm:$0xff] %v2745
    %2914 = vst [vmem:[#allocation4 + $0x2c0] sm:$0xff] %v2747
    %2915 = vst [vmem:[#allocation4 + $0x2c8] sm:$0xff] %v2873
    %2916 = vst [vmem:[#allocation4 + $0x300] sm:$0xff] %v2751
    %2917 = vst [vmem:[#allocation4 + $0x308] sm:$0xff] %v2753
    %2918 = vst [vmem:[#allocation4 + $0x310] sm:$0xff] %v2878
    %2919 = vst [vmem:[#allocation4 + $0x348] sm:$0xff] %v2757
    %2920 = vst [vmem:[#allocation4 + $0x350] sm:$0xff] %v2759
    %2921 = vst [vmem:[#allocation4 + $0x358] sm:$0xff] %v2883
    %v2922 = vand.u32 %v212, 7
    %v2923 = vand.u32 %v213, 7
    %v2924 = vand.u32 %v214, 7
    %v2925 = vand.u32 %v215, 7
    %v2926 = vand.u32 %v216, 7
    %v2927 = vand.u32 %v217, 7
    %v2928 = vand.u32 %v218, 7
    %v2929 = vand.u32 %v219, 7
    %vm2930 = vcmp.ge.s32.totalorder %v2922, 1
    %vm2931 = vcmp.ge.s32.totalorder %v2923, 1
    %vm2932 = vcmp.ge.s32.totalorder %v2924, 1
    %vm2933 = vcmp.ge.s32.totalorder %v2925, 1
    %vm2934 = vcmp.ge.s32.totalorder %v2926, 1
    %vm2935 = vcmp.ge.s32.totalorder %v2927, 1
    %vm2936 = vcmp.ge.s32.totalorder %v2928, 1
    %vm2937 = vcmp.ge.s32.totalorder %v2929, 1
    %v2938 = vsel %vm2930, 1.0, 0.0
    %v2939 = vsel %vm2931, 1.0, 0.0
    %v2940 = vsel %vm2932, 1.0, 0.0
    %v2941 = vsel %vm2933, 1.0, 0.0
    %v2942 = vsel %vm2934, 1.0, 0.0
    %v2943 = vsel %vm2935, 1.0, 0.0
    %v2944 = vsel %vm2936, 1.0, 0.0
    %v2945 = vsel %vm2937, 1.0, 0.0
    %vm2946 = vcmp.le.s32.totalorder %v2922, 6
    %vm2947 = vcmp.le.s32.totalorder %v2923, 6
    %vm2948 = vcmp.le.s32.totalorder %v2924, 6
    %vm2949 = vcmp.le.s32.totalorder %v2925, 6
    %vm2950 = vcmp.le.s32.totalorder %v2926, 6
    %vm2951 = vcmp.le.s32.totalorder %v2927, 6
    %vm2952 = vcmp.le.s32.totalorder %v2928, 6
    %vm2953 = vcmp.le.s32.totalorder %v2929, 6
    %v2954 = vsel %vm2946, 1.0, 0.0
    %v2955 = vsel %vm2947, 1.0, 0.0
    %v2956 = vsel %vm2948, 1.0, 0.0
    %v2957 = vsel %vm2949, 1.0, 0.0
    %v2958 = vsel %vm2950, 1.0, 0.0
    %v2959 = vsel %vm2951, 1.0, 0.0
    %v2960 = vsel %vm2952, 1.0, 0.0
    %v2961 = vsel %vm2953, 1.0, 0.0
    %v2962 = vld [vmem:[#allocation4] sm:$0x80]
    %v2963 = vld [vmem:[#allocation4 + $0x48] sm:$0xff]
    %v2964 = vld [vmem:[#allocation4 + $0x90] sm:$0xff]
    %v2965 = vld [vmem:[#allocation4 + $0xd8] sm:$0xff]
    %v2966 = vld [vmem:[#allocation4 + $0x120] sm:$0xff]
    %v2967 = vld [vmem:[#allocation4 + $0x168] sm:$0xff]
    %v2968 = vld [vmem:[#allocation4 + $0x1b0] sm:$0xff]
    %v2969 = vld [vmem:[#allocation4 + $0x1f8] sm:$0xff]
    %v2970 = vld [vmem:[#allocation4 + $0x240] sm:$0x7f]
    %vm2979 = vcmask 1046528
    %v2980 = vrot.slane %v2938, 1
    %v2981 = vrot.slane %v2939, 1
    %v2982 = vsel %vm2979, %v2980, %v2981
    %v2983 = vrot.slane %v2940, 1
    %v2984 = vsel %vm2979, %v2981, %v2983
    %v2985 = vrot.slane %v2941, 1
    %v2986 = vsel %vm2979, %v2983, %v2985
    %v2987 = vrot.slane %v2942, 1
    %v2988 = vsel %vm2979, %v2985, %v2987
    %v2989 = vrot.slane %v2943, 1
    %v2990 = vsel %vm2979, %v2987, %v2989
    %v2991 = vrot.slane %v2944, 1
    %v2992 = vsel %vm2979, %v2989, %v2991
    %v2993 = vrot.slane %v2945, 1
    %v2994 = vsel %vm2979, %v2991, %v2993
    %v3004 = vmul.f32 %v2962, %v2980
    %v3005 = vmul.f32 %v2963, %v2982
    %v3006 = vmul.f32 %v2964, %v2984
    %v3007 = vmul.f32 %v2965, %v2986
    %v3008 = vmul.f32 %v2966, %v2988
    %v3009 = vmul.f32 %v2967, %v2990
    %v3010 = vmul.f32 %v2968, %v2992
    %v3011 = vmul.f32 %v2969, %v2994
    %v3012 = vmul.f32 %v2970, %v2993
    %v3013 = vadd.f32 %v3004, 0.0
    %v3014 = vadd.f32 %v3005, 0.0
    %v3015 = vadd.f32 %v3006, 0.0
    %v3016 = vadd.f32 %v3007, 0.0
    %v3017 = vadd.f32 %v3008, 0.0
    %v3018 = vadd.f32 %v3009, 0.0
    %v3019 = vadd.f32 %v3010, 0.0
    %v3020 = vadd.f32 %v3011, 0.0
    %v3021 = vadd.f32 %v3012, 0.0
    %v3022 = vld [vmem:[#allocation4 + $0x50] sm:$0xff]
    %v3023 = vld [vmem:[#allocation4 + $0x98] sm:$0xff]
    %v3024 = vld [vmem:[#allocation4 + $0xe0] sm:$0xff]
    %v3025 = vld [vmem:[#allocation4 + $0x128] sm:$0xff]
    %v3026 = vld [vmem:[#allocation4 + $0x170] sm:$0xff]
    %v3027 = vld [vmem:[#allocation4 + $0x1b8] sm:$0xff]
    %v3028 = vld [vmem:[#allocation4 + $0x200] sm:$0xff]
    %v3029 = vld [vmem:[#allocation4 + $0x248] sm:$0xff]
    %v3038 = vrot.slane %v3022, 1
    %v3039 = vrot.slane %v3023, 1
    %v3040 = vsel %vm2979, %v3038, %v3039
    %v3041 = vrot.slane %v3024, 1
    %v3042 = vsel %vm2979, %v3039, %v3041
    %v3043 = vrot.slane %v3025, 1
    %v3044 = vsel %vm2979, %v3041, %v3043
    %v3045 = vrot.slane %v3026, 1
    %v3046 = vsel %vm2979, %v3043, %v3045
    %v3047 = vrot.slane %v3027, 1
    %v3048 = vsel %vm2979, %v3045, %v3047
    %v3049 = vrot.slane %v3028, 1
    %v3050 = vsel %vm2979, %v3047, %v3049
    %v3051 = vrot.slane %v3029, 1
    %v3052 = vsel %vm2979, %v3049, %v3051
    %v3062 = vadd.f32 %v3013, %v3038
    %v3063 = vadd.f32 %v3014, %v3040
    %v3064 = vadd.f32 %v3015, %v3042
    %v3065 = vadd.f32 %v3016, %v3044
    %v3066 = vadd.f32 %v3017, %v3046
    %v3067 = vadd.f32 %v3018, %v3048
    %v3068 = vadd.f32 %v3019, %v3050
    %v3069 = vadd.f32 %v3020, %v3052
    %v3070 = vadd.f32 %v3021, %v3051
    %v3071 = vld [vmem:[#allocation4 + $0x58] sm:$0xfe]
    %v3072 = vld [vmem:[#allocation4 + $0xa0] sm:$0xff]
    %v3073 = vld [vmem:[#allocation4 + $0xe8] sm:$0xff]
    %v3074 = vld [vmem:[#allocation4 + $0x130] sm:$0xff]
    %v3075 = vld [vmem:[#allocation4 + $0x178] sm:$0xff]
    %v3076 = vld [vmem:[#allocation4 + $0x1c0] sm:$0xff]
    %v3077 = vld [vmem:[#allocation4 + $0x208] sm:$0xff]
    %v3078 = vld [vmem:[#allocation4 + $0x250] sm:$0xff]
    %v3079 = vld [vmem:[#allocation4 + $0x298] sm:$0x1]
    %vm3088 = vcmask 1040384
    %v3089 = vrot.slane %v2954, 7
    %v3090 = vrot.slane %v2955, 7
    %v3091 = vsel %vm3088, %v3089, %v3090
    %v3092 = vrot.slane %v2956, 7
    %v3093 = vsel %vm3088, %v3090, %v3092
    %v3094 = vrot.slane %v2957, 7
    %v3095 = vsel %vm3088, %v3092, %v3094
    %v3096 = vrot.slane %v2958, 7
    %v3097 = vsel %vm3088, %v3094, %v3096
    %v3098 = vrot.slane %v2959, 7
    %v3099 = vsel %vm3088, %v3096, %v3098
    %v3100 = vrot.slane %v2960, 7
    %v3101 = vsel %vm3088, %v3098, %v3100
    %v3102 = vrot.slane %v2961, 7
    %v3103 = vsel %vm3088, %v3100, %v3102
    %v3113 = vmul.f32 %v3071, %v3089
    %v3114 = vmul.f32 %v3072, %v3091
    %v3115 = vmul.f32 %v3073, %v3093
    %v3116 = vmul.f32 %v3074, %v3095
    %v3117 = vmul.f32 %v3075, %v3097
    %v3118 = vmul.f32 %v3076, %v3099
    %v3119 = vmul.f32 %v3077, %v3101
    %v3120 = vmul.f32 %v3078, %v3103
    %v3121 = vmul.f32 %v3079, %v3102
    %vm3131 = vcmask 1045504
    %v3132 = vrot.slane %v3113, 2
    %v3133 = vrot.slane %v3114, 2
    %v3134 = vsel %vm3131, %v3132, %v3133
    %v3135 = vrot.slane %v3115, 2
    %v3136 = vsel %vm3131, %v3133, %v3135
    %v3137 = vrot.slane %v3116, 2
    %v3138 = vsel %vm3131, %v3135, %v3137
    %v3139 = vrot.slane %v3117, 2
    %v3140 = vsel %vm3131, %v3137, %v3139
    %v3141 = vrot.slane %v3118, 2
    %v3142 = vsel %vm3131, %v3139, %v3141
    %v3143 = vrot.slane %v3119, 2
    %v3144 = vsel %vm3131, %v3141, %v3143
    %v3145 = vrot.slane %v3120, 2
    %v3146 = vsel %vm3131, %v3143, %v3145
    %v3147 = vrot.slane %v3121, 2
    %v3148 = vsel %vm3131, %v3145, %v3147
    %v3158 = vadd.f32 %v3062, %v3132
    %v3159 = vadd.f32 %v3063, %v3134
    %v3160 = vadd.f32 %v3064, %v3136
    %v3161 = vadd.f32 %v3065, %v3138
    %v3162 = vadd.f32 %v3066, %v3140
    %v3163 = vadd.f32 %v3067, %v3142
    %v3164 = vadd.f32 %v3068, %v3144
    %v3165 = vadd.f32 %v3069, %v3146
    %v3166 = vadd.f32 %v3070, %v3148
    %v3167 = vld [vmem:[#allocation4 + $0x60] sm:$0x80]
    %v3168 = vld [vmem:[#allocation4 + $0xa8] sm:$0xff]
    %v3169 = vld [vmem:[#allocation4 + $0xf0] sm:$0xff]
    %v3170 = vld [vmem:[#allocation4 + $0x138] sm:$0xff]
    %v3171 = vld [vmem:[#allocation4 + $0x180] sm:$0xff]
    %v3172 = vld [vmem:[#allocation4 + $0x1c8] sm:$0xff]
    %v3173 = vld [vmem:[#allocation4 + $0x210] sm:$0xff]
    %v3174 = vld [vmem:[#allocation4 + $0x258] sm:$0xff]
    %v3175 = vld [vmem:[#allocation4 + $0x2a0] sm:$0x7f]
    %v3176 = vmul.f32 %v3167, %v2980
    %v3177 = vmul.f32 %v3168, %v2982
    %v3178 = vmul.f32 %v3169, %v2984
    %v3179 = vmul.f32 %v3170, %v2986
    %v3180 = vmul.f32 %v3171, %v2988
    %v3181 = vmul.f32 %v3172, %v2990
    %v3182 = vmul.f32 %v3173, %v2992
    %v3183 = vmul.f32 %v3174, %v2994
    %v3184 = vmul.f32 %v3175, %v2993
    %v3185 = vadd.f32 %v3158, %v3176
    %v3186 = vadd.f32 %v3159, %v3177
    %v3187 = vadd.f32 %v3160, %v3178
    %v3188 = vadd.f32 %v3161, %v3179
    %v3189 = vadd.f32 %v3162, %v3180
    %v3190 = vadd.f32 %v3163, %v3181
    %v3191 = vadd.f32 %v3164, %v3182
    %v3192 = vadd.f32 %v3165, %v3183
    %v3193 = vadd.f32 %v3166, %v3184
    %v3194 = vld [vmem:[#allocation4 + $0xb0] sm:$0xff]
    %v3195 = vld [vmem:[#allocation4 + $0xf8] sm:$0xff]
    %v3196 = vld [vmem:[#allocation4 + $0x140] sm:$0xff]
    %v3197 = vld [vmem:[#allocation4 + $0x188] sm:$0xff]
    %v3198 = vld [vmem:[#allocation4 + $0x1d0] sm:$0xff]
    %v3199 = vld [vmem:[#allocation4 + $0x218] sm:$0xff]
    %v3200 = vld [vmem:[#allocation4 + $0x260] sm:$0xff]
    %v3201 = vld [vmem:[#allocation4 + $0x2a8] sm:$0xff]
    %v3210 = vrot.slane %v3194, 1
    %v3211 = vrot.slane %v3195, 1
    %v3212 = vsel %vm2979, %v3210, %v3211
    %v3213 = vrot.slane %v3196, 1
    %v3214 = vsel %vm2979, %v3211, %v3213
    %v3215 = vrot.slane %v3197, 1
    %v3216 = vsel %vm2979, %v3213, %v3215
    %v3217 = vrot.slane %v3198, 1
    %v3218 = vsel %vm2979, %v3215, %v3217
    %v3219 = vrot.slane %v3199, 1
    %v3220 = vsel %vm2979, %v3217, %v3219
    %v3221 = vrot.slane %v3200, 1
    %v3222 = vsel %vm2979, %v3219, %v3221
    %v3223 = vrot.slane %v3201, 1
    %v3224 = vsel %vm2979, %v3221, %v3223
    %v3234 = vadd.f32 %v3185, %v3210
    %v3235 = vadd.f32 %v3186, %v3212
    %v3236 = vadd.f32 %v3187, %v3214
    %v3237 = vadd.f32 %v3188, %v3216
    %v3238 = vadd.f32 %v3189, %v3218
    %v3239 = vadd.f32 %v3190, %v3220
    %v3240 = vadd.f32 %v3191, %v3222
    %v3241 = vadd.f32 %v3192, %v3224
    %v3242 = vadd.f32 %v3193, %v3223
    %v3243 = vld [vmem:[#allocation4 + $0xb8] sm:$0xfe]
    %v3244 = vld [vmem:[#allocation4 + $0x100] sm:$0xff]
    %v3245 = vld [vmem:[#allocation4 + $0x148] sm:$0xff]
    %v3246 = vld [vmem:[#allocation4 + $0x190] sm:$0xff]
    %v3247 = vld [vmem:[#allocation4 + $0x1d8] sm:$0xff]
    %v3248 = vld [vmem:[#allocation4 + $0x220] sm:$0xff]
    %v3249 = vld [vmem:[#allocation4 + $0x268] sm:$0xff]
    %v3250 = vld [vmem:[#allocation4 + $0x2b0] sm:$0xff]
    %v3251 = vld [vmem:[#allocation4 + $0x2f8] sm:$0x1]
    %v3252 = vmul.f32 %v3243, %v3089
    %v3253 = vmul.f32 %v3244, %v3091
    %v3254 = vmul.f32 %v3245, %v3093
    %v3255 = vmul.f32 %v3246, %v3095
    %v3256 = vmul.f32 %v3247, %v3097
    %v3257 = vmul.f32 %v3248, %v3099
    %v3258 = vmul.f32 %v3249, %v3101
    %v3259 = vmul.f32 %v3250, %v3103
    %v3260 = vmul.f32 %v3251, %v3102
    %v3270 = vrot.slane %v3252, 2
    %v3271 = vrot.slane %v3253, 2
    %v3272 = vsel %vm3131, %v3270, %v3271
    %v3273 = vrot.slane %v3254, 2
    %v3274 = vsel %vm3131, %v3271, %v3273
    %v3275 = vrot.slane %v3255, 2
    %v3276 = vsel %vm3131, %v3273, %v3275
    %v3277 = vrot.slane %v3256, 2
    %v3278 = vsel %vm3131, %v3275, %v3277
    %v3279 = vrot.slane %v3257, 2
    %v3280 = vsel %vm3131, %v3277, %v3279
    %v3281 = vrot.slane %v3258, 2
    %v3282 = vsel %vm3131, %v3279, %v3281
    %v3283 = vrot.slane %v3259, 2
    %v3284 = vsel %vm3131, %v3281, %v3283
    %v3285 = vrot.slane %v3260, 2
    %v3286 = vsel %vm3131, %v3283, %v3285
    %v3296 = vadd.f32 %v3234, %v3270
    %v3297 = vadd.f32 %v3235, %v3272
    %v3298 = vadd.f32 %v3236, %v3274
    %v3299 = vadd.f32 %v3237, %v3276
    %v3300 = vadd.f32 %v3238, %v3278
    %v3301 = vadd.f32 %v3239, %v3280
    %v3302 = vadd.f32 %v3240, %v3282
    %v3303 = vadd.f32 %v3241, %v3284
    %v3304 = vadd.f32 %v3242, %v3286
    %v3305 = vld [vmem:[#allocation4 + $0xc0] sm:$0x80]
    %v3306 = vld [vmem:[#allocation4 + $0x108] sm:$0xff]
    %v3307 = vld [vmem:[#allocation4 + $0x150] sm:$0xff]
    %v3308 = vld [vmem:[#allocation4 + $0x198] sm:$0xff]
    %v3309 = vld [vmem:[#allocation4 + $0x1e0] sm:$0xff]
    %v3310 = vld [vmem:[#allocation4 + $0x228] sm:$0xff]
    %v3311 = vld [vmem:[#allocation4 + $0x270] sm:$0xff]
    %v3312 = vld [vmem:[#allocation4 + $0x2b8] sm:$0xff]
    %v3313 = vld [vmem:[#allocation4 + $0x300] sm:$0x7f]
    %v3314 = vmul.f32 %v3305, %v2980
    %v3315 = vmul.f32 %v3306, %v2982
    %v3316 = vmul.f32 %v3307, %v2984
    %v3317 = vmul.f32 %v3308, %v2986
    %v3318 = vmul.f32 %v3309, %v2988
    %v3319 = vmul.f32 %v3310, %v2990
    %v3320 = vmul.f32 %v3311, %v2992
    %v3321 = vmul.f32 %v3312, %v2994
    %v3322 = vmul.f32 %v3313, %v2993
    %v3323 = vadd.f32 %v3296, %v3314
    %v3324 = vadd.f32 %v3297, %v3315
    %v3325 = vadd.f32 %v3298, %v3316
    %v3326 = vadd.f32 %v3299, %v3317
    %v3327 = vadd.f32 %v3300, %v3318
    %v3328 = vadd.f32 %v3301, %v3319
    %v3329 = vadd.f32 %v3302, %v3320
    %v3330 = vadd.f32 %v3303, %v3321
    %v3331 = vadd.f32 %v3304, %v3322
    %v3332 = vld [vmem:[#allocation4 + $0x110] sm:$0xff]
    %v3333 = vld [vmem:[#allocation4 + $0x158] sm:$0xff]
    %v3334 = vld [vmem:[#allocation4 + $0x1a0] sm:$0xff]
    %v3335 = vld [vmem:[#allocation4 + $0x1e8] sm:$0xff]
    %v3336 = vld [vmem:[#allocation4 + $0x230] sm:$0xff]
    %v3337 = vld [vmem:[#allocation4 + $0x278] sm:$0xff]
    %v3338 = vld [vmem:[#allocation4 + $0x2c0] sm:$0xff]
    %v3339 = vld [vmem:[#allocation4 + $0x308] sm:$0xff]
    %v3348 = vrot.slane %v3332, 1
    %v3349 = vrot.slane %v3333, 1
    %v3350 = vsel %vm2979, %v3348, %v3349
    %v3351 = vrot.slane %v3334, 1
    %v3352 = vsel %vm2979, %v3349, %v3351
    %v3353 = vrot.slane %v3335, 1
    %v3354 = vsel %vm2979, %v3351, %v3353
    %v3355 = vrot.slane %v3336, 1
    %v3356 = vsel %vm2979, %v3353, %v3355
    %v3357 = vrot.slane %v3337, 1
    %v3358 = vsel %vm2979, %v3355, %v3357
    %v3359 = vrot.slane %v3338, 1
    %v3360 = vsel %vm2979, %v3357, %v3359
    %v3361 = vrot.slane %v3339, 1
    %v3362 = vsel %vm2979, %v3359, %v3361
    %v3372 = vadd.f32 %v3323, %v3348
    %v3373 = vadd.f32 %v3324, %v3350
    %v3374 = vadd.f32 %v3325, %v3352
    %v3375 = vadd.f32 %v3326, %v3354
    %v3376 = vadd.f32 %v3327, %v3356
    %v3377 = vadd.f32 %v3328, %v3358
    %v3378 = vadd.f32 %v3329, %v3360
    %v3379 = vadd.f32 %v3330, %v3362
    %v3380 = vadd.f32 %v3331, %v3361
    %v3381 = vld [vmem:[#allocation4 + $0x118] sm:$0xfe]
    %v3382 = vld [vmem:[#allocation4 + $0x160] sm:$0xff]
    %v3383 = vld [vmem:[#allocation4 + $0x1a8] sm:$0xff]
    %v3384 = vld [vmem:[#allocation4 + $0x1f0] sm:$0xff]
    %v3385 = vld [vmem:[#allocation4 + $0x238] sm:$0xff]
    %v3386 = vld [vmem:[#allocation4 + $0x280] sm:$0xff]
    %v3387 = vld [vmem:[#allocation4 + $0x2c8] sm:$0xff]
    %v3388 = vld [vmem:[#allocation4 + $0x310] sm:$0xff]
    %v3389 = vld [vmem:[#allocation4 + $0x358] sm:$0x1]
    %v3390 = vmul.f32 %v3381, %v3089
    %v3391 = vmul.f32 %v3382, %v3091
    %v3392 = vmul.f32 %v3383, %v3093
    %v3393 = vmul.f32 %v3384, %v3095
    %v3394 = vmul.f32 %v3385, %v3097
    %v3395 = vmul.f32 %v3386, %v3099
    %v3396 = vmul.f32 %v3387, %v3101
    %v3397 = vmul.f32 %v3388, %v3103
    %v3398 = vmul.f32 %v3389, %v3102
    %v3408 = vrot.slane %v3390, 2
    %v3409 = vrot.slane %v3391, 2
    %v3410 = vsel %vm3131, %v3408, %v3409
    %v3411 = vrot.slane %v3392, 2
    %v3412 = vsel %vm3131, %v3409, %v3411
    %v3413 = vrot.slane %v3393, 2
    %v3414 = vsel %vm3131, %v3411, %v3413
    %v3415 = vrot.slane %v3394, 2
    %v3416 = vsel %vm3131, %v3413, %v3415
    %v3417 = vrot.slane %v3395, 2
    %v3418 = vsel %vm3131, %v3415, %v3417
    %v3419 = vrot.slane %v3396, 2
    %v3420 = vsel %vm3131, %v3417, %v3419
    %v3421 = vrot.slane %v3397, 2
    %v3422 = vsel %vm3131, %v3419, %v3421
    %v3423 = vrot.slane %v3398, 2
    %v3424 = vsel %vm3131, %v3421, %v3423
    %v3434 = vadd.f32 %v3372, %v3408
    %v3435 = vadd.f32 %v3373, %v3410
    %v3436 = vadd.f32 %v3374, %v3412
    %v3437 = vadd.f32 %v3375, %v3414
    %v3438 = vadd.f32 %v3376, %v3416
    %v3439 = vadd.f32 %v3377, %v3418
    %v3440 = vadd.f32 %v3378, %v3420
    %v3441 = vadd.f32 %v3379, %v3422
    %v3442 = vadd.f32 %v3380, %v3424
    %v3443 = vld [vmem:[%s4] sm:$0x1]
    %v3445 = vlaneseq
    %v3446 = vshrl.u32 %v3445, 7
    %v3447 = vsub.s32 0, %v3446
    %v3448 = vrot.slane %v3443, %v3447
    %v3450 = vadd.f32 %v3434, %v3448
    %v3451 = vadd.f32 %v3435, %v3448
    %v3452 = vadd.f32 %v3436, %v3448
    %v3453 = vadd.f32 %v3437, %v3448
    %v3454 = vadd.f32 %v3438, %v3448
    %v3455 = vadd.f32 %v3439, %v3448
    %v3456 = vadd.f32 %v3440, %v3448
    %v3457 = vadd.f32 %v3441, %v3448
    %v3458 = vadd.f32 %v3442, %v3448
    %v3459 = vmax.f32 %v3450, 0.0
    %v3460 = vmax.f32 %v3451, 0.0
    %v3461 = vmax.f32 %v3452, 0.0
    %v3462 = vmax.f32 %v3453, 0.0
    %v3463 = vmax.f32 %v3454, 0.0
    %v3464 = vmax.f32 %v3455, 0.0
    %v3465 = vmax.f32 %v3456, 0.0
    %v3466 = vmax.f32 %v3457, 0.0
    %v3467 = vmax.f32 %v3458, 0.0
    %vm3468 = vcmask 523271
    %3469 = vst.msk [vmem:[#allocation3 - $0x7] sm:$0x80] %vm3468, %v3459
    %3470 = vst.msk [vmem:[#allocation3 + $0x1] sm:$0xff] %vm172, %v3460
    %3471 = vst.msk [vmem:[#allocation3 + $0x9] sm:$0xff] %vm172, %v3461
    %3472 = vst.msk [vmem:[#allocation3 + $0x11] sm:$0xff] %vm172, %v3462
    %3473 = vst.msk [vmem:[#allocation3 + $0x19] sm:$0xff] %vm172, %v3463
    %3474 = vst.msk [vmem:[#allocation3 + $0x21] sm:$0xff] %vm172, %v3464
    %3475 = vst.msk [vmem:[#allocation3 + $0x29] sm:$0xff] %vm172, %v3465
    %3476 = vst.msk [vmem:[#allocation3 + $0x31] sm:$0xff] %vm172, %v3466
    %vm3477 = vcmask 522240
    %3478 = vst.msk [vmem:[#allocation3 + $0x39] sm:$0x7f] %vm3477, %v3467
    %3479 = vst.msk [vmem:[#allocation3 + $0x40] sm:$0xff] %vm172, 0.0
    %3480 = vst.msk [vmem:[#allocation3 + $0x48] sm:$0xff] %vm172, 0.0
    %v3481 = vld [vmem:[#allocation3] sm:$0xff]
    %v3482 = vld [vmem:[#allocation3 + $0x8] sm:$0xff]
    %v3483 = vld [vmem:[#allocation3 + $0x10] sm:$0xff]
    %v3484 = vld [vmem:[#allocation3 + $0x18] sm:$0xff]
    %v3485 = vld [vmem:[#allocation3 + $0x20] sm:$0xff]
    %v3486 = vld [vmem:[#allocation3 + $0x28] sm:$0xff]
    %v3487 = vld [vmem:[#allocation3 + $0x30] sm:$0xff]
    %v3488 = vld [vmem:[#allocation3 + $0x38] sm:$0xff]
    %v3489 = vld [vmem:[#allocation3 + $0x1] sm:$0xff]
    %v3490 = vld [vmem:[#allocation3 + $0x9] sm:$0xff]
    %v3491 = vld [vmem:[#allocation3 + $0x11] sm:$0xff]
    %v3492 = vld [vmem:[#allocation3 + $0x19] sm:$0xff]
    %v3493 = vld [vmem:[#allocation3 + $0x21] sm:$0xff]
    %v3494 = vld [vmem:[#allocation3 + $0x29] sm:$0xff]
    %v3495 = vld [vmem:[#allocation3 + $0x31] sm:$0xff]
    %v3496 = vld [vmem:[#allocation3 + $0x39] sm:$0xff]
    %v3497 = vmax.f32 %v3481, %v3489
    %v3498 = vmax.f32 %v3482, %v3490
    %v3499 = vmax.f32 %v3483, %v3491
    %v3500 = vmax.f32 %v3484, %v3492
    %v3501 = vmax.f32 %v3485, %v3493
    %v3502 = vmax.f32 %v3486, %v3494
    %v3503 = vmax.f32 %v3487, %v3495
    %v3504 = vmax.f32 %v3488, %v3496
    %v3505 = vld [vmem:[#allocation3 + $0x40] sm:$0xff]
    %v3506 = vld [vmem:[#allocation3 + $0x41] sm:$0xff]
    %v3507 = vmax.f32 %v3505, %v3506
    %v3508 = vmax.f32 %v3497, %v3498
    %v3509 = vmax.f32 %v3498, %v3499
    %v3510 = vmax.f32 %v3499, %v3500
    %v3511 = vmax.f32 %v3500, %v3501
    %v3512 = vmax.f32 %v3501, %v3502
    %v3513 = vmax.f32 %v3502, %v3503
    %v3514 = vmax.f32 %v3503, %v3504
    %v3515 = vmax.f32 %v3504, %v3507
    %v3516 = vld [vmem:[%s10] sm:$0xff]
    %v3517 = vld [vmem:[%s10 + $0x8] sm:$0xff]
    %v3519 = vsel %vm172, %v3516, 0
    %v3522 = vsel %vm172, %v3517, 0
    %3524 = vmatprep.subr.mxu0 0.0
    %3525 = vmatpush1.msra.mxu0 %v3508
    %3526 = vmatprep.subr.mxu0 0.0
    %3527 = vmatpush1.msra.mxu0 %v3509
    %3528 = vmatprep.subr.mxu0 0.0
    %3529 = vmatpush1.msra.mxu0 %v3510
    %3530 = vmatprep.subr.mxu0 0.0
    %3531 = vmatpush1.msra.mxu0 %v3511
    %3532 = vmatprep.subr.mxu0 0.0
    %3533 = vmatpush1.msra.mxu0 %v3512
    %3534 = vmatprep.subr.mxu0 0.0
    %3535 = vmatpush1.msra.mxu0 %v3513
    %3536 = vmatprep.subr.mxu0 0.0
    %3537 = vmatpush1.msra.mxu0 %v3514
    %3538 = vmatprep.subr.mxu0 0.0
    %3539 = vmatpush1.msra.mxu0 %v3515
    %3540 = vmatprep.subr.mxu0 0.0
    %3541 = vmatpush1.msra.mxu0 0.0
    %3542 = vmatprep.subr.mxu0 0.0
    %3543 = vmatpush1.msra.mxu0 0.0
    %3544 = vmatprep.subr.mxu0 0.0
    %3545 = vmatpush1.msra.mxu0 0.0
    %3546 = vmatprep.subr.mxu0 0.0
    %3547 = vmatpush1.msra.mxu0 0.0
    %3548 = vmatprep.subr.mxu0 0.0
    %3549 = vmatpush1.msra.mxu0 0.0
    %3550 = vmatprep.subr.mxu0 0.0
    %3551 = vmatpush1.msra.mxu0 0.0
    %3552 = vmatprep.subr.mxu0 0.0
    %3553 = vmatpush1.msra.mxu0 0.0
    %3554 = vmatprep.subr.mxu0 0.0
    %3555 = vmatpush1.msra.mxu0 0.0
    %3556 = vmatprep.subr.mxu0 0.0
    %3557 = vmatpush1.msra.mxu0 0.0
    %3558 = vmatprep.subr.mxu0 0.0
    %3559 = vmatpush1.msra.mxu0 0.0
    %3560 = vmatprep.subr.mxu0 0.0
    %3561 = vmatpush1.msra.mxu0 0.0
    %3562 = vmatprep.subr.mxu0 0.0
    %3563 = vmatpush1.msra.mxu0 0.0
    %3564 = vmatprep.subr.mxu0 0.0
    %3565 = vmatpush1.msra.mxu0 0.0
    %3566 = vmatprep.subr.mxu0 0.0
    %3567 = vmatpush1.msra.mxu0 0.0
    %3568 = vmatprep.subr.mxu0 0.0
    %3569 = vmatpush1.msra.mxu0 0.0
    %3570 = vmatprep.subr.mxu0 0.0
    %3571 = vmatpush1.msra.mxu0 0.0
    %3572 = vmatprep.subr.mxu0 0.0
    %3573 = vmatpush1.msra.mxu0 0.0
    %3574 = vmatprep.subr.mxu0 0.0
    %3575 = vmatpush1.msra.mxu0 0.0
    %3576 = vmatprep.subr.mxu0 0.0
    %3577 = vmatpush1.msra.mxu0 0.0
    %3578 = vmatprep.subr.mxu0 0.0
    %3579 = vmatpush1.msra.mxu0 0.0
    %3580 = vmatprep.subr.mxu0 0.0
    %3581 = vmatpush1.msra.mxu0 0.0
    %3582 = vmatprep.subr.mxu0 0.0
    %3583 = vmatpush1.msra.mxu0 0.0
    %3584 = vmatprep.subr.mxu0 0.0
    %3585 = vmatpush1.msra.mxu0 0.0
    %3586 = vmatprep.subr.mxu0 0.0
    %3587 = vmatpush1.msra.mxu0 0.0
    %3588 = vmatprep.mubr.f32.mxu0 0.0
    %3589 = vmatmul.mubr.f32.gmra.mrb[0].mxu0 %v3519
    %v3590 = vpop.f32.mrb[0].mxu0
    %v3591 = vadd.f32 0.0, %v3590
    %v3592 = vpop.f32.mrb[0].mxu0
    %3593 = vmatprep.mubr.f32.mxu0 0.0
    %3594 = vmatmul.mubr.f32.gmra.mrb[0].mxu0 %v3522
    %v3595 = vpop.f32.mrb[0].mxu0
    %v3596 = vadd.f32 0.0, %v3595
    %v3597 = vpop.f32.mrb[0].mxu0
    %3598 = vdwg.mxu0
    %3599 = vst.msk [vmem:[#allocation2 + $0x8] sm:$0xff] %vm172, 0.0
    %3600 = vst.msk [vmem:[#allocation2 + $0x10] sm:$0xff] %vm172, 0.0
    %3601 = vst.msk [vmem:[#allocation2 + $0x28] sm:$0xff] %vm172, 0.0
    %3602 = vst.msk [vmem:[#allocation2 + $0x30] sm:$0xff] %vm172, 0.0
    %3603 = vst.msk [vmem:[#allocation2 + $0x18] sm:$0xff] %vm172, %v3591
    %3604 = vst.msk [vmem:[#allocation2 + $0x20] sm:$0xff] %vm172, %v3596
    %v3605 = vld [vmem:[#allocation2 + $0x10] sm:$0xff]
    %v3606 = vld [vmem:[#allocation2 + $0x18] sm:$0xff]
    %v3607 = vld [vmem:[#allocation2 + $0x20] sm:$0xff]
    %v3608 = vld [vmem:[#allocation2 + $0x28] sm:$0xff]
    %v3609 = vld [vmem:[#allocation10] sm:$0xff]
    %v3610 = vld [vmem:[#allocation10 + $0x8] sm:$0xff]
    %v3611 = vld [vmem:[#allocation10 + $0x10] sm:$0xff]
    %v3612 = vld [vmem:[#allocation10 + $0x48] sm:$0xff]
    %v3613 = vld [vmem:[#allocation10 + $0x50] sm:$0xff]
    %v3614 = vld [vmem:[#allocation10 + $0x58] sm:$0xff]
    %v3615 = vld [vmem:[#allocation10 + $0x90] sm:$0xff]
    %v3616 = vld [vmem:[#allocation10 + $0x98] sm:$0xff]
    %v3617 = vld [vmem:[#allocation10 + $0xa0] sm:$0xff]
    %v3618 = vld [vmem:[#allocation10 + $0xd8] sm:$0xff]
    %v3619 = vld [vmem:[#allocation10 + $0xe0] sm:$0xff]
    %v3620 = vld [vmem:[#allocation10 + $0xe8] sm:$0xff]
    %v3621 = vld [vmem:[#allocation10 + $0x120] sm:$0xff]
    %v3622 = vld [vmem:[#allocation10 + $0x128] sm:$0xff]
    %v3623 = vld [vmem:[#allocation10 + $0x130] sm:$0xff]
    %v3624 = vld [vmem:[#allocation10 + $0x168] sm:$0xff]
    %v3625 = vld [vmem:[#allocation10 + $0x170] sm:$0xff]
    %v3626 = vld [vmem:[#allocation10 + $0x178] sm:$0xff]
    %v3627 = vld [vmem:[#allocation10 + $0x1b0] sm:$0xff]
    %v3628 = vld [vmem:[#allocation10 + $0x1b8] sm:$0xff]
    %v3629 = vld [vmem:[#allocation10 + $0x1c0] sm:$0xff]
    %v3630 = vld [vmem:[#allocation10 + $0x1f8] sm:$0xff]
    %v3631 = vld [vmem:[#allocation10 + $0x200] sm:$0xff]
    %v3632 = vld [vmem:[#allocation10 + $0x208] sm:$0xff]
    %v3634 = vsel %vm172, %v3605, 0
    %v3637 = vsel %vm172, %v3606, 0
    %v3640 = vsel %vm172, %v3607, 0
    %v3643 = vsel %vm172, %v3608, 0
    %3645 = vmatprep.subr.mxu0 %v3610
    %3646 = vmatpush1.msra.mxu0 %v3609
    %3647 = vmatprep.subr.mxu0 %v3613
    %3648 = vmatpush1.msra.mxu0 %v3612
    %3649 = vmatprep.subr.mxu0 %v3616
    %3650 = vmatpush1.msra.mxu0 %v3615
    %3651 = vmatprep.subr.mxu0 %v3619
    %3652 = vmatpush1.msra.mxu0 %v3618
    %3653 = vmatprep.subr.mxu0 %v3622
    %3654 = vmatpush1.msra.mxu0 %v3621
    %3655 = vmatprep.subr.mxu0 %v3625
    %3656 = vmatpush1.msra.mxu0 %v3624
    %3657 = vmatprep.subr.mxu0 %v3628
    %3658 = vmatpush1.msra.mxu0 %v3627
    %3659 = vmatprep.subr.mxu0 %v3631
    %3660 = vmatpush1.msra.mxu0 %v3630
    %3661 = vmatprep.subr.mxu0 0.0
    %3662 = vmatpush1.msra.mxu0 0.0
    %3663 = vmatprep.subr.mxu0 0.0
    %3664 = vmatpush1.msra.mxu0 0.0
    %3665 = vmatprep.subr.mxu0 0.0
    %3666 = vmatpush1.msra.mxu0 0.0
    %3667 = vmatprep.subr.mxu0 0.0
    %3668 = vmatpush1.msra.mxu0 0.0
    %3669 = vmatprep.subr.mxu0 0.0
    %3670 = vmatpush1.msra.mxu0 0.0
    %3671 = vmatprep.subr.mxu0 0.0
    %3672 = vmatpush1.msra.mxu0 0.0
    %3673 = vmatprep.subr.mxu0 0.0
    %3674 = vmatpush1.msra.mxu0 0.0
    %3675 = vmatprep.subr.mxu0 0.0
    %3676 = vmatpush1.msra.mxu0 0.0
    %3677 = vmatprep.subr.mxu0 0.0
    %3678 = vmatpush1.msra.mxu0 0.0
    %3679 = vmatprep.subr.mxu0 0.0
    %3680 = vmatpush1.msra.mxu0 0.0
    %3681 = vmatprep.subr.mxu0 0.0
    %3682 = vmatpush1.msra.mxu0 0.0
    %3683 = vmatprep.subr.mxu0 0.0
    %3684 = vmatpush1.msra.mxu0 0.0
    %3685 = vmatprep.subr.mxu0 0.0
    %3686 = vmatpush1.msra.mxu0 0.0
    %3687 = vmatprep.subr.mxu0 0.0
    %3688 = vmatpush1.msra.mxu0 0.0
    %3689 = vmatprep.subr.mxu0 0.0
    %3690 = vmatpush1.msra.mxu0 0.0
    %3691 = vmatprep.subr.mxu0 0.0
    %3692 = vmatpush1.msra.mxu0 0.0
    %3693 = vmatprep.subr.mxu0 0.0
    %3694 = vmatpush1.msra.mxu0 0.0
    %3695 = vmatprep.subr.mxu0 0.0
    %3696 = vmatpush1.msra.mxu0 0.0
    %3697 = vmatprep.subr.mxu0 0.0
    %3698 = vmatpush1.msra.mxu0 0.0
    %3699 = vmatprep.subr.mxu0 0.0
    %3700 = vmatpush1.msra.mxu0 0.0
    %3701 = vmatprep.subr.mxu0 0.0
    %3702 = vmatpush1.msra.mxu0 0.0
    %3703 = vmatprep.subr.mxu0 0.0
    %3704 = vmatpush1.msra.mxu0 0.0
    %3705 = vmatprep.subr.mxu0 0.0
    %3706 = vmatpush1.msra.mxu0 0.0
    %3707 = vmatprep.subr.mxu0 0.0
    %3708 = vmatpush1.msra.mxu0 0.0
    %3709 = vmatprep.mubr.f32.mxu0 0.0
    %3710 = vmatmul.mubr.f32.gmra.mrb[0].mxu0 %v3634
    %v3711 = vpop.f32.mrb[0].mxu0
    %v3712 = vadd.f32 0.0, %v3711
    %v3713 = vpop.f32.mrb[0].mxu0
    %v3714 = vadd.f32 0.0, %v3713
    %3715 = vmatprep.mubr.f32.mxu0 0.0
    %3716 = vmatmul.mubr.f32.gmra.mrb[0].mxu0 %v3637
    %v3717 = vpop.f32.mrb[0].mxu0
    %v3718 = vadd.f32 0.0, %v3717
    %v3719 = vpop.f32.mrb[0].mxu0
    %v3720 = vadd.f32 0.0, %v3719
    %3721 = vmatprep.mubr.f32.mxu0 0.0
    %3722 = vmatmul.mubr.f32.gmra.mrb[0].mxu0 %v3640
    %v3723 = vpop.f32.mrb[0].mxu0
    %v3724 = vadd.f32 0.0, %v3723
    %v3725 = vpop.f32.mrb[0].mxu0
    %v3726 = vadd.f32 0.0, %v3725
    %3727 = vmatprep.mubr.f32.mxu0 0.0
    %3728 = vmatmul.mubr.f32.gmra.mrb[0].mxu0 %v3643
    %v3729 = vpop.f32.mrb[0].mxu0
    %v3730 = vadd.f32 0.0, %v3729
    %v3731 = vpop.f32.mrb[0].mxu0
    %v3732 = vadd.f32 0.0, %v3731
    %3733 = vdwg.mxu0
    %3734 = vmatprep.subr.mxu0 0.0
    %3735 = vmatpush1.msra.mxu0 %v3611
    %3736 = vmatprep.subr.mxu0 0.0
    %3737 = vmatpush1.msra.mxu0 %v3614
    %3738 = vmatprep.subr.mxu0 0.0
    %3739 = vmatpush1.msra.mxu0 %v3617
    %3740 = vmatprep.subr.mxu0 0.0
    %3741 = vmatpush1.msra.mxu0 %v3620
    %3742 = vmatprep.subr.mxu0 0.0
    %3743 = vmatpush1.msra.mxu0 %v3623
    %3744 = vmatprep.subr.mxu0 0.0
    %3745 = vmatpush1.msra.mxu0 %v3626
    %3746 = vmatprep.subr.mxu0 0.0
    %3747 = vmatpush1.msra.mxu0 %v3629
    %3748 = vmatprep.subr.mxu0 0.0
    %3749 = vmatpush1.msra.mxu0 %v3632
    %3750 = vmatprep.subr.mxu0 0.0
    %3751 = vmatpush1.msra.mxu0 0.0
    %3752 = vmatprep.subr.mxu0 0.0
    %3753 = vmatpush1.msra.mxu0 0.0
    %3754 = vmatprep.subr.mxu0 0.0
    %3755 = vmatpush1.msra.mxu0 0.0
    %3756 = vmatprep.subr.mxu0 0.0
    %3757 = vmatpush1.msra.mxu0 0.0
    %3758 = vmatprep.subr.mxu0 0.0
    %3759 = vmatpush1.msra.mxu0 0.0
    %3760 = vmatprep.subr.mxu0 0.0
    %3761 = vmatpush1.msra.mxu0 0.0
    %3762 = vmatprep.subr.mxu0 0.0
    %3763 = vmatpush1.msra.mxu0 0.0
    %3764 = vmatprep.subr.mxu0 0.0
    %3765 = vmatpush1.msra.mxu0 0.0
    %3766 = vmatprep.subr.mxu0 0.0
    %3767 = vmatpush1.msra.mxu0 0.0
    %3768 = vmatprep.subr.mxu0 0.0
    %3769 = vmatpush1.msra.mxu0 0.0
    %3770 = vmatprep.subr.mxu0 0.0
    %3771 = vmatpush1.msra.mxu0 0.0
    %3772 = vmatprep.subr.mxu0 0.0
    %3773 = vmatpush1.msra.mxu0 0.0
    %3774 = vmatprep.subr.mxu0 0.0
    %3775 = vmatpush1.msra.mxu0 0.0
    %3776 = vmatprep.subr.mxu0 0.0
    %3777 = vmatpush1.msra.mxu0 0.0
    %3778 = vmatprep.subr.mxu0 0.0
    %3779 = vmatpush1.msra.mxu0 0.0
    %3780 = vmatprep.subr.mxu0 0.0
    %3781 = vmatpush1.msra.mxu0 0.0
    %3782 = vmatprep.subr.mxu0 0.0
    %3783 = vmatpush1.msra.mxu0 0.0
    %3784 = vmatprep.subr.mxu0 0.0
    %3785 = vmatpush1.msra.mxu0 0.0
    %3786 = vmatprep.subr.mxu0 0.0
    %3787 = vmatpush1.msra.mxu0 0.0
    %3788 = vmatprep.subr.mxu0 0.0
    %3789 = vmatpush1.msra.mxu0 0.0
    %3790 = vmatprep.subr.mxu0 0.0
    %3791 = vmatpush1.msra.mxu0 0.0
    %3792 = vmatprep.subr.mxu0 0.0
    %3793 = vmatpush1.msra.mxu0 0.0
    %3794 = vmatprep.subr.mxu0 0.0
    %3795 = vmatpush1.msra.mxu0 0.0
    %3796 = vmatprep.subr.mxu0 0.0
    %3797 = vmatpush1.msra.mxu0 0.0
    %3798 = vmatprep.mubr.f32.mxu0 0.0
    %3799 = vmatmul.mubr.f32.gmra.mrb[0].mxu0 %v3634
    %v3800 = vpop.f32.mrb[0].mxu0
    %v3801 = vadd.f32 0.0, %v3800
    %v3802 = vpop.f32.mrb[0].mxu0
    %3803 = vmatprep.mubr.f32.mxu0 0.0
    %3804 = vmatmul.mubr.f32.gmra.mrb[0].mxu0 %v3637
    %v3805 = vpop.f32.mrb[0].mxu0
    %v3806 = vadd.f32 0.0, %v3805
    %v3807 = vpop.f32.mrb[0].mxu0
    %3808 = vmatprep.mubr.f32.mxu0 0.0
    %3809 = vmatmul.mubr.f32.gmra.mrb[0].mxu0 %v3640
    %v3810 = vpop.f32.mrb[0].mxu0
    %v3811 = vadd.f32 0.0, %v3810
    %v3812 = vpop.f32.mrb[0].mxu0
    %3813 = vmatprep.mubr.f32.mxu0 0.0
    %3814 = vmatmul.mubr.f32.gmra.mrb[0].mxu0 %v3643
    %v3815 = vpop.f32.mrb[0].mxu0
    %v3816 = vadd.f32 0.0, %v3815
    %v3817 = vpop.f32.mrb[0].mxu0
    %3818 = vdwg.mxu0
    %3819 = vst [vmem:[#allocation4] sm:$0xff] %v3712
    %3820 = vst [vmem:[#allocation4 + $0x8] sm:$0xff] %v3714
    %3821 = vst [vmem:[#allocation4 + $0x10] sm:$0xff] %v3801
    %3822 = vst [vmem:[#allocation4 + $0x48] sm:$0xff] %v3718
    %3823 = vst [vmem:[#allocation4 + $0x50] sm:$0xff] %v3720
    %3824 = vst [vmem:[#allocation4 + $0x58] sm:$0xff] %v3806
    %3825 = vst [vmem:[#allocation4 + $0x90] sm:$0xff] %v3724
    %3826 = vst [vmem:[#allocation4 + $0x98] sm:$0xff] %v3726
    %3827 = vst [vmem:[#allocation4 + $0xa0] sm:$0xff] %v3811
    %3828 = vst [vmem:[#allocation4 + $0xd8] sm:$0xff] %v3730
    %3829 = vst [vmem:[#allocation4 + $0xe0] sm:$0xff] %v3732
    %3830 = vst [vmem:[#allocation4 + $0xe8] sm:$0xff] %v3816
    %v3831 = vld [vmem:[#allocation10 + $0x18] sm:$0xff]
    %v3832 = vld [vmem:[#allocation10 + $0x20] sm:$0xff]
    %v3833 = vld [vmem:[#allocation10 + $0x28] sm:$0xff]
    %v3834 = vld [vmem:[#allocation10 + $0x60] sm:$0xff]
    %v3835 = vld [vmem:[#allocation10 + $0x68] sm:$0xff]
    %v3836 = vld [vmem:[#allocation10 + $0x70] sm:$0xff]
    %v3837 = vld [vmem:[#allocation10 + $0xa8] sm:$0xff]
    %v3838 = vld [vmem:[#allocation10 + $0xb0] sm:$0xff]
    %v3839 = vld [vmem:[#allocation10 + $0xb8] sm:$0xff]
    %v3840 = vld [vmem:[#allocation10 + $0xf0] sm:$0xff]
    %v3841 = vld [vmem:[#allocation10 + $0xf8] sm:$0xff]
    %v3842 = vld [vmem:[#allocation10 + $0x100] sm:$0xff]
    %v3843 = vld [vmem:[#allocation10 + $0x138] sm:$0xff]
    %v3844 = vld [vmem:[#allocation10 + $0x140] sm:$0xff]
    %v3845 = vld [vmem:[#allocation10 + $0x148] sm:$0xff]
    %v3846 = vld [vmem:[#allocation10 + $0x180] sm:$0xff]
    %v3847 = vld [vmem:[#allocation10 + $0x188] sm:$0xff]
    %v3848 = vld [vmem:[#allocation10 + $0x190] sm:$0xff]
    %v3849 = vld [vmem:[#allocation10 + $0x1c8] sm:$0xff]
    %v3850 = vld [vmem:[#allocation10 + $0x1d0] sm:$0xff]
    %v3851 = vld [vmem:[#allocation10 + $0x1d8] sm:$0xff]
    %v3852 = vld [vmem:[#allocation10 + $0x210] sm:$0xff]
    %v3853 = vld [vmem:[#allocation10 + $0x218] sm:$0xff]
    %v3854 = vld [vmem:[#allocation10 + $0x220] sm:$0xff]
    %3855 = vmatprep.subr.mxu0 %v3832
    %3856 = vmatpush1.msra.mxu0 %v3831
    %3857 = vmatprep.subr.mxu0 %v3835
    %3858 = vmatpush1.msra.mxu0 %v3834
    %3859 = vmatprep.subr.mxu0 %v3838
    %3860 = vmatpush1.msra.mxu0 %v3837
    %3861 = vmatprep.subr.mxu0 %v3841
    %3862 = vmatpush1.msra.mxu0 %v3840
    %3863 = vmatprep.subr.mxu0 %v3844
    %3864 = vmatpush1.msra.mxu0 %v3843
    %3865 = vmatprep.subr.mxu0 %v3847
    %3866 = vmatpush1.msra.mxu0 %v3846
    %3867 = vmatprep.subr.mxu0 %v3850
    %3868 = vmatpush1.msra.mxu0 %v3849
    %3869 = vmatprep.subr.mxu0 %v3853
    %3870 = vmatpush1.msra.mxu0 %v3852
    %3871 = vmatprep.subr.mxu0 0.0
    %3872 = vmatpush1.msra.mxu0 0.0
    %3873 = vmatprep.subr.mxu0 0.0
    %3874 = vmatpush1.msra.mxu0 0.0
    %3875 = vmatprep.subr.mxu0 0.0
    %3876 = vmatpush1.msra.mxu0 0.0
    %3877 = vmatprep.subr.mxu0 0.0
    %3878 = vmatpush1.msra.mxu0 0.0
    %3879 = vmatprep.subr.mxu0 0.0
    %3880 = vmatpush1.msra.mxu0 0.0
    %3881 = vmatprep.subr.mxu0 0.0
    %3882 = vmatpush1.msra.mxu0 0.0
    %3883 = vmatprep.subr.mxu0 0.0
    %3884 = vmatpush1.msra.mxu0 0.0
    %3885 = vmatprep.subr.mxu0 0.0
    %3886 = vmatpush1.msra.mxu0 0.0
    %3887 = vmatprep.subr.mxu0 0.0
    %3888 = vmatpush1.msra.mxu0 0.0
    %3889 = vmatprep.subr.mxu0 0.0
    %3890 = vmatpush1.msra.mxu0 0.0
    %3891 = vmatprep.subr.mxu0 0.0
    %3892 = vmatpush1.msra.mxu0 0.0
    %3893 = vmatprep.subr.mxu0 0.0
    %3894 = vmatpush1.msra.mxu0 0.0
    %3895 = vmatprep.subr.mxu0 0.0
    %3896 = vmatpush1.msra.mxu0 0.0
    %3897 = vmatprep.subr.mxu0 0.0
    %3898 = vmatpush1.msra.mxu0 0.0
    %3899 = vmatprep.subr.mxu0 0.0
    %3900 = vmatpush1.msra.mxu0 0.0
    %3901 = vmatprep.subr.mxu0 0.0
    %3902 = vmatpush1.msra.mxu0 0.0
    %3903 = vmatprep.subr.mxu0 0.0
    %3904 = vmatpush1.msra.mxu0 0.0
    %3905 = vmatprep.subr.mxu0 0.0
    %3906 = vmatpush1.msra.mxu0 0.0
    %3907 = vmatprep.subr.mxu0 0.0
    %3908 = vmatpush1.msra.mxu0 0.0
    %3909 = vmatprep.subr.mxu0 0.0
    %3910 = vmatpush1.msra.mxu0 0.0
    %3911 = vmatprep.subr.mxu0 0.0
    %3912 = vmatpush1.msra.mxu0 0.0
    %3913 = vmatprep.subr.mxu0 0.0
    %3914 = vmatpush1.msra.mxu0 0.0
    %3915 = vmatprep.subr.mxu0 0.0
    %3916 = vmatpush1.msra.mxu0 0.0
    %3917 = vmatprep.subr.mxu0 0.0
    %3918 = vmatpush1.msra.mxu0 0.0
    %3919 = vmatprep.mubr.f32.mxu0 0.0
    %3920 = vmatmul.mubr.f32.gmra.mrb[0].mxu0 %v3634
    %v3921 = vpop.f32.mrb[0].mxu0
    %v3922 = vadd.f32 0.0, %v3921
    %v3923 = vpop.f32.mrb[0].mxu0
    %v3924 = vadd.f32 0.0, %v3923
    %3925 = vmatprep.mubr.f32.mxu0 0.0
    %3926 = vmatmul.mubr.f32.gmra.mrb[0].mxu0 %v3637
    %v3927 = vpop.f32.mrb[0].mxu0
    %v3928 = vadd.f32 0.0, %v3927
    %v3929 = vpop.f32.mrb[0].mxu0
    %v3930 = vadd.f32 0.0, %v3929
    %3931 = vmatprep.mubr.f32.mxu0 0.0
    %3932 = vmatmul.mubr.f32.gmra.mrb[0].mxu0 %v3640
    %v3933 = vpop.f32.mrb[0].mxu0
    %v3934 = vadd.f32 0.0, %v3933
    %v3935 = vpop.f32.mrb[0].mxu0
    %v3936 = vadd.f32 0.0, %v3935
    %3937 = vmatprep.mubr.f32.mxu0 0.0
    %3938 = vmatmul.mubr.f32.gmra.mrb[0].mxu0 %v3643
    %v3939 = vpop.f32.mrb[0].mxu0
    %v3940 = vadd.f32 0.0, %v3939
    %v3941 = vpop.f32.mrb[0].mxu0
    %v3942 = vadd.f32 0.0, %v3941
    %3943 = vdwg.mxu0
    %3944 = vmatprep.subr.mxu0 0.0
    %3945 = vmatpush1.msra.mxu0 %v3833
    %3946 = vmatprep.subr.mxu0 0.0
    %3947 = vmatpush1.msra.mxu0 %v3836
    %3948 = vmatprep.subr.mxu0 0.0
    %3949 = vmatpush1.msra.mxu0 %v3839
    %3950 = vmatprep.subr.mxu0 0.0
    %3951 = vmatpush1.msra.mxu0 %v3842
    %3952 = vmatprep.subr.mxu0 0.0
    %3953 = vmatpush1.msra.mxu0 %v3845
    %3954 = vmatprep.subr.mxu0 0.0
    %3955 = vmatpush1.msra.mxu0 %v3848
    %3956 = vmatprep.subr.mxu0 0.0
    %3957 = vmatpush1.msra.mxu0 %v3851
    %3958 = vmatprep.subr.mxu0 0.0
    %3959 = vmatpush1.msra.mxu0 %v3854
    %3960 = vmatprep.subr.mxu0 0.0
    %3961 = vmatpush1.msra.mxu0 0.0
    %3962 = vmatprep.subr.mxu0 0.0
    %3963 = vmatpush1.msra.mxu0 0.0
    %3964 = vmatprep.subr.mxu0 0.0
    %3965 = vmatpush1.msra.mxu0 0.0
    %3966 = vmatprep.subr.mxu0 0.0
    %3967 = vmatpush1.msra.mxu0 0.0
    %3968 = vmatprep.subr.mxu0 0.0
    %3969 = vmatpush1.msra.mxu0 0.0
    %3970 = vmatprep.subr.mxu0 0.0
    %3971 = vmatpush1.msra.mxu0 0.0
    %3972 = vmatprep.subr.mxu0 0.0
    %3973 = vmatpush1.msra.mxu0 0.0
    %3974 = vmatprep.subr.mxu0 0.0
    %3975 = vmatpush1.msra.mxu0 0.0
    %3976 = vmatprep.subr.mxu0 0.0
    %3977 = vmatpush1.msra.mxu0 0.0
    %3978 = vmatprep.subr.mxu0 0.0
    %3979 = vmatpush1.msra.mxu0 0.0
    %3980 = vmatprep.subr.mxu0 0.0
    %3981 = vmatpush1.msra.mxu0 0.0
    %3982 = vmatprep.subr.mxu0 0.0
    %3983 = vmatpush1.msra.mxu0 0.0
    %3984 = vmatprep.subr.mxu0 0.0
    %3985 = vmatpush1.msra.mxu0 0.0
    %3986 = vmatprep.subr.mxu0 0.0
    %3987 = vmatpush1.msra.mxu0 0.0
    %3988 = vmatprep.subr.mxu0 0.0
    %3989 = vmatpush1.msra.mxu0 0.0
    %3990 = vmatprep.subr.mxu0 0.0
    %3991 = vmatpush1.msra.mxu0 0.0
    %3992 = vmatprep.subr.mxu0 0.0
    %3993 = vmatpush1.msra.mxu0 0.0
    %3994 = vmatprep.subr.mxu0 0.0
    %3995 = vmatpush1.msra.mxu0 0.0
    %3996 = vmatprep.subr.mxu0 0.0
    %3997 = vmatpush1.msra.mxu0 0.0
    %3998 = vmatprep.subr.mxu0 0.0
    %3999 = vmatpush1.msra.mxu0 0.0
    %4000 = vmatprep.subr.mxu0 0.0
    %4001 = vmatpush1.msra.mxu0 0.0
    %4002 = vmatprep.subr.mxu0 0.0
    %4003 = vmatpush1.msra.mxu0 0.0
    %4004 = vmatprep.subr.mxu0 0.0
    %4005 = vmatpush1.msra.mxu0 0.0
    %4006 = vmatprep.subr.mxu0 0.0
    %4007 = vmatpush1.msra.mxu0 0.0
    %4008 = vmatprep.mubr.f32.mxu0 0.0
    %4009 = vmatmul.mubr.f32.gmra.mrb[0].mxu0 %v3634
    %v4010 = vpop.f32.mrb[0].mxu0
    %v4011 = vadd.f32 0.0, %v4010
    %v4012 = vpop.f32.mrb[0].mxu0
    %4013 = vmatprep.mubr.f32.mxu0 0.0
    %4014 = vmatmul.mubr.f32.gmra.mrb[0].mxu0 %v3637
    %v4015 = vpop.f32.mrb[0].mxu0
    %v4016 = vadd.f32 0.0, %v4015
    %v4017 = vpop.f32.mrb[0].mxu0
    %4018 = vmatprep.mubr.f32.mxu0 0.0
    %4019 = vmatmul.mubr.f32.gmra.mrb[0].mxu0 %v3640
    %v4020 = vpop.f32.mrb[0].mxu0
    %v4021 = vadd.f32 0.0, %v4020
    %v4022 = vpop.f32.mrb[0].mxu0
    %4023 = vmatprep.mubr.f32.mxu0 0.0
    %4024 = vmatmul.mubr.f32.gmra.mrb[0].mxu0 %v3643
    %v4025 = vpop.f32.mrb[0].mxu0
    %v4026 = vadd.f32 0.0, %v4025
    %v4027 = vpop.f32.mrb[0].mxu0
    %4028 = vdwg.mxu0
    %4029 = vst [vmem:[#allocation4 + $0x18] sm:$0xff] %v3922
    %4030 = vst [vmem:[#allocation4 + $0x20] sm:$0xff] %v3924
    %4031 = vst [vmem:[#allocation4 + $0x28] sm:$0xff] %v4011
    %4032 = vst [vmem:[#allocation4 + $0x60] sm:$0xff] %v3928
    %4033 = vst [vmem:[#allocation4 + $0x68] sm:$0xff] %v3930
    %4034 = vst [vmem:[#allocation4 + $0x70] sm:$0xff] %v4016
    %4035 = vst [vmem:[#allocation4 + $0xa8] sm:$0xff] %v3934
    %4036 = vst [vmem:[#allocation4 + $0xb0] sm:$0xff] %v3936
    %4037 = vst [vmem:[#allocation4 + $0xb8] sm:$0xff] %v4021
    %4038 = vst [vmem:[#allocation4 + $0xf0] sm:$0xff] %v3940
    %4039 = vst [vmem:[#allocation4 + $0xf8] sm:$0xff] %v3942
    %4040 = vst [vmem:[#allocation4 + $0x100] sm:$0xff] %v4026
    %v4041 = vld [vmem:[#allocation10 + $0x30] sm:$0xff]
    %v4042 = vld [vmem:[#allocation10 + $0x38] sm:$0xff]
    %v4043 = vld [vmem:[#allocation10 + $0x40] sm:$0xff]
    %v4044 = vld [vmem:[#allocation10 + $0x78] sm:$0xff]
    %v4045 = vld [vmem:[#allocation10 + $0x80] sm:$0xff]
    %v4046 = vld [vmem:[#allocation10 + $0x88] sm:$0xff]
    %v4047 = vld [vmem:[#allocation10 + $0xc0] sm:$0xff]
    %v4048 = vld [vmem:[#allocation10 + $0xc8] sm:$0xff]
    %v4049 = vld [vmem:[#allocation10 + $0xd0] sm:$0xff]
    %v4050 = vld [vmem:[#allocation10 + $0x108] sm:$0xff]
    %v4051 = vld [vmem:[#allocation10 + $0x110] sm:$0xff]
    %v4052 = vld [vmem:[#allocation10 + $0x118] sm:$0xff]
    %v4053 = vld [vmem:[#allocation10 + $0x150] sm:$0xff]
    %v4054 = vld [vmem:[#allocation10 + $0x158] sm:$0xff]
    %v4055 = vld [vmem:[#allocation10 + $0x160] sm:$0xff]
    %v4056 = vld [vmem:[#allocation10 + $0x198] sm:$0xff]
    %v4057 = vld [vmem:[#allocation10 + $0x1a0] sm:$0xff]
    %v4058 = vld [vmem:[#allocation10 + $0x1a8] sm:$0xff]
    %v4059 = vld [vmem:[#allocation10 + $0x1e0] sm:$0xff]
    %v4060 = vld [vmem:[#allocation10 + $0x1e8] sm:$0xff]
    %v4061 = vld [vmem:[#allocation10 + $0x1f0] sm:$0xff]
    %v4062 = vld [vmem:[#allocation10 + $0x228] sm:$0xff]
    %v4063 = vld [vmem:[#allocation10 + $0x230] sm:$0xff]
    %v4064 = vld [vmem:[#allocation10 + $0x238] sm:$0xff]
    %4065 = vmatprep.subr.mxu0 %v4042
    %4066 = vmatpush1.msra.mxu0 %v4041
    %4067 = vmatprep.subr.mxu0 %v4045
    %4068 = vmatpush1.msra.mxu0 %v4044
    %4069 = vmatprep.subr.mxu0 %v4048
    %4070 = vmatpush1.msra.mxu0 %v4047
    %4071 = vmatprep.subr.mxu0 %v4051
    %4072 = vmatpush1.msra.mxu0 %v4050
    %4073 = vmatprep.subr.mxu0 %v4054
    %4074 = vmatpush1.msra.mxu0 %v4053
    %4075 = vmatprep.subr.mxu0 %v4057
    %4076 = vmatpush1.msra.mxu0 %v4056
    %4077 = vmatprep.subr.mxu0 %v4060
    %4078 = vmatpush1.msra.mxu0 %v4059
    %4079 = vmatprep.subr.mxu0 %v4063
    %4080 = vmatpush1.msra.mxu0 %v4062
    %4081 = vmatprep.subr.mxu0 0.0
    %4082 = vmatpush1.msra.mxu0 0.0
    %4083 = vmatprep.subr.mxu0 0.0
    %4084 = vmatpush1.msra.mxu0 0.0
    %4085 = vmatprep.subr.mxu0 0.0
    %4086 = vmatpush1.msra.mxu0 0.0
    %4087 = vmatprep.subr.mxu0 0.0
    %4088 = vmatpush1.msra.mxu0 0.0
    %4089 = vmatprep.subr.mxu0 0.0
    %4090 = vmatpush1.msra.mxu0 0.0
    %4091 = vmatprep.subr.mxu0 0.0
    %4092 = vmatpush1.msra.mxu0 0.0
    %4093 = vmatprep.subr.mxu0 0.0
    %4094 = vmatpush1.msra.mxu0 0.0
    %4095 = vmatprep.subr.mxu0 0.0
    %4096 = vmatpush1.msra.mxu0 0.0
    %4097 = vmatprep.subr.mxu0 0.0
    %4098 = vmatpush1.msra.mxu0 0.0
    %4099 = vmatprep.subr.mxu0 0.0
    %4100 = vmatpush1.msra.mxu0 0.0
    %4101 = vmatprep.subr.mxu0 0.0
    %4102 = vmatpush1.msra.mxu0 0.0
    %4103 = vmatprep.subr.mxu0 0.0
    %4104 = vmatpush1.msra.mxu0 0.0
    %4105 = vmatprep.subr.mxu0 0.0
    %4106 = vmatpush1.msra.mxu0 0.0
    %4107 = vmatprep.subr.mxu0 0.0
    %4108 = vmatpush1.msra.mxu0 0.0
    %4109 = vmatprep.subr.mxu0 0.0
    %4110 = vmatpush1.msra.mxu0 0.0
    %4111 = vmatprep.subr.mxu0 0.0
    %4112 = vmatpush1.msra.mxu0 0.0
    %4113 = vmatprep.subr.mxu0 0.0
    %4114 = vmatpush1.msra.mxu0 0.0
    %4115 = vmatprep.subr.mxu0 0.0
    %4116 = vmatpush1.msra.mxu0 0.0
    %4117 = vmatprep.subr.mxu0 0.0
    %4118 = vmatpush1.msra.mxu0 0.0
    %4119 = vmatprep.subr.mxu0 0.0
    %4120 = vmatpush1.msra.mxu0 0.0
    %4121 = vmatprep.subr.mxu0 0.0
    %4122 = vmatpush1.msra.mxu0 0.0
    %4123 = vmatprep.subr.mxu0 0.0
    %4124 = vmatpush1.msra.mxu0 0.0
    %4125 = vmatprep.subr.mxu0 0.0
    %4126 = vmatpush1.msra.mxu0 0.0
    %4127 = vmatprep.subr.mxu0 0.0
    %4128 = vmatpush1.msra.mxu0 0.0
    %4129 = vmatprep.mubr.f32.mxu0 0.0
    %4130 = vmatmul.mubr.f32.gmra.mrb[0].mxu0 %v3634
    %v4131 = vpop.f32.mrb[0].mxu0
    %v4132 = vadd.f32 0.0, %v4131
    %v4133 = vpop.f32.mrb[0].mxu0
    %v4134 = vadd.f32 0.0, %v4133
    %4135 = vmatprep.mubr.f32.mxu0 0.0
    %4136 = vmatmul.mubr.f32.gmra.mrb[0].mxu0 %v3637
    %v4137 = vpop.f32.mrb[0].mxu0
    %v4138 = vadd.f32 0.0, %v4137
    %v4139 = vpop.f32.mrb[0].mxu0
    %v4140 = vadd.f32 0.0, %v4139
    %4141 = vmatprep.mubr.f32.mxu0 0.0
    %4142 = vmatmul.mubr.f32.gmra.mrb[0].mxu0 %v3640
    %v4143 = vpop.f32.mrb[0].mxu0
    %v4144 = vadd.f32 0.0, %v4143
    %v4145 = vpop.f32.mrb[0].mxu0
    %v4146 = vadd.f32 0.0, %v4145
    %4147 = vmatprep.mubr.f32.mxu0 0.0
    %4148 = vmatmul.mubr.f32.gmra.mrb[0].mxu0 %v3643
    %v4149 = vpop.f32.mrb[0].mxu0
    %v4150 = vadd.f32 0.0, %v4149
    %v4151 = vpop.f32.mrb[0].mxu0
    %v4152 = vadd.f32 0.0, %v4151
    %4153 = vdwg.mxu0
    %4154 = vmatprep.subr.mxu0 0.0
    %4155 = vmatpush1.msra.mxu0 %v4043
    %4156 = vmatprep.subr.mxu0 0.0
    %4157 = vmatpush1.msra.mxu0 %v4046
    %4158 = vmatprep.subr.mxu0 0.0
    %4159 = vmatpush1.msra.mxu0 %v4049
    %4160 = vmatprep.subr.mxu0 0.0
    %4161 = vmatpush1.msra.mxu0 %v4052
    %4162 = vmatprep.subr.mxu0 0.0
    %4163 = vmatpush1.msra.mxu0 %v4055
    %4164 = vmatprep.subr.mxu0 0.0
    %4165 = vmatpush1.msra.mxu0 %v4058
    %4166 = vmatprep.subr.mxu0 0.0
    %4167 = vmatpush1.msra.mxu0 %v4061
    %4168 = vmatprep.subr.mxu0 0.0
    %4169 = vmatpush1.msra.mxu0 %v4064
    %4170 = vmatprep.subr.mxu0 0.0
    %4171 = vmatpush1.msra.mxu0 0.0
    %4172 = vmatprep.subr.mxu0 0.0
    %4173 = vmatpush1.msra.mxu0 0.0
    %4174 = vmatprep.subr.mxu0 0.0
    %4175 = vmatpush1.msra.mxu0 0.0
    %4176 = vmatprep.subr.mxu0 0.0
    %4177 = vmatpush1.msra.mxu0 0.0
    %4178 = vmatprep.subr.mxu0 0.0
    %4179 = vmatpush1.msra.mxu0 0.0
    %4180 = vmatprep.subr.mxu0 0.0
    %4181 = vmatpush1.msra.mxu0 0.0
    %4182 = vmatprep.subr.mxu0 0.0
    %4183 = vmatpush1.msra.mxu0 0.0
    %4184 = vmatprep.subr.mxu0 0.0
    %4185 = vmatpush1.msra.mxu0 0.0
    %4186 = vmatprep.subr.mxu0 0.0
    %4187 = vmatpush1.msra.mxu0 0.0
    %4188 = vmatprep.subr.mxu0 0.0
    %4189 = vmatpush1.msra.mxu0 0.0
    %4190 = vmatprep.subr.mxu0 0.0
    %4191 = vmatpush1.msra.mxu0 0.0
    %4192 = vmatprep.subr.mxu0 0.0
    %4193 = vmatpush1.msra.mxu0 0.0
    %4194 = vmatprep.subr.mxu0 0.0
    %4195 = vmatpush1.msra.mxu0 0.0
    %4196 = vmatprep.subr.mxu0 0.0
    %4197 = vmatpush1.msra.mxu0 0.0
    %4198 = vmatprep.subr.mxu0 0.0
    %4199 = vmatpush1.msra.mxu0 0.0
    %4200 = vmatprep.subr.mxu0 0.0
    %4201 = vmatpush1.msra.mxu0 0.0
    %4202 = vmatprep.subr.mxu0 0.0
    %4203 = vmatpush1.msra.mxu0 0.0
    %4204 = vmatprep.subr.mxu0 0.0
    %4205 = vmatpush1.msra.mxu0 0.0
    %4206 = vmatprep.subr.mxu0 0.0
    %4207 = vmatpush1.msra.mxu0 0.0
    %4208 = vmatprep.subr.mxu0 0.0
    %4209 = vmatpush1.msra.mxu0 0.0
    %4210 = vmatprep.subr.mxu0 0.0
    %4211 = vmatpush1.msra.mxu0 0.0
    %4212 = vmatprep.subr.mxu0 0.0
    %4213 = vmatpush1.msra.mxu0 0.0
    %4214 = vmatprep.subr.mxu0 0.0
    %4215 = vmatpush1.msra.mxu0 0.0
    %4216 = vmatprep.subr.mxu0 0.0
    %4217 = vmatpush1.msra.mxu0 0.0
    %4218 = vmatprep.mubr.f32.mxu0 0.0
    %4219 = vmatmul.mubr.f32.gmra.mrb[0].mxu0 %v3634
    %v4220 = vpop.f32.mrb[0].mxu0
    %v4221 = vadd.f32 0.0, %v4220
    %v4222 = vpop.f32.mrb[0].mxu0
    %4223 = vmatprep.mubr.f32.mxu0 0.0
    %4224 = vmatmul.mubr.f32.gmra.mrb[0].mxu0 %v3637
    %v4225 = vpop.f32.mrb[0].mxu0
    %v4226 = vadd.f32 0.0, %v4225
    %v4227 = vpop.f32.mrb[0].mxu0
    %4228 = vmatprep.mubr.f32.mxu0 0.0
    %4229 = vmatmul.mubr.f32.gmra.mrb[0].mxu0 %v3640
    %v4230 = vpop.f32.mrb[0].mxu0
    %v4231 = vadd.f32 0.0, %v4230
    %v4232 = vpop.f32.mrb[0].mxu0
    %4233 = vmatprep.mubr.f32.mxu0 0.0
    %4234 = vmatmul.mubr.f32.gmra.mrb[0].mxu0 %v3643
    %v4235 = vpop.f32.mrb[0].mxu0
    %v4236 = vadd.f32 0.0, %v4235
    %v4237 = vpop.f32.mrb[0].mxu0
    %4238 = vdwg.mxu0
    %4239 = vst [vmem:[#allocation4 + $0x30] sm:$0xff] %v4132
    %4240 = vst [vmem:[#allocation4 + $0x38] sm:$0xff] %v4134
    %4241 = vst [vmem:[#allocation4 + $0x40] sm:$0xff] %v4221
    %4242 = vst [vmem:[#allocation4 + $0x78] sm:$0xff] %v4138
    %4243 = vst [vmem:[#allocation4 + $0x80] sm:$0xff] %v4140
    %4244 = vst [vmem:[#allocation4 + $0x88] sm:$0xff] %v4226
    %4245 = vst [vmem:[#allocation4 + $0xc0] sm:$0xff] %v4144
    %4246 = vst [vmem:[#allocation4 + $0xc8] sm:$0xff] %v4146
    %4247 = vst [vmem:[#allocation4 + $0xd0] sm:$0xff] %v4231
    %4248 = vst [vmem:[#allocation4 + $0x108] sm:$0xff] %v4150
    %4249 = vst [vmem:[#allocation4 + $0x110] sm:$0xff] %v4152
    %4250 = vst [vmem:[#allocation4 + $0x118] sm:$0xff] %v4236
    %v4251 = vand.u32 %v212, 3
    %v4252 = vand.u32 %v213, 3
    %vm4253 = vcmp.ge.s32.totalorder %v4251, 1
    %vm4254 = vcmp.ge.s32.totalorder %v4252, 1
    %v4255 = vsel %vm4253, 1.0, 0.0
    %v4256 = vsel %vm4254, 1.0, 0.0
    %vm4257 = vcmp.le.s32.totalorder %v4251, 2
    %vm4258 = vcmp.le.s32.totalorder %v4252, 2
    %v4259 = vsel %vm4257, 1.0, 0.0
    %v4260 = vsel %vm4258, 1.0, 0.0
    %v4261 = vld [vmem:[#allocation4] sm:$0xf8]
    %v4262 = vld [vmem:[#allocation4 + $0x48] sm:$0xff]
    %v4263 = vld [vmem:[#allocation4 + $0x90] sm:$0x7]
    %vm4266 = vcmask 1042432
    %v4267 = vrot.slane %v4255, 5
    %v4268 = vrot.slane %v4256, 5
    %v4269 = vsel %vm4266, %v4267, %v4268
    %v4273 = vmul.f32 %v4261, %v4267
    %v4274 = vmul.f32 %v4262, %v4269
    %v4275 = vmul.f32 %v4263, %v4268
    %v4276 = vadd.f32 %v4273, 0.0
    %v4277 = vadd.f32 %v4274, 0.0
    %v4278 = vadd.f32 %v4275, 0.0
    %v4279 = vld [vmem:[#allocation4 + $0x8] sm:$0xf0]
    %v4280 = vld [vmem:[#allocation4 + $0x50] sm:$0xff]
    %v4281 = vld [vmem:[#allocation4 + $0x98] sm:$0xf]
    %v4285 = vrot.slane %v4279, 1
    %v4286 = vrot.slane %v4280, 1
    %v4287 = vsel %vm2979, %v4285, %v4286
    %v4288 = vrot.slane %v4281, 1
    %v4289 = vsel %vm2979, %v4286, %v4288
    %v4293 = vadd.f32 %v4276, %v4287
    %v4294 = vadd.f32 %v4277, %v4289
    %v4295 = vadd.f32 %v4278, %v4288
    %v4296 = vld [vmem:[#allocation4 + $0x10] sm:$0xe0]
    %v4297 = vld [vmem:[#allocation4 + $0x58] sm:$0xff]
    %v4298 = vld [vmem:[#allocation4 + $0xa0] sm:$0x1f]
    %vm4301 = vcmask 1044480
    %v4302 = vrot.slane %v4259, 3
    %v4303 = vrot.slane %v4260, 3
    %v4304 = vsel %vm4301, %v4302, %v4303
    %v4308 = vmul.f32 %v4296, %v4302
    %v4309 = vmul.f32 %v4297, %v4304
    %v4310 = vmul.f32 %v4298, %v4303
    %v4314 = vrot.slane %v4308, 2
    %v4315 = vrot.slane %v4309, 2
    %v4316 = vsel %vm3131, %v4314, %v4315
    %v4317 = vrot.slane %v4310, 2
    %v4318 = vsel %vm3131, %v4315, %v4317
    %v4322 = vadd.f32 %v4293, %v4316
    %v4323 = vadd.f32 %v4294, %v4318
    %v4324 = vadd.f32 %v4295, %v4317
    %v4325 = vld [vmem:[#allocation4 + $0x18] sm:$0x80]
    %v4326 = vld [vmem:[#allocation4 + $0x60] sm:$0xff]
    %v4327 = vld [vmem:[#allocation4 + $0xa8] sm:$0x7f]
    %v4328 = vrot.slane %v4255, 1
    %v4329 = vrot.slane %v4256, 1
    %v4330 = vsel %vm2979, %v4328, %v4329
    %v4334 = vmul.f32 %v4325, %v4328
    %v4335 = vmul.f32 %v4326, %v4330
    %v4336 = vmul.f32 %v4327, %v4329
    %vm4340 = vcmask 1043456
    %v4341 = vrot.slane %v4334, 4
    %v4342 = vrot.slane %v4335, 4
    %v4343 = vsel %vm4340, %v4341, %v4342
    %v4344 = vrot.slane %v4336, 4
    %v4345 = vsel %vm4340, %v4342, %v4344
    %v4349 = vadd.f32 %v4322, %v4343
    %v4350 = vadd.f32 %v4323, %v4345
    %v4351 = vadd.f32 %v4324, %v4344
    %v4352 = vld [vmem:[#allocation4 + $0x68] sm:$0xff]
    %v4353 = vld [vmem:[#allocation4 + $0xb0] sm:$0xff]
    %v4356 = vrot.slane %v4352, 5
    %v4357 = vrot.slane %v4353, 5
    %v4358 = vsel %vm4266, %v4356, %v4357
    %v4362 = vadd.f32 %v4349, %v4356
    %v4363 = vadd.f32 %v4350, %v4358
    %v4364 = vadd.f32 %v4351, %v4357
    %v4365 = vld [vmem:[#allocation4 + $0x70] sm:$0xfe]
    %v4366 = vld [vmem:[#allocation4 + $0xb8] sm:$0xff]
    %v4367 = vld [vmem:[#allocation4 + $0x100] sm:$0x1]
    %v4368 = vrot.slane %v4259, 7
    %v4369 = vrot.slane %v4260, 7
    %v4370 = vsel %vm3088, %v4368, %v4369
    %v4374 = vmul.f32 %v4365, %v4368
    %v4375 = vmul.f32 %v4366, %v4370
    %v4376 = vmul.f32 %v4367, %v4369
    %vm4380 = vcmask 1041408
    %v4381 = vrot.slane %v4374, 6
    %v4382 = vrot.slane %v4375, 6
    %v4383 = vsel %vm4380, %v4381, %v4382
    %v4384 = vrot.slane %v4376, 6
    %v4385 = vsel %vm4380, %v4382, %v4384
    %v4389 = vadd.f32 %v4362, %v4381
    %v4390 = vadd.f32 %v4363, %v4383
    %v4391 = vadd.f32 %v4364, %v4385
    %v4392 = vld [vmem:[#allocation4 + $0x78] sm:$0xf8]
    %v4393 = vld [vmem:[#allocation4 + $0xc0] sm:$0xff]
    %v4394 = vld [vmem:[#allocation4 + $0x108] sm:$0x7]
    %v4395 = vmul.f32 %v4392, %v4267
    %v4396 = vmul.f32 %v4393, %v4269
    %v4397 = vmul.f32 %v4394, %v4268
    %v4398 = vadd.f32 %v4389, %v4395
    %v4399 = vadd.f32 %v4390, %v4396
    %v4400 = vadd.f32 %v4391, %v4397
    %v4401 = vld [vmem:[#allocation4 + $0x80] sm:$0xf0]
    %v4402 = vld [vmem:[#allocation4 + $0xc8] sm:$0xff]
    %v4403 = vld [vmem:[#allocation4 + $0x110] sm:$0xf]
    %v4407 = vrot.slane %v4401, 1
    %v4408 = vrot.slane %v4402, 1
    %v4409 = vsel %vm2979, %v4407, %v4408
    %v4410 = vrot.slane %v4403, 1
    %v4411 = vsel %vm2979, %v4408, %v4410
    %v4415 = vadd.f32 %v4398, %v4409
    %v4416 = vadd.f32 %v4399, %v4411
    %v4417 = vadd.f32 %v4400, %v4410
    %v4418 = vld [vmem:[#allocation4 + $0x88] sm:$0xe0]
    %v4419 = vld [vmem:[#allocation4 + $0xd0] sm:$0xff]
    %v4420 = vld [vmem:[#allocation4 + $0x118] sm:$0x1f]
    %v4421 = vmul.f32 %v4418, %v4302
    %v4422 = vmul.f32 %v4419, %v4304
    %v4423 = vmul.f32 %v4420, %v4303
    %v4427 = vrot.slane %v4421, 2
    %v4428 = vrot.slane %v4422, 2
    %v4429 = vsel %vm3131, %v4427, %v4428
    %v4430 = vrot.slane %v4423, 2
    %v4431 = vsel %vm3131, %v4428, %v4430
    %v4435 = vadd.f32 %v4415, %v4429
    %v4436 = vadd.f32 %v4416, %v4431
    %v4437 = vadd.f32 %v4417, %v4430
    %v4438 = vld [vmem:[#allocation11] sm:$0x1]
    %v4440 = vlaneseq
    %v4441 = vshrl.u32 %v4440, 7
    %v4442 = vsub.s32 0, %v4441
    %v4443 = vrot.slane %v4438, %v4442
    %v4445 = vadd.f32 %v4435, %v4443
    %v4446 = vadd.f32 %v4436, %v4443
    %v4447 = vadd.f32 %v4437, %v4443
    %v4448 = vmax.f32 %v4445, 0.0
    %v4449 = vmax.f32 %v4446, 0.0
    %v4450 = vmax.f32 %v4447, 0.0
    %vm4451 = vcmask 523267
    %4452 = vst.msk [vmem:[#allocation3 - $0x3] sm:$0xf8] %vm4451, %v4448
    %4453 = vst.msk [vmem:[#allocation3 + $0x5] sm:$0xff] %vm172, %v4449
    %vm4454 = vcmask 518144
    %4455 = vst.msk [vmem:[#allocation3 + $0xd] sm:$0x7] %vm4454, %v4450
    %4456 = vst.msk [vmem:[#allocation3 + $0x10] sm:$0xff] %vm172, 0.0
    %v4457 = vld [vmem:[#allocation3] sm:$0xff]
    %v4458 = vld [vmem:[#allocation3 + $0x8] sm:$0xff]
    %v4459 = vld [vmem:[#allocation3 + $0x1] sm:$0xff]
    %v4460 = vld [vmem:[#allocation3 + $0x9] sm:$0xff]
    %v4461 = vmax.f32 %v4457, %v4459
    %v4462 = vmax.f32 %v4458, %v4460
    %v4463 = vld [vmem:[#allocation3 + $0x4] sm:$0xff]
    %v4464 = vld [vmem:[#allocation3 + $0xc] sm:$0xff]
    %v4465 = vld [vmem:[#allocation3 + $0x5] sm:$0xff]
    %v4466 = vld [vmem:[#allocation3 + $0xd] sm:$0xff]
    %v4467 = vmax.f32 %v4463, %v4465
    %v4468 = vmax.f32 %v4464, %v4466
    %v4469 = vmax.f32 %v4461, %v4467
    %v4470 = vmax.f32 %v4462, %v4468
    %v4471 = vld [vmem:[%s11] sm:$0xf]
    %vm4472 = vcmask 130048
    %v4474 = vsel %vm4472, %v4471, 0
    %4476 = vmatprep.subr.mxu0 0.0
    %4477 = vmatpush1.msra.mxu0 %v4469
    %4478 = vmatprep.subr.mxu0 0.0
    %4479 = vmatpush1.msra.mxu0 %v4470
    %4480 = vmatprep.subr.mxu0 0.0
    %4481 = vmatpush1.msra.mxu0 0.0
    %4482 = vmatprep.subr.mxu0 0.0
    %4483 = vmatpush1.msra.mxu0 0.0
    %4484 = vmatprep.subr.mxu0 0.0
    %4485 = vmatpush1.msra.mxu0 0.0
    %4486 = vmatprep.subr.mxu0 0.0
    %4487 = vmatpush1.msra.mxu0 0.0
    %4488 = vmatprep.subr.mxu0 0.0
    %4489 = vmatpush1.msra.mxu0 0.0
    %4490 = vmatprep.subr.mxu0 0.0
    %4491 = vmatpush1.msra.mxu0 0.0
    %4492 = vmatprep.subr.mxu0 0.0
    %4493 = vmatpush1.msra.mxu0 0.0
    %4494 = vmatprep.subr.mxu0 0.0
    %4495 = vmatpush1.msra.mxu0 0.0
    %4496 = vmatprep.subr.mxu0 0.0
    %4497 = vmatpush1.msra.mxu0 0.0
    %4498 = vmatprep.subr.mxu0 0.0
    %4499 = vmatpush1.msra.mxu0 0.0
    %4500 = vmatprep.subr.mxu0 0.0
    %4501 = vmatpush1.msra.mxu0 0.0
    %4502 = vmatprep.subr.mxu0 0.0
    %4503 = vmatpush1.msra.mxu0 0.0
    %4504 = vmatprep.subr.mxu0 0.0
    %4505 = vmatpush1.msra.mxu0 0.0
    %4506 = vmatprep.subr.mxu0 0.0
    %4507 = vmatpush1.msra.mxu0 0.0
    %4508 = vmatprep.subr.mxu0 0.0
    %4509 = vmatpush1.msra.mxu0 0.0
    %4510 = vmatprep.subr.mxu0 0.0
    %4511 = vmatpush1.msra.mxu0 0.0
    %4512 = vmatprep.subr.mxu0 0.0
    %4513 = vmatpush1.msra.mxu0 0.0
    %4514 = vmatprep.subr.mxu0 0.0
    %4515 = vmatpush1.msra.mxu0 0.0
    %4516 = vmatprep.subr.mxu0 0.0
    %4517 = vmatpush1.msra.mxu0 0.0
    %4518 = vmatprep.subr.mxu0 0.0
    %4519 = vmatpush1.msra.mxu0 0.0
    %4520 = vmatprep.subr.mxu0 0.0
    %4521 = vmatpush1.msra.mxu0 0.0
    %4522 = vmatprep.subr.mxu0 0.0
    %4523 = vmatpush1.msra.mxu0 0.0
    %4524 = vmatprep.subr.mxu0 0.0
    %4525 = vmatpush1.msra.mxu0 0.0
    %4526 = vmatprep.subr.mxu0 0.0
    %4527 = vmatpush1.msra.mxu0 0.0
    %4528 = vmatprep.subr.mxu0 0.0
    %4529 = vmatpush1.msra.mxu0 0.0
    %4530 = vmatprep.subr.mxu0 0.0
    %4531 = vmatpush1.msra.mxu0 0.0
    %4532 = vmatprep.subr.mxu0 0.0
    %4533 = vmatpush1.msra.mxu0 0.0
    %4534 = vmatprep.subr.mxu0 0.0
    %4535 = vmatpush1.msra.mxu0 0.0
    %4536 = vmatprep.subr.mxu0 0.0
    %4537 = vmatpush1.msra.mxu0 0.0
    %4538 = vmatprep.subr.mxu0 0.0
    %4539 = vmatpush1.msra.mxu0 0.0
    %4540 = vmatprep.mubr.f32.mxu0 0.0
    %4541 = vmatmul.mubr.f32.gmra.mrb[0].mxu0 %v4474
    %v4542 = vpop.f32.mrb[0].mxu0
    %v4543 = vadd.f32 0.0, %v4542
    %v4544 = vpop.f32.mrb[0].mxu0
    %4545 = vdwg.mxu0
    %4546 = vst.msk [vmem:[#allocation2 + $0x8] sm:$0xff] %vm172, 0.0
    %4547 = vst.msk [vmem:[#allocation2 + $0x10] sm:$0xff] %vm172, 0.0
    %4548 = vst.msk [vmem:[#allocation2 + $0x1c] sm:$0xff] %vm172, 0.0
    %4549 = vst.msk [vmem:[#allocation2 + $0x24] sm:$0xff] %vm172, 0.0
    %vm4550 = vcmask 519168
    %4551 = vst.msk [vmem:[#allocation2 + $0x18] sm:$0xf] %vm4550, %v4543
    %v4552 = vld [vmem:[#allocation2 + $0x10] sm:$0xff]
    %v4553 = vld [vmem:[#allocation2 + $0x18] sm:$0xff]
    %v4554 = vld [vmem:[#allocation13] sm:$0xff]
    %v4555 = vld [vmem:[#allocation13 + $0x8] sm:$0xff]
    %v4556 = vld [vmem:[#allocation13 + $0x10] sm:$0xff]
    %v4557 = vld [vmem:[#allocation13 + $0x48] sm:$0xff]
    %v4558 = vld [vmem:[#allocation13 + $0x50] sm:$0xff]
    %v4559 = vld [vmem:[#allocation13 + $0x58] sm:$0xff]
    %v4560 = vld [vmem:[#allocation13 + $0x90] sm:$0xff]
    %v4561 = vld [vmem:[#allocation13 + $0x98] sm:$0xff]
    %v4562 = vld [vmem:[#allocation13 + $0xa0] sm:$0xff]
    %v4563 = vld [vmem:[#allocation13 + $0xd8] sm:$0xff]
    %v4564 = vld [vmem:[#allocation13 + $0xe0] sm:$0xff]
    %v4565 = vld [vmem:[#allocation13 + $0xe8] sm:$0xff]
    %v4566 = vld [vmem:[#allocation13 + $0x120] sm:$0xff]
    %v4567 = vld [vmem:[#allocation13 + $0x128] sm:$0xff]
    %v4568 = vld [vmem:[#allocation13 + $0x130] sm:$0xff]
    %v4569 = vld [vmem:[#allocation13 + $0x168] sm:$0xff]
    %v4570 = vld [vmem:[#allocation13 + $0x170] sm:$0xff]
    %v4571 = vld [vmem:[#allocation13 + $0x178] sm:$0xff]
    %v4572 = vld [vmem:[#allocation13 + $0x1b0] sm:$0xff]
    %v4573 = vld [vmem:[#allocation13 + $0x1b8] sm:$0xff]
    %v4574 = vld [vmem:[#allocation13 + $0x1c0] sm:$0xff]
    %v4575 = vld [vmem:[#allocation13 + $0x1f8] sm:$0xff]
    %v4576 = vld [vmem:[#allocation13 + $0x200] sm:$0xff]
    %v4577 = vld [vmem:[#allocation13 + $0x208] sm:$0xff]
    %v4579 = vsel %vm172, %v4552, 0
    %v4582 = vsel %vm172, %v4553, 0
    %4584 = vmatprep.subr.mxu0 %v4555
    %4585 = vmatpush1.msra.mxu0 %v4554
    %4586 = vmatprep.subr.mxu0 %v4558
    %4587 = vmatpush1.msra.mxu0 %v4557
    %4588 = vmatprep.subr.mxu0 %v4561
    %4589 = vmatpush1.msra.mxu0 %v4560
    %4590 = vmatprep.subr.mxu0 %v4564
    %4591 = vmatpush1.msra.mxu0 %v4563
    %4592 = vmatprep.subr.mxu0 %v4567
    %4593 = vmatpush1.msra.mxu0 %v4566
    %4594 = vmatprep.subr.mxu0 %v4570
    %4595 = vmatpush1.msra.mxu0 %v4569
    %4596 = vmatprep.subr.mxu0 %v4573
    %4597 = vmatpush1.msra.mxu0 %v4572
    %4598 = vmatprep.subr.mxu0 %v4576
    %4599 = vmatpush1.msra.mxu0 %v4575
    %4600 = vmatprep.subr.mxu0 0.0
    %4601 = vmatpush1.msra.mxu0 0.0
    %4602 = vmatprep.subr.mxu0 0.0
    %4603 = vmatpush1.msra.mxu0 0.0
    %4604 = vmatprep.subr.mxu0 0.0
    %4605 = vmatpush1.msra.mxu0 0.0
    %4606 = vmatprep.subr.mxu0 0.0
    %4607 = vmatpush1.msra.mxu0 0.0
    %4608 = vmatprep.subr.mxu0 0.0
    %4609 = vmatpush1.msra.mxu0 0.0
    %4610 = vmatprep.subr.mxu0 0.0
    %4611 = vmatpush1.msra.mxu0 0.0
    %4612 = vmatprep.subr.mxu0 0.0
    %4613 = vmatpush1.msra.mxu0 0.0
    %4614 = vmatprep.subr.mxu0 0.0
    %4615 = vmatpush1.msra.mxu0 0.0
    %4616 = vmatprep.subr.mxu0 0.0
    %4617 = vmatpush1.msra.mxu0 0.0
    %4618 = vmatprep.subr.mxu0 0.0
    %4619 = vmatpush1.msra.mxu0 0.0
    %4620 = vmatprep.subr.mxu0 0.0
    %4621 = vmatpush1.msra.mxu0 0.0
    %4622 = vmatprep.subr.mxu0 0.0
    %4623 = vmatpush1.msra.mxu0 0.0
    %4624 = vmatprep.subr.mxu0 0.0
    %4625 = vmatpush1.msra.mxu0 0.0
    %4626 = vmatprep.subr.mxu0 0.0
    %4627 = vmatpush1.msra.mxu0 0.0
    %4628 = vmatprep.subr.mxu0 0.0
    %4629 = vmatpush1.msra.mxu0 0.0
    %4630 = vmatprep.subr.mxu0 0.0
    %4631 = vmatpush1.msra.mxu0 0.0
    %4632 = vmatprep.subr.mxu0 0.0
    %4633 = vmatpush1.msra.mxu0 0.0
    %4634 = vmatprep.subr.mxu0 0.0
    %4635 = vmatpush1.msra.mxu0 0.0
    %4636 = vmatprep.subr.mxu0 0.0
    %4637 = vmatpush1.msra.mxu0 0.0
    %4638 = vmatprep.subr.mxu0 0.0
    %4639 = vmatpush1.msra.mxu0 0.0
    %4640 = vmatprep.subr.mxu0 0.0
    %4641 = vmatpush1.msra.mxu0 0.0
    %4642 = vmatprep.subr.mxu0 0.0
    %4643 = vmatpush1.msra.mxu0 0.0
    %4644 = vmatprep.subr.mxu0 0.0
    %4645 = vmatpush1.msra.mxu0 0.0
    %4646 = vmatprep.subr.mxu0 0.0
    %4647 = vmatpush1.msra.mxu0 0.0
    %4648 = vmatprep.mubr.f32.mxu0 0.0
    %4649 = vmatmul.mubr.f32.gmra.mrb[0].mxu0 %v4579
    %v4650 = vpop.f32.mrb[0].mxu0
    %v4651 = vadd.f32 0.0, %v4650
    %v4652 = vpop.f32.mrb[0].mxu0
    %v4653 = vadd.f32 0.0, %v4652
    %4654 = vmatprep.mubr.f32.mxu0 0.0
    %4655 = vmatmul.mubr.f32.gmra.mrb[0].mxu0 %v4582
    %v4656 = vpop.f32.mrb[0].mxu0
    %v4657 = vadd.f32 0.0, %v4656
    %v4658 = vpop.f32.mrb[0].mxu0
    %v4659 = vadd.f32 0.0, %v4658
    %4660 = vdwg.mxu0
    %4661 = vmatprep.subr.mxu0 0.0
    %4662 = vmatpush1.msra.mxu0 %v4556
    %4663 = vmatprep.subr.mxu0 0.0
    %4664 = vmatpush1.msra.mxu0 %v4559
    %4665 = vmatprep.subr.mxu0 0.0
    %4666 = vmatpush1.msra.mxu0 %v4562
    %4667 = vmatprep.subr.mxu0 0.0
    %4668 = vmatpush1.msra.mxu0 %v4565
    %4669 = vmatprep.subr.mxu0 0.0
    %4670 = vmatpush1.msra.mxu0 %v4568
    %4671 = vmatprep.subr.mxu0 0.0
    %4672 = vmatpush1.msra.mxu0 %v4571
    %4673 = vmatprep.subr.mxu0 0.0
    %4674 = vmatpush1.msra.mxu0 %v4574
    %4675 = vmatprep.subr.mxu0 0.0
    %4676 = vmatpush1.msra.mxu0 %v4577
    %4677 = vmatprep.subr.mxu0 0.0
    %4678 = vmatpush1.msra.mxu0 0.0
    %4679 = vmatprep.subr.mxu0 0.0
    %4680 = vmatpush1.msra.mxu0 0.0
    %4681 = vmatprep.subr.mxu0 0.0
    %4682 = vmatpush1.msra.mxu0 0.0
    %4683 = vmatprep.subr.mxu0 0.0
    %4684 = vmatpush1.msra.mxu0 0.0
    %4685 = vmatprep.subr.mxu0 0.0
    %4686 = vmatpush1.msra.mxu0 0.0
    %4687 = vmatprep.subr.mxu0 0.0
    %4688 = vmatpush1.msra.mxu0 0.0
    %4689 = vmatprep.subr.mxu0 0.0
    %4690 = vmatpush1.msra.mxu0 0.0
    %4691 = vmatprep.subr.mxu0 0.0
    %4692 = vmatpush1.msra.mxu0 0.0
    %4693 = vmatprep.subr.mxu0 0.0
    %4694 = vmatpush1.msra.mxu0 0.0
    %4695 = vmatprep.subr.mxu0 0.0
    %4696 = vmatpush1.msra.mxu0 0.0
    %4697 = vmatprep.subr.mxu0 0.0
    %4698 = vmatpush1.msra.mxu0 0.0
    %4699 = vmatprep.subr.mxu0 0.0
    %4700 = vmatpush1.msra.mxu0 0.0
    %4701 = vmatprep.subr.mxu0 0.0
    %4702 = vmatpush1.msra.mxu0 0.0
    %4703 = vmatprep.subr.mxu0 0.0
    %4704 = vmatpush1.msra.mxu0 0.0
    %4705 = vmatprep.subr.mxu0 0.0
    %4706 = vmatpush1.msra.mxu0 0.0
    %4707 = vmatprep.subr.mxu0 0.0
    %4708 = vmatpush1.msra.mxu0 0.0
    %4709 = vmatprep.subr.mxu0 0.0
    %4710 = vmatpush1.msra.mxu0 0.0
    %4711 = vmatprep.subr.mxu0 0.0
    %4712 = vmatpush1.msra.mxu0 0.0
    %4713 = vmatprep.subr.mxu0 0.0
    %4714 = vmatpush1.msra.mxu0 0.0
    %4715 = vmatprep.subr.mxu0 0.0
    %4716 = vmatpush1.msra.mxu0 0.0
    %4717 = vmatprep.subr.mxu0 0.0
    %4718 = vmatpush1.msra.mxu0 0.0
    %4719 = vmatprep.subr.mxu0 0.0
    %4720 = vmatpush1.msra.mxu0 0.0
    %4721 = vmatprep.subr.mxu0 0.0
    %4722 = vmatpush1.msra.mxu0 0.0
    %4723 = vmatprep.subr.mxu0 0.0
    %4724 = vmatpush1.msra.mxu0 0.0
    %4725 = vmatprep.mubr.f32.mxu0 0.0
    %4726 = vmatmul.mubr.f32.gmra.mrb[0].mxu0 %v4579
    %v4727 = vpop.f32.mrb[0].mxu0
    %v4728 = vadd.f32 0.0, %v4727
    %v4729 = vpop.f32.mrb[0].mxu0
    %4730 = vmatprep.mubr.f32.mxu0 0.0
    %4731 = vmatmul.mubr.f32.gmra.mrb[0].mxu0 %v4582
    %v4732 = vpop.f32.mrb[0].mxu0
    %v4733 = vadd.f32 0.0, %v4732
    %v4734 = vpop.f32.mrb[0].mxu0
    %4735 = vdwg.mxu0
    %4736 = vst [vmem:[#allocation4] sm:$0xff] %v4651
    %4737 = vst [vmem:[#allocation4 + $0x8] sm:$0xff] %v4653
    %4738 = vst [vmem:[#allocation4 + $0x10] sm:$0xff] %v4728
    %4739 = vst [vmem:[#allocation4 + $0x48] sm:$0xff] %v4657
    %4740 = vst [vmem:[#allocation4 + $0x50] sm:$0xff] %v4659
    %4741 = vst [vmem:[#allocation4 + $0x58] sm:$0xff] %v4733
    %v4742 = vld [vmem:[#allocation13 + $0x18] sm:$0xff]
    %v4743 = vld [vmem:[#allocation13 + $0x20] sm:$0xff]
    %v4744 = vld [vmem:[#allocation13 + $0x28] sm:$0xff]
    %v4745 = vld [vmem:[#allocation13 + $0x60] sm:$0xff]
    %v4746 = vld [vmem:[#allocation13 + $0x68] sm:$0xff]
    %v4747 = vld [vmem:[#allocation13 + $0x70] sm:$0xff]
    %v4748 = vld [vmem:[#allocation13 + $0xa8] sm:$0xff]
    %v4749 = vld [vmem:[#allocation13 + $0xb0] sm:$0xff]
    %v4750 = vld [vmem:[#allocation13 + $0xb8] sm:$0xff]
    %v4751 = vld [vmem:[#allocation13 + $0xf0] sm:$0xff]
    %v4752 = vld [vmem:[#allocation13 + $0xf8] sm:$0xff]
    %v4753 = vld [vmem:[#allocation13 + $0x100] sm:$0xff]
    %v4754 = vld [vmem:[#allocation13 + $0x138] sm:$0xff]
    %v4755 = vld [vmem:[#allocation13 + $0x140] sm:$0xff]
    %v4756 = vld [vmem:[#allocation13 + $0x148] sm:$0xff]
    %v4757 = vld [vmem:[#allocation13 + $0x180] sm:$0xff]
    %v4758 = vld [vmem:[#allocation13 + $0x188] sm:$0xff]
    %v4759 = vld [vmem:[#allocation13 + $0x190] sm:$0xff]
    %v4760 = vld [vmem:[#allocation13 + $0x1c8] sm:$0xff]
    %v4761 = vld [vmem:[#allocation13 + $0x1d0] sm:$0xff]
    %v4762 = vld [vmem:[#allocation13 + $0x1d8] sm:$0xff]
    %v4763 = vld [vmem:[#allocation13 + $0x210] sm:$0xff]
    %v4764 = vld [vmem:[#allocation13 + $0x218] sm:$0xff]
    %v4765 = vld [vmem:[#allocation13 + $0x220] sm:$0xff]
    %4766 = vmatprep.subr.mxu0 %v4743
    %4767 = vmatpush1.msra.mxu0 %v4742
    %4768 = vmatprep.subr.mxu0 %v4746
    %4769 = vmatpush1.msra.mxu0 %v4745
    %4770 = vmatprep.subr.mxu0 %v4749
    %4771 = vmatpush1.msra.mxu0 %v4748
    %4772 = vmatprep.subr.mxu0 %v4752
    %4773 = vmatpush1.msra.mxu0 %v4751
    %4774 = vmatprep.subr.mxu0 %v4755
    %4775 = vmatpush1.msra.mxu0 %v4754
    %4776 = vmatprep.subr.mxu0 %v4758
    %4777 = vmatpush1.msra.mxu0 %v4757
    %4778 = vmatprep.subr.mxu0 %v4761
    %4779 = vmatpush1.msra.mxu0 %v4760
    %4780 = vmatprep.subr.mxu0 %v4764
    %4781 = vmatpush1.msra.mxu0 %v4763
    %4782 = vmatprep.subr.mxu0 0.0
    %4783 = vmatpush1.msra.mxu0 0.0
    %4784 = vmatprep.subr.mxu0 0.0
    %4785 = vmatpush1.msra.mxu0 0.0
    %4786 = vmatprep.subr.mxu0 0.0
    %4787 = vmatpush1.msra.mxu0 0.0
    %4788 = vmatprep.subr.mxu0 0.0
    %4789 = vmatpush1.msra.mxu0 0.0
    %4790 = vmatprep.subr.mxu0 0.0
    %4791 = vmatpush1.msra.mxu0 0.0
    %4792 = vmatprep.subr.mxu0 0.0
    %4793 = vmatpush1.msra.mxu0 0.0
    %4794 = vmatprep.subr.mxu0 0.0
    %4795 = vmatpush1.msra.mxu0 0.0
    %4796 = vmatprep.subr.mxu0 0.0
    %4797 = vmatpush1.msra.mxu0 0.0
    %4798 = vmatprep.subr.mxu0 0.0
    %4799 = vmatpush1.msra.mxu0 0.0
    %4800 = vmatprep.subr.mxu0 0.0
    %4801 = vmatpush1.msra.mxu0 0.0
    %4802 = vmatprep.subr.mxu0 0.0
    %4803 = vmatpush1.msra.mxu0 0.0
    %4804 = vmatprep.subr.mxu0 0.0
    %4805 = vmatpush1.msra.mxu0 0.0
    %4806 = vmatprep.subr.mxu0 0.0
    %4807 = vmatpush1.msra.mxu0 0.0
    %4808 = vmatprep.subr.mxu0 0.0
    %4809 = vmatpush1.msra.mxu0 0.0
    %4810 = vmatprep.subr.mxu0 0.0
    %4811 = vmatpush1.msra.mxu0 0.0
    %4812 = vmatprep.subr.mxu0 0.0
    %4813 = vmatpush1.msra.mxu0 0.0
    %4814 = vmatprep.subr.mxu0 0.0
    %4815 = vmatpush1.msra.mxu0 0.0
    %4816 = vmatprep.subr.mxu0 0.0
    %4817 = vmatpush1.msra.mxu0 0.0
    %4818 = vmatprep.subr.mxu0 0.0
    %4819 = vmatpush1.msra.mxu0 0.0
    %4820 = vmatprep.subr.mxu0 0.0
    %4821 = vmatpush1.msra.mxu0 0.0
    %4822 = vmatprep.subr.mxu0 0.0
    %4823 = vmatpush1.msra.mxu0 0.0
    %4824 = vmatprep.subr.mxu0 0.0
    %4825 = vmatpush1.msra.mxu0 0.0
    %4826 = vmatprep.subr.mxu0 0.0
    %4827 = vmatpush1.msra.mxu0 0.0
    %4828 = vmatprep.subr.mxu0 0.0
    %4829 = vmatpush1.msra.mxu0 0.0
    %4830 = vmatprep.mubr.f32.mxu0 0.0
    %4831 = vmatmul.mubr.f32.gmra.mrb[0].mxu0 %v4579
    %v4832 = vpop.f32.mrb[0].mxu0
    %v4833 = vadd.f32 0.0, %v4832
    %v4834 = vpop.f32.mrb[0].mxu0
    %v4835 = vadd.f32 0.0, %v4834
    %4836 = vmatprep.mubr.f32.mxu0 0.0
    %4837 = vmatmul.mubr.f32.gmra.mrb[0].mxu0 %v4582
    %v4838 = vpop.f32.mrb[0].mxu0
    %v4839 = vadd.f32 0.0, %v4838
    %v4840 = vpop.f32.mrb[0].mxu0
    %v4841 = vadd.f32 0.0, %v4840
    %4842 = vdwg.mxu0
    %4843 = vmatprep.subr.mxu0 0.0
    %4844 = vmatpush1.msra.mxu0 %v4744
    %4845 = vmatprep.subr.mxu0 0.0
    %4846 = vmatpush1.msra.mxu0 %v4747
    %4847 = vmatprep.subr.mxu0 0.0
    %4848 = vmatpush1.msra.mxu0 %v4750
    %4849 = vmatprep.subr.mxu0 0.0
    %4850 = vmatpush1.msra.mxu0 %v4753
    %4851 = vmatprep.subr.mxu0 0.0
    %4852 = vmatpush1.msra.mxu0 %v4756
    %4853 = vmatprep.subr.mxu0 0.0
    %4854 = vmatpush1.msra.mxu0 %v4759
    %4855 = vmatprep.subr.mxu0 0.0
    %4856 = vmatpush1.msra.mxu0 %v4762
    %4857 = vmatprep.subr.mxu0 0.0
    %4858 = vmatpush1.msra.mxu0 %v4765
    %4859 = vmatprep.subr.mxu0 0.0
    %4860 = vmatpush1.msra.mxu0 0.0
    %4861 = vmatprep.subr.mxu0 0.0
    %4862 = vmatpush1.msra.mxu0 0.0
    %4863 = vmatprep.subr.mxu0 0.0
    %4864 = vmatpush1.msra.mxu0 0.0
    %4865 = vmatprep.subr.mxu0 0.0
    %4866 = vmatpush1.msra.mxu0 0.0
    %4867 = vmatprep.subr.mxu0 0.0
    %4868 = vmatpush1.msra.mxu0 0.0
    %4869 = vmatprep.subr.mxu0 0.0
    %4870 = vmatpush1.msra.mxu0 0.0
    %4871 = vmatprep.subr.mxu0 0.0
    %4872 = vmatpush1.msra.mxu0 0.0
    %4873 = vmatprep.subr.mxu0 0.0
    %4874 = vmatpush1.msra.mxu0 0.0
    %4875 = vmatprep.subr.mxu0 0.0
    %4876 = vmatpush1.msra.mxu0 0.0
    %4877 = vmatprep.subr.mxu0 0.0
    %4878 = vmatpush1.msra.mxu0 0.0
    %4879 = vmatprep.subr.mxu0 0.0
    %4880 = vmatpush1.msra.mxu0 0.0
    %4881 = vmatprep.subr.mxu0 0.0
    %4882 = vmatpush1.msra.mxu0 0.0
    %4883 = vmatprep.subr.mxu0 0.0
    %4884 = vmatpush1.msra.mxu0 0.0
    %4885 = vmatprep.subr.mxu0 0.0
    %4886 = vmatpush1.msra.mxu0 0.0
    %4887 = vmatprep.subr.mxu0 0.0
    %4888 = vmatpush1.msra.mxu0 0.0
    %4889 = vmatprep.subr.mxu0 0.0
    %4890 = vmatpush1.msra.mxu0 0.0
    %4891 = vmatprep.subr.mxu0 0.0
    %4892 = vmatpush1.msra.mxu0 0.0
    %4893 = vmatprep.subr.mxu0 0.0
    %4894 = vmatpush1.msra.mxu0 0.0
    %4895 = vmatprep.subr.mxu0 0.0
    %4896 = vmatpush1.msra.mxu0 0.0
    %4897 = vmatprep.subr.mxu0 0.0
    %4898 = vmatpush1.msra.mxu0 0.0
    %4899 = vmatprep.subr.mxu0 0.0
    %4900 = vmatpush1.msra.mxu0 0.0
    %4901 = vmatprep.subr.mxu0 0.0
    %4902 = vmatpush1.msra.mxu0 0.0
    %4903 = vmatprep.subr.mxu0 0.0
    %4904 = vmatpush1.msra.mxu0 0.0
    %4905 = vmatprep.subr.mxu0 0.0
    %4906 = vmatpush1.msra.mxu0 0.0
    %4907 = vmatprep.mubr.f32.mxu0 0.0
    %4908 = vmatmul.mubr.f32.gmra.mrb[0].mxu0 %v4579
    %v4909 = vpop.f32.mrb[0].mxu0
    %v4910 = vadd.f32 0.0, %v4909
    %v4911 = vpop.f32.mrb[0].mxu0
    %4912 = vmatprep.mubr.f32.mxu0 0.0
    %4913 = vmatmul.mubr.f32.gmra.mrb[0].mxu0 %v4582
    %v4914 = vpop.f32.mrb[0].mxu0
    %v4915 = vadd.f32 0.0, %v4914
    %v4916 = vpop.f32.mrb[0].mxu0
    %4917 = vdwg.mxu0
    %4918 = vst [vmem:[#allocation4 + $0x18] sm:$0xff] %v4833
    %4919 = vst [vmem:[#allocation4 + $0x20] sm:$0xff] %v4835
    %4920 = vst [vmem:[#allocation4 + $0x28] sm:$0xff] %v4910
    %4921 = vst [vmem:[#allocation4 + $0x60] sm:$0xff] %v4839
    %4922 = vst [vmem:[#allocation4 + $0x68] sm:$0xff] %v4841
    %4923 = vst [vmem:[#allocation4 + $0x70] sm:$0xff] %v4915
    %v4924 = vld [vmem:[#allocation13 + $0x30] sm:$0xff]
    %v4925 = vld [vmem:[#allocation13 + $0x38] sm:$0xff]
    %v4926 = vld [vmem:[#allocation13 + $0x40] sm:$0xff]
    %v4927 = vld [vmem:[#allocation13 + $0x78] sm:$0xff]
    %v4928 = vld [vmem:[#allocation13 + $0x80] sm:$0xff]
    %v4929 = vld [vmem:[#allocation13 + $0x88] sm:$0xff]
    %v4930 = vld [vmem:[#allocation13 + $0xc0] sm:$0xff]
    %v4931 = vld [vmem:[#allocation13 + $0xc8] sm:$0xff]
    %v4932 = vld [vmem:[#allocation13 + $0xd0] sm:$0xff]
    %v4933 = vld [vmem:[#allocation13 + $0x108] sm:$0xff]
    %v4934 = vld [vmem:[#allocation13 + $0x110] sm:$0xff]
    %v4935 = vld [vmem:[#allocation13 + $0x118] sm:$0xff]
    %v4936 = vld [vmem:[#allocation13 + $0x150] sm:$0xff]
    %v4937 = vld [vmem:[#allocation13 + $0x158] sm:$0xff]
    %v4938 = vld [vmem:[#allocation13 + $0x160] sm:$0xff]
    %v4939 = vld [vmem:[#allocation13 + $0x198] sm:$0xff]
    %v4940 = vld [vmem:[#allocation13 + $0x1a0] sm:$0xff]
    %v4941 = vld [vmem:[#allocation13 + $0x1a8] sm:$0xff]
    %v4942 = vld [vmem:[#allocation13 + $0x1e0] sm:$0xff]
    %v4943 = vld [vmem:[#allocation13 + $0x1e8] sm:$0xff]
    %v4944 = vld [vmem:[#allocation13 + $0x1f0] sm:$0xff]
    %v4945 = vld [vmem:[#allocation13 + $0x228] sm:$0xff]
    %v4946 = vld [vmem:[#allocation13 + $0x230] sm:$0xff]
    %v4947 = vld [vmem:[#allocation13 + $0x238] sm:$0xff]
    %4948 = vmatprep.subr.mxu0 %v4925
    %4949 = vmatpush1.msra.mxu0 %v4924
    %4950 = vmatprep.subr.mxu0 %v4928
    %4951 = vmatpush1.msra.mxu0 %v4927
    %4952 = vmatprep.subr.mxu0 %v4931
    %4953 = vmatpush1.msra.mxu0 %v4930
    %4954 = vmatprep.subr.mxu0 %v4934
    %4955 = vmatpush1.msra.mxu0 %v4933
    %4956 = vmatprep.subr.mxu0 %v4937
    %4957 = vmatpush1.msra.mxu0 %v4936
    %4958 = vmatprep.subr.mxu0 %v4940
    %4959 = vmatpush1.msra.mxu0 %v4939
    %4960 = vmatprep.subr.mxu0 %v4943
    %4961 = vmatpush1.msra.mxu0 %v4942
    %4962 = vmatprep.subr.mxu0 %v4946
    %4963 = vmatpush1.msra.mxu0 %v4945
    %4964 = vmatprep.subr.mxu0 0.0
    %4965 = vmatpush1.msra.mxu0 0.0
    %4966 = vmatprep.subr.mxu0 0.0
    %4967 = vmatpush1.msra.mxu0 0.0
    %4968 = vmatprep.subr.mxu0 0.0
    %4969 = vmatpush1.msra.mxu0 0.0
    %4970 = vmatprep.subr.mxu0 0.0
    %4971 = vmatpush1.msra.mxu0 0.0
    %4972 = vmatprep.subr.mxu0 0.0
    %4973 = vmatpush1.msra.mxu0 0.0
    %4974 = vmatprep.subr.mxu0 0.0
    %4975 = vmatpush1.msra.mxu0 0.0
    %4976 = vmatprep.subr.mxu0 0.0
    %4977 = vmatpush1.msra.mxu0 0.0
    %4978 = vmatprep.subr.mxu0 0.0
    %4979 = vmatpush1.msra.mxu0 0.0
    %4980 = vmatprep.subr.mxu0 0.0
    %4981 = vmatpush1.msra.mxu0 0.0
    %4982 = vmatprep.subr.mxu0 0.0
    %4983 = vmatpush1.msra.mxu0 0.0
    %4984 = vmatprep.subr.mxu0 0.0
    %4985 = vmatpush1.msra.mxu0 0.0
    %4986 = vmatprep.subr.mxu0 0.0
    %4987 = vmatpush1.msra.mxu0 0.0
    %4988 = vmatprep.subr.mxu0 0.0
    %4989 = vmatpush1.msra.mxu0 0.0
    %4990 = vmatprep.subr.mxu0 0.0
    %4991 = vmatpush1.msra.mxu0 0.0
    %4992 = vmatprep.subr.mxu0 0.0
    %4993 = vmatpush1.msra.mxu0 0.0
    %4994 = vmatprep.subr.mxu0 0.0
    %4995 = vmatpush1.msra.mxu0 0.0
    %4996 = vmatprep.subr.mxu0 0.0
    %4997 = vmatpush1.msra.mxu0 0.0
    %4998 = vmatprep.subr.mxu0 0.0
    %4999 = vmatpush1.msra.mxu0 0.0
    %5000 = vmatprep.subr.mxu0 0.0
    %5001 = vmatpush1.msra.mxu0 0.0
    %5002 = vmatprep.subr.mxu0 0.0
    %5003 = vmatpush1.msra.mxu0 0.0
    %5004 = vmatprep.subr.mxu0 0.0
    %5005 = vmatpush1.msra.mxu0 0.0
    %5006 = vmatprep.subr.mxu0 0.0
    %5007 = vmatpush1.msra.mxu0 0.0
    %5008 = vmatprep.subr.mxu0 0.0
    %5009 = vmatpush1.msra.mxu0 0.0
    %5010 = vmatprep.subr.mxu0 0.0
    %5011 = vmatpush1.msra.mxu0 0.0
    %5012 = vmatprep.mubr.f32.mxu0 0.0
    %5013 = vmatmul.mubr.f32.gmra.mrb[0].mxu0 %v4579
    %v5014 = vpop.f32.mrb[0].mxu0
    %v5015 = vadd.f32 0.0, %v5014
    %v5016 = vpop.f32.mrb[0].mxu0
    %v5017 = vadd.f32 0.0, %v5016
    %5018 = vmatprep.mubr.f32.mxu0 0.0
    %5019 = vmatmul.mubr.f32.gmra.mrb[0].mxu0 %v4582
    %v5020 = vpop.f32.mrb[0].mxu0
    %v5021 = vadd.f32 0.0, %v5020
    %v5022 = vpop.f32.mrb[0].mxu0
    %v5023 = vadd.f32 0.0, %v5022
    %5024 = vdwg.mxu0
    %5025 = vmatprep.subr.mxu0 0.0
    %5026 = vmatpush1.msra.mxu0 %v4926
    %5027 = vmatprep.subr.mxu0 0.0
    %5028 = vmatpush1.msra.mxu0 %v4929
    %5029 = vmatprep.subr.mxu0 0.0
    %5030 = vmatpush1.msra.mxu0 %v4932
    %5031 = vmatprep.subr.mxu0 0.0
    %5032 = vmatpush1.msra.mxu0 %v4935
    %5033 = vmatprep.subr.mxu0 0.0
    %5034 = vmatpush1.msra.mxu0 %v4938
    %5035 = vmatprep.subr.mxu0 0.0
    %5036 = vmatpush1.msra.mxu0 %v4941
    %5037 = vmatprep.subr.mxu0 0.0
    %5038 = vmatpush1.msra.mxu0 %v4944
    %5039 = vmatprep.subr.mxu0 0.0
    %5040 = vmatpush1.msra.mxu0 %v4947
    %5041 = vmatprep.subr.mxu0 0.0
    %5042 = vmatpush1.msra.mxu0 0.0
    %5043 = vmatprep.subr.mxu0 0.0
    %5044 = vmatpush1.msra.mxu0 0.0
    %5045 = vmatprep.subr.mxu0 0.0
    %5046 = vmatpush1.msra.mxu0 0.0
    %5047 = vmatprep.subr.mxu0 0.0
    %5048 = vmatpush1.msra.mxu0 0.0
    %5049 = vmatprep.subr.mxu0 0.0
    %5050 = vmatpush1.msra.mxu0 0.0
    %5051 = vmatprep.subr.mxu0 0.0
    %5052 = vmatpush1.msra.mxu0 0.0
    %5053 = vmatprep.subr.mxu0 0.0
    %5054 = vmatpush1.msra.mxu0 0.0
    %5055 = vmatprep.subr.mxu0 0.0
    %5056 = vmatpush1.msra.mxu0 0.0
    %5057 = vmatprep.subr.mxu0 0.0
    %5058 = vmatpush1.msra.mxu0 0.0
    %5059 = vmatprep.subr.mxu0 0.0
    %5060 = vmatpush1.msra.mxu0 0.0
    %5061 = vmatprep.subr.mxu0 0.0
    %5062 = vmatpush1.msra.mxu0 0.0
    %5063 = vmatprep.subr.mxu0 0.0
    %5064 = vmatpush1.msra.mxu0 0.0
    %5065 = vmatprep.subr.mxu0 0.0
    %5066 = vmatpush1.msra.mxu0 0.0
    %5067 = vmatprep.subr.mxu0 0.0
    %5068 = vmatpush1.msra.mxu0 0.0
    %5069 = vmatprep.subr.mxu0 0.0
    %5070 = vmatpush1.msra.mxu0 0.0
    %5071 = vmatprep.subr.mxu0 0.0
    %5072 = vmatpush1.msra.mxu0 0.0
    %5073 = vmatprep.subr.mxu0 0.0
    %5074 = vmatpush1.msra.mxu0 0.0
    %5075 = vmatprep.subr.mxu0 0.0
    %5076 = vmatpush1.msra.mxu0 0.0
    %5077 = vmatprep.subr.mxu0 0.0
    %5078 = vmatpush1.msra.mxu0 0.0
    %5079 = vmatprep.subr.mxu0 0.0
    %5080 = vmatpush1.msra.mxu0 0.0
    %5081 = vmatprep.subr.mxu0 0.0
    %5082 = vmatpush1.msra.mxu0 0.0
    %5083 = vmatprep.subr.mxu0 0.0
    %5084 = vmatpush1.msra.mxu0 0.0
    %5085 = vmatprep.subr.mxu0 0.0
    %5086 = vmatpush1.msra.mxu0 0.0
    %5087 = vmatprep.subr.mxu0 0.0
    %5088 = vmatpush1.msra.mxu0 0.0
    %5089 = vmatprep.mubr.f32.mxu0 0.0
    %5090 = vmatmul.mubr.f32.gmra.mrb[0].mxu0 %v4579
    %v5091 = vpop.f32.mrb[0].mxu0
    %v5092 = vadd.f32 0.0, %v5091
    %v5093 = vpop.f32.mrb[0].mxu0
    %5094 = vmatprep.mubr.f32.mxu0 0.0
    %5095 = vmatmul.mubr.f32.gmra.mrb[0].mxu0 %v4582
    %v5096 = vpop.f32.mrb[0].mxu0
    %v5097 = vadd.f32 0.0, %v5096
    %v5098 = vpop.f32.mrb[0].mxu0
    %5099 = vdwg.mxu0
    %5100 = vst [vmem:[#allocation4 + $0x30] sm:$0xff] %v5015
    %5101 = vst [vmem:[#allocation4 + $0x38] sm:$0xff] %v5017
    %5102 = vst [vmem:[#allocation4 + $0x40] sm:$0xff] %v5092
    %5103 = vst [vmem:[#allocation4 + $0x78] sm:$0xff] %v5021
    %5104 = vst [vmem:[#allocation4 + $0x80] sm:$0xff] %v5023
    %5105 = vst [vmem:[#allocation4 + $0x88] sm:$0xff] %v5097
    %v5106 = vand.u32 %v212, 1
    %vm5107 = vcmp.ge.s32.totalorder %v5106, 1
    %v5108 = vsel %vm5107, 1.0, 0.0
    %vm5109 = vcmp.le.s32.totalorder %v5106, 0
    %v5110 = vsel %vm5109, 1.0, 0.0
    %v5111 = vld [vmem:[#allocation4] sm:$0xe0]
    %v5112 = vld [vmem:[#allocation4 + $0x48] sm:$0x1]
    %v5114 = vrot.slane %v5108, 3
    %v5116 = vmul.f32 %v5111, %v5114
    %v5117 = vmul.f32 %v5112, %v5114
    %v5118 = vadd.f32 %v5116, 0.0
    %v5119 = vadd.f32 %v5117, 0.0
    %v5120 = vld [vmem:[#allocation4 + $0x8] sm:$0xc0]
    %v5121 = vld [vmem:[#allocation4 + $0x50] sm:$0x3]
    %v5124 = vrot.slane %v5120, 1
    %v5125 = vrot.slane %v5121, 1
    %v5126 = vsel %vm2979, %v5124, %v5125
    %v5129 = vadd.f32 %v5118, %v5126
    %v5130 = vadd.f32 %v5119, %v5125
    %v5131 = vld [vmem:[#allocation4 + $0x10] sm:$0x80]
    %v5132 = vld [vmem:[#allocation4 + $0x58] sm:$0x7]
    %v5134 = vrot.slane %v5110, 1
    %v5136 = vmul.f32 %v5131, %v5134
    %v5137 = vmul.f32 %v5132, %v5134
    %v5140 = vrot.slane %v5136, 2
    %v5141 = vrot.slane %v5137, 2
    %v5142 = vsel %vm3131, %v5140, %v5141
    %v5145 = vadd.f32 %v5129, %v5142
    %v5146 = vadd.f32 %v5130, %v5141
    %v5147 = vld [vmem:[#allocation4 + $0x18] sm:$0x80]
    %v5148 = vld [vmem:[#allocation4 + $0x60] sm:$0x7]
    %v5149 = vrot.slane %v5108, 1
    %v5151 = vmul.f32 %v5147, %v5149
    %v5152 = vmul.f32 %v5148, %v5149
    %v5155 = vrot.slane %v5151, 2
    %v5156 = vrot.slane %v5152, 2
    %v5157 = vsel %vm3131, %v5155, %v5156
    %v5160 = vadd.f32 %v5145, %v5157
    %v5161 = vadd.f32 %v5146, %v5156
    %v5162 = vld [vmem:[#allocation4 + $0x68] sm:$0xf]
    %v5164 = vrot.slane %v5162, 3
    %v5166 = vadd.f32 %v5160, %v5164
    %v5167 = vadd.f32 %v5161, %v5164
    %v5168 = vld [vmem:[#allocation4 + $0x70] sm:$0x1e]
    %v5169 = vrot.slane %v5110, 7
    %v5171 = vmul.f32 %v5168, %v5169
    %v5173 = vrot.slane %v5171, 4
    %v5175 = vadd.f32 %v5166, %v5173
    %v5176 = vadd.f32 %v5167, %v5173
    %v5177 = vld [vmem:[#allocation4 + $0x78] sm:$0x1e]
    %v5178 = vrot.slane %v5108, 7
    %v5180 = vmul.f32 %v5177, %v5178
    %v5182 = vrot.slane %v5180, 4
    %v5184 = vadd.f32 %v5175, %v5182
    %v5185 = vadd.f32 %v5176, %v5182
    %v5186 = vld [vmem:[#allocation4 + $0x80] sm:$0x3c]
    %v5188 = vrot.slane %v5186, 5
    %v5190 = vadd.f32 %v5184, %v5188
    %v5191 = vadd.f32 %v5185, %v5188
    %v5192 = vld [vmem:[#allocation4 + $0x88] sm:$0x78]
    %v5193 = vrot.slane %v5110, 5
    %v5195 = vmul.f32 %v5192, %v5193
    %v5197 = vrot.slane %v5195, 6
    %v5199 = vadd.f32 %v5190, %v5197
    %v5200 = vadd.f32 %v5191, %v5197
    %v5201 = vld [vmem:[%s8] sm:$0x1]
    %v5203 = vlaneseq
    %v5204 = vshrl.u32 %v5203, 7
    %v5205 = vsub.s32 0, %v5204
    %v5206 = vrot.slane %v5201, %v5205
    %v5208 = vadd.f32 %v5199, %v5206
    %v5209 = vadd.f32 %v5200, %v5206
    %v5210 = vmax.f32 %v5208, 0.0
    %v5211 = vmax.f32 %v5209, 0.0
    %vm5212 = vcmask 1047557
    %v5213 = vsel %vm5212, %v5210, -inf
    %v5214 = vsel %vm3088, %v5211, -inf
    %v5215 = vmax.f32 %v5213, %v5214
    %v5216 = vrot.slane %v5215, 4
    %v5217 = vmax.f32 %v5215, %v5216
    %v5218 = vrot.slane %v5217, 2
    %v5219 = vmax.f32 %v5217, %v5218
    %v5220 = vrot.slane %v5219, 1
    %v5221 = vmax.f32 %v5219, %v5220
    %v5222 = vld [vmem:[%s12] sm:$0xff]
    %v5223 = vld [vmem:[%s12 + $0x8] sm:$0xff]
    %v5224 = vld [vmem:[%s12 + $0x10] sm:$0xff]
    %v5225 = vld [vmem:[%s12 + $0x18] sm:$0xff]
    %v5226 = vld [vmem:[%s12 + $0x20] sm:$0xff]
    %v5227 = vld [vmem:[%s12 + $0x28] sm:$0xff]
    %v5228 = vld [vmem:[%s12 + $0x30] sm:$0xff]
    %v5229 = vld [vmem:[%s12 + $0x38] sm:$0xff]
    %v5230 = vld [vmem:[%s12 + $0x40] sm:$0xff]
    %v5231 = vld [vmem:[%s12 + $0x48] sm:$0xff]
    %v5232 = vld [vmem:[%s12 + $0x50] sm:$0xff]
    %v5233 = vld [vmem:[%s12 + $0x58] sm:$0xff]
    %v5234 = vld [vmem:[%s12 + $0x60] sm:$0xff]
    %v5235 = vld [vmem:[%s12 + $0x68] sm:$0xff]
    %v5236 = vld [vmem:[%s12 + $0x70] sm:$0xff]
    %v5237 = vld [vmem:[%s12 + $0x78] sm:$0xff]
    %v5238 = vld [vmem:[%s13] sm:$0x1]
    %5239 = vmatprep.subr.mxu0 0.0
    %5240 = vmatpush1.msra.mxu0 %v5222
    %5241 = vmatprep.subr.mxu0 0.0
    %5242 = vmatpush1.msra.mxu0 %v5223
    %5243 = vmatprep.subr.mxu0 0.0
    %5244 = vmatpush1.msra.mxu0 %v5224
    %5245 = vmatprep.subr.mxu0 0.0
    %5246 = vmatpush1.msra.mxu0 %v5225
    %5247 = vmatprep.subr.mxu0 0.0
    %5248 = vmatpush1.msra.mxu0 %v5226
    %5249 = vmatprep.subr.mxu0 0.0
    %5250 = vmatpush1.msra.mxu0 %v5227
    %5251 = vmatprep.subr.mxu0 0.0
    %5252 = vmatpush1.msra.mxu0 %v5228
    %5253 = vmatprep.subr.mxu0 0.0
    %5254 = vmatpush1.msra.mxu0 %v5229
    %5255 = vmatprep.subr.mxu0 0.0
    %5256 = vmatpush1.msra.mxu0 %v5230
    %5257 = vmatprep.subr.mxu0 0.0
    %5258 = vmatpush1.msra.mxu0 %v5231
    %5259 = vmatprep.subr.mxu0 0.0
    %5260 = vmatpush1.msra.mxu0 %v5232
    %5261 = vmatprep.subr.mxu0 0.0
    %5262 = vmatpush1.msra.mxu0 %v5233
    %5263 = vmatprep.subr.mxu0 0.0
    %5264 = vmatpush1.msra.mxu0 %v5234
    %5265 = vmatprep.subr.mxu0 0.0
    %5266 = vmatpush1.msra.mxu0 %v5235
    %5267 = vmatprep.subr.mxu0 0.0
    %5268 = vmatpush1.msra.mxu0 %v5236
    %5269 = vmatprep.subr.mxu0 0.0
    %5270 = vmatpush1.msra.mxu0 %v5237
    %5271 = vmatprep.subr.mxu0 0.0
    %5272 = vmatpush1.msra.mxu0 0.0
    %5273 = vmatprep.subr.mxu0 0.0
    %5274 = vmatpush1.msra.mxu0 0.0
    %5275 = vmatprep.subr.mxu0 0.0
    %5276 = vmatpush1.msra.mxu0 0.0
    %5277 = vmatprep.subr.mxu0 0.0
    %5278 = vmatpush1.msra.mxu0 0.0
    %5279 = vmatprep.subr.mxu0 0.0
    %5280 = vmatpush1.msra.mxu0 0.0
    %5281 = vmatprep.subr.mxu0 0.0
    %5282 = vmatpush1.msra.mxu0 0.0
    %5283 = vmatprep.subr.mxu0 0.0
    %5284 = vmatpush1.msra.mxu0 0.0
    %5285 = vmatprep.subr.mxu0 0.0
    %5286 = vmatpush1.msra.mxu0 0.0
    %5287 = vmatprep.subr.mxu0 0.0
    %5288 = vmatpush1.msra.mxu0 0.0
    %5289 = vmatprep.subr.mxu0 0.0
    %5290 = vmatpush1.msra.mxu0 0.0
    %5291 = vmatprep.subr.mxu0 0.0
    %5292 = vmatpush1.msra.mxu0 0.0
    %5293 = vmatprep.subr.mxu0 0.0
    %5294 = vmatpush1.msra.mxu0 0.0
    %5295 = vmatprep.subr.mxu0 0.0
    %5296 = vmatpush1.msra.mxu0 0.0
    %5297 = vmatprep.subr.mxu0 0.0
    %5298 = vmatpush1.msra.mxu0 0.0
    %5299 = vmatprep.subr.mxu0 0.0
    %5300 = vmatpush1.msra.mxu0 0.0
    %5301 = vmatprep.subr.mxu0 0.0
    %5302 = vmatpush1.msra.mxu0 0.0
    %5303 = vmatprep.mubr.f32.mxu0 0.0
    %5304 = vmatmul.mubr.f32.gmra.mrb[0].mxu0 %v5221
    %v5305 = vpop.f32.mrb[0].mxu0
    %v5306 = vadd.f32 %v5238, %v5305
    %v5307 = vpop.f32.mrb[0].mxu0
    %5308 = vdwg.mxu0
    %v5309 = vmax.f32 %v5306, 0.0
    %v5310 = vld [vmem:[%s14] sm:$0xff]
    %v5311 = vld [vmem:[%s14 + $0x8] sm:$0xff]
    %v5312 = vld [vmem:[%s14 + $0x10] sm:$0xff]
    %v5313 = vld [vmem:[%s14 + $0x18] sm:$0xff]
    %v5314 = vld [vmem:[%s14 + $0x20] sm:$0xff]
    %v5315 = vld [vmem:[%s14 + $0x28] sm:$0xff]
    %v5316 = vld [vmem:[%s14 + $0x30] sm:$0xff]
    %v5317 = vld [vmem:[%s14 + $0x38] sm:$0xff]
    %v5318 = vld [vmem:[%s14 + $0x40] sm:$0xff]
    %v5319 = vld [vmem:[%s14 + $0x48] sm:$0xff]
    %v5320 = vld [vmem:[%s14 + $0x50] sm:$0xff]
    %v5321 = vld [vmem:[%s14 + $0x58] sm:$0xff]
    %v5322 = vld [vmem:[%s14 + $0x60] sm:$0xff]
    %v5323 = vld [vmem:[%s14 + $0x68] sm:$0xff]
    %v5324 = vld [vmem:[%s14 + $0x70] sm:$0xff]
    %v5325 = vld [vmem:[%s14 + $0x78] sm:$0xff]
    %v5326 = vld [vmem:[%s15] sm:$0x1]
    %5327 = vmatprep.subr.mxu0 0.0
    %5328 = vmatpush1.msra.mxu0 %v5310
    %5329 = vmatprep.subr.mxu0 0.0
    %5330 = vmatpush1.msra.mxu0 %v5311
    %5331 = vmatprep.subr.mxu0 0.0
    %5332 = vmatpush1.msra.mxu0 %v5312
    %5333 = vmatprep.subr.mxu0 0.0
    %5334 = vmatpush1.msra.mxu0 %v5313
    %5335 = vmatprep.subr.mxu0 0.0
    %5336 = vmatpush1.msra.mxu0 %v5314
    %5337 = vmatprep.subr.mxu0 0.0
    %5338 = vmatpush1.msra.mxu0 %v5315
    %5339 = vmatprep.subr.mxu0 0.0
    %5340 = vmatpush1.msra.mxu0 %v5316
    %5341 = vmatprep.subr.mxu0 0.0
    %5342 = vmatpush1.msra.mxu0 %v5317
    %5343 = vmatprep.subr.mxu0 0.0
    %5344 = vmatpush1.msra.mxu0 %v5318
    %5345 = vmatprep.subr.mxu0 0.0
    %5346 = vmatpush1.msra.mxu0 %v5319
    %5347 = vmatprep.subr.mxu0 0.0
    %5348 = vmatpush1.msra.mxu0 %v5320
    %5349 = vmatprep.subr.mxu0 0.0
    %5350 = vmatpush1.msra.mxu0 %v5321
    %5351 = vmatprep.subr.mxu0 0.0
    %5352 = vmatpush1.msra.mxu0 %v5322
    %5353 = vmatprep.subr.mxu0 0.0
    %5354 = vmatpush1.msra.mxu0 %v5323
    %5355 = vmatprep.subr.mxu0 0.0
    %5356 = vmatpush1.msra.mxu0 %v5324
    %5357 = vmatprep.subr.mxu0 0.0
    %5358 = vmatpush1.msra.mxu0 %v5325
    %5359 = vmatprep.subr.mxu0 0.0
    %5360 = vmatpush1.msra.mxu0 0.0
    %5361 = vmatprep.subr.mxu0 0.0
    %5362 = vmatpush1.msra.mxu0 0.0
    %5363 = vmatprep.subr.mxu0 0.0
    %5364 = vmatpush1.msra.mxu0 0.0
    %5365 = vmatprep.subr.mxu0 0.0
    %5366 = vmatpush1.msra.mxu0 0.0
    %5367 = vmatprep.subr.mxu0 0.0
    %5368 = vmatpush1.msra.mxu0 0.0
    %5369 = vmatprep.subr.mxu0 0.0
    %5370 = vmatpush1.msra.mxu0 0.0
    %5371 = vmatprep.subr.mxu0 0.0
    %5372 = vmatpush1.msra.mxu0 0.0
    %5373 = vmatprep.subr.mxu0 0.0
    %5374 = vmatpush1.msra.mxu0 0.0
    %5375 = vmatprep.subr.mxu0 0.0
    %5376 = vmatpush1.msra.mxu0 0.0
    %5377 = vmatprep.subr.mxu0 0.0
    %5378 = vmatpush1.msra.mxu0 0.0
    %5379 = vmatprep.subr.mxu0 0.0
    %5380 = vmatpush1.msra.mxu0 0.0
    %5381 = vmatprep.subr.mxu0 0.0
    %5382 = vmatpush1.msra.mxu0 0.0
    %5383 = vmatprep.subr.mxu0 0.0
    %5384 = vmatpush1.msra.mxu0 0.0
    %5385 = vmatprep.subr.mxu0 0.0
    %5386 = vmatpush1.msra.mxu0 0.0
    %5387 = vmatprep.subr.mxu0 0.0
    %5388 = vmatpush1.msra.mxu0 0.0
    %5389 = vmatprep.subr.mxu0 0.0
    %5390 = vmatpush1.msra.mxu0 0.0
    %5391 = vmatprep.mubr.f32.mxu0 0.0
    %5392 = vmatmul.mubr.f32.gmra.mrb[0].mxu0 %v5309
    %v5393 = vpop.f32.mrb[0].mxu0
    %v5394 = vadd.f32 %v5326, %v5393
    %v5395 = vpop.f32.mrb[0].mxu0
    %5396 = vdwg.mxu0
    %v5397 = vmax.f32 %v5394, 0.0
    %v5398 = vld [vmem:[#allocation14] sm:$0xff]
    %v5399 = vld [vmem:[#allocation14 + $0x8] sm:$0xff]
    %v5400 = vld [vmem:[#allocation14 + $0x10] sm:$0xff]
    %v5401 = vld [vmem:[#allocation14 + $0x18] sm:$0xff]
    %v5402 = vld [vmem:[#allocation14 + $0x20] sm:$0xff]
    %v5403 = vld [vmem:[#allocation14 + $0x28] sm:$0xff]
    %v5404 = vld [vmem:[#allocation14 + $0x30] sm:$0xff]
    %v5405 = vld [vmem:[#allocation14 + $0x38] sm:$0xff]
    %v5406 = vld [vmem:[#allocation14 + $0x40] sm:$0xff]
    %v5407 = vld [vmem:[#allocation14 + $0x48] sm:$0xff]
    %v5408 = vld [vmem:[#allocation14 + $0x50] sm:$0xff]
    %v5409 = vld [vmem:[#allocation14 + $0x58] sm:$0xff]
    %v5410 = vld [vmem:[#allocation14 + $0x60] sm:$0xff]
    %v5411 = vld [vmem:[#allocation14 + $0x68] sm:$0xff]
    %v5412 = vld [vmem:[#allocation14 + $0x70] sm:$0xff]
    %v5413 = vld [vmem:[#allocation14 + $0x78] sm:$0xff]
    %v5414 = vld [vmem:[%s17] sm:$0x1]
    %5415 = vmatprep.subr.mxu0 0.0
    %5416 = vmatpush1.msra.mxu0 %v5398
    %5417 = vmatprep.subr.mxu0 0.0
    %5418 = vmatpush1.msra.mxu0 %v5399
    %5419 = vmatprep.subr.mxu0 0.0
    %5420 = vmatpush1.msra.mxu0 %v5400
    %5421 = vmatprep.subr.mxu0 0.0
    %5422 = vmatpush1.msra.mxu0 %v5401
    %5423 = vmatprep.subr.mxu0 0.0
    %5424 = vmatpush1.msra.mxu0 %v5402
    %5425 = vmatprep.subr.mxu0 0.0
    %5426 = vmatpush1.msra.mxu0 %v5403
    %5427 = vmatprep.subr.mxu0 0.0
    %5428 = vmatpush1.msra.mxu0 %v5404
    %5429 = vmatprep.subr.mxu0 0.0
    %5430 = vmatpush1.msra.mxu0 %v5405
    %5431 = vmatprep.subr.mxu0 0.0
    %5432 = vmatpush1.msra.mxu0 %v5406
    %5433 = vmatprep.subr.mxu0 0.0
    %5434 = vmatpush1.msra.mxu0 %v5407
    %5435 = vmatprep.subr.mxu0 0.0
    %5436 = vmatpush1.msra.mxu0 %v5408
    %5437 = vmatprep.subr.mxu0 0.0
    %5438 = vmatpush1.msra.mxu0 %v5409
    %5439 = vmatprep.subr.mxu0 0.0
    %5440 = vmatpush1.msra.mxu0 %v5410
    %5441 = vmatprep.subr.mxu0 0.0
    %5442 = vmatpush1.msra.mxu0 %v5411
    %5443 = vmatprep.subr.mxu0 0.0
    %5444 = vmatpush1.msra.mxu0 %v5412
    %5445 = vmatprep.subr.mxu0 0.0
    %5446 = vmatpush1.msra.mxu0 %v5413
    %5447 = vmatprep.subr.mxu0 0.0
    %5448 = vmatpush1.msra.mxu0 0.0
    %5449 = vmatprep.subr.mxu0 0.0
    %5450 = vmatpush1.msra.mxu0 0.0
    %5451 = vmatprep.subr.mxu0 0.0
    %5452 = vmatpush1.msra.mxu0 0.0
    %5453 = vmatprep.subr.mxu0 0.0
    %5454 = vmatpush1.msra.mxu0 0.0
    %5455 = vmatprep.subr.mxu0 0.0
    %5456 = vmatpush1.msra.mxu0 0.0
    %5457 = vmatprep.subr.mxu0 0.0
    %5458 = vmatpush1.msra.mxu0 0.0
    %5459 = vmatprep.subr.mxu0 0.0
    %5460 = vmatpush1.msra.mxu0 0.0
    %5461 = vmatprep.subr.mxu0 0.0
    %5462 = vmatpush1.msra.mxu0 0.0
    %5463 = vmatprep.subr.mxu0 0.0
    %5464 = vmatpush1.msra.mxu0 0.0
    %5465 = vmatprep.subr.mxu0 0.0
    %5466 = vmatpush1.msra.mxu0 0.0
    %5467 = vmatprep.subr.mxu0 0.0
    %5468 = vmatpush1.msra.mxu0 0.0
    %5469 = vmatprep.subr.mxu0 0.0
    %5470 = vmatpush1.msra.mxu0 0.0
    %5471 = vmatprep.subr.mxu0 0.0
    %5472 = vmatpush1.msra.mxu0 0.0
    %5473 = vmatprep.subr.mxu0 0.0
    %5474 = vmatpush1.msra.mxu0 0.0
    %5475 = vmatprep.subr.mxu0 0.0
    %5476 = vmatpush1.msra.mxu0 0.0
    %5477 = vmatprep.subr.mxu0 0.0
    %5478 = vmatpush1.msra.mxu0 0.0
    %5479 = vmatprep.mubr.f32.mxu0 0.0
    %5480 = vmatmul.mubr.f32.gmra.mrb[0].mxu0 %v5397
    %v5481 = vpop.f32.mrb[0].mxu0
    %v5482 = vadd.f32 %v5414, %v5481
    %v5483 = vpop.f32.mrb[0].mxu0
    %5484 = vdwg.mxu0
    %5485 = vst [vmem:[#allocation16] sm:$0x1] %v5482
    // Predicated region
    $region98: #{tpu_custom_call.1} parent=1 // pred_check
      _
    $region99: #{tpu_custom_call.1} parent=1 // pred_check_branch
      %5487 = sbr.rel (0) target = $region101
    $region100: #{tpu_custom_call.1} parent=1 // pred_region
      %s5489 = ssub.s32 16, 16
      %5490 = vsyncadd [#allocation7], %s5489
      %s5492 = sshll.u32 [#allocation16], 4
      %s5493 = int_to_ptr.vmem [resolvable:$true] %s5492
      %5495 = dma.vmem_to_hbm [thread:$0]  %s5493, 16, %s18, [#allocation7]
    $region101: #{tpu_custom_call.1} parent=1 // pred_fallthru
      _
    // Predicated region
    $region102: #{tpu_custom_call.1} parent=1 // pred_check
      _
    $region103: #{tpu_custom_call.1} parent=1 // pred_check_branch
      %5497 = sbr.rel (0) target = $region105
    $region104: #{tpu_custom_call.1} parent=1 // pred_region
      %5498 = dma.done [#allocation7], 16
    $region105: #{tpu_custom_call.1} parent=1 // pred_fallthru
      _
    %5499 = vsyncpa [#allocation6], 1
    %5500 = vsyncpa [#allocation9], 1
    %5501 = vsyncpa [#allocation12], 1
    %5502 = vsyncpa [#allocation15], 1
    %5503 = vsyncpa [#allocation7], 1

</llo_original>
